<compile_context>
chip_gen: v6e
topology: v6e:2x2x1
jax: 0.10.0
libtpu: 0.0.40
codegen_flags: <defaults>
</compile_context>

<pallas_src>
import functools
import math

import numpy as np

import jax
import jax.numpy as jnp
from jax.experimental import pallas as pl
from jax.experimental.pallas import tpu as pltpu

LN_EPS = 1e-5  # nn.LayerNorm default
_VMEM_LIMIT = 32 * 1024 * 1024


def _round_up(x, m):
    return ((x + m - 1) // m) * m


def _num_tensorcores():
    # Best effort; v7x exposes 2 TensorCores per chip, v5e/v6e have 1.
    try:
        return max(1, int(getattr(jax.devices()[0], "num_cores", 1)))
    except Exception:  # pragma: no cover
        return 1


# --------------------------------------------------------------------------
# Pallas kernels
# --------------------------------------------------------------------------

def _masked_ln(x, g, b, c):
    """LayerNorm over the first `c` lanes of a zero-padded (rows, cp) slab."""
    cp = x.shape[-1]
    inv_c = 1.0 / c
    mean = jnp.sum(x, axis=-1, keepdims=True) * inv_c      # pads are 0 -> exact
    xc = x - mean
    if cp != c:
        col = jax.lax.broadcasted_iota(jnp.int32, (1, cp), 1)
        xm = jnp.where(col < c, xc, 0.0)
    else:
        xm = xc
    var = jnp.sum(xm * xm, axis=-1, keepdims=True) * inv_c
    # gamma/beta pads are 0, so pad lanes of y are exactly 0.
    return xc * jax.lax.rsqrt(var + LN_EPS) * g + b


def _window_attn_kernel(x_ref, g1_ref, b1_ref, wqkv_ref, bqkv_ref, relb_ref,
                        wproj_ref, bproj_ref, *rest,
                        num_heads, c, wb, n, has_mask):
    """WB windows per grid step.

    o = x + proj( MHSA( LN1(x) ) )   (attention residual fused)
    x_ref/o_ref are (WB*N, Cp) lane-dense row slabs (Cp multiple of 128).
    Weights are bf16; accumulation f32; LN/softmax statistics f32.
    """
    if has_mask:
        mask_ref, o_ref = rest
    else:
        (o_ref,) = rest

    x = x_ref[...]                                          # (WB*N, Cp) f32
    dh = c // num_heads

    y = _masked_ln(x, g1_ref[...], b1_ref[...], c)
    y16 = y.astype(jnp.bfloat16)

    # ONE fused QKV projection (MXU N = 3C).  1/sqrt(dh) already folded into Wq/bq.
    qkv = (jnp.dot(y16, wqkv_ref[...], preferred_element_type=jnp.float32)
           + bqkv_ref[...])                                 # (WB*N, 3C) f32

    if has_mask:
        mask = mask_ref[...]                                # (WB, N, N)

    head_outs = []
    for h in range(num_heads):                              # static unroll
        qh = qkv[:, h * dh:(h + 1) * dh].reshape(wb, n, dh).astype(jnp.bfloat16)
        kh = qkv[:, c + h * dh:c + (h + 1) * dh].reshape(wb, n, dh).astype(jnp.bfloat16)
        vh = qkv[:, 2 * c + h * dh:2 * c + (h + 1) * dh].reshape(wb, n, dh).astype(jnp.bfloat16)

        s = jnp.einsum("wqd,wkd->wqk", qh, kh,
                       preferred_element_type=jnp.float32)  # (WB, N, N) f32
        s = s + relb_ref[h]
        if has_mask:
            s = s + mask
        s = s - jnp.max(s, axis=-1, keepdims=True)
        e = jnp.exp(s)
        p = e * pl.reciprocal(jnp.sum(e, axis=-1, keepdims=True), approx=True)

        oh = jnp.einsum("wqk,wkd->wqd", p.astype(jnp.bfloat16), vh,
                        preferred_element_type=jnp.float32)  # (WB, N, dh)
        head_outs.append(oh.reshape(wb * n, dh))

    o_cat = head_outs[0] if num_heads == 1 else jnp.concatenate(head_outs, axis=-1)
    out = (jnp.dot(o_cat.astype(jnp.bfloat16), wproj_ref[...],
                   preferred_element_type=jnp.float32) + bproj_ref[...])
    # Fused attention residual; Wproj/bproj pad columns are 0 and x pad lanes
    # are 0, so output pad lanes stay exactly 0.  Lane-dense (Cp) store.
    o_ref[...] = (x + out).astype(o_ref.dtype)


def _erf_approx(x):
    # Abramowitz & Stegun 7.1.26 rational approximation, |err| <= 1.5e-7.
    # TODO(synk): Mosaic has no guaranteed lax.erf lowering; this matches the
    # exact (erf-form) torch.nn.GELU to ~fp32 precision.
    p = 0.3275911
    a1, a2, a3, a4, a5 = (0.254829592, -0.284496736, 1.421413741,
                          -1.453152027, 1.061405429)
    ax = jnp.abs(x)
    t = 1.0 / (1.0 + p * ax)
    poly = ((((a5 * t + a4) * t + a3) * t + a2) * t + a1) * t
    y = 1.0 - poly * jnp.exp(-(ax * ax))
    return jnp.where(x < 0, -y, y)


def _mlp_kernel(x_ref, g2_ref, b2_ref, w1_ref, bb1_ref, w2_ref, bb2_ref, o_ref,
                *, c):
    """Row tile of tokens: out = x + fc2(GELU(fc1(LN2(x)))) (residual fused)."""
    x = x_ref[...]                                          # (TM, Cp) f32
    y = _masked_ln(x, g2_ref[...], b2_ref[...], c).astype(jnp.bfloat16)
    h = jnp.dot(y, w1_ref[...], preferred_element_type=jnp.float32) + bb1_ref[...]
    h = 0.5 * h * (1.0 + _erf_approx(h * (1.0 / math.sqrt(2.0))))  # exact GELU
    out = (jnp.dot(h.astype(jnp.bfloat16), w2_ref[...],
                   preferred_element_type=jnp.float32) + bb2_ref[...])
    o_ref[...] = (x + out).astype(o_ref.dtype)


# --------------------------------------------------------------------------
# Pallas wrappers
# --------------------------------------------------------------------------

def _pick_wb(nw_img, nw_total, n, max_rows=1024):
    """Windows per grid step: divides nW_img (mask dedupe invariant), caps the
    row-slab size, prefers >= 2*num_tensorcores grid steps when possible."""
    min_steps = 2 * _num_tensorcores()
    divs = [d for d in range(1, nw_img + 1)
            if nw_img % d == 0 and d * n <= max_rows]
    if not divs:
        return 1
    ok = [d for d in divs if nw_total // d >= min_steps]
    return max(ok) if ok else max(divs)


def _pick_tm(m):
    min_steps = max(2, 2 * _num_tensorcores())
    for tm in (512, 256, 128):
        if m >= min_steps * tm:
            return tm
    return min(128, max(8, ((m + 7) // 8) * 8))


def window_attention(x_flat, mask_img, p, num_heads, *, c, n, nw_img, wb):
    """x_flat: (NW*N, Cp) windowed tokens; mask_img: (nW_img, N, N) or None."""
    M, Cp = x_flat.shape
    nw = M // n
    grid = nw // wb
    has_mask = mask_img is not None
    c3 = p["wqkv"].shape[1]

    kernel = functools.partial(_window_attn_kernel, num_heads=num_heads,
                               c=c, wb=wb, n=n, has_mask=has_mask)

    in_specs = [
        pl.BlockSpec((wb * n, Cp), lambda w: (w, 0)),                  # x rows
        pl.BlockSpec((1, Cp), lambda w: (0, 0)),                       # norm1 gamma
        pl.BlockSpec((1, Cp), lambda w: (0, 0)),                       # norm1 beta
        pl.BlockSpec((Cp, c3), lambda w: (0, 0)),                      # W_qkv (bf16)
        pl.BlockSpec((1, c3), lambda w: (0, 0)),                       # b_qkv
        pl.BlockSpec((num_heads, n, n), lambda w: (0, 0, 0)),          # rel pos bias
        pl.BlockSpec((c, Cp), lambda w: (0, 0)),                       # W_proj (bf16)
        pl.BlockSpec((1, Cp), lambda w: (0, 0)),                       # b_proj
    ]
    args = [x_flat, p["g1"], p["b1"], p["wqkv"], p["bqkv"], p["rel_bias"],
            p["wproj"], p["bproj"]]
    if has_mask:
        mb = nw_img // wb          # mask blocks (mask is NOT tiled over batch)
        in_specs.append(pl.BlockSpec((wb, n, n), lambda w: (w % mb, 0, 0)))
        args.append(mask_img)

    return pl.pallas_call(
        kernel,
        out_shape=jax.ShapeDtypeStruct((M, Cp), x_flat.dtype),
        grid=(grid,),
        in_specs=in_specs,
        out_specs=pl.BlockSpec((wb * n, Cp), lambda w: (w, 0)),
        compiler_params=pltpu.CompilerParams(
            dimension_semantics=("parallel",),
            vmem_limit_bytes=_VMEM_LIMIT),
    )(*args)


def mlp_residual(x2d, p, *, c):
    M, Cp = x2d.shape
    Hp = p["w1"].shape[1]
    tm = _pick_tm(M)
    Mp = ((M + tm - 1) // tm) * tm
    xp = x2d if Mp == M else jnp.pad(x2d, ((0, Mp - M), (0, 0)))
    aliases = {0: 0} if Mp == M else {}
    out = pl.pallas_call(
        functools.partial(_mlp_kernel, c=c),
        out_shape=jax.ShapeDtypeStruct((Mp, Cp), x2d.dtype),
        grid=(Mp // tm,),
        in_specs=[
            pl.BlockSpec((tm, Cp), lambda i: (i, 0)),
            pl.BlockSpec((1, Cp), lambda i: (0, 0)),                   # norm2 gamma
            pl.BlockSpec((1, Cp), lambda i: (0, 0)),                   # norm2 beta
            pl.BlockSpec((Cp, Hp), lambda i: (0, 0)),                  # fc1 W (bf16)
            pl.BlockSpec((1, Hp), lambda i: (0, 0)),                   # fc1 b
            pl.BlockSpec((Hp, Cp), lambda i: (0, 0)),                  # fc2 W (bf16)
            pl.BlockSpec((1, Cp), lambda i: (0, 0)),                   # fc2 b
        ],
        out_specs=pl.BlockSpec((tm, Cp), lambda i: (i, 0)),
        input_output_aliases=aliases,
        compiler_params=pltpu.CompilerParams(
            dimension_semantics=("parallel",),
            vmem_limit_bytes=_VMEM_LIMIT),
    )(xp, p["g2"], p["b2"], p["w1"], p["bb1"], p["w2"], p["bb2"])
    return out if Mp == M else out[:M]


# --------------------------------------------------------------------------
# Plain-JAX / numpy glue (window partition, masks, rel-pos bias, params)
# --------------------------------------------------------------------------

def window_partition(x, win):
    B, H, W, C = x.shape
    x = x.reshape(B, H // win, win, W // win, win, C)
    x = jnp.transpose(x, (0, 1, 3, 2, 4, 5))
    return x.reshape(-1, win, win, C)


def window_reverse(windows, win, H, W):
    B = windows.shape[0] // ((H // win) * (W // win))
    x = windows.reshape(B, H // win, W // win, win, win, -1)
    x = jnp.transpose(x, (0, 1, 3, 2, 4, 5))
    return x.reshape(B, H, W, -1)


def _shift_attn_mask(H, W, win, shift):
    img = np.zeros((H, W), np.float32)
    cnt = 0
    for hs in (slice(0, -win), slice(-win, -shift), slice(-shift, None)):
        for ws in (slice(0, -win), slice(-win, -shift), slice(-shift, None)):
            img[hs, ws] = cnt
            cnt += 1
    m = img.reshape(H // win, win, W // win, win).transpose(0, 2, 1, 3)
    m = m.reshape(-1, win * win)                               # (nW, N)
    diff = m[:, None, :] - m[:, :, None]                       # (nW, N, N)
    return jnp.asarray(np.where(diff != 0, -100.0, 0.0).astype(np.float32))


def _rel_pos_index(win):
    coords = np.stack(np.meshgrid(np.arange(win), np.arange(win), indexing="ij"))
    flat = coords.reshape(2, -1)                               # (2, N)
    rel = (flat[:, :, None] - flat[:, None, :]).transpose(1, 2, 0)
    rel[:, :, 0] += win - 1
    rel[:, :, 1] += win - 1
    rel[:, :, 0] *= 2 * win - 1
    return rel.sum(-1)                                         # (N, N)


def _gather_rel_bias(table, win, num_heads):
    idx = _rel_pos_index(win)
    N = win * win
    bias = table[jnp.asarray(idx.reshape(-1))]                 # (N*N, nh)
    return jnp.transpose(bias.reshape(N, N, num_heads), (2, 0, 1))


def init_block_params(key, dim, num_heads, win, mlp_hidden):
    """Raw, PyTorch-layout parameters (f32)."""
    ks = jax.random.split(key, 7)
    std = 0.02
    return dict(
        g1=jnp.ones((1, dim), jnp.float32),
        b1=jnp.zeros((1, dim), jnp.float32),
        wqkv=(jax.random.normal(ks[0], (dim, 3 * dim)) * std).astype(jnp.float32),
        bqkv=(jax.random.normal(ks[1], (1, 3 * dim)) * std).astype(jnp.float32),
        rel_table=(jax.random.normal(ks[2], ((2 * win - 1) ** 2, num_heads)) * std
                   ).astype(jnp.float32),
        wproj=(jax.random.normal(ks[3], (dim, dim)) * std).astype(jnp.float32),
        bproj=(jax.random.normal(ks[4], (1, dim)) * std).astype(jnp.float32),
        g2=jnp.ones((1, dim), jnp.float32),
        b2=jnp.zeros((1, dim), jnp.float32),
        w1=(jax.random.normal(ks[5], (dim, mlp_hidden)) * std).astype(jnp.float32),
        bb1=jnp.zeros((1, mlp_hidden), jnp.float32),
        w2=(jax.random.normal(ks[6], (mlp_hidden, dim)) * std).astype(jnp.float32),
        bb2=jnp.zeros((1, dim), jnp.float32),
    )


def prepare_block_params(raw, *, dim, num_heads, win, mlp_hidden):
    """One-time (outside jit) prep: fold q-scale, zero-pad to lane-dense widths,
    cast matmul weights to bf16, pre-gather the relative-position bias."""
    C, Hd = dim, mlp_hidden
    Cp = _round_up(C, 128)
    Hp = _round_up(Hd, 128)
    dh = C // num_heads
    scale = float(dh ** -0.5)

    # Fold 1/sqrt(dh) into Wq / bq (first C columns of the fused qkv weight).
    col_scale = jnp.concatenate(
        [jnp.full((C,), scale, jnp.float32), jnp.ones((2 * C,), jnp.float32)])
    wqkv = raw["wqkv"] * col_scale[None, :]
    bqkv = raw["bqkv"] * col_scale[None, :]

    pc = Cp - C
    ph = Hp - Hd
    return dict(
        g1=jnp.pad(raw["g1"], ((0, 0), (0, pc))),
        b1=jnp.pad(raw["b1"], ((0, 0), (0, pc))),
        wqkv=jnp.pad(wqkv, ((0, pc), (0, 0))).astype(jnp.bfloat16),     # (Cp, 3C)
        bqkv=bqkv,                                                      # (1, 3C)
        rel_bias=_gather_rel_bias(raw["rel_table"], win, num_heads),    # (nh, N, N)
        wproj=jnp.pad(raw["wproj"], ((0, 0), (0, pc))).astype(jnp.bfloat16),  # (C, Cp)
        bproj=jnp.pad(raw["bproj"], ((0, 0), (0, pc))),
        g2=jnp.pad(raw["g2"], ((0, 0), (0, pc))),
        b2=jnp.pad(raw["b2"], ((0, 0), (0, pc))),
        w1=jnp.pad(raw["w1"], ((0, pc), (0, ph))).astype(jnp.bfloat16),  # (Cp, Hp)
        bb1=jnp.pad(raw["bb1"], ((0, 0), (0, ph))),
        w2=jnp.pad(raw["w2"], ((0, ph), (0, pc))).astype(jnp.bfloat16),  # (Hp, Cp)
        bb2=jnp.pad(raw["bb2"], ((0, 0), (0, pc))),
    )


# --------------------------------------------------------------------------
# Block / layer forward
# --------------------------------------------------------------------------

def lewin_block(x, p, *, H, W, win, shift, num_heads, C):
    """x: (B, L, Cp) lane-dense padded activations (pad lanes are zero)."""
    B, L, Cp = x.shape
    N = win * win

    xim = x.reshape(B, H, W, Cp)
    if shift > 0:
        xim = jnp.roll(xim, shift=(-shift, -shift), axis=(1, 2))
    x_win = window_partition(xim, win)                         # (NW, win, win, Cp)
    NW = x_win.shape[0]
    nW_img = (H // win) * (W // win)

    wb = _pick_wb(nW_img, NW, N)

    # shift==0: mask-free kernel variant (no zero-mask HBM traffic).
    mask_img = _shift_attn_mask(H, W, win, shift) if shift > 0 else None

    # Attention residual is fused inside the kernel (x_win slab IS the shortcut
    # in windowed coordinates; window_reverse/roll are permutations).
    attn_flat = window_attention(x_win.reshape(NW * N, Cp), mask_img, p,
                                 num_heads, c=C, n=N, nw_img=nW_img, wb=wb)
    attn_im = window_reverse(attn_flat.reshape(NW, win, win, Cp), win, H, W)
    if shift > 0:
        attn_im = jnp.roll(attn_im, shift=(shift, shift), axis=(1, 2))

    x = attn_im.reshape(B, L, Cp)                              # = shortcut + attn

    y2d = mlp_residual(x.reshape(B * L, Cp), p, c=C)
    return y2d.reshape(B, L, Cp)


def basic_uformer_layer(x, params, *, H, W, win_size, num_heads):
    # mask=None, region=None path (no F.interpolate input-mask branch).
    B, L, C = x.shape
    Cp = params[0]["g1"].shape[1]
    if Cp != C:
        x = jnp.pad(x, ((0, 0), (0, 0), (0, Cp - C)))          # pad once per layer
    win = min(H, W) if min(H, W) <= win_size else win_size
    for i, p in enumerate(params):
        shift = 0 if i % 2 == 0 else win_size // 2
        if min(H, W) <= win_size:
            shift = 0
        x = lewin_block(x, p, H=H, W=W, win=win, shift=shift,
                        num_heads=num_heads, C=C)
    return x[..., :C] if Cp != C else x


# --------------------------------------------------------------------------
# Demo
# --------------------------------------------------------------------------

if __name__ == "__main__":
    B = 2
    H = W = 16
    dim = 16
    num_heads = 2
    win_size = 8
    depth = 2          # block 0: shift=0, block 1: shift=win_size//2=4
    mlp_ratio = 4.0

    eff_win = min(H, W) if min(H, W) <= win_size else win_size
    mlp_hidden = int(dim * mlp_ratio)

    key = jax.random.PRNGKey(0)
    kx, kp = jax.random.split(key)
    x = jax.random.normal(kx, (B, H * W, dim), dtype=jnp.float32)

    raw_params = [
        init_block_params(jax.random.fold_in(kp, i), dim, num_heads,
                          eff_win, mlp_hidden)
        for i in range(depth)
    ]
    # One-time weight prep (scale fold, padding, bf16 cast, rel-bias gather).
    params = [
        prepare_block_params(rp, dim=dim, num_heads=num_heads, win=eff_win,
                             mlp_hidden=mlp_hidden)
        for rp in raw_params
    ]

    fwd = jax.jit(functools.partial(basic_uformer_layer, H=H, W=W,
                                    win_size=win_size, num_heads=num_heads))
    out = fwd(x, params)
    out = jax.block_until_ready(out)

    assert out.shape == (B, H * W, dim)
    assert out.dtype == jnp.float32
    assert bool(jnp.all(jnp.isfinite(out)))
    print("KERNEL_OK")
</pallas_src>

<mosaic_0001>
module attributes {stable_mosaic.version = 11 : i64} {
  func.func @_window_attn_kernel(%arg0: i32, %arg1: memref<256x128xf32, #tpu.memory_space<vmem>>, %arg2: memref<1x128xf32, #tpu.memory_space<vmem>>, %arg3: memref<1x128xf32, #tpu.memory_space<vmem>>, %arg4: memref<128x48xbf16, #tpu.memory_space<vmem>>, %arg5: memref<1x48xf32, #tpu.memory_space<vmem>>, %arg6: memref<2x64x64xf32, #tpu.memory_space<vmem>>, %arg7: memref<16x128xbf16, #tpu.memory_space<vmem>>, %arg8: memref<1x128xf32, #tpu.memory_space<vmem>>, %arg9: memref<256x128xf32, #tpu.memory_space<vmem>>) attributes {dimension_semantics = [#tpu.dimension_semantics<parallel>], iteration_bounds = array<i64: 2>, scalar_prefetch = 0 : i64, scratch_operands = 0 : i64, tpu.core_type = #tpu.core_type<tc>, window_params = [{transform_indices = @transform_0, window_bounds = array<i64: 256, 128>}, {pipeline_mode = #tpu.pipeline_mode<synchronous>, transform_indices = @transform_1, window_bounds = array<i64: 1, 128>}, {pipeline_mode = #tpu.pipeline_mode<synchronous>, transform_indices = @transform_2, window_bounds = array<i64: 1, 128>}, {pipeline_mode = #tpu.pipeline_mode<synchronous>, transform_indices = @transform_3, window_bounds = array<i64: 128, 48>}, {pipeline_mode = #tpu.pipeline_mode<synchronous>, transform_indices = @transform_4, window_bounds = array<i64: 1, 48>}, {pipeline_mode = #tpu.pipeline_mode<synchronous>, transform_indices = @transform_5, window_bounds = array<i64: 2, 64, 64>}, {pipeline_mode = #tpu.pipeline_mode<synchronous>, transform_indices = @transform_6, window_bounds = array<i64: 16, 128>}, {pipeline_mode = #tpu.pipeline_mode<synchronous>, transform_indices = @transform_7, window_bounds = array<i64: 1, 128>}, {transform_indices = @transform_8, window_bounds = array<i64: 256, 128>}]} {
    %c0 = arith.constant 0 : index
    %c0_0 = arith.constant 0 : index
    %0 = vector.load %arg1[%c0, %c0_0] : memref<256x128xf32, #tpu.memory_space<vmem>>, vector<256x128xf32>
    %c0_1 = arith.constant 0 : index
    %c0_2 = arith.constant 0 : index
    %1 = vector.load %arg2[%c0_1, %c0_2] : memref<1x128xf32, #tpu.memory_space<vmem>>, vector<1x128xf32>
    %c0_3 = arith.constant 0 : index
    %c0_4 = arith.constant 0 : index
    %2 = vector.load %arg3[%c0_3, %c0_4] : memref<1x128xf32, #tpu.memory_space<vmem>>, vector<1x128xf32>
    %cst = arith.constant dense<0.000000e+00> : vector<256xf32>
    %3 = vector.multi_reduction <add>, %0, %cst [1] : vector<256x128xf32> to vector<256xf32>
    %4 = vector.shape_cast %3 : vector<256xf32> to vector<256x1xf32>
    %cst_5 = arith.constant 6.250000e-02 : f32
    %5 = vector.broadcast %cst_5 : f32 to vector<256x1xf32>
    %6 = arith.mulf %4, %5 : vector<256x1xf32>
    %7 = vector.broadcast %6 : vector<256x1xf32> to vector<256x128xf32>
    %8 = arith.subf %0, %7 : vector<256x128xf32>
    %9 = tpu.iota {dimensions = array<i32: 1>} : vector<1x128xi32>
    %c16_i32 = arith.constant 16 : i32
    %10 = vector.broadcast %c16_i32 : i32 to vector<1x128xi32>
    %11 = arith.cmpi slt, %9, %10 : vector<1x128xi32>
    %cst_6 = arith.constant 0.000000e+00 : f32
    %12 = vector.shape_cast %11 : vector<1x128xi1> to vector<1x128xi1>
    %13 = vector.broadcast %12 : vector<1x128xi1> to vector<256x128xi1>
    %14 = vector.broadcast %cst_6 : f32 to vector<256x128xf32>
    %15 = arith.select %13, %8, %14 : vector<256x128xi1>, vector<256x128xf32>
    %16 = arith.mulf %15, %15 : vector<256x128xf32>
    %cst_7 = arith.constant dense<0.000000e+00> : vector<256xf32>
    %17 = vector.multi_reduction <add>, %16, %cst_7 [1] : vector<256x128xf32> to vector<256xf32>
    %18 = vector.shape_cast %17 : vector<256xf32> to vector<256x1xf32>
    %cst_8 = arith.constant 6.250000e-02 : f32
    %19 = vector.broadcast %cst_8 : f32 to vector<256x1xf32>
    %20 = arith.mulf %18, %19 : vector<256x1xf32>
    %cst_9 = arith.constant 9.99999974E-6 : f32
    %21 = vector.broadcast %cst_9 : f32 to vector<256x1xf32>
    %22 = arith.addf %20, %21 : vector<256x1xf32>
    %23 = math.rsqrt %22 : vector<256x1xf32>
    %24 = vector.broadcast %23 : vector<256x1xf32> to vector<256x128xf32>
    %25 = arith.mulf %8, %24 : vector<256x128xf32>
    %26 = vector.broadcast %1 : vector<1x128xf32> to vector<256x128xf32>
    %27 = arith.mulf %25, %26 : vector<256x128xf32>
    %28 = vector.broadcast %2 : vector<1x128xf32> to vector<256x128xf32>
    %29 = arith.addf %27, %28 : vector<256x128xf32>
    %30 = arith.truncf %29 : vector<256x128xf32> to vector<256x128xbf16>
    %c0_10 = arith.constant 0 : index
    %c0_11 = arith.constant 0 : index
    %31 = vector.load %arg4[%c0_10, %c0_11] : memref<128x48xbf16, #tpu.memory_space<vmem>>, vector<128x48xbf16>
    %cst_12 = arith.constant dense<0.000000e+00> : vector<256x48xf32>
    %32 = tpu.matmul %30, %31, %cst_12 {dimension_numbers = #tpu.dot_dimension_numbers<[1], [0], [0], [1], [0, 0, 1, 1], [], []>} : vector<256x128xbf16>, vector<128x48xbf16>, vector<256x48xf32> -> vector<256x48xf32>
    %c0_13 = arith.constant 0 : index
    %c0_14 = arith.constant 0 : index
    %33 = vector.load %arg5[%c0_13, %c0_14] : memref<1x48xf32, #tpu.memory_space<vmem>>, vector<1x48xf32>
    %34 = vector.broadcast %33 : vector<1x48xf32> to vector<256x48xf32>
    %35 = arith.addf %32, %34 : vector<256x48xf32>
    %36 = vector.extract_strided_slice %35 {offsets = [0, 0], sizes = [256, 8], strides = [1, 1]} : vector<256x48xf32> to vector<256x8xf32>
    %37 = vector.shape_cast %36 : vector<256x8xf32> to vector<4x64x8xf32>
    %38 = arith.truncf %37 : vector<4x64x8xf32> to vector<4x64x8xbf16>
    %39 = vector.extract_strided_slice %35 {offsets = [0, 16], sizes = [256, 8], strides = [1, 1]} : vector<256x48xf32> to vector<256x8xf32>
    %40 = vector.shape_cast %39 : vector<256x8xf32> to vector<4x64x8xf32>
    %41 = arith.truncf %40 : vector<4x64x8xf32> to vector<4x64x8xbf16>
    %42 = vector.extract_strided_slice %35 {offsets = [0, 32], sizes = [256, 8], strides = [1, 1]} : vector<256x48xf32> to vector<256x8xf32>
    %43 = vector.shape_cast %42 : vector<256x8xf32> to vector<4x64x8xf32>
    %44 = arith.truncf %43 : vector<4x64x8xf32> to vector<4x64x8xbf16>
    "tpu.trace_start"() <{level = 10 : i32, message = "wqd,wkd->wqk"}> : () -> ()
    %cst_15 = arith.constant dense<0.000000e+00> : vector<4x64x64xf32>
    %45 = tpu.matmul %38, %41, %cst_15 {dimension_numbers = #tpu.dot_dimension_numbers<[2], [2], [1], [1], [0, 0, 0, 1, 1, 1], [0], [0]>} : vector<4x64x8xbf16>, vector<4x64x8xbf16>, vector<4x64x64xf32> -> vector<4x64x64xf32>
    "tpu.trace_stop"() : () -> ()
    %c0_16 = arith.constant 0 : index
    %c0_17 = arith.constant 0 : index
    %c0_18 = arith.constant 0 : index
    %46 = vector.load %arg6[%c0_16, %c0_17, %c0_18] : memref<2x64x64xf32, #tpu.memory_space<vmem>>, vector<1x64x64xf32>
    %47 = vector.shape_cast %46 : vector<1x64x64xf32> to vector<64x64xf32>
    %48 = vector.shape_cast %47 : vector<64x64xf32> to vector<1x64x64xf32>
    %49 = vector.broadcast %48 : vector<1x64x64xf32> to vector<4x64x64xf32>
    %50 = arith.addf %45, %49 : vector<4x64x64xf32>
    %cst_19 = arith.constant dense<0xFF800000> : vector<4x64xf32>
    %51 = vector.multi_reduction <maximumf>, %50, %cst_19 [2] : vector<4x64x64xf32> to vector<4x64xf32>
    %52 = vector.shape_cast %51 : vector<4x64xf32> to vector<4x64x1xf32>
    %53 = vector.broadcast %52 : vector<4x64x1xf32> to vector<4x64x64xf32>
    %54 = arith.subf %50, %53 : vector<4x64x64xf32>
    %55 = math.exp %54 : vector<4x64x64xf32>
    %cst_20 = arith.constant dense<0.000000e+00> : vector<4x64xf32>
    %56 = vector.multi_reduction <add>, %55, %cst_20 [2] : vector<4x64x64xf32> to vector<4x64xf32>
    %57 = vector.shape_cast %56 : vector<4x64xf32> to vector<4x64x1xf32>
    %58 = tpu.reciprocal %57 {approx = true} : vector<4x64x1xf32> -> vector<4x64x1xf32>
    %59 = vector.broadcast %58 : vector<4x64x1xf32> to vector<4x64x64xf32>
    %60 = arith.mulf %55, %59 : vector<4x64x64xf32>
    %61 = arith.truncf %60 : vector<4x64x64xf32> to vector<4x64x64xbf16>
    "tpu.trace_start"() <{level = 10 : i32, message = "wqk,wkd->wqd"}> : () -> ()
    %cst_21 = arith.constant dense<0.000000e+00> : vector<4x64x8xf32>
    %62 = tpu.matmul %61, %44, %cst_21 {dimension_numbers = #tpu.dot_dimension_numbers<[2], [1], [1], [2], [0, 0, 0, 1, 1, 2], [0], [0]>} : vector<4x64x64xbf16>, vector<4x64x8xbf16>, vector<4x64x8xf32> -> vector<4x64x8xf32>
    "tpu.trace_stop"() : () -> ()
    %63 = vector.shape_cast %62 : vector<4x64x8xf32> to vector<256x8xf32>
    %64 = vector.extract_strided_slice %35 {offsets = [0, 8], sizes = [256, 8], strides = [1, 1]} : vector<256x48xf32> to vector<256x8xf32>
    %65 = vector.shape_cast %64 : vector<256x8xf32> to vector<4x64x8xf32>
    %66 = arith.truncf %65 : vector<4x64x8xf32> to vector<4x64x8xbf16>
    %67 = vector.extract_strided_slice %35 {offsets = [0, 24], sizes = [256, 8], strides = [1, 1]} : vector<256x48xf32> to vector<256x8xf32>
    %68 = vector.shape_cast %67 : vector<256x8xf32> to vector<4x64x8xf32>
    %69 = arith.truncf %68 : vector<4x64x8xf32> to vector<4x64x8xbf16>
    %70 = vector.extract_strided_slice %35 {offsets = [0, 40], sizes = [256, 8], strides = [1, 1]} : vector<256x48xf32> to vector<256x8xf32>
    %71 = vector.shape_cast %70 : vector<256x8xf32> to vector<4x64x8xf32>
    %72 = arith.truncf %71 : vector<4x64x8xf32> to vector<4x64x8xbf16>
    "tpu.trace_start"() <{level = 10 : i32, message = "wqd,wkd->wqk"}> : () -> ()
    %cst_22 = arith.constant dense<0.000000e+00> : vector<4x64x64xf32>
    %73 = tpu.matmul %66, %69, %cst_22 {dimension_numbers = #tpu.dot_dimension_numbers<[2], [2], [1], [1], [0, 0, 0, 1, 1, 1], [0], [0]>} : vector<4x64x8xbf16>, vector<4x64x8xbf16>, vector<4x64x64xf32> -> vector<4x64x64xf32>
    "tpu.trace_stop"() : () -> ()
    %c1 = arith.constant 1 : index
    %c0_23 = arith.constant 0 : index
    %c0_24 = arith.constant 0 : index
    %74 = vector.load %arg6[%c1, %c0_23, %c0_24] : memref<2x64x64xf32, #tpu.memory_space<vmem>>, vector<1x64x64xf32>
    %75 = vector.shape_cast %74 : vector<1x64x64xf32> to vector<64x64xf32>
    %76 = vector.shape_cast %75 : vector<64x64xf32> to vector<1x64x64xf32>
    %77 = vector.broadcast %76 : vector<1x64x64xf32> to vector<4x64x64xf32>
    %78 = arith.addf %73, %77 : vector<4x64x64xf32>
    %cst_25 = arith.constant dense<0xFF800000> : vector<4x64xf32>
    %79 = vector.multi_reduction <maximumf>, %78, %cst_25 [2] : vector<4x64x64xf32> to vector<4x64xf32>
    %80 = vector.shape_cast %79 : vector<4x64xf32> to vector<4x64x1xf32>
    %81 = vector.broadcast %80 : vector<4x64x1xf32> to vector<4x64x64xf32>
    %82 = arith.subf %78, %81 : vector<4x64x64xf32>
    %83 = math.exp %82 : vector<4x64x64xf32>
    %cst_26 = arith.constant dense<0.000000e+00> : vector<4x64xf32>
    %84 = vector.multi_reduction <add>, %83, %cst_26 [2] : vector<4x64x64xf32> to vector<4x64xf32>
    %85 = vector.shape_cast %84 : vector<4x64xf32> to vector<4x64x1xf32>
    %86 = tpu.reciprocal %85 {approx = true} : vector<4x64x1xf32> -> vector<4x64x1xf32>
    %87 = vector.broadcast %86 : vector<4x64x1xf32> to vector<4x64x64xf32>
    %88 = arith.mulf %83, %87 : vector<4x64x64xf32>
    %89 = arith.truncf %88 : vector<4x64x64xf32> to vector<4x64x64xbf16>
    "tpu.trace_start"() <{level = 10 : i32, message = "wqk,wkd->wqd"}> : () -> ()
    %cst_27 = arith.constant dense<0.000000e+00> : vector<4x64x8xf32>
    %90 = tpu.matmul %89, %72, %cst_27 {dimension_numbers = #tpu.dot_dimension_numbers<[2], [1], [1], [2], [0, 0, 0, 1, 1, 2], [0], [0]>} : vector<4x64x64xbf16>, vector<4x64x8xbf16>, vector<4x64x8xf32> -> vector<4x64x8xf32>
    "tpu.trace_stop"() : () -> ()
    %91 = vector.shape_cast %90 : vector<4x64x8xf32> to vector<256x8xf32>
    %92 = tpu.concatenate %63, %91 in 1 : vector<256x8xf32>, vector<256x8xf32> -> vector<256x16xf32>
    %93 = arith.truncf %92 : vector<256x16xf32> to vector<256x16xbf16>
    %c0_28 = arith.constant 0 : index
    %c0_29 = arith.constant 0 : index
    %94 = vector.load %arg7[%c0_28, %c0_29] : memref<16x128xbf16, #tpu.memory_space<vmem>>, vector<16x128xbf16>
    %cst_30 = arith.constant dense<0.000000e+00> : vector<256x128xf32>
    %95 = tpu.matmul %93, %94, %cst_30 {dimension_numbers = #tpu.dot_dimension_numbers<[1], [0], [0], [1], [0, 0, 1, 1], [], []>} : vector<256x16xbf16>, vector<16x128xbf16>, vector<256x128xf32> -> vector<256x128xf32>
    %c0_31 = arith.constant 0 : index
    %c0_32 = arith.constant 0 : index
    %96 = vector.load %arg8[%c0_31, %c0_32] : memref<1x128xf32, #tpu.memory_space<vmem>>, vector<1x128xf32>
    %97 = vector.broadcast %96 : vector<1x128xf32> to vector<256x128xf32>
    %98 = arith.addf %95, %97 : vector<256x128xf32>
    %99 = arith.addf %0, %98 : vector<256x128xf32>
    %c0_33 = arith.constant 0 : index
    %c0_34 = arith.constant 0 : index
    %100 = vector.load %arg9[%c0_33, %c0_34] : memref<256x128xf32, #tpu.memory_space<vmem>>, vector<256x128xf32>
    tpu.vector_store %arg9[%c0_33, %c0_34], %99 {strides = array<i32>} : memref<256x128xf32, #tpu.memory_space<vmem>>, vector<256x128xf32>,
    return
  }
  func.func @transform_0(%arg0: i32) -> (i32, i32) {
    %c0_i32 = arith.constant 0 : i32
    %c0_i32_0 = arith.constant 0 : i32
    return %arg0, %c0_i32 : i32, i32
  }
  func.func @transform_1(%arg0: i32) -> (i32, i32) {
    %c0_i32 = arith.constant 0 : i32
    %c0_i32_0 = arith.constant 0 : i32
    %c0_i32_1 = arith.constant 0 : i32
    return %c0_i32, %c0_i32_0 : i32, i32
  }
  func.func @transform_2(%arg0: i32) -> (i32, i32) {
    %c0_i32 = arith.constant 0 : i32
    %c0_i32_0 = arith.constant 0 : i32
    %c0_i32_1 = arith.constant 0 : i32
    return %c0_i32, %c0_i32_0 : i32, i32
  }
  func.func @transform_3(%arg0: i32) -> (i32, i32) {
    %c0_i32 = arith.constant 0 : i32
    %c0_i32_0 = arith.constant 0 : i32
    %c0_i32_1 = arith.constant 0 : i32
    return %c0_i32, %c0_i32_0 : i32, i32
  }
  func.func @transform_4(%arg0: i32) -> (i32, i32) {
    %c0_i32 = arith.constant 0 : i32
    %c0_i32_0 = arith.constant 0 : i32
    %c0_i32_1 = arith.constant 0 : i32
    return %c0_i32, %c0_i32_0 : i32, i32
  }
  func.func @transform_5(%arg0: i32) -> (i32, i32, i32) {
    %c0_i32 = arith.constant 0 : i32
    %c0_i32_0 = arith.constant 0 : i32
    %c0_i32_1 = arith.constant 0 : i32
    %c0_i32_2 = arith.constant 0 : i32
    return %c0_i32, %c0_i32_0, %c0_i32_1 : i32, i32, i32
  }
  func.func @transform_6(%arg0: i32) -> (i32, i32) {
    %c0_i32 = arith.constant 0 : i32
    %c0_i32_0 = arith.constant 0 : i32
    %c0_i32_1 = arith.constant 0 : i32
    return %c0_i32, %c0_i32_0 : i32, i32
  }
  func.func @transform_7(%arg0: i32) -> (i32, i32) {
    %c0_i32 = arith.constant 0 : i32
    %c0_i32_0 = arith.constant 0 : i32
    %c0_i32_1 = arith.constant 0 : i32
    return %c0_i32, %c0_i32_0 : i32, i32
  }
  func.func @transform_8(%arg0: i32) -> (i32, i32) {
    %c0_i32 = arith.constant 0 : i32
    %c0_i32_0 = arith.constant 0 : i32
    return %arg0, %c0_i32 : i32, i32
  }
}

module attributes {stable_mosaic.version = 11 : i64} {
  func.func @_mlp_kernel(%arg0: i32, %arg1: memref<256x128xf32, #tpu.memory_space<vmem>>, %arg2: memref<1x128xf32, #tpu.memory_space<vmem>>, %arg3: memref<1x128xf32, #tpu.memory_space<vmem>>, %arg4: memref<128x128xbf16, #tpu.memory_space<vmem>>, %arg5: memref<1x128xf32, #tpu.memory_space<vmem>>, %arg6: memref<128x128xbf16, #tpu.memory_space<vmem>>, %arg7: memref<1x128xf32, #tpu.memory_space<vmem>>, %arg8: memref<256x128xf32, #tpu.memory_space<vmem>>) attributes {dimension_semantics = [#tpu.dimension_semantics<parallel>], iteration_bounds = array<i64: 2>, scalar_prefetch = 0 : i64, scratch_operands = 0 : i64, tpu.core_type = #tpu.core_type<tc>, window_params = [{transform_indices = @transform_0, window_bounds = array<i64: 256, 128>}, {pipeline_mode = #tpu.pipeline_mode<synchronous>, transform_indices = @transform_1, window_bounds = array<i64: 1, 128>}, {pipeline_mode = #tpu.pipeline_mode<synchronous>, transform_indices = @transform_2, window_bounds = array<i64: 1, 128>}, {pipeline_mode = #tpu.pipeline_mode<synchronous>, transform_indices = @transform_3, window_bounds = array<i64: 128, 128>}, {pipeline_mode = #tpu.pipeline_mode<synchronous>, transform_indices = @transform_4, window_bounds = array<i64: 1, 128>}, {pipeline_mode = #tpu.pipeline_mode<synchronous>, transform_indices = @transform_5, window_bounds = array<i64: 128, 128>}, {pipeline_mode = #tpu.pipeline_mode<synchronous>, transform_indices = @transform_6, window_bounds = array<i64: 1, 128>}, {transform_indices = @transform_7, window_bounds = array<i64: 256, 128>}]} {
    %c0 = arith.constant 0 : index
    %c0_0 = arith.constant 0 : index
    %0 = vector.load %arg1[%c0, %c0_0] : memref<256x128xf32, #tpu.memory_space<vmem>>, vector<256x128xf32>
    %c0_1 = arith.constant 0 : index
    %c0_2 = arith.constant 0 : index
    %1 = vector.load %arg2[%c0_1, %c0_2] : memref<1x128xf32, #tpu.memory_space<vmem>>, vector<1x128xf32>
    %c0_3 = arith.constant 0 : index
    %c0_4 = arith.constant 0 : index
    %2 = vector.load %arg3[%c0_3, %c0_4] : memref<1x128xf32, #tpu.memory_space<vmem>>, vector<1x128xf32>
    %cst = arith.constant dense<0.000000e+00> : vector<256xf32>
    %3 = vector.multi_reduction <add>, %0, %cst [1] : vector<256x128xf32> to vector<256xf32>
    %4 = vector.shape_cast %3 : vector<256xf32> to vector<256x1xf32>
    %cst_5 = arith.constant 6.250000e-02 : f32
    %5 = vector.broadcast %cst_5 : f32 to vector<256x1xf32>
    %6 = arith.mulf %4, %5 : vector<256x1xf32>
    %7 = vector.broadcast %6 : vector<256x1xf32> to vector<256x128xf32>
    %8 = arith.subf %0, %7 : vector<256x128xf32>
    %9 = tpu.iota {dimensions = array<i32: 1>} : vector<1x128xi32>
    %c16_i32 = arith.constant 16 : i32
    %10 = vector.broadcast %c16_i32 : i32 to vector<1x128xi32>
    %11 = arith.cmpi slt, %9, %10 : vector<1x128xi32>
    %cst_6 = arith.constant 0.000000e+00 : f32
    %12 = vector.shape_cast %11 : vector<1x128xi1> to vector<1x128xi1>
    %13 = vector.broadcast %12 : vector<1x128xi1> to vector<256x128xi1>
    %14 = vector.broadcast %cst_6 : f32 to vector<256x128xf32>
    %15 = arith.select %13, %8, %14 : vector<256x128xi1>, vector<256x128xf32>
    %16 = arith.mulf %15, %15 : vector<256x128xf32>
    %cst_7 = arith.constant dense<0.000000e+00> : vector<256xf32>
    %17 = vector.multi_reduction <add>, %16, %cst_7 [1] : vector<256x128xf32> to vector<256xf32>
    %18 = vector.shape_cast %17 : vector<256xf32> to vector<256x1xf32>
    %cst_8 = arith.constant 6.250000e-02 : f32
    %19 = vector.broadcast %cst_8 : f32 to vector<256x1xf32>
    %20 = arith.mulf %18, %19 : vector<256x1xf32>
    %cst_9 = arith.constant 9.99999974E-6 : f32
    %21 = vector.broadcast %cst_9 : f32 to vector<256x1xf32>
    %22 = arith.addf %20, %21 : vector<256x1xf32>
    %23 = math.rsqrt %22 : vector<256x1xf32>
    %24 = vector.broadcast %23 : vector<256x1xf32> to vector<256x128xf32>
    %25 = arith.mulf %8, %24 : vector<256x128xf32>
    %26 = vector.broadcast %1 : vector<1x128xf32> to vector<256x128xf32>
    %27 = arith.mulf %25, %26 : vector<256x128xf32>
    %28 = vector.broadcast %2 : vector<1x128xf32> to vector<256x128xf32>
    %29 = arith.addf %27, %28 : vector<256x128xf32>
    %30 = arith.truncf %29 : vector<256x128xf32> to vector<256x128xbf16>
    %c0_10 = arith.constant 0 : index
    %c0_11 = arith.constant 0 : index
    %31 = vector.load %arg4[%c0_10, %c0_11] : memref<128x128xbf16, #tpu.memory_space<vmem>>, vector<128x128xbf16>
    %cst_12 = arith.constant dense<0.000000e+00> : vector<256x128xf32>
    %32 = tpu.matmul %30, %31, %cst_12 {dimension_numbers = #tpu.dot_dimension_numbers<[1], [0], [0], [1], [0, 0, 1, 1], [], []>} : vector<256x128xbf16>, vector<128x128xbf16>, vector<256x128xf32> -> vector<256x128xf32>
    %c0_13 = arith.constant 0 : index
    %c0_14 = arith.constant 0 : index
    %33 = vector.load %arg5[%c0_13, %c0_14] : memref<1x128xf32, #tpu.memory_space<vmem>>, vector<1x128xf32>
    %34 = vector.broadcast %33 : vector<1x128xf32> to vector<256x128xf32>
    %35 = arith.addf %32, %34 : vector<256x128xf32>
    %cst_15 = arith.constant 5.000000e-01 : f32
    %36 = vector.broadcast %cst_15 : f32 to vector<256x128xf32>
    %37 = arith.mulf %36, %35 : vector<256x128xf32>
    %cst_16 = arith.constant 0.707106769 : f32
    %38 = vector.broadcast %cst_16 : f32 to vector<256x128xf32>
    %39 = arith.mulf %35, %38 : vector<256x128xf32>
    %40 = math.absf %39 : vector<256x128xf32>
    %cst_17 = arith.constant 0.327591091 : f32
    %41 = vector.broadcast %cst_17 : f32 to vector<256x128xf32>
    %42 = arith.mulf %41, %40 : vector<256x128xf32>
    %cst_18 = arith.constant 1.000000e+00 : f32
    %43 = vector.broadcast %cst_18 : f32 to vector<256x128xf32>
    %44 = arith.addf %43, %42 : vector<256x128xf32>
    %cst_19 = arith.constant 1.000000e+00 : f32
    %45 = vector.broadcast %cst_19 : f32 to vector<256x128xf32>
    %46 = arith.divf %45, %44 : vector<256x128xf32>
    %cst_20 = arith.constant 1.06140542 : f32
    %47 = vector.broadcast %cst_20 : f32 to vector<256x128xf32>
    %48 = arith.mulf %47, %46 : vector<256x128xf32>
    %cst_21 = arith.constant -1.45315206 : f32
    %49 = vector.broadcast %cst_21 : f32 to vector<256x128xf32>
    %50 = arith.addf %48, %49 : vector<256x128xf32>
    %51 = arith.mulf %50, %46 : vector<256x128xf32>
    %cst_22 = arith.constant 1.42141378 : f32
    %52 = vector.broadcast %cst_22 : f32 to vector<256x128xf32>
    %53 = arith.addf %51, %52 : vector<256x128xf32>
    %54 = arith.mulf %53, %46 : vector<256x128xf32>
    %cst_23 = arith.constant -0.284496725 : f32
    %55 = vector.broadcast %cst_23 : f32 to vector<256x128xf32>
    %56 = arith.addf %54, %55 : vector<256x128xf32>
    %57 = arith.mulf %56, %46 : vector<256x128xf32>
    %cst_24 = arith.constant 0.254829586 : f32
    %58 = vector.broadcast %cst_24 : f32 to vector<256x128xf32>
    %59 = arith.addf %57, %58 : vector<256x128xf32>
    %60 = arith.mulf %59, %46 : vector<256x128xf32>
    %61 = arith.mulf %40, %40 : vector<256x128xf32>
    %cst_25 = arith.constant 0.000000e+00 : f32
    %62 = vector.broadcast %cst_25 : f32 to vector<256x128xf32>
    %63 = arith.subf %62, %61 : vector<256x128xf32>
    %64 = math.exp %63 : vector<256x128xf32>
    %65 = arith.mulf %60, %64 : vector<256x128xf32>
    %cst_26 = arith.constant 1.000000e+00 : f32
    %66 = vector.broadcast %cst_26 : f32 to vector<256x128xf32>
    %67 = arith.subf %66, %65 : vector<256x128xf32>
    %cst_27 = arith.constant 0.000000e+00 : f32
    %68 = vector.broadcast %cst_27 : f32 to vector<256x128xf32>
    %69 = arith.cmpf olt, %39, %68 : vector<256x128xf32>
    %cst_28 = arith.constant 0.000000e+00 : f32
    %70 = vector.broadcast %cst_28 : f32 to vector<256x128xf32>
    %71 = arith.subf %70, %67 : vector<256x128xf32>
    %72 = arith.select %69, %71, %67 : vector<256x128xi1>, vector<256x128xf32>
    %cst_29 = arith.constant 1.000000e+00 : f32
    %73 = vector.broadcast %cst_29 : f32 to vector<256x128xf32>
    %74 = arith.addf %73, %72 : vector<256x128xf32>
    %75 = arith.mulf %37, %74 : vector<256x128xf32>
    %76 = arith.truncf %75 : vector<256x128xf32> to vector<256x128xbf16>
    %c0_30 = arith.constant 0 : index
    %c0_31 = arith.constant 0 : index
    %77 = vector.load %arg6[%c0_30, %c0_31] : memref<128x128xbf16, #tpu.memory_space<vmem>>, vector<128x128xbf16>
    %cst_32 = arith.constant dense<0.000000e+00> : vector<256x128xf32>
    %78 = tpu.matmul %76, %77, %cst_32 {dimension_numbers = #tpu.dot_dimension_numbers<[1], [0], [0], [1], [0, 0, 1, 1], [], []>} : vector<256x128xbf16>, vector<128x128xbf16>, vector<256x128xf32> -> vector<256x128xf32>
    %c0_33 = arith.constant 0 : index
    %c0_34 = arith.constant 0 : index
    %79 = vector.load %arg7[%c0_33, %c0_34] : memref<1x128xf32, #tpu.memory_space<vmem>>, vector<1x128xf32>
    %80 = vector.broadcast %79 : vector<1x128xf32> to vector<256x128xf32>
    %81 = arith.addf %78, %80 : vector<256x128xf32>
    %82 = arith.addf %0, %81 : vector<256x128xf32>
    %c0_35 = arith.constant 0 : index
    %c0_36 = arith.constant 0 : index
    %83 = vector.load %arg8[%c0_35, %c0_36] : memref<256x128xf32, #tpu.memory_space<vmem>>, vector<256x128xf32>
    tpu.vector_store %arg8[%c0_35, %c0_36], %82 {strides = array<i32>} : memref<256x128xf32, #tpu.memory_space<vmem>>, vector<256x128xf32>,
    return
  }
  func.func @transform_0(%arg0: i32) -> (i32, i32) {
    %c0_i32 = arith.constant 0 : i32
    %c0_i32_0 = arith.constant 0 : i32
    return %arg0, %c0_i32 : i32, i32
  }
  func.func @transform_1(%arg0: i32) -> (i32, i32) {
    %c0_i32 = arith.constant 0 : i32
    %c0_i32_0 = arith.constant 0 : i32
    %c0_i32_1 = arith.constant 0 : i32
    return %c0_i32, %c0_i32_0 : i32, i32
  }
  func.func @transform_2(%arg0: i32) -> (i32, i32) {
    %c0_i32 = arith.constant 0 : i32
    %c0_i32_0 = arith.constant 0 : i32
    %c0_i32_1 = arith.constant 0 : i32
    return %c0_i32, %c0_i32_0 : i32, i32
  }
  func.func @transform_3(%arg0: i32) -> (i32, i32) {
    %c0_i32 = arith.constant 0 : i32
    %c0_i32_0 = arith.constant 0 : i32
    %c0_i32_1 = arith.constant 0 : i32
    return %c0_i32, %c0_i32_0 : i32, i32
  }
  func.func @transform_4(%arg0: i32) -> (i32, i32) {
    %c0_i32 = arith.constant 0 : i32
    %c0_i32_0 = arith.constant 0 : i32
    %c0_i32_1 = arith.constant 0 : i32
    return %c0_i32, %c0_i32_0 : i32, i32
  }
  func.func @transform_5(%arg0: i32) -> (i32, i32) {
    %c0_i32 = arith.constant 0 : i32
    %c0_i32_0 = arith.constant 0 : i32
    %c0_i32_1 = arith.constant 0 : i32
    return %c0_i32, %c0_i32_0 : i32, i32
  }
  func.func @transform_6(%arg0: i32) -> (i32, i32) {
    %c0_i32 = arith.constant 0 : i32
    %c0_i32_0 = arith.constant 0 : i32
    %c0_i32_1 = arith.constant 0 : i32
    return %c0_i32, %c0_i32_0 : i32, i32
  }
  func.func @transform_7(%arg0: i32) -> (i32, i32) {
    %c0_i32 = arith.constant 0 : i32
    %c0_i32_0 = arith.constant 0 : i32
    return %arg0, %c0_i32 : i32, i32
  }
}

module attributes {stable_mosaic.version = 11 : i64} {
  func.func @_window_attn_kernel(%arg0: i32, %arg1: memref<256x128xf32, #tpu.memory_space<vmem>>, %arg2: memref<1x128xf32, #tpu.memory_space<vmem>>, %arg3: memref<1x128xf32, #tpu.memory_space<vmem>>, %arg4: memref<128x48xbf16, #tpu.memory_space<vmem>>, %arg5: memref<1x48xf32, #tpu.memory_space<vmem>>, %arg6: memref<2x64x64xf32, #tpu.memory_space<vmem>>, %arg7: memref<16x128xbf16, #tpu.memory_space<vmem>>, %arg8: memref<1x128xf32, #tpu.memory_space<vmem>>, %arg9: memref<4x64x64xf32, #tpu.memory_space<vmem>>, %arg10: memref<256x128xf32, #tpu.memory_space<vmem>>) attributes {dimension_semantics = [#tpu.dimension_semantics<parallel>], iteration_bounds = array<i64: 2>, scalar_prefetch = 0 : i64, scratch_operands = 0 : i64, tpu.core_type = #tpu.core_type<tc>, window_params = [{transform_indices = @transform_0, window_bounds = array<i64: 256, 128>}, {pipeline_mode = #tpu.pipeline_mode<synchronous>, transform_indices = @transform_1, window_bounds = array<i64: 1, 128>}, {pipeline_mode = #tpu.pipeline_mode<synchronous>, transform_indices = @transform_2, window_bounds = array<i64: 1, 128>}, {pipeline_mode = #tpu.pipeline_mode<synchronous>, transform_indices = @transform_3, window_bounds = array<i64: 128, 48>}, {pipeline_mode = #tpu.pipeline_mode<synchronous>, transform_indices = @transform_4, window_bounds = array<i64: 1, 48>}, {pipeline_mode = #tpu.pipeline_mode<synchronous>, transform_indices = @transform_5, window_bounds = array<i64: 2, 64, 64>}, {pipeline_mode = #tpu.pipeline_mode<synchronous>, transform_indices = @transform_6, window_bounds = array<i64: 16, 128>}, {pipeline_mode = #tpu.pipeline_mode<synchronous>, transform_indices = @transform_7, window_bounds = array<i64: 1, 128>}, {transform_indices = @transform_8, window_bounds = array<i64: 4, 64, 64>}, {transform_indices = @transform_9, window_bounds = array<i64: 256, 128>}]} {
    %c0 = arith.constant 0 : index
    %c0_0 = arith.constant 0 : index
    %0 = vector.load %arg1[%c0, %c0_0] : memref<256x128xf32, #tpu.memory_space<vmem>>, vector<256x128xf32>
    %c0_1 = arith.constant 0 : index
    %c0_2 = arith.constant 0 : index
    %1 = vector.load %arg2[%c0_1, %c0_2] : memref<1x128xf32, #tpu.memory_space<vmem>>, vector<1x128xf32>
    %c0_3 = arith.constant 0 : index
    %c0_4 = arith.constant 0 : index
    %2 = vector.load %arg3[%c0_3, %c0_4] : memref<1x128xf32, #tpu.memory_space<vmem>>, vector<1x128xf32>
    %cst = arith.constant dense<0.000000e+00> : vector<256xf32>
    %3 = vector.multi_reduction <add>, %0, %cst [1] : vector<256x128xf32> to vector<256xf32>
    %4 = vector.shape_cast %3 : vector<256xf32> to vector<256x1xf32>
    %cst_5 = arith.constant 6.250000e-02 : f32
    %5 = vector.broadcast %cst_5 : f32 to vector<256x1xf32>
    %6 = arith.mulf %4, %5 : vector<256x1xf32>
    %7 = vector.broadcast %6 : vector<256x1xf32> to vector<256x128xf32>
    %8 = arith.subf %0, %7 : vector<256x128xf32>
    %9 = tpu.iota {dimensions = array<i32: 1>} : vector<1x128xi32>
    %c16_i32 = arith.constant 16 : i32
    %10 = vector.broadcast %c16_i32 : i32 to vector<1x128xi32>
    %11 = arith.cmpi slt, %9, %10 : vector<1x128xi32>
    %cst_6 = arith.constant 0.000000e+00 : f32
    %12 = vector.shape_cast %11 : vector<1x128xi1> to vector<1x128xi1>
    %13 = vector.broadcast %12 : vector<1x128xi1> to vector<256x128xi1>
    %14 = vector.broadcast %cst_6 : f32 to vector<256x128xf32>
    %15 = arith.select %13, %8, %14 : vector<256x128xi1>, vector<256x128xf32>
    %16 = arith.mulf %15, %15 : vector<256x128xf32>
    %cst_7 = arith.constant dense<0.000000e+00> : vector<256xf32>
    %17 = vector.multi_reduction <add>, %16, %cst_7 [1] : vector<256x128xf32> to vector<256xf32>
    %18 = vector.shape_cast %17 : vector<256xf32> to vector<256x1xf32>
    %cst_8 = arith.constant 6.250000e-02 : f32
    %19 = vector.broadcast %cst_8 : f32 to vector<256x1xf32>
    %20 = arith.mulf %18, %19 : vector<256x1xf32>
    %cst_9 = arith.constant 9.99999974E-6 : f32
    %21 = vector.broadcast %cst_9 : f32 to vector<256x1xf32>
    %22 = arith.addf %20, %21 : vector<256x1xf32>
    %23 = math.rsqrt %22 : vector<256x1xf32>
    %24 = vector.broadcast %23 : vector<256x1xf32> to vector<256x128xf32>
    %25 = arith.mulf %8, %24 : vector<256x128xf32>
    %26 = vector.broadcast %1 : vector<1x128xf32> to vector<256x128xf32>
    %27 = arith.mulf %25, %26 : vector<256x128xf32>
    %28 = vector.broadcast %2 : vector<1x128xf32> to vector<256x128xf32>
    %29 = arith.addf %27, %28 : vector<256x128xf32>
    %30 = arith.truncf %29 : vector<256x128xf32> to vector<256x128xbf16>
    %c0_10 = arith.constant 0 : index
    %c0_11 = arith.constant 0 : index
    %31 = vector.load %arg4[%c0_10, %c0_11] : memref<128x48xbf16, #tpu.memory_space<vmem>>, vector<128x48xbf16>
    %cst_12 = arith.constant dense<0.000000e+00> : vector<256x48xf32>
    %32 = tpu.matmul %30, %31, %cst_12 {dimension_numbers = #tpu.dot_dimension_numbers<[1], [0], [0], [1], [0, 0, 1, 1], [], []>} : vector<256x128xbf16>, vector<128x48xbf16>, vector<256x48xf32> -> vector<256x48xf32>
    %c0_13 = arith.constant 0 : index
    %c0_14 = arith.constant 0 : index
    %33 = vector.load %arg5[%c0_13, %c0_14] : memref<1x48xf32, #tpu.memory_space<vmem>>, vector<1x48xf32>
    %34 = vector.broadcast %33 : vector<1x48xf32> to vector<256x48xf32>
    %35 = arith.addf %32, %34 : vector<256x48xf32>
    %c0_15 = arith.constant 0 : index
    %c0_16 = arith.constant 0 : index
    %c0_17 = arith.constant 0 : index
    %36 = vector.load %arg9[%c0_15, %c0_16, %c0_17] : memref<4x64x64xf32, #tpu.memory_space<vmem>>, vector<4x64x64xf32>
    %37 = vector.extract_strided_slice %35 {offsets = [0, 0], sizes = [256, 8], strides = [1, 1]} : vector<256x48xf32> to vector<256x8xf32>
    %38 = vector.shape_cast %37 : vector<256x8xf32> to vector<4x64x8xf32>
    %39 = arith.truncf %38 : vector<4x64x8xf32> to vector<4x64x8xbf16>
    %40 = vector.extract_strided_slice %35 {offsets = [0, 16], sizes = [256, 8], strides = [1, 1]} : vector<256x48xf32> to vector<256x8xf32>
    %41 = vector.shape_cast %40 : vector<256x8xf32> to vector<4x64x8xf32>
    %42 = arith.truncf %41 : vector<4x64x8xf32> to vector<4x64x8xbf16>
    %43 = vector.extract_strided_slice %35 {offsets = [0, 32], sizes = [256, 8], strides = [1, 1]} : vector<256x48xf32> to vector<256x8xf32>
    %44 = vector.shape_cast %43 : vector<256x8xf32> to vector<4x64x8xf32>
    %45 = arith.truncf %44 : vector<4x64x8xf32> to vector<4x64x8xbf16>
    "tpu.trace_start"() <{level = 10 : i32, message = "wqd,wkd->wqk"}> : () -> ()
    %cst_18 = arith.constant dense<0.000000e+00> : vector<4x64x64xf32>
    %46 = tpu.matmul %39, %42, %cst_18 {dimension_numbers = #tpu.dot_dimension_numbers<[2], [2], [1], [1], [0, 0, 0, 1, 1, 1], [0], [0]>} : vector<4x64x8xbf16>, vector<4x64x8xbf16>, vector<4x64x64xf32> -> vector<4x64x64xf32>
    "tpu.trace_stop"() : () -> ()
    %c0_19 = arith.constant 0 : index
    %c0_20 = arith.constant 0 : index
    %c0_21 = arith.constant 0 : index
    %47 = vector.load %arg6[%c0_19, %c0_20, %c0_21] : memref<2x64x64xf32, #tpu.memory_space<vmem>>, vector<1x64x64xf32>
    %48 = vector.shape_cast %47 : vector<1x64x64xf32> to vector<64x64xf32>
    %49 = vector.shape_cast %48 : vector<64x64xf32> to vector<1x64x64xf32>
    %50 = vector.broadcast %49 : vector<1x64x64xf32> to vector<4x64x64xf32>
    %51 = arith.addf %46, %50 : vector<4x64x64xf32>
    %52 = arith.addf %51, %36 : vector<4x64x64xf32>
    %cst_22 = arith.constant dense<0xFF800000> : vector<4x64xf32>
    %53 = vector.multi_reduction <maximumf>, %52, %cst_22 [2] : vector<4x64x64xf32> to vector<4x64xf32>
    %54 = vector.shape_cast %53 : vector<4x64xf32> to vector<4x64x1xf32>
    %55 = vector.broadcast %54 : vector<4x64x1xf32> to vector<4x64x64xf32>
    %56 = arith.subf %52, %55 : vector<4x64x64xf32>
    %57 = math.exp %56 : vector<4x64x64xf32>
    %cst_23 = arith.constant dense<0.000000e+00> : vector<4x64xf32>
    %58 = vector.multi_reduction <add>, %57, %cst_23 [2] : vector<4x64x64xf32> to vector<4x64xf32>
    %59 = vector.shape_cast %58 : vector<4x64xf32> to vector<4x64x1xf32>
    %60 = tpu.reciprocal %59 {approx = true} : vector<4x64x1xf32> -> vector<4x64x1xf32>
    %61 = vector.broadcast %60 : vector<4x64x1xf32> to vector<4x64x64xf32>
    %62 = arith.mulf %57, %61 : vector<4x64x64xf32>
    %63 = arith.truncf %62 : vector<4x64x64xf32> to vector<4x64x64xbf16>
    "tpu.trace_start"() <{level = 10 : i32, message = "wqk,wkd->wqd"}> : () -> ()
    %cst_24 = arith.constant dense<0.000000e+00> : vector<4x64x8xf32>
    %64 = tpu.matmul %63, %45, %cst_24 {dimension_numbers = #tpu.dot_dimension_numbers<[2], [1], [1], [2], [0, 0, 0, 1, 1, 2], [0], [0]>} : vector<4x64x64xbf16>, vector<4x64x8xbf16>, vector<4x64x8xf32> -> vector<4x64x8xf32>
    "tpu.trace_stop"() : () -> ()
    %65 = vector.shape_cast %64 : vector<4x64x8xf32> to vector<256x8xf32>
    %66 = vector.extract_strided_slice %35 {offsets = [0, 8], sizes = [256, 8], strides = [1, 1]} : vector<256x48xf32> to vector<256x8xf32>
    %67 = vector.shape_cast %66 : vector<256x8xf32> to vector<4x64x8xf32>
    %68 = arith.truncf %67 : vector<4x64x8xf32> to vector<4x64x8xbf16>
    %69 = vector.extract_strided_slice %35 {offsets = [0, 24], sizes = [256, 8], strides = [1, 1]} : vector<256x48xf32> to vector<256x8xf32>
    %70 = vector.shape_cast %69 : vector<256x8xf32> to vector<4x64x8xf32>
    %71 = arith.truncf %70 : vector<4x64x8xf32> to vector<4x64x8xbf16>
    %72 = vector.extract_strided_slice %35 {offsets = [0, 40], sizes = [256, 8], strides = [1, 1]} : vector<256x48xf32> to vector<256x8xf32>
    %73 = vector.shape_cast %72 : vector<256x8xf32> to vector<4x64x8xf32>
    %74 = arith.truncf %73 : vector<4x64x8xf32> to vector<4x64x8xbf16>
    "tpu.trace_start"() <{level = 10 : i32, message = "wqd,wkd->wqk"}> : () -> ()
    %cst_25 = arith.constant dense<0.000000e+00> : vector<4x64x64xf32>
    %75 = tpu.matmul %68, %71, %cst_25 {dimension_numbers = #tpu.dot_dimension_numbers<[2], [2], [1], [1], [0, 0, 0, 1, 1, 1], [0], [0]>} : vector<4x64x8xbf16>, vector<4x64x8xbf16>, vector<4x64x64xf32> -> vector<4x64x64xf32>
    "tpu.trace_stop"() : () -> ()
    %c1 = arith.constant 1 : index
    %c0_26 = arith.constant 0 : index
    %c0_27 = arith.constant 0 : index
    %76 = vector.load %arg6[%c1, %c0_26, %c0_27] : memref<2x64x64xf32, #tpu.memory_space<vmem>>, vector<1x64x64xf32>
    %77 = vector.shape_cast %76 : vector<1x64x64xf32> to vector<64x64xf32>
    %78 = vector.shape_cast %77 : vector<64x64xf32> to vector<1x64x64xf32>
    %79 = vector.broadcast %78 : vector<1x64x64xf32> to vector<4x64x64xf32>
    %80 = arith.addf %75, %79 : vector<4x64x64xf32>
    %81 = arith.addf %80, %36 : vector<4x64x64xf32>
    %cst_28 = arith.constant dense<0xFF800000> : vector<4x64xf32>
    %82 = vector.multi_reduction <maximumf>, %81, %cst_28 [2] : vector<4x64x64xf32> to vector<4x64xf32>
    %83 = vector.shape_cast %82 : vector<4x64xf32> to vector<4x64x1xf32>
    %84 = vector.broadcast %83 : vector<4x64x1xf32> to vector<4x64x64xf32>
    %85 = arith.subf %81, %84 : vector<4x64x64xf32>
    %86 = math.exp %85 : vector<4x64x64xf32>
    %cst_29 = arith.constant dense<0.000000e+00> : vector<4x64xf32>
    %87 = vector.multi_reduction <add>, %86, %cst_29 [2] : vector<4x64x64xf32> to vector<4x64xf32>
    %88 = vector.shape_cast %87 : vector<4x64xf32> to vector<4x64x1xf32>
    %89 = tpu.reciprocal %88 {approx = true} : vector<4x64x1xf32> -> vector<4x64x1xf32>
    %90 = vector.broadcast %89 : vector<4x64x1xf32> to vector<4x64x64xf32>
    %91 = arith.mulf %86, %90 : vector<4x64x64xf32>
    %92 = arith.truncf %91 : vector<4x64x64xf32> to vector<4x64x64xbf16>
    "tpu.trace_start"() <{level = 10 : i32, message = "wqk,wkd->wqd"}> : () -> ()
    %cst_30 = arith.constant dense<0.000000e+00> : vector<4x64x8xf32>
    %93 = tpu.matmul %92, %74, %cst_30 {dimension_numbers = #tpu.dot_dimension_numbers<[2], [1], [1], [2], [0, 0, 0, 1, 1, 2], [0], [0]>} : vector<4x64x64xbf16>, vector<4x64x8xbf16>, vector<4x64x8xf32> -> vector<4x64x8xf32>
    "tpu.trace_stop"() : () -> ()
    %94 = vector.shape_cast %93 : vector<4x64x8xf32> to vector<256x8xf32>
    %95 = tpu.concatenate %65, %94 in 1 : vector<256x8xf32>, vector<256x8xf32> -> vector<256x16xf32>
    %96 = arith.truncf %95 : vector<256x16xf32> to vector<256x16xbf16>
    %c0_31 = arith.constant 0 : index
    %c0_32 = arith.constant 0 : index
    %97 = vector.load %arg7[%c0_31, %c0_32] : memref<16x128xbf16, #tpu.memory_space<vmem>>, vector<16x128xbf16>
    %cst_33 = arith.constant dense<0.000000e+00> : vector<256x128xf32>
    %98 = tpu.matmul %96, %97, %cst_33 {dimension_numbers = #tpu.dot_dimension_numbers<[1], [0], [0], [1], [0, 0, 1, 1], [], []>} : vector<256x16xbf16>, vector<16x128xbf16>, vector<256x128xf32> -> vector<256x128xf32>
    %c0_34 = arith.constant 0 : index
    %c0_35 = arith.constant 0 : index
    %99 = vector.load %arg8[%c0_34, %c0_35] : memref<1x128xf32, #tpu.memory_space<vmem>>, vector<1x128xf32>
    %100 = vector.broadcast %99 : vector<1x128xf32> to vector<256x128xf32>
    %101 = arith.addf %98, %100 : vector<256x128xf32>
    %102 = arith.addf %0, %101 : vector<256x128xf32>
    %c0_36 = arith.constant 0 : index
    %c0_37 = arith.constant 0 : index
    %103 = vector.load %arg10[%c0_36, %c0_37] : memref<256x128xf32, #tpu.memory_space<vmem>>, vector<256x128xf32>
    tpu.vector_store %arg10[%c0_36, %c0_37], %102 {strides = array<i32>} : memref<256x128xf32, #tpu.memory_space<vmem>>, vector<256x128xf32>,
    return
  }
  func.func @transform_0(%arg0: i32) -> (i32, i32) {
    %c0_i32 = arith.constant 0 : i32
    %c0_i32_0 = arith.constant 0 : i32
    return %arg0, %c0_i32 : i32, i32
  }
  func.func @transform_1(%arg0: i32) -> (i32, i32) {
    %c0_i32 = arith.constant 0 : i32
    %c0_i32_0 = arith.constant 0 : i32
    %c0_i32_1 = arith.constant 0 : i32
    return %c0_i32, %c0_i32_0 : i32, i32
  }
  func.func @transform_2(%arg0: i32) -> (i32, i32) {
    %c0_i32 = arith.constant 0 : i32
    %c0_i32_0 = arith.constant 0 : i32
    %c0_i32_1 = arith.constant 0 : i32
    return %c0_i32, %c0_i32_0 : i32, i32
  }
  func.func @transform_3(%arg0: i32) -> (i32, i32) {
    %c0_i32 = arith.constant 0 : i32
    %c0_i32_0 = arith.constant 0 : i32
    %c0_i32_1 = arith.constant 0 : i32
    return %c0_i32, %c0_i32_0 : i32, i32
  }
  func.func @transform_4(%arg0: i32) -> (i32, i32) {
    %c0_i32 = arith.constant 0 : i32
    %c0_i32_0 = arith.constant 0 : i32
    %c0_i32_1 = arith.constant 0 : i32
    return %c0_i32, %c0_i32_0 : i32, i32
  }
  func.func @transform_5(%arg0: i32) -> (i32, i32, i32) {
    %c0_i32 = arith.constant 0 : i32
    %c0_i32_0 = arith.constant 0 : i32
    %c0_i32_1 = arith.constant 0 : i32
    %c0_i32_2 = arith.constant 0 : i32
    return %c0_i32, %c0_i32_0, %c0_i32_1 : i32, i32, i32
  }
  func.func @transform_6(%arg0: i32) -> (i32, i32) {
    %c0_i32 = arith.constant 0 : i32
    %c0_i32_0 = arith.constant 0 : i32
    %c0_i32_1 = arith.constant 0 : i32
    return %c0_i32, %c0_i32_0 : i32, i32
  }
  func.func @transform_7(%arg0: i32) -> (i32, i32) {
    %c0_i32 = arith.constant 0 : i32
    %c0_i32_0 = arith.constant 0 : i32
    %c0_i32_1 = arith.constant 0 : i32
    return %c0_i32, %c0_i32_0 : i32, i32
  }
  func.func @transform_8(%arg0: i32) -> (i32, i32, i32) {
    %c1_i32 = arith.constant 1 : i32
    %c0_i32 = arith.constant 0 : i32
    %0 = arith.cmpi eq, %c1_i32, %c0_i32 : i32
    %c1_i32_0 = arith.constant 1 : i32
    %1 = arith.select %0, %c1_i32_0, %c1_i32 : i32
    %2 = arith.remsi %arg0, %1 : i32
    %c0_i32_1 = arith.constant 0 : i32
    %3 = arith.cmpi ne, %2, %c0_i32_1 : i32
    %c0_i32_2 = arith.constant 0 : i32
    %4 = arith.cmpi slt, %2, %c0_i32_2 : i32
    %c0_i32_3 = arith.constant 0 : i32
    %5 = arith.cmpi slt, %1, %c0_i32_3 : i32
    %6 = arith.xori %4, %5 : i1
    %7 = arith.andi %6, %3 : i1
    %8 = arith.addi %2, %1 : i32
    %9 = arith.select %7, %8, %2 : i32
    %c0_i32_4 = arith.constant 0 : i32
    %c0_i32_5 = arith.constant 0 : i32
    %c0_i32_6 = arith.constant 0 : i32
    return %9, %c0_i32_4, %c0_i32_5 : i32, i32, i32
  }
  func.func @transform_9(%arg0: i32) -> (i32, i32) {
    %c0_i32 = arith.constant 0 : i32
    %c0_i32_0 = arith.constant 0 : i32
    return %arg0, %c0_i32 : i32, i32
  }
}

</mosaic_0001>

<llo_original>
// kernel: basic_uformer_layer.5
$region0: #{basic_uformer_layer.5}
  #allocation0 [shape = 'u32[]', space=smem, size = 0x4, offset = 0x4, fixed_abs, tag = 'smem constant byte address 0x4 - core index']
  #allocation1 [shape = 'u32[144,128]{1,0:T(1,128)}', space=vmem, size = 0x12000, scoped, tag = 'internal scratch']
  %s0 = inlined_call_operand.vmem [shape: f32[512,128], index: 0, kind: input, shape index: {}, may-alias: {0,7}]
  %s1 = inlined_call_operand.vmem [shape: f32[1,128], index: 1, kind: input, shape index: {}]
  %s2 = inlined_call_operand.vmem [shape: f32[1,128], index: 2, kind: input, shape index: {}]
  %s3 = inlined_call_operand.vmem [shape: bf16[128,128], index: 3, kind: input, shape index: {}]
  %s4 = inlined_call_operand.vmem [shape: f32[1,128], index: 4, kind: input, shape index: {}]
  %s5 = inlined_call_operand.vmem [shape: bf16[128,128], index: 5, kind: input, shape index: {}]
  %s6 = inlined_call_operand.vmem [shape: f32[1,128], index: 6, kind: input, shape index: {}]
  %s7 = inlined_call_operand.vmem [shape: f32[512,128], index: 7, kind: output, shape index: {}, may-alias: {0,7}]
  %s8 = sld [smem:[#allocation0]]
  $region61: #{basic_uformer_layer.5} parent=0
    _
  %s10 = ssub.s32 1, %s8
  %s11 = scalar_select 0, %s10, %s8
  loop: start=0, step=1, limit=4
  $region2: #{basic_uformer_layer.5} parent=0 // loop_pre_header
    _
  $region3: #{basic_uformer_layer.5} parent=0 // loop_header
    %s13 = sphi 0, %s17
    %p14 = scmp.ge.s32.totalorder %s13, 4
    %s23 = sphi 0, %s25
    %s26 = sphi 0, %s23
    %s27 = sphi 0, %s26
    %s43 = sphi 0, %s27
    %s47 = sphi 0, %s47
    %s49 = sphi 0, %s47
    %s50 = sphi 0, %s49
    %s64 = sphi 0, %s50
    %s68 = sphi 0, %s68
    %s70 = sphi 0, %s68
    %s71 = sphi 0, %s70
    %s85 = sphi 0, %s71
    %s89 = sphi 0, %s89
    %s91 = sphi 0, %s89
    %s92 = sphi 0, %s91
    %s106 = sphi 0, %s92
    %s110 = sphi 0, %s110
    %s112 = sphi 0, %s110
    %s113 = sphi 0, %s112
    %s127 = sphi 0, %s113
    %s131 = sphi 0, %s131
    %s133 = sphi 0, %s131
    %s134 = sphi 0, %s133
    %s148 = sphi 0, %s134
    %s152 = sphi 0, %s152
    %s154 = sphi 0, %s152
    %s155 = sphi 0, %s154
    %s169 = sphi 0, %s155
    %s175 = sphi 0, %s177
    %s178 = sphi 0, %s175
    %s179 = sphi 0, %s178
    %s195 = sphi 0, %s179
  $region4: #{basic_uformer_layer.5} parent=0 // loop_header_branch
    %16 = sbr.rel (%p14) target = $region8
  $region5: #{basic_uformer_layer.5} parent=0 // loop_body
    %s18 = ssub.s32 %s13, 1
    %s19 = ssub.s32 %s13, 2
    %s20 = sadd.s32 %s13, 1
    %s21 = ssub.s32 %s13, %s20
    %p22 = scmp.eq.s32.totalorder %s21, 0
    %s24 = sadd.s32 %s23, 1
    %s25 = scalar_select %p22, %s23, %s24
    %p28 = pneg %p22
    %p29 = scmp.eq.s32.totalorder %s13, 1
    %p30 = por %p28, %p29
    %p31 = scmp.ne.s32.totalorder %s23, %s26
    %p32 = scmp.eq.s32.totalorder %s13, 0
    %p33 = por %p31, %p32
    %p34 = scmp.ne.s32.totalorder %s23, %s26
    %p35 = scmp.eq.s32.totalorder %s18, 1
    %p36 = por %p34, %p35
    %p37 = scmp.ne.s32.totalorder %s26, %s27
    %p38 = scmp.eq.s32.totalorder %s18, 0
    %p39 = por %p37, %p38
    %p40 = scmp.ne.s32.totalorder %s26, %s27
    %p41 = scmp.eq.s32.totalorder %s19, 1
    %p42 = por %p40, %p41
    %p44 = scmp.ne.s32.totalorder %s27, %s43
    %p45 = scmp.eq.s32.totalorder %s19, 0
    %p46 = por %p44, %p45
    %s48 = sadd.s32 %s47, 1
    %p51 = scmp.eq.s32.totalorder %s13, 1
    %p52 = scmp.ne.s32.totalorder %s47, %s49
    %p53 = scmp.eq.s32.totalorder %s13, 0
    %p54 = por %p52, %p53
    %p55 = scmp.ne.s32.totalorder %s47, %s49
    %p56 = scmp.eq.s32.totalorder %s18, 1
    %p57 = por %p55, %p56
    %p58 = scmp.ne.s32.totalorder %s49, %s50
    %p59 = scmp.eq.s32.totalorder %s18, 0
    %p60 = por %p58, %p59
    %p61 = scmp.ne.s32.totalorder %s49, %s50
    %p62 = scmp.eq.s32.totalorder %s19, 1
    %p63 = por %p61, %p62
    %p65 = scmp.ne.s32.totalorder %s50, %s64
    %p66 = scmp.eq.s32.totalorder %s19, 0
    %p67 = por %p65, %p66
    %s69 = sadd.s32 %s68, 1
    %p72 = scmp.eq.s32.totalorder %s13, 1
    %p73 = scmp.ne.s32.totalorder %s68, %s70
    %p74 = scmp.eq.s32.totalorder %s13, 0
    %p75 = por %p73, %p74
    %p76 = scmp.ne.s32.totalorder %s68, %s70
    %p77 = scmp.eq.s32.totalorder %s18, 1
    %p78 = por %p76, %p77
    %p79 = scmp.ne.s32.totalorder %s70, %s71
    %p80 = scmp.eq.s32.totalorder %s18, 0
    %p81 = por %p79, %p80
    %p82 = scmp.ne.s32.totalorder %s70, %s71
    %p83 = scmp.eq.s32.totalorder %s19, 1
    %p84 = por %p82, %p83
    %p86 = scmp.ne.s32.totalorder %s71, %s85
    %p87 = scmp.eq.s32.totalorder %s19, 0
    %p88 = por %p86, %p87
    %s90 = sadd.s32 %s89, 1
    %p93 = scmp.eq.s32.totalorder %s13, 1
    %p94 = scmp.ne.s32.totalorder %s89, %s91
    %p95 = scmp.eq.s32.totalorder %s13, 0
    %p96 = por %p94, %p95
    %p97 = scmp.ne.s32.totalorder %s89, %s91
    %p98 = scmp.eq.s32.totalorder %s18, 1
    %p99 = por %p97, %p98
    %p100 = scmp.ne.s32.totalorder %s91, %s92
    %p101 = scmp.eq.s32.totalorder %s18, 0
    %p102 = por %p100, %p101
    %p103 = scmp.ne.s32.totalorder %s91, %s92
    %p104 = scmp.eq.s32.totalorder %s19, 1
    %p105 = por %p103, %p104
    %p107 = scmp.ne.s32.totalorder %s92, %s106
    %p108 = scmp.eq.s32.totalorder %s19, 0
    %p109 = por %p107, %p108
    %s111 = sadd.s32 %s110, 1
    %p114 = scmp.eq.s32.totalorder %s13, 1
    %p115 = scmp.ne.s32.totalorder %s110, %s112
    %p116 = scmp.eq.s32.totalorder %s13, 0
    %p117 = por %p115, %p116
    %p118 = scmp.ne.s32.totalorder %s110, %s112
    %p119 = scmp.eq.s32.totalorder %s18, 1
    %p120 = por %p118, %p119
    %p121 = scmp.ne.s32.totalorder %s112, %s113
    %p122 = scmp.eq.s32.totalorder %s18, 0
    %p123 = por %p121, %p122
    %p124 = scmp.ne.s32.totalorder %s112, %s113
    %p125 = scmp.eq.s32.totalorder %s19, 1
    %p126 = por %p124, %p125
    %p128 = scmp.ne.s32.totalorder %s113, %s127
    %p129 = scmp.eq.s32.totalorder %s19, 0
    %p130 = por %p128, %p129
    %s132 = sadd.s32 %s131, 1
    %p135 = scmp.eq.s32.totalorder %s13, 1
    %p136 = scmp.ne.s32.totalorder %s131, %s133
    %p137 = scmp.eq.s32.totalorder %s13, 0
    %p138 = por %p136, %p137
    %p139 = scmp.ne.s32.totalorder %s131, %s133
    %p140 = scmp.eq.s32.totalorder %s18, 1
    %p141 = por %p139, %p140
    %p142 = scmp.ne.s32.totalorder %s133, %s134
    %p143 = scmp.eq.s32.totalorder %s18, 0
    %p144 = por %p142, %p143
    %p145 = scmp.ne.s32.totalorder %s133, %s134
    %p146 = scmp.eq.s32.totalorder %s19, 1
    %p147 = por %p145, %p146
    %p149 = scmp.ne.s32.totalorder %s134, %s148
    %p150 = scmp.eq.s32.totalorder %s19, 0
    %p151 = por %p149, %p150
    %s153 = sadd.s32 %s152, 1
    %p156 = scmp.eq.s32.totalorder %s13, 1
    %p157 = scmp.ne.s32.totalorder %s152, %s154
    %p158 = scmp.eq.s32.totalorder %s13, 0
    %p159 = por %p157, %p158
    %p160 = scmp.ne.s32.totalorder %s152, %s154
    %p161 = scmp.eq.s32.totalorder %s18, 1
    %p162 = por %p160, %p161
    %p163 = scmp.ne.s32.totalorder %s154, %s155
    %p164 = scmp.eq.s32.totalorder %s18, 0
    %p165 = por %p163, %p164
    %p166 = scmp.ne.s32.totalorder %s154, %s155
    %p167 = scmp.eq.s32.totalorder %s19, 1
    %p168 = por %p166, %p167
    %p170 = scmp.ne.s32.totalorder %s155, %s169
    %p171 = scmp.eq.s32.totalorder %s19, 0
    %p172 = por %p170, %p171
    %s173 = ssub.s32 %s13, %s20
    %p174 = scmp.eq.s32.totalorder %s173, 0
    %s176 = sadd.s32 %s175, 1
    %s177 = scalar_select %p174, %s175, %s176
    %p180 = pneg %p174
    %p181 = scmp.eq.s32.totalorder %s13, 1
    %p182 = por %p180, %p181
    %p183 = scmp.ne.s32.totalorder %s175, %s178
    %p184 = scmp.eq.s32.totalorder %s13, 0
    %p185 = por %p183, %p184
    %p186 = scmp.ne.s32.totalorder %s175, %s178
    %p187 = scmp.eq.s32.totalorder %s18, 1
    %p188 = por %p186, %p187
    %p189 = scmp.ne.s32.totalorder %s178, %s179
    %p190 = scmp.eq.s32.totalorder %s18, 0
    %p191 = por %p189, %p190
    %p192 = scmp.ne.s32.totalorder %s178, %s179
    %p193 = scmp.eq.s32.totalorder %s19, 1
    %p194 = por %p192, %p193
    %p196 = scmp.ne.s32.totalorder %s179, %s195
    %p197 = scmp.eq.s32.totalorder %s19, 0
    %p198 = por %p196, %p197
    %p199 = scmp.le.s32.totalorder 1, %s13
    %p200 = scmp.lt.s32.totalorder %s13, 3
    %p201 = pnand %p199, %p200
    %p202 = pneg %p201
    // Predicated region
    $region9: #{basic_uformer_layer.5} parent=5 // pred_check
      _
    $region10: #{basic_uformer_layer.5} parent=5 // pred_check_branch
      %204 = sbr.rel (%p201) target = $region12
    $region11: #{basic_uformer_layer.5} parent=5 // pred_region
      %s205 = ssub.s32 %s13, 1
      // Predicated region
      $region13: #{basic_uformer_layer.5} parent=11 // pred_check
        %p206 = pneg %p60
      $region14: #{basic_uformer_layer.5} parent=11 // pred_check_branch
        %208 = sbr.rel (%p206) target = $region16
      $region15: #{basic_uformer_layer.5} parent=11 // pred_region
        _
      $region16: #{basic_uformer_layer.5} parent=11 // pred_fallthru
        _
      // Predicated region
      $region17: #{basic_uformer_layer.5} parent=11 // pred_check
        %p209 = pneg %p81
      $region18: #{basic_uformer_layer.5} parent=11 // pred_check_branch
        %211 = sbr.rel (%p209) target = $region20
      $region19: #{basic_uformer_layer.5} parent=11 // pred_region
        _
      $region20: #{basic_uformer_layer.5} parent=11 // pred_fallthru
        _
      // Predicated region
      $region21: #{basic_uformer_layer.5} parent=11 // pred_check
        %p212 = pneg %p102
      $region22: #{basic_uformer_layer.5} parent=11 // pred_check_branch
        %214 = sbr.rel (%p212) target = $region24
      $region23: #{basic_uformer_layer.5} parent=11 // pred_region
        _
      $region24: #{basic_uformer_layer.5} parent=11 // pred_fallthru
        _
      // Predicated region
      $region25: #{basic_uformer_layer.5} parent=11 // pred_check
        %p215 = pneg %p123
      $region26: #{basic_uformer_layer.5} parent=11 // pred_check_branch
        %217 = sbr.rel (%p215) target = $region28
      $region27: #{basic_uformer_layer.5} parent=11 // pred_region
        _
      $region28: #{basic_uformer_layer.5} parent=11 // pred_fallthru
        _
      // Predicated region
      $region29: #{basic_uformer_layer.5} parent=11 // pred_check
        %p218 = pneg %p144
      $region30: #{basic_uformer_layer.5} parent=11 // pred_check_branch
        %220 = sbr.rel (%p218) target = $region32
      $region31: #{basic_uformer_layer.5} parent=11 // pred_region
        _
      $region32: #{basic_uformer_layer.5} parent=11 // pred_fallthru
        _
      // Predicated region
      $region33: #{basic_uformer_layer.5} parent=11 // pred_check
        %p221 = pneg %p165
      $region34: #{basic_uformer_layer.5} parent=11 // pred_check_branch
        %223 = sbr.rel (%p221) target = $region36
      $region35: #{basic_uformer_layer.5} parent=11 // pred_region
        _
      $region36: #{basic_uformer_layer.5} parent=11 // pred_fallthru
        _
    $region12: #{basic_uformer_layer.5} parent=5 // pred_fallthru
      _
    %p224 = scmp.lt.s32.totalorder %s13, 2
    // Predicated region
    $region37: #{basic_uformer_layer.5} parent=5 // pred_check
      %p225 = pneg %p224
    $region38: #{basic_uformer_layer.5} parent=5 // pred_check_branch
      %227 = sbr.rel (%p225) target = $region40
    $region39: #{basic_uformer_layer.5} parent=5 // pred_region
      // Predicated region
      $region41: #{basic_uformer_layer.5} parent=39 // pred_check
        %p228 = pneg %p33
      $region42: #{basic_uformer_layer.5} parent=39 // pred_check_branch
        %230 = sbr.rel (%p228) target = $region44
      $region43: #{basic_uformer_layer.5} parent=39 // pred_region
        %s231 = smul.u32 32, %s13
        %p232 = scmp.lt.s32.totalorder %s231, 63
        %s233 = scalar_select %p232, %s231, 63
        %s234 = smul.addr %s233, 8
        %s235 = scalar_lea.vmem %s0, %s234
        %s236 = smul.u32 32, %s13
      $region44: #{basic_uformer_layer.5} parent=39 // pred_fallthru
        _
    $region40: #{basic_uformer_layer.5} parent=5 // pred_fallthru
      _
    %p237 = scmp.le.s32.totalorder 1, %s13
    %p238 = scmp.lt.s32.totalorder %s13, 3
    %p239 = pnand %p237, %p238
    %p240 = pneg %p239
    // Predicated region
    $region45: #{basic_uformer_layer.5} parent=5 // pred_check
      _
    $region46: #{basic_uformer_layer.5} parent=5 // pred_check_branch
      %242 = sbr.rel (%p239) target = $region48
    $region47: #{basic_uformer_layer.5} parent=5 // pred_region
      %s243 = ssub.s32 %s13, 1
      %s244 = smul.u32 32, %s18
      %p245 = scmp.lt.s32.totalorder %s244, 63
      %s246 = scalar_select %p245, %s244, 63
      %s247 = smul.addr %s246, 8
      %s248 = scalar_lea.vmem %s0, %s247
      %p249 = pneg %p39
      %p250 = pneg %p36
      %p251 = pneg %p60
      %p252 = pneg %p57
      %p253 = pneg %p81
      %p254 = pneg %p78
      %p255 = pneg %p102
      %p256 = pneg %p99
      %p257 = pneg %p123
      %p258 = pneg %p120
      %p259 = pneg %p144
      %p260 = pneg %p141
      %p261 = pneg %p165
      %p262 = pneg %p162
      %p263 = pneg %p191
      %p264 = pneg %p188
      %s265 = smul.u32 32, %s18
      %p266 = scmp.lt.s32.totalorder %s265, 63
      %s267 = scalar_select %p266, %s265, 63
      %s268 = smul.addr %s267, 8
      %s269 = scalar_lea.vmem %s7, %s268
      %s270 = smul.u32 32, %s18
      %p271 = scmp.lt.s32.totalorder %s270, 63
      %s272 = scalar_select %p271, %s270, 63
      %s273 = smul.addr %s272, 8
      %s274 = scalar_lea.vmem %s0, %s273
      %s275 = smul.u32 32, %s18
      %s276 = smul.u32 32, %s18
      %p277 = scmp.lt.s32.totalorder %s276, 63
      %s278 = scalar_select %p277, %s276, 63
      %s279 = smul.addr %s278, 8
      %s280 = scalar_lea.vmem %s7, %s279
      %s281 = smul.u32 32, %s18
      %v283 = vld [vmem:[%s274] sm:$0xff]
      %v284 = vld [vmem:[%s274 + $0x8] sm:$0xff]
      %v285 = vld [vmem:[%s274 + $0x10] sm:$0xff]
      %v286 = vld [vmem:[%s274 + $0x18] sm:$0xff]
      %v287 = vld [vmem:[%s274 + $0x20] sm:$0xff]
      %v288 = vld [vmem:[%s274 + $0x28] sm:$0xff]
      %v289 = vld [vmem:[%s274 + $0x30] sm:$0xff]
      %v290 = vld [vmem:[%s274 + $0x38] sm:$0xff]
      %v291 = vld [vmem:[%s274 + $0x40] sm:$0xff]
      %v292 = vld [vmem:[%s274 + $0x48] sm:$0xff]
      %v293 = vld [vmem:[%s274 + $0x50] sm:$0xff]
      %v294 = vld [vmem:[%s274 + $0x58] sm:$0xff]
      %v295 = vld [vmem:[%s274 + $0x60] sm:$0xff]
      %v296 = vld [vmem:[%s274 + $0x68] sm:$0xff]
      %v297 = vld [vmem:[%s274 + $0x70] sm:$0xff]
      %v298 = vld [vmem:[%s274 + $0x78] sm:$0xff]
      %v299 = vld [vmem:[%s274 + $0x80] sm:$0xff]
      %v300 = vld [vmem:[%s274 + $0x88] sm:$0xff]
      %v301 = vld [vmem:[%s274 + $0x90] sm:$0xff]
      %v302 = vld [vmem:[%s274 + $0x98] sm:$0xff]
      %v303 = vld [vmem:[%s274 + $0xa0] sm:$0xff]
      %v304 = vld [vmem:[%s274 + $0xa8] sm:$0xff]
      %v305 = vld [vmem:[%s274 + $0xb0] sm:$0xff]
      %v306 = vld [vmem:[%s274 + $0xb8] sm:$0xff]
      %v307 = vld [vmem:[%s274 + $0xc0] sm:$0xff]
      %v308 = vld [vmem:[%s274 + $0xc8] sm:$0xff]
      %v309 = vld [vmem:[%s274 + $0xd0] sm:$0xff]
      %v310 = vld [vmem:[%s274 + $0xd8] sm:$0xff]
      %v311 = vld [vmem:[%s274 + $0xe0] sm:$0xff]
      %v312 = vld [vmem:[%s274 + $0xe8] sm:$0xff]
      %v313 = vld [vmem:[%s274 + $0xf0] sm:$0xff]
      %v314 = vld [vmem:[%s274 + $0xf8] sm:$0xff]
      %v315 = vld [vmem:[%s1] sm:$0x1]
      %v316 = vld [vmem:[%s2] sm:$0x1]
      %317 = vadd.xlane.f32.xlu0 %v283
      %v318 = vpop.xlane.xlu0 %317
      %319 = vadd.xlane.f32.xlu0 %v284
      %v320 = vpop.xlane.xlu0 %319
      %321 = vadd.xlane.f32.xlu0 %v285
      %v322 = vpop.xlane.xlu0 %321
      %323 = vadd.xlane.f32.xlu0 %v286
      %v324 = vpop.xlane.xlu0 %323
      %325 = vadd.xlane.f32.xlu0 %v287
      %v326 = vpop.xlane.xlu0 %325
      %327 = vadd.xlane.f32.xlu0 %v288
      %v328 = vpop.xlane.xlu0 %327
      %329 = vadd.xlane.f32.xlu0 %v289
      %v330 = vpop.xlane.xlu0 %329
      %331 = vadd.xlane.f32.xlu0 %v290
      %v332 = vpop.xlane.xlu0 %331
      %333 = vadd.xlane.f32.xlu0 %v291
      %v334 = vpop.xlane.xlu0 %333
      %335 = vadd.xlane.f32.xlu0 %v292
      %v336 = vpop.xlane.xlu0 %335
      %337 = vadd.xlane.f32.xlu0 %v293
      %v338 = vpop.xlane.xlu0 %337
      %339 = vadd.xlane.f32.xlu0 %v294
      %v340 = vpop.xlane.xlu0 %339
      %341 = vadd.xlane.f32.xlu0 %v295
      %v342 = vpop.xlane.xlu0 %341
      %343 = vadd.xlane.f32.xlu0 %v296
      %v344 = vpop.xlane.xlu0 %343
      %345 = vadd.xlane.f32.xlu0 %v297
      %v346 = vpop.xlane.xlu0 %345
      %347 = vadd.xlane.f32.xlu0 %v298
      %v348 = vpop.xlane.xlu0 %347
      %349 = vadd.xlane.f32.xlu0 %v299
      %v350 = vpop.xlane.xlu0 %349
      %351 = vadd.xlane.f32.xlu0 %v300
      %v352 = vpop.xlane.xlu0 %351
      %353 = vadd.xlane.f32.xlu0 %v301
      %v354 = vpop.xlane.xlu0 %353
      %355 = vadd.xlane.f32.xlu0 %v302
      %v356 = vpop.xlane.xlu0 %355
      %357 = vadd.xlane.f32.xlu0 %v303
      %v358 = vpop.xlane.xlu0 %357
      %359 = vadd.xlane.f32.xlu0 %v304
      %v360 = vpop.xlane.xlu0 %359
      %361 = vadd.xlane.f32.xlu0 %v305
      %v362 = vpop.xlane.xlu0 %361
      %363 = vadd.xlane.f32.xlu0 %v306
      %v364 = vpop.xlane.xlu0 %363
      %365 = vadd.xlane.f32.xlu0 %v307
      %v366 = vpop.xlane.xlu0 %365
      %367 = vadd.xlane.f32.xlu0 %v308
      %v368 = vpop.xlane.xlu0 %367
      %369 = vadd.xlane.f32.xlu0 %v309
      %v370 = vpop.xlane.xlu0 %369
      %371 = vadd.xlane.f32.xlu0 %v310
      %v372 = vpop.xlane.xlu0 %371
      %373 = vadd.xlane.f32.xlu0 %v311
      %v374 = vpop.xlane.xlu0 %373
      %375 = vadd.xlane.f32.xlu0 %v312
      %v376 = vpop.xlane.xlu0 %375
      %377 = vadd.xlane.f32.xlu0 %v313
      %v378 = vpop.xlane.xlu0 %377
      %379 = vadd.xlane.f32.xlu0 %v314
      %v380 = vpop.xlane.xlu0 %379
      %v381 = vmul.f32 %v318, 0.0625
      %v382 = vmul.f32 %v320, 0.0625
      %v383 = vmul.f32 %v322, 0.0625
      %v384 = vmul.f32 %v324, 0.0625
      %v385 = vmul.f32 %v326, 0.0625
      %v386 = vmul.f32 %v328, 0.0625
      %v387 = vmul.f32 %v330, 0.0625
      %v388 = vmul.f32 %v332, 0.0625
      %v389 = vmul.f32 %v334, 0.0625
      %v390 = vmul.f32 %v336, 0.0625
      %v391 = vmul.f32 %v338, 0.0625
      %v392 = vmul.f32 %v340, 0.0625
      %v393 = vmul.f32 %v342, 0.0625
      %v394 = vmul.f32 %v344, 0.0625
      %v395 = vmul.f32 %v346, 0.0625
      %v396 = vmul.f32 %v348, 0.0625
      %v397 = vmul.f32 %v350, 0.0625
      %v398 = vmul.f32 %v352, 0.0625
      %v399 = vmul.f32 %v354, 0.0625
      %v400 = vmul.f32 %v356, 0.0625
      %v401 = vmul.f32 %v358, 0.0625
      %v402 = vmul.f32 %v360, 0.0625
      %v403 = vmul.f32 %v362, 0.0625
      %v404 = vmul.f32 %v364, 0.0625
      %v405 = vmul.f32 %v366, 0.0625
      %v406 = vmul.f32 %v368, 0.0625
      %v407 = vmul.f32 %v370, 0.0625
      %v408 = vmul.f32 %v372, 0.0625
      %v409 = vmul.f32 %v374, 0.0625
      %v410 = vmul.f32 %v376, 0.0625
      %v411 = vmul.f32 %v378, 0.0625
      %v412 = vmul.f32 %v380, 0.0625
      %v413 = vsub.f32 %v283, %v381
      %v414 = vsub.f32 %v284, %v382
      %v415 = vsub.f32 %v285, %v383
      %v416 = vsub.f32 %v286, %v384
      %v417 = vsub.f32 %v287, %v385
      %v418 = vsub.f32 %v288, %v386
      %v419 = vsub.f32 %v289, %v387
      %v420 = vsub.f32 %v290, %v388
      %v421 = vsub.f32 %v291, %v389
      %v422 = vsub.f32 %v292, %v390
      %v423 = vsub.f32 %v293, %v391
      %v424 = vsub.f32 %v294, %v392
      %v425 = vsub.f32 %v295, %v393
      %v426 = vsub.f32 %v296, %v394
      %v427 = vsub.f32 %v297, %v395
      %v428 = vsub.f32 %v298, %v396
      %v429 = vsub.f32 %v299, %v397
      %v430 = vsub.f32 %v300, %v398
      %v431 = vsub.f32 %v301, %v399
      %v432 = vsub.f32 %v302, %v400
      %v433 = vsub.f32 %v303, %v401
      %v434 = vsub.f32 %v304, %v402
      %v435 = vsub.f32 %v305, %v403
      %v436 = vsub.f32 %v306, %v404
      %v437 = vsub.f32 %v307, %v405
      %v438 = vsub.f32 %v308, %v406
      %v439 = vsub.f32 %v309, %v407
      %v440 = vsub.f32 %v310, %v408
      %v441 = vsub.f32 %v311, %v409
      %v442 = vsub.f32 %v312, %v410
      %v443 = vsub.f32 %v313, %v411
      %v444 = vsub.f32 %v314, %v412
      %v445 = vlaneseq
      %v446 = vand.u32 %v445, 127
      %vm447 = vcmp.lt.s32.totalorder %v446, 16
      %v448 = vsel %vm447, 1, 0
      %vm449 = vcmp.eq.s32.totalorder %v448, 1
      %v450 = vsel %vm449, %v413, 0.0
      %v451 = vsel %vm449, %v414, 0.0
      %v452 = vsel %vm449, %v415, 0.0
      %v453 = vsel %vm449, %v416, 0.0
      %v454 = vsel %vm449, %v417, 0.0
      %v455 = vsel %vm449, %v418, 0.0
      %v456 = vsel %vm449, %v419, 0.0
      %v457 = vsel %vm449, %v420, 0.0
      %v458 = vsel %vm449, %v421, 0.0
      %v459 = vsel %vm449, %v422, 0.0
      %v460 = vsel %vm449, %v423, 0.0
      %v461 = vsel %vm449, %v424, 0.0
      %v462 = vsel %vm449, %v425, 0.0
      %v463 = vsel %vm449, %v426, 0.0
      %v464 = vsel %vm449, %v427, 0.0
      %v465 = vsel %vm449, %v428, 0.0
      %v466 = vsel %vm449, %v429, 0.0
      %v467 = vsel %vm449, %v430, 0.0
      %v468 = vsel %vm449, %v431, 0.0
      %v469 = vsel %vm449, %v432, 0.0
      %v470 = vsel %vm449, %v433, 0.0
      %v471 = vsel %vm449, %v434, 0.0
      %v472 = vsel %vm449, %v435, 0.0
      %v473 = vsel %vm449, %v436, 0.0
      %v474 = vsel %vm449, %v437, 0.0
      %v475 = vsel %vm449, %v438, 0.0
      %v476 = vsel %vm449, %v439, 0.0
      %v477 = vsel %vm449, %v440, 0.0
      %v478 = vsel %vm449, %v441, 0.0
      %v479 = vsel %vm449, %v442, 0.0
      %v480 = vsel %vm449, %v443, 0.0
      %v481 = vsel %vm449, %v444, 0.0
      %v482 = vmul.f32 %v450, %v450
      %v483 = vmul.f32 %v451, %v451
      %v484 = vmul.f32 %v452, %v452
      %v485 = vmul.f32 %v453, %v453
      %v486 = vmul.f32 %v454, %v454
      %v487 = vmul.f32 %v455, %v455
      %v488 = vmul.f32 %v456, %v456
      %v489 = vmul.f32 %v457, %v457
      %v490 = vmul.f32 %v458, %v458
      %v491 = vmul.f32 %v459, %v459
      %v492 = vmul.f32 %v460, %v460
      %v493 = vmul.f32 %v461, %v461
      %v494 = vmul.f32 %v462, %v462
      %v495 = vmul.f32 %v463, %v463
      %v496 = vmul.f32 %v464, %v464
      %v497 = vmul.f32 %v465, %v465
      %v498 = vmul.f32 %v466, %v466
      %v499 = vmul.f32 %v467, %v467
      %v500 = vmul.f32 %v468, %v468
      %v501 = vmul.f32 %v469, %v469
      %v502 = vmul.f32 %v470, %v470
      %v503 = vmul.f32 %v471, %v471
      %v504 = vmul.f32 %v472, %v472
      %v505 = vmul.f32 %v473, %v473
      %v506 = vmul.f32 %v474, %v474
      %v507 = vmul.f32 %v475, %v475
      %v508 = vmul.f32 %v476, %v476
      %v509 = vmul.f32 %v477, %v477
      %v510 = vmul.f32 %v478, %v478
      %v511 = vmul.f32 %v479, %v479
      %v512 = vmul.f32 %v480, %v480
      %v513 = vmul.f32 %v481, %v481
      %514 = vadd.xlane.f32.xlu0 %v482
      %v515 = vpop.xlane.xlu0 %514
      %516 = vadd.xlane.f32.xlu0 %v483
      %v517 = vpop.xlane.xlu0 %516
      %518 = vadd.xlane.f32.xlu0 %v484
      %v519 = vpop.xlane.xlu0 %518
      %520 = vadd.xlane.f32.xlu0 %v485
      %v521 = vpop.xlane.xlu0 %520
      %522 = vadd.xlane.f32.xlu0 %v486
      %v523 = vpop.xlane.xlu0 %522
      %524 = vadd.xlane.f32.xlu0 %v487
      %v525 = vpop.xlane.xlu0 %524
      %526 = vadd.xlane.f32.xlu0 %v488
      %v527 = vpop.xlane.xlu0 %526
      %528 = vadd.xlane.f32.xlu0 %v489
      %v529 = vpop.xlane.xlu0 %528
      %530 = vadd.xlane.f32.xlu0 %v490
      %v531 = vpop.xlane.xlu0 %530
      %532 = vadd.xlane.f32.xlu0 %v491
      %v533 = vpop.xlane.xlu0 %532
      %534 = vadd.xlane.f32.xlu0 %v492
      %v535 = vpop.xlane.xlu0 %534
      %536 = vadd.xlane.f32.xlu0 %v493
      %v537 = vpop.xlane.xlu0 %536
      %538 = vadd.xlane.f32.xlu0 %v494
      %v539 = vpop.xlane.xlu0 %538
      %540 = vadd.xlane.f32.xlu0 %v495
      %v541 = vpop.xlane.xlu0 %540
      %542 = vadd.xlane.f32.xlu0 %v496
      %v543 = vpop.xlane.xlu0 %542
      %544 = vadd.xlane.f32.xlu0 %v497
      %v545 = vpop.xlane.xlu0 %544
      %546 = vadd.xlane.f32.xlu0 %v498
      %v547 = vpop.xlane.xlu0 %546
      %548 = vadd.xlane.f32.xlu0 %v499
      %v549 = vpop.xlane.xlu0 %548
      %550 = vadd.xlane.f32.xlu0 %v500
      %v551 = vpop.xlane.xlu0 %550
      %552 = vadd.xlane.f32.xlu0 %v501
      %v553 = vpop.xlane.xlu0 %552
      %554 = vadd.xlane.f32.xlu0 %v502
      %v555 = vpop.xlane.xlu0 %554
      %556 = vadd.xlane.f32.xlu0 %v503
      %v557 = vpop.xlane.xlu0 %556
      %558 = vadd.xlane.f32.xlu0 %v504
      %v559 = vpop.xlane.xlu0 %558
      %560 = vadd.xlane.f32.xlu0 %v505
      %v561 = vpop.xlane.xlu0 %560
      %562 = vadd.xlane.f32.xlu0 %v506
      %v563 = vpop.xlane.xlu0 %562
      %564 = vadd.xlane.f32.xlu0 %v507
      %v565 = vpop.xlane.xlu0 %564
      %566 = vadd.xlane.f32.xlu0 %v508
      %v567 = vpop.xlane.xlu0 %566
      %568 = vadd.xlane.f32.xlu0 %v509
      %v569 = vpop.xlane.xlu0 %568
      %570 = vadd.xlane.f32.xlu0 %v510
      %v571 = vpop.xlane.xlu0 %570
      %572 = vadd.xlane.f32.xlu0 %v511
      %v573 = vpop.xlane.xlu0 %572
      %574 = vadd.xlane.f32.xlu0 %v512
      %v575 = vpop.xlane.xlu0 %574
      %576 = vadd.xlane.f32.xlu0 %v513
      %v577 = vpop.xlane.xlu0 %576
      %v578 = vmul.f32 %v515, 0.0625
      %v579 = vmul.f32 %v517, 0.0625
      %v580 = vmul.f32 %v519, 0.0625
      %v581 = vmul.f32 %v521, 0.0625
      %v582 = vmul.f32 %v523, 0.0625
      %v583 = vmul.f32 %v525, 0.0625
      %v584 = vmul.f32 %v527, 0.0625
      %v585 = vmul.f32 %v529, 0.0625
      %v586 = vmul.f32 %v531, 0.0625
      %v587 = vmul.f32 %v533, 0.0625
      %v588 = vmul.f32 %v535, 0.0625
      %v589 = vmul.f32 %v537, 0.0625
      %v590 = vmul.f32 %v539, 0.0625
      %v591 = vmul.f32 %v541, 0.0625
      %v592 = vmul.f32 %v543, 0.0625
      %v593 = vmul.f32 %v545, 0.0625
      %v594 = vmul.f32 %v547, 0.0625
      %v595 = vmul.f32 %v549, 0.0625
      %v596 = vmul.f32 %v551, 0.0625
      %v597 = vmul.f32 %v553, 0.0625
      %v598 = vmul.f32 %v555, 0.0625
      %v599 = vmul.f32 %v557, 0.0625
      %v600 = vmul.f32 %v559, 0.0625
      %v601 = vmul.f32 %v561, 0.0625
      %v602 = vmul.f32 %v563, 0.0625
      %v603 = vmul.f32 %v565, 0.0625
      %v604 = vmul.f32 %v567, 0.0625
      %v605 = vmul.f32 %v569, 0.0625
      %v606 = vmul.f32 %v571, 0.0625
      %v607 = vmul.f32 %v573, 0.0625
      %v608 = vmul.f32 %v575, 0.0625
      %v609 = vmul.f32 %v577, 0.0625
      %v610 = vadd.f32 %v578, 1e-05
      %v611 = vadd.f32 %v579, 1e-05
      %v612 = vadd.f32 %v580, 1e-05
      %v613 = vadd.f32 %v581, 1e-05
      %v614 = vadd.f32 %v582, 1e-05
      %v615 = vadd.f32 %v583, 1e-05
      %v616 = vadd.f32 %v584, 1e-05
      %v617 = vadd.f32 %v585, 1e-05
      %v618 = vadd.f32 %v586, 1e-05
      %v619 = vadd.f32 %v587, 1e-05
      %v620 = vadd.f32 %v588, 1e-05
      %v621 = vadd.f32 %v589, 1e-05
      %v622 = vadd.f32 %v590, 1e-05
      %v623 = vadd.f32 %v591, 1e-05
      %v624 = vadd.f32 %v592, 1e-05
      %v625 = vadd.f32 %v593, 1e-05
      %v626 = vadd.f32 %v594, 1e-05
      %v627 = vadd.f32 %v595, 1e-05
      %v628 = vadd.f32 %v596, 1e-05
      %v629 = vadd.f32 %v597, 1e-05
      %v630 = vadd.f32 %v598, 1e-05
      %v631 = vadd.f32 %v599, 1e-05
      %v632 = vadd.f32 %v600, 1e-05
      %v633 = vadd.f32 %v601, 1e-05
      %v634 = vadd.f32 %v602, 1e-05
      %v635 = vadd.f32 %v603, 1e-05
      %v636 = vadd.f32 %v604, 1e-05
      %v637 = vadd.f32 %v605, 1e-05
      %v638 = vadd.f32 %v606, 1e-05
      %v639 = vadd.f32 %v607, 1e-05
      %v640 = vadd.f32 %v608, 1e-05
      %v641 = vadd.f32 %v609, 1e-05
      %v642 = vrsqrt.pop %v610
      %v643 = vrsqrt.pop %v611
      %v644 = vrsqrt.pop %v612
      %v645 = vrsqrt.pop %v613
      %v646 = vrsqrt.pop %v614
      %v647 = vrsqrt.pop %v615
      %v648 = vrsqrt.pop %v616
      %v649 = vrsqrt.pop %v617
      %v650 = vrsqrt.pop %v618
      %v651 = vrsqrt.pop %v619
      %v652 = vrsqrt.pop %v620
      %v653 = vrsqrt.pop %v621
      %v654 = vrsqrt.pop %v622
      %v655 = vrsqrt.pop %v623
      %v656 = vrsqrt.pop %v624
      %v657 = vrsqrt.pop %v625
      %v658 = vrsqrt.pop %v626
      %v659 = vrsqrt.pop %v627
      %v660 = vrsqrt.pop %v628
      %v661 = vrsqrt.pop %v629
      %v662 = vrsqrt.pop %v630
      %v663 = vrsqrt.pop %v631
      %v664 = vrsqrt.pop %v632
      %v665 = vrsqrt.pop %v633
      %v666 = vrsqrt.pop %v634
      %v667 = vrsqrt.pop %v635
      %v668 = vrsqrt.pop %v636
      %v669 = vrsqrt.pop %v637
      %v670 = vrsqrt.pop %v638
      %v671 = vrsqrt.pop %v639
      %v672 = vrsqrt.pop %v640
      %v673 = vrsqrt.pop %v641
      %v674 = vmul.f32 %v413, %v642
      %v675 = vmul.f32 %v414, %v643
      %v676 = vmul.f32 %v415, %v644
      %v677 = vmul.f32 %v416, %v645
      %v678 = vmul.f32 %v417, %v646
      %v679 = vmul.f32 %v418, %v647
      %v680 = vmul.f32 %v419, %v648
      %v681 = vmul.f32 %v420, %v649
      %v682 = vmul.f32 %v421, %v650
      %v683 = vmul.f32 %v422, %v651
      %v684 = vmul.f32 %v423, %v652
      %v685 = vmul.f32 %v424, %v653
      %v686 = vmul.f32 %v425, %v654
      %v687 = vmul.f32 %v426, %v655
      %v688 = vmul.f32 %v427, %v656
      %v689 = vmul.f32 %v428, %v657
      %v690 = vmul.f32 %v429, %v658
      %v691 = vmul.f32 %v430, %v659
      %v692 = vmul.f32 %v431, %v660
      %v693 = vmul.f32 %v432, %v661
      %v694 = vmul.f32 %v433, %v662
      %v695 = vmul.f32 %v434, %v663
      %v696 = vmul.f32 %v435, %v664
      %v697 = vmul.f32 %v436, %v665
      %v698 = vmul.f32 %v437, %v666
      %v699 = vmul.f32 %v438, %v667
      %v700 = vmul.f32 %v439, %v668
      %v701 = vmul.f32 %v440, %v669
      %v702 = vmul.f32 %v441, %v670
      %v703 = vmul.f32 %v442, %v671
      %v704 = vmul.f32 %v443, %v672
      %v705 = vmul.f32 %v444, %v673
      %v707 = vlaneseq
      %v708 = vshrl.u32 %v707, 7
      %v709 = vsub.s32 0, %v708
      %v710 = vrot.slane %v315, %v709
      %v712 = vmul.f32 %v674, %v710
      %v713 = vmul.f32 %v675, %v710
      %v714 = vmul.f32 %v676, %v710
      %v715 = vmul.f32 %v677, %v710
      %v716 = vmul.f32 %v678, %v710
      %v717 = vmul.f32 %v679, %v710
      %v718 = vmul.f32 %v680, %v710
      %v719 = vmul.f32 %v681, %v710
      %v720 = vmul.f32 %v682, %v710
      %v721 = vmul.f32 %v683, %v710
      %v722 = vmul.f32 %v684, %v710
      %v723 = vmul.f32 %v685, %v710
      %v724 = vmul.f32 %v686, %v710
      %v725 = vmul.f32 %v687, %v710
      %v726 = vmul.f32 %v688, %v710
      %v727 = vmul.f32 %v689, %v710
      %v728 = vmul.f32 %v690, %v710
      %v729 = vmul.f32 %v691, %v710
      %v730 = vmul.f32 %v692, %v710
      %v731 = vmul.f32 %v693, %v710
      %v732 = vmul.f32 %v694, %v710
      %v733 = vmul.f32 %v695, %v710
      %v734 = vmul.f32 %v696, %v710
      %v735 = vmul.f32 %v697, %v710
      %v736 = vmul.f32 %v698, %v710
      %v737 = vmul.f32 %v699, %v710
      %v738 = vmul.f32 %v700, %v710
      %v739 = vmul.f32 %v701, %v710
      %v740 = vmul.f32 %v702, %v710
      %v741 = vmul.f32 %v703, %v710
      %v742 = vmul.f32 %v704, %v710
      %v743 = vmul.f32 %v705, %v710
      %v745 = vlaneseq
      %v746 = vshrl.u32 %v745, 7
      %v747 = vsub.s32 0, %v746
      %v748 = vrot.slane %v316, %v747
      %v750 = vadd.f32 %v712, %v748
      %v751 = vadd.f32 %v713, %v748
      %v752 = vadd.f32 %v714, %v748
      %v753 = vadd.f32 %v715, %v748
      %v754 = vadd.f32 %v716, %v748
      %v755 = vadd.f32 %v717, %v748
      %v756 = vadd.f32 %v718, %v748
      %v757 = vadd.f32 %v719, %v748
      %v758 = vadd.f32 %v720, %v748
      %v759 = vadd.f32 %v721, %v748
      %v760 = vadd.f32 %v722, %v748
      %v761 = vadd.f32 %v723, %v748
      %v762 = vadd.f32 %v724, %v748
      %v763 = vadd.f32 %v725, %v748
      %v764 = vadd.f32 %v726, %v748
      %v765 = vadd.f32 %v727, %v748
      %v766 = vadd.f32 %v728, %v748
      %v767 = vadd.f32 %v729, %v748
      %v768 = vadd.f32 %v730, %v748
      %v769 = vadd.f32 %v731, %v748
      %v770 = vadd.f32 %v732, %v748
      %v771 = vadd.f32 %v733, %v748
      %v772 = vadd.f32 %v734, %v748
      %v773 = vadd.f32 %v735, %v748
      %v774 = vadd.f32 %v736, %v748
      %v775 = vadd.f32 %v737, %v748
      %v776 = vadd.f32 %v738, %v748
      %v777 = vadd.f32 %v739, %v748
      %v778 = vadd.f32 %v740, %v748
      %v779 = vadd.f32 %v741, %v748
      %v780 = vadd.f32 %v742, %v748
      %v781 = vadd.f32 %v743, %v748
      %v782 = vpack.c.bf16 %v751, %v750
      %v783 = vpack.c.bf16 %v753, %v752
      %v784 = vpack.c.bf16 %v755, %v754
      %v785 = vpack.c.bf16 %v757, %v756
      %v786 = vpack.c.bf16 %v759, %v758
      %v787 = vpack.c.bf16 %v761, %v760
      %v788 = vpack.c.bf16 %v763, %v762
      %v789 = vpack.c.bf16 %v765, %v764
      %v790 = vpack.c.bf16 %v767, %v766
      %v791 = vpack.c.bf16 %v769, %v768
      %v792 = vpack.c.bf16 %v771, %v770
      %v793 = vpack.c.bf16 %v773, %v772
      %v794 = vpack.c.bf16 %v775, %v774
      %v795 = vpack.c.bf16 %v777, %v776
      %v796 = vpack.c.bf16 %v779, %v778
      %v797 = vpack.c.bf16 %v781, %v780
      %v798 = vld [vmem:[%s3] sm:$0xf]
      %v799 = vld [vmem:[%s3 + $0x4] sm:$0xf]
      %v800 = vld [vmem:[%s3 + $0x8] sm:$0xf]
      %v801 = vld [vmem:[%s3 + $0xc] sm:$0xf]
      %v802 = vld [vmem:[%s3 + $0x10] sm:$0xf]
      %v803 = vld [vmem:[%s3 + $0x14] sm:$0xf]
      %v804 = vld [vmem:[%s3 + $0x18] sm:$0xf]
      %v805 = vld [vmem:[%s3 + $0x1c] sm:$0xf]
      %v806 = vld [vmem:[%s3 + $0x20] sm:$0xf]
      %v807 = vld [vmem:[%s3 + $0x24] sm:$0xf]
      %v808 = vld [vmem:[%s3 + $0x28] sm:$0xf]
      %v809 = vld [vmem:[%s3 + $0x2c] sm:$0xf]
      %v810 = vld [vmem:[%s3 + $0x30] sm:$0xf]
      %v811 = vld [vmem:[%s3 + $0x34] sm:$0xf]
      %v812 = vld [vmem:[%s3 + $0x38] sm:$0xf]
      %v813 = vld [vmem:[%s3 + $0x3c] sm:$0xf]
      %v814 = vld [vmem:[%s4] sm:$0x1]
      %v816 = vlaneseq
      %v817 = vshrl.u32 %v816, 7
      %v818 = vsub.s32 0, %v817
      %v819 = vrot.slane %v814, %v818
      %v837 = vunpack.c.l.b16 %v798
      %v838 = vunpack.c.l.b16 %v799
      %v839 = vunpack.c.l.b16 %v800
      %v840 = vunpack.c.l.b16 %v801
      %v841 = vunpack.c.l.b16 %v802
      %v842 = vunpack.c.l.b16 %v803
      %v843 = vunpack.c.l.b16 %v804
      %v844 = vunpack.c.l.b16 %v805
      %v845 = vunpack.c.l.b16 %v806
      %v846 = vunpack.c.l.b16 %v807
      %v847 = vunpack.c.l.b16 %v808
      %v848 = vunpack.c.l.b16 %v809
      %v849 = vunpack.c.l.b16 %v810
      %v850 = vunpack.c.l.b16 %v811
      %v851 = vunpack.c.l.b16 %v812
      %v852 = vunpack.c.l.b16 %v813
      %v853 = vpack.c.b16 %v838, %v837
      %v854 = vpack.c.b16 %v840, %v839
      %v855 = vpack.c.b16 %v842, %v841
      %v856 = vpack.c.b16 %v844, %v843
      %v857 = vpack.c.b16 %v846, %v845
      %v858 = vpack.c.b16 %v848, %v847
      %v859 = vpack.c.b16 %v850, %v849
      %v860 = vpack.c.b16 %v852, %v851
      %869 = vmatprep.subr.bf16.mxu0 0
      %870 = vmatpush1.bf16.msra.mxu0 %v860
      %871 = vmatprep.subr.bf16.mxu0 0
      %872 = vmatpush1.bf16.msra.mxu0 %v859
      %873 = vmatprep.subr.bf16.mxu0 0
      %874 = vmatpush1.bf16.msra.mxu0 %v858
      %875 = vmatprep.subr.bf16.mxu0 0
      %876 = vmatpush1.bf16.msra.mxu0 %v857
      %877 = vmatprep.subr.bf16.mxu0 0
      %878 = vmatpush1.bf16.msra.mxu0 %v856
      %879 = vmatprep.subr.bf16.mxu0 0
      %880 = vmatpush1.bf16.msra.mxu0 %v855
      %881 = vmatprep.subr.bf16.mxu0 0
      %882 = vmatpush1.bf16.msra.mxu0 %v854
      %883 = vmatprep.subr.bf16.mxu0 0
      %884 = vmatpush1.bf16.msra.mxu0 %v853
      %885 = vmatprep.subr.bf16.mxu0 0
      %886 = vmatpush2.bf16.msra.mxu0 0
      %887 = vmatprep.subr.bf16.mxu0 0
      %888 = vmatpush2.bf16.msra.mxu0 0
      %889 = vmatprep.subr.bf16.mxu0 0
      %890 = vmatpush2.bf16.msra.mxu0 0
      %891 = vmatprep.subr.bf16.mxu0 0
      %892 = vmatpush2.bf16.msra.mxu0 0
      %893 = vmatprep.subr.bf16.mxu0 0
      %894 = vmatpush2.bf16.msra.mxu0 0
      %895 = vmatprep.subr.bf16.mxu0 0
      %896 = vmatpush2.bf16.msra.mxu0 0
      %897 = vmatprep.subr.bf16.mxu0 0
      %898 = vmatpush2.bf16.msra.mxu0 0
      %899 = vmatprep.subr.bf16.mxu0 0
      %900 = vmatpush2.bf16.msra.mxu0 0
      %901 = vmatprep.mubr.bf16.mxu0 0
      %902 = vmatmul.mubr.bf16.gmra.mxu0 %v782
      %v903 = vpop.f32.mrf.mxu0
      %v904 = vadd.f32 %v819, %v903
      %v905 = vpop.f32.mrf.mxu0
      %v906 = vpop.f32.mrf.mxu0
      %v907 = vadd.f32 %v819, %v906
      %v908 = vpop.f32.mrf.mxu0
      %909 = vmatprep.mubr.bf16.mxu0 0
      %910 = vmatmul.mubr.bf16.gmra.mxu0 %v783
      %v911 = vpop.f32.mrf.mxu0
      %v912 = vadd.f32 %v819, %v911
      %v913 = vpop.f32.mrf.mxu0
      %v914 = vpop.f32.mrf.mxu0
      %v915 = vadd.f32 %v819, %v914
      %v916 = vpop.f32.mrf.mxu0
      %917 = vmatprep.mubr.bf16.mxu0 0
      %918 = vmatmul.mubr.bf16.gmra.mxu0 %v784
      %v919 = vpop.f32.mrf.mxu0
      %v920 = vadd.f32 %v819, %v919
      %v921 = vpop.f32.mrf.mxu0
      %v922 = vpop.f32.mrf.mxu0
      %v923 = vadd.f32 %v819, %v922
      %v924 = vpop.f32.mrf.mxu0
      %925 = vmatprep.mubr.bf16.mxu0 0
      %926 = vmatmul.mubr.bf16.gmra.mxu0 %v785
      %v927 = vpop.f32.mrf.mxu0
      %v928 = vadd.f32 %v819, %v927
      %v929 = vpop.f32.mrf.mxu0
      %v930 = vpop.f32.mrf.mxu0
      %v931 = vadd.f32 %v819, %v930
      %v932 = vpop.f32.mrf.mxu0
      %933 = vmatprep.mubr.bf16.mxu0 0
      %934 = vmatmul.mubr.bf16.gmra.mxu0 %v786
      %v935 = vpop.f32.mrf.mxu0
      %v936 = vadd.f32 %v819, %v935
      %v937 = vpop.f32.mrf.mxu0
      %v938 = vpop.f32.mrf.mxu0
      %v939 = vadd.f32 %v819, %v938
      %v940 = vpop.f32.mrf.mxu0
      %941 = vmatprep.mubr.bf16.mxu0 0
      %942 = vmatmul.mubr.bf16.gmra.mxu0 %v787
      %v943 = vpop.f32.mrf.mxu0
      %v944 = vadd.f32 %v819, %v943
      %v945 = vpop.f32.mrf.mxu0
      %v946 = vpop.f32.mrf.mxu0
      %v947 = vadd.f32 %v819, %v946
      %v948 = vpop.f32.mrf.mxu0
      %949 = vmatprep.mubr.bf16.mxu0 0
      %950 = vmatmul.mubr.bf16.gmra.mxu0 %v788
      %v951 = vpop.f32.mrf.mxu0
      %v952 = vadd.f32 %v819, %v951
      %v953 = vpop.f32.mrf.mxu0
      %v954 = vpop.f32.mrf.mxu0
      %v955 = vadd.f32 %v819, %v954
      %v956 = vpop.f32.mrf.mxu0
      %957 = vmatprep.mubr.bf16.mxu0 0
      %958 = vmatmul.mubr.bf16.gmra.mxu0 %v789
      %v959 = vpop.f32.mrf.mxu0
      %v960 = vadd.f32 %v819, %v959
      %v961 = vpop.f32.mrf.mxu0
      %v962 = vpop.f32.mrf.mxu0
      %v963 = vadd.f32 %v819, %v962
      %v964 = vpop.f32.mrf.mxu0
      %965 = vmatprep.mubr.bf16.mxu0 0
      %966 = vmatmul.mubr.bf16.gmra.mxu0 %v790
      %v967 = vpop.f32.mrf.mxu0
      %v968 = vadd.f32 %v819, %v967
      %v969 = vpop.f32.mrf.mxu0
      %v970 = vpop.f32.mrf.mxu0
      %v971 = vadd.f32 %v819, %v970
      %v972 = vpop.f32.mrf.mxu0
      %973 = vmatprep.mubr.bf16.mxu0 0
      %974 = vmatmul.mubr.bf16.gmra.mxu0 %v791
      %v975 = vpop.f32.mrf.mxu0
      %v976 = vadd.f32 %v819, %v975
      %v977 = vpop.f32.mrf.mxu0
      %v978 = vpop.f32.mrf.mxu0
      %v979 = vadd.f32 %v819, %v978
      %v980 = vpop.f32.mrf.mxu0
      %981 = vmatprep.mubr.bf16.mxu0 0
      %982 = vmatmul.mubr.bf16.gmra.mxu0 %v792
      %v983 = vpop.f32.mrf.mxu0
      %v984 = vadd.f32 %v819, %v983
      %v985 = vpop.f32.mrf.mxu0
      %v986 = vpop.f32.mrf.mxu0
      %v987 = vadd.f32 %v819, %v986
      %v988 = vpop.f32.mrf.mxu0
      %989 = vmatprep.mubr.bf16.mxu0 0
      %990 = vmatmul.mubr.bf16.gmra.mxu0 %v793
      %v991 = vpop.f32.mrf.mxu0
      %v992 = vadd.f32 %v819, %v991
      %v993 = vpop.f32.mrf.mxu0
      %v994 = vpop.f32.mrf.mxu0
      %v995 = vadd.f32 %v819, %v994
      %v996 = vpop.f32.mrf.mxu0
      %997 = vmatprep.mubr.bf16.mxu0 0
      %998 = vmatmul.mubr.bf16.gmra.mxu0 %v794
      %v999 = vpop.f32.mrf.mxu0
      %v1000 = vadd.f32 %v819, %v999
      %v1001 = vpop.f32.mrf.mxu0
      %v1002 = vpop.f32.mrf.mxu0
      %v1003 = vadd.f32 %v819, %v1002
      %v1004 = vpop.f32.mrf.mxu0
      %1005 = vmatprep.mubr.bf16.mxu0 0
      %1006 = vmatmul.mubr.bf16.gmra.mxu0 %v795
      %v1007 = vpop.f32.mrf.mxu0
      %v1008 = vadd.f32 %v819, %v1007
      %v1009 = vpop.f32.mrf.mxu0
      %v1010 = vpop.f32.mrf.mxu0
      %v1011 = vadd.f32 %v819, %v1010
      %v1012 = vpop.f32.mrf.mxu0
      %1013 = vmatprep.mubr.bf16.mxu0 0
      %1014 = vmatmul.mubr.bf16.gmra.mxu0 %v796
      %v1015 = vpop.f32.mrf.mxu0
      %v1016 = vadd.f32 %v819, %v1015
      %v1017 = vpop.f32.mrf.mxu0
      %v1018 = vpop.f32.mrf.mxu0
      %v1019 = vadd.f32 %v819, %v1018
      %v1020 = vpop.f32.mrf.mxu0
      %1021 = vmatprep.mubr.bf16.mxu0 0
      %1022 = vmatmul.mubr.bf16.gmra.mxu0 %v797
      %v1023 = vpop.f32.mrf.mxu0
      %v1024 = vadd.f32 %v819, %v1023
      %v1025 = vpop.f32.mrf.mxu0
      %v1026 = vpop.f32.mrf.mxu0
      %v1027 = vadd.f32 %v819, %v1026
      %v1028 = vpop.f32.mrf.mxu0
      %1029 = vdwg.mxu0
      %v1030 = vmul.f32 %v904, 0.5
      %v1031 = vmul.f32 %v907, 0.5
      %v1032 = vmul.f32 %v912, 0.5
      %v1033 = vmul.f32 %v915, 0.5
      %v1034 = vmul.f32 %v920, 0.5
      %v1035 = vmul.f32 %v923, 0.5
      %v1036 = vmul.f32 %v928, 0.5
      %v1037 = vmul.f32 %v931, 0.5
      %v1038 = vmul.f32 %v936, 0.5
      %v1039 = vmul.f32 %v939, 0.5
      %v1040 = vmul.f32 %v944, 0.5
      %v1041 = vmul.f32 %v947, 0.5
      %v1042 = vmul.f32 %v952, 0.5
      %v1043 = vmul.f32 %v955, 0.5
      %v1044 = vmul.f32 %v960, 0.5
      %v1045 = vmul.f32 %v963, 0.5
      %v1046 = vmul.f32 %v968, 0.5
      %v1047 = vmul.f32 %v971, 0.5
      %v1048 = vmul.f32 %v976, 0.5
      %v1049 = vmul.f32 %v979, 0.5
      %v1050 = vmul.f32 %v984, 0.5
      %v1051 = vmul.f32 %v987, 0.5
      %v1052 = vmul.f32 %v992, 0.5
      %v1053 = vmul.f32 %v995, 0.5
      %v1054 = vmul.f32 %v1000, 0.5
      %v1055 = vmul.f32 %v1003, 0.5
      %v1056 = vmul.f32 %v1008, 0.5
      %v1057 = vmul.f32 %v1011, 0.5
      %v1058 = vmul.f32 %v1016, 0.5
      %v1059 = vmul.f32 %v1019, 0.5
      %v1060 = vmul.f32 %v1024, 0.5
      %v1061 = vmul.f32 %v1027, 0.5
      %v1062 = vmul.f32 %v904, 0.70710677
      %v1063 = vmul.f32 %v907, 0.70710677
      %v1064 = vmul.f32 %v912, 0.70710677
      %v1065 = vmul.f32 %v915, 0.70710677
      %v1066 = vmul.f32 %v920, 0.70710677
      %v1067 = vmul.f32 %v923, 0.70710677
      %v1068 = vmul.f32 %v928, 0.70710677
      %v1069 = vmul.f32 %v931, 0.70710677
      %v1070 = vmul.f32 %v936, 0.70710677
      %v1071 = vmul.f32 %v939, 0.70710677
      %v1072 = vmul.f32 %v944, 0.70710677
      %v1073 = vmul.f32 %v947, 0.70710677
      %v1074 = vmul.f32 %v952, 0.70710677
      %v1075 = vmul.f32 %v955, 0.70710677
      %v1076 = vmul.f32 %v960, 0.70710677
      %v1077 = vmul.f32 %v963, 0.70710677
      %v1078 = vmul.f32 %v968, 0.70710677
      %v1079 = vmul.f32 %v971, 0.70710677
      %v1080 = vmul.f32 %v976, 0.70710677
      %v1081 = vmul.f32 %v979, 0.70710677
      %v1082 = vmul.f32 %v984, 0.70710677
      %v1083 = vmul.f32 %v987, 0.70710677
      %v1084 = vmul.f32 %v992, 0.70710677
      %v1085 = vmul.f32 %v995, 0.70710677
      %v1086 = vmul.f32 %v1000, 0.70710677
      %v1087 = vmul.f32 %v1003, 0.70710677
      %v1088 = vmul.f32 %v1008, 0.70710677
      %v1089 = vmul.f32 %v1011, 0.70710677
      %v1090 = vmul.f32 %v1016, 0.70710677
      %v1091 = vmul.f32 %v1019, 0.70710677
      %v1092 = vmul.f32 %v1024, 0.70710677
      %v1093 = vmul.f32 %v1027, 0.70710677
      %v1094 = vand.u32 2147483647, %v1062
      %v1095 = vand.u32 2147483647, %v1063
      %v1096 = vand.u32 2147483647, %v1064
      %v1097 = vand.u32 2147483647, %v1065
      %v1098 = vand.u32 2147483647, %v1066
      %v1099 = vand.u32 2147483647, %v1067
      %v1100 = vand.u32 2147483647, %v1068
      %v1101 = vand.u32 2147483647, %v1069
      %v1102 = vand.u32 2147483647, %v1070
      %v1103 = vand.u32 2147483647, %v1071
      %v1104 = vand.u32 2147483647, %v1072
      %v1105 = vand.u32 2147483647, %v1073
      %v1106 = vand.u32 2147483647, %v1074
      %v1107 = vand.u32 2147483647, %v1075
      %v1108 = vand.u32 2147483647, %v1076
      %v1109 = vand.u32 2147483647, %v1077
      %v1110 = vand.u32 2147483647, %v1078
      %v1111 = vand.u32 2147483647, %v1079
      %v1112 = vand.u32 2147483647, %v1080
      %v1113 = vand.u32 2147483647, %v1081
      %v1114 = vand.u32 2147483647, %v1082
      %v1115 = vand.u32 2147483647, %v1083
      %v1116 = vand.u32 2147483647, %v1084
      %v1117 = vand.u32 2147483647, %v1085
      %v1118 = vand.u32 2147483647, %v1086
      %v1119 = vand.u32 2147483647, %v1087
      %v1120 = vand.u32 2147483647, %v1088
      %v1121 = vand.u32 2147483647, %v1089
      %v1122 = vand.u32 2147483647, %v1090
      %v1123 = vand.u32 2147483647, %v1091
      %v1124 = vand.u32 2147483647, %v1092
      %v1125 = vand.u32 2147483647, %v1093
      %v1126 = vmul.f32 %v1094, 0.3275911
      %v1127 = vmul.f32 %v1095, 0.3275911
      %v1128 = vmul.f32 %v1096, 0.3275911
      %v1129 = vmul.f32 %v1097, 0.3275911
      %v1130 = vmul.f32 %v1098, 0.3275911
      %v1131 = vmul.f32 %v1099, 0.3275911
      %v1132 = vmul.f32 %v1100, 0.3275911
      %v1133 = vmul.f32 %v1101, 0.3275911
      %v1134 = vmul.f32 %v1102, 0.3275911
      %v1135 = vmul.f32 %v1103, 0.3275911
      %v1136 = vmul.f32 %v1104, 0.3275911
      %v1137 = vmul.f32 %v1105, 0.3275911
      %v1138 = vmul.f32 %v1106, 0.3275911
      %v1139 = vmul.f32 %v1107, 0.3275911
      %v1140 = vmul.f32 %v1108, 0.3275911
      %v1141 = vmul.f32 %v1109, 0.3275911
      %v1142 = vmul.f32 %v1110, 0.3275911
      %v1143 = vmul.f32 %v1111, 0.3275911
      %v1144 = vmul.f32 %v1112, 0.3275911
      %v1145 = vmul.f32 %v1113, 0.3275911
      %v1146 = vmul.f32 %v1114, 0.3275911
      %v1147 = vmul.f32 %v1115, 0.3275911
      %v1148 = vmul.f32 %v1116, 0.3275911
      %v1149 = vmul.f32 %v1117, 0.3275911
      %v1150 = vmul.f32 %v1118, 0.3275911
      %v1151 = vmul.f32 %v1119, 0.3275911
      %v1152 = vmul.f32 %v1120, 0.3275911
      %v1153 = vmul.f32 %v1121, 0.3275911
      %v1154 = vmul.f32 %v1122, 0.3275911
      %v1155 = vmul.f32 %v1123, 0.3275911
      %v1156 = vmul.f32 %v1124, 0.3275911
      %v1157 = vmul.f32 %v1125, 0.3275911
      %v1158 = vadd.f32 %v1126, 1.0
      %v1159 = vadd.f32 %v1127, 1.0
      %v1160 = vadd.f32 %v1128, 1.0
      %v1161 = vadd.f32 %v1129, 1.0
      %v1162 = vadd.f32 %v1130, 1.0
      %v1163 = vadd.f32 %v1131, 1.0
      %v1164 = vadd.f32 %v1132, 1.0
      %v1165 = vadd.f32 %v1133, 1.0
      %v1166 = vadd.f32 %v1134, 1.0
      %v1167 = vadd.f32 %v1135, 1.0
      %v1168 = vadd.f32 %v1136, 1.0
      %v1169 = vadd.f32 %v1137, 1.0
      %v1170 = vadd.f32 %v1138, 1.0
      %v1171 = vadd.f32 %v1139, 1.0
      %v1172 = vadd.f32 %v1140, 1.0
      %v1173 = vadd.f32 %v1141, 1.0
      %v1174 = vadd.f32 %v1142, 1.0
      %v1175 = vadd.f32 %v1143, 1.0
      %v1176 = vadd.f32 %v1144, 1.0
      %v1177 = vadd.f32 %v1145, 1.0
      %v1178 = vadd.f32 %v1146, 1.0
      %v1179 = vadd.f32 %v1147, 1.0
      %v1180 = vadd.f32 %v1148, 1.0
      %v1181 = vadd.f32 %v1149, 1.0
      %v1182 = vadd.f32 %v1150, 1.0
      %v1183 = vadd.f32 %v1151, 1.0
      %v1184 = vadd.f32 %v1152, 1.0
      %v1185 = vadd.f32 %v1153, 1.0
      %v1186 = vadd.f32 %v1154, 1.0
      %v1187 = vadd.f32 %v1155, 1.0
      %v1188 = vadd.f32 %v1156, 1.0
      %v1189 = vadd.f32 %v1157, 1.0
      %v1190 = vrcp.pop %v1158
      %v1191 = vmul.f32 1.0, %v1190
      %v1192 = vrcp.pop %v1159
      %v1193 = vmul.f32 1.0, %v1192
      %v1194 = vrcp.pop %v1160
      %v1195 = vmul.f32 1.0, %v1194
      %v1196 = vrcp.pop %v1161
      %v1197 = vmul.f32 1.0, %v1196
      %v1198 = vrcp.pop %v1162
      %v1199 = vmul.f32 1.0, %v1198
      %v1200 = vrcp.pop %v1163
      %v1201 = vmul.f32 1.0, %v1200
      %v1202 = vrcp.pop %v1164
      %v1203 = vmul.f32 1.0, %v1202
      %v1204 = vrcp.pop %v1165
      %v1205 = vmul.f32 1.0, %v1204
      %v1206 = vrcp.pop %v1166
      %v1207 = vmul.f32 1.0, %v1206
      %v1208 = vrcp.pop %v1167
      %v1209 = vmul.f32 1.0, %v1208
      %v1210 = vrcp.pop %v1168
      %v1211 = vmul.f32 1.0, %v1210
      %v1212 = vrcp.pop %v1169
      %v1213 = vmul.f32 1.0, %v1212
      %v1214 = vrcp.pop %v1170
      %v1215 = vmul.f32 1.0, %v1214
      %v1216 = vrcp.pop %v1171
      %v1217 = vmul.f32 1.0, %v1216
      %v1218 = vrcp.pop %v1172
      %v1219 = vmul.f32 1.0, %v1218
      %v1220 = vrcp.pop %v1173
      %v1221 = vmul.f32 1.0, %v1220
      %v1222 = vrcp.pop %v1174
      %v1223 = vmul.f32 1.0, %v1222
      %v1224 = vrcp.pop %v1175
      %v1225 = vmul.f32 1.0, %v1224
      %v1226 = vrcp.pop %v1176
      %v1227 = vmul.f32 1.0, %v1226
      %v1228 = vrcp.pop %v1177
      %v1229 = vmul.f32 1.0, %v1228
      %v1230 = vrcp.pop %v1178
      %v1231 = vmul.f32 1.0, %v1230
      %v1232 = vrcp.pop %v1179
      %v1233 = vmul.f32 1.0, %v1232
      %v1234 = vrcp.pop %v1180
      %v1235 = vmul.f32 1.0, %v1234
      %v1236 = vrcp.pop %v1181
      %v1237 = vmul.f32 1.0, %v1236
      %v1238 = vrcp.pop %v1182
      %v1239 = vmul.f32 1.0, %v1238
      %v1240 = vrcp.pop %v1183
      %v1241 = vmul.f32 1.0, %v1240
      %v1242 = vrcp.pop %v1184
      %v1243 = vmul.f32 1.0, %v1242
      %v1244 = vrcp.pop %v1185
      %v1245 = vmul.f32 1.0, %v1244
      %v1246 = vrcp.pop %v1186
      %v1247 = vmul.f32 1.0, %v1246
      %v1248 = vrcp.pop %v1187
      %v1249 = vmul.f32 1.0, %v1248
      %v1250 = vrcp.pop %v1188
      %v1251 = vmul.f32 1.0, %v1250
      %v1252 = vrcp.pop %v1189
      %v1253 = vmul.f32 1.0, %v1252
      %v1254 = vmul.f32 %v1191, 1.0614054
      %v1255 = vmul.f32 %v1193, 1.0614054
      %v1256 = vmul.f32 %v1195, 1.0614054
      %v1257 = vmul.f32 %v1197, 1.0614054
      %v1258 = vmul.f32 %v1199, 1.0614054
      %v1259 = vmul.f32 %v1201, 1.0614054
      %v1260 = vmul.f32 %v1203, 1.0614054
      %v1261 = vmul.f32 %v1205, 1.0614054
      %v1262 = vmul.f32 %v1207, 1.0614054
      %v1263 = vmul.f32 %v1209, 1.0614054
      %v1264 = vmul.f32 %v1211, 1.0614054
      %v1265 = vmul.f32 %v1213, 1.0614054
      %v1266 = vmul.f32 %v1215, 1.0614054
      %v1267 = vmul.f32 %v1217, 1.0614054
      %v1268 = vmul.f32 %v1219, 1.0614054
      %v1269 = vmul.f32 %v1221, 1.0614054
      %v1270 = vmul.f32 %v1223, 1.0614054
      %v1271 = vmul.f32 %v1225, 1.0614054
      %v1272 = vmul.f32 %v1227, 1.0614054
      %v1273 = vmul.f32 %v1229, 1.0614054
      %v1274 = vmul.f32 %v1231, 1.0614054
      %v1275 = vmul.f32 %v1233, 1.0614054
      %v1276 = vmul.f32 %v1235, 1.0614054
      %v1277 = vmul.f32 %v1237, 1.0614054
      %v1278 = vmul.f32 %v1239, 1.0614054
      %v1279 = vmul.f32 %v1241, 1.0614054
      %v1280 = vmul.f32 %v1243, 1.0614054
      %v1281 = vmul.f32 %v1245, 1.0614054
      %v1282 = vmul.f32 %v1247, 1.0614054
      %v1283 = vmul.f32 %v1249, 1.0614054
      %v1284 = vmul.f32 %v1251, 1.0614054
      %v1285 = vmul.f32 %v1253, 1.0614054
      %v1286 = vadd.f32 %v1254, -1.4531521
      %v1287 = vadd.f32 %v1255, -1.4531521
      %v1288 = vadd.f32 %v1256, -1.4531521
      %v1289 = vadd.f32 %v1257, -1.4531521
      %v1290 = vadd.f32 %v1258, -1.4531521
      %v1291 = vadd.f32 %v1259, -1.4531521
      %v1292 = vadd.f32 %v1260, -1.4531521
      %v1293 = vadd.f32 %v1261, -1.4531521
      %v1294 = vadd.f32 %v1262, -1.4531521
      %v1295 = vadd.f32 %v1263, -1.4531521
      %v1296 = vadd.f32 %v1264, -1.4531521
      %v1297 = vadd.f32 %v1265, -1.4531521
      %v1298 = vadd.f32 %v1266, -1.4531521
      %v1299 = vadd.f32 %v1267, -1.4531521
      %v1300 = vadd.f32 %v1268, -1.4531521
      %v1301 = vadd.f32 %v1269, -1.4531521
      %v1302 = vadd.f32 %v1270, -1.4531521
      %v1303 = vadd.f32 %v1271, -1.4531521
      %v1304 = vadd.f32 %v1272, -1.4531521
      %v1305 = vadd.f32 %v1273, -1.4531521
      %v1306 = vadd.f32 %v1274, -1.4531521
      %v1307 = vadd.f32 %v1275, -1.4531521
      %v1308 = vadd.f32 %v1276, -1.4531521
      %v1309 = vadd.f32 %v1277, -1.4531521
      %v1310 = vadd.f32 %v1278, -1.4531521
      %v1311 = vadd.f32 %v1279, -1.4531521
      %v1312 = vadd.f32 %v1280, -1.4531521
      %v1313 = vadd.f32 %v1281, -1.4531521
      %v1314 = vadd.f32 %v1282, -1.4531521
      %v1315 = vadd.f32 %v1283, -1.4531521
      %v1316 = vadd.f32 %v1284, -1.4531521
      %v1317 = vadd.f32 %v1285, -1.4531521
      %v1318 = vmul.f32 %v1286, %v1191
      %v1319 = vmul.f32 %v1287, %v1193
      %v1320 = vmul.f32 %v1288, %v1195
      %v1321 = vmul.f32 %v1289, %v1197
      %v1322 = vmul.f32 %v1290, %v1199
      %v1323 = vmul.f32 %v1291, %v1201
      %v1324 = vmul.f32 %v1292, %v1203
      %v1325 = vmul.f32 %v1293, %v1205
      %v1326 = vmul.f32 %v1294, %v1207
      %v1327 = vmul.f32 %v1295, %v1209
      %v1328 = vmul.f32 %v1296, %v1211
      %v1329 = vmul.f32 %v1297, %v1213
      %v1330 = vmul.f32 %v1298, %v1215
      %v1331 = vmul.f32 %v1299, %v1217
      %v1332 = vmul.f32 %v1300, %v1219
      %v1333 = vmul.f32 %v1301, %v1221
      %v1334 = vmul.f32 %v1302, %v1223
      %v1335 = vmul.f32 %v1303, %v1225
      %v1336 = vmul.f32 %v1304, %v1227
      %v1337 = vmul.f32 %v1305, %v1229
      %v1338 = vmul.f32 %v1306, %v1231
      %v1339 = vmul.f32 %v1307, %v1233
      %v1340 = vmul.f32 %v1308, %v1235
      %v1341 = vmul.f32 %v1309, %v1237
      %v1342 = vmul.f32 %v1310, %v1239
      %v1343 = vmul.f32 %v1311, %v1241
      %v1344 = vmul.f32 %v1312, %v1243
      %v1345 = vmul.f32 %v1313, %v1245
      %v1346 = vmul.f32 %v1314, %v1247
      %v1347 = vmul.f32 %v1315, %v1249
      %v1348 = vmul.f32 %v1316, %v1251
      %v1349 = vmul.f32 %v1317, %v1253
      %v1350 = vadd.f32 %v1318, 1.4214138
      %v1351 = vadd.f32 %v1319, 1.4214138
      %v1352 = vadd.f32 %v1320, 1.4214138
      %v1353 = vadd.f32 %v1321, 1.4214138
      %v1354 = vadd.f32 %v1322, 1.4214138
      %v1355 = vadd.f32 %v1323, 1.4214138
      %v1356 = vadd.f32 %v1324, 1.4214138
      %v1357 = vadd.f32 %v1325, 1.4214138
      %v1358 = vadd.f32 %v1326, 1.4214138
      %v1359 = vadd.f32 %v1327, 1.4214138
      %v1360 = vadd.f32 %v1328, 1.4214138
      %v1361 = vadd.f32 %v1329, 1.4214138
      %v1362 = vadd.f32 %v1330, 1.4214138
      %v1363 = vadd.f32 %v1331, 1.4214138
      %v1364 = vadd.f32 %v1332, 1.4214138
      %v1365 = vadd.f32 %v1333, 1.4214138
      %v1366 = vadd.f32 %v1334, 1.4214138
      %v1367 = vadd.f32 %v1335, 1.4214138
      %v1368 = vadd.f32 %v1336, 1.4214138
      %v1369 = vadd.f32 %v1337, 1.4214138
      %v1370 = vadd.f32 %v1338, 1.4214138
      %v1371 = vadd.f32 %v1339, 1.4214138
      %v1372 = vadd.f32 %v1340, 1.4214138
      %v1373 = vadd.f32 %v1341, 1.4214138
      %v1374 = vadd.f32 %v1342, 1.4214138
      %v1375 = vadd.f32 %v1343, 1.4214138
      %v1376 = vadd.f32 %v1344, 1.4214138
      %v1377 = vadd.f32 %v1345, 1.4214138
      %v1378 = vadd.f32 %v1346, 1.4214138
      %v1379 = vadd.f32 %v1347, 1.4214138
      %v1380 = vadd.f32 %v1348, 1.4214138
      %v1381 = vadd.f32 %v1349, 1.4214138
      %v1382 = vmul.f32 %v1350, %v1191
      %v1383 = vmul.f32 %v1351, %v1193
      %v1384 = vmul.f32 %v1352, %v1195
      %v1385 = vmul.f32 %v1353, %v1197
      %v1386 = vmul.f32 %v1354, %v1199
      %v1387 = vmul.f32 %v1355, %v1201
      %v1388 = vmul.f32 %v1356, %v1203
      %v1389 = vmul.f32 %v1357, %v1205
      %v1390 = vmul.f32 %v1358, %v1207
      %v1391 = vmul.f32 %v1359, %v1209
      %v1392 = vmul.f32 %v1360, %v1211
      %v1393 = vmul.f32 %v1361, %v1213
      %v1394 = vmul.f32 %v1362, %v1215
      %v1395 = vmul.f32 %v1363, %v1217
      %v1396 = vmul.f32 %v1364, %v1219
      %v1397 = vmul.f32 %v1365, %v1221
      %v1398 = vmul.f32 %v1366, %v1223
      %v1399 = vmul.f32 %v1367, %v1225
      %v1400 = vmul.f32 %v1368, %v1227
      %v1401 = vmul.f32 %v1369, %v1229
      %v1402 = vmul.f32 %v1370, %v1231
      %v1403 = vmul.f32 %v1371, %v1233
      %v1404 = vmul.f32 %v1372, %v1235
      %v1405 = vmul.f32 %v1373, %v1237
      %v1406 = vmul.f32 %v1374, %v1239
      %v1407 = vmul.f32 %v1375, %v1241
      %v1408 = vmul.f32 %v1376, %v1243
      %v1409 = vmul.f32 %v1377, %v1245
      %v1410 = vmul.f32 %v1378, %v1247
      %v1411 = vmul.f32 %v1379, %v1249
      %v1412 = vmul.f32 %v1380, %v1251
      %v1413 = vmul.f32 %v1381, %v1253
      %v1414 = vadd.f32 %v1382, -0.28449672
      %v1415 = vadd.f32 %v1383, -0.28449672
      %v1416 = vadd.f32 %v1384, -0.28449672
      %v1417 = vadd.f32 %v1385, -0.28449672
      %v1418 = vadd.f32 %v1386, -0.28449672
      %v1419 = vadd.f32 %v1387, -0.28449672
      %v1420 = vadd.f32 %v1388, -0.28449672
      %v1421 = vadd.f32 %v1389, -0.28449672
      %v1422 = vadd.f32 %v1390, -0.28449672
      %v1423 = vadd.f32 %v1391, -0.28449672
      %v1424 = vadd.f32 %v1392, -0.28449672
      %v1425 = vadd.f32 %v1393, -0.28449672
      %v1426 = vadd.f32 %v1394, -0.28449672
      %v1427 = vadd.f32 %v1395, -0.28449672
      %v1428 = vadd.f32 %v1396, -0.28449672
      %v1429 = vadd.f32 %v1397, -0.28449672
      %v1430 = vadd.f32 %v1398, -0.28449672
      %v1431 = vadd.f32 %v1399, -0.28449672
      %v1432 = vadd.f32 %v1400, -0.28449672
      %v1433 = vadd.f32 %v1401, -0.28449672
      %v1434 = vadd.f32 %v1402, -0.28449672
      %v1435 = vadd.f32 %v1403, -0.28449672
      %v1436 = vadd.f32 %v1404, -0.28449672
      %v1437 = vadd.f32 %v1405, -0.28449672
      %v1438 = vadd.f32 %v1406, -0.28449672
      %v1439 = vadd.f32 %v1407, -0.28449672
      %v1440 = vadd.f32 %v1408, -0.28449672
      %v1441 = vadd.f32 %v1409, -0.28449672
      %v1442 = vadd.f32 %v1410, -0.28449672
      %v1443 = vadd.f32 %v1411, -0.28449672
      %v1444 = vadd.f32 %v1412, -0.28449672
      %v1445 = vadd.f32 %v1413, -0.28449672
      %v1446 = vmul.f32 %v1414, %v1191
      %v1447 = vmul.f32 %v1415, %v1193
      %v1448 = vmul.f32 %v1416, %v1195
      %v1449 = vmul.f32 %v1417, %v1197
      %v1450 = vmul.f32 %v1418, %v1199
      %v1451 = vmul.f32 %v1419, %v1201
      %v1452 = vmul.f32 %v1420, %v1203
      %v1453 = vmul.f32 %v1421, %v1205
      %v1454 = vmul.f32 %v1422, %v1207
      %v1455 = vmul.f32 %v1423, %v1209
      %v1456 = vmul.f32 %v1424, %v1211
      %v1457 = vmul.f32 %v1425, %v1213
      %v1458 = vmul.f32 %v1426, %v1215
      %v1459 = vmul.f32 %v1427, %v1217
      %v1460 = vmul.f32 %v1428, %v1219
      %v1461 = vmul.f32 %v1429, %v1221
      %v1462 = vmul.f32 %v1430, %v1223
      %v1463 = vmul.f32 %v1431, %v1225
      %v1464 = vmul.f32 %v1432, %v1227
      %v1465 = vmul.f32 %v1433, %v1229
      %v1466 = vmul.f32 %v1434, %v1231
      %v1467 = vmul.f32 %v1435, %v1233
      %v1468 = vmul.f32 %v1436, %v1235
      %v1469 = vmul.f32 %v1437, %v1237
      %v1470 = vmul.f32 %v1438, %v1239
      %v1471 = vmul.f32 %v1439, %v1241
      %v1472 = vmul.f32 %v1440, %v1243
      %v1473 = vmul.f32 %v1441, %v1245
      %v1474 = vmul.f32 %v1442, %v1247
      %v1475 = vmul.f32 %v1443, %v1249
      %v1476 = vmul.f32 %v1444, %v1251
      %v1477 = vmul.f32 %v1445, %v1253
      %v1478 = vadd.f32 %v1446, 0.2548296
      %v1479 = vadd.f32 %v1447, 0.2548296
      %v1480 = vadd.f32 %v1448, 0.2548296
      %v1481 = vadd.f32 %v1449, 0.2548296
      %v1482 = vadd.f32 %v1450, 0.2548296
      %v1483 = vadd.f32 %v1451, 0.2548296
      %v1484 = vadd.f32 %v1452, 0.2548296
      %v1485 = vadd.f32 %v1453, 0.2548296
      %v1486 = vadd.f32 %v1454, 0.2548296
      %v1487 = vadd.f32 %v1455, 0.2548296
      %v1488 = vadd.f32 %v1456, 0.2548296
      %v1489 = vadd.f32 %v1457, 0.2548296
      %v1490 = vadd.f32 %v1458, 0.2548296
      %v1491 = vadd.f32 %v1459, 0.2548296
      %v1492 = vadd.f32 %v1460, 0.2548296
      %v1493 = vadd.f32 %v1461, 0.2548296
      %v1494 = vadd.f32 %v1462, 0.2548296
      %v1495 = vadd.f32 %v1463, 0.2548296
      %v1496 = vadd.f32 %v1464, 0.2548296
      %v1497 = vadd.f32 %v1465, 0.2548296
      %v1498 = vadd.f32 %v1466, 0.2548296
      %v1499 = vadd.f32 %v1467, 0.2548296
      %v1500 = vadd.f32 %v1468, 0.2548296
      %v1501 = vadd.f32 %v1469, 0.2548296
      %v1502 = vadd.f32 %v1470, 0.2548296
      %v1503 = vadd.f32 %v1471, 0.2548296
      %v1504 = vadd.f32 %v1472, 0.2548296
      %v1505 = vadd.f32 %v1473, 0.2548296
      %v1506 = vadd.f32 %v1474, 0.2548296
      %v1507 = vadd.f32 %v1475, 0.2548296
      %v1508 = vadd.f32 %v1476, 0.2548296
      %v1509 = vadd.f32 %v1477, 0.2548296
      %v1510 = vmul.f32 %v1478, %v1191
      %v1511 = vmul.f32 %v1479, %v1193
      %v1512 = vmul.f32 %v1480, %v1195
      %v1513 = vmul.f32 %v1481, %v1197
      %v1514 = vmul.f32 %v1482, %v1199
      %v1515 = vmul.f32 %v1483, %v1201
      %v1516 = vmul.f32 %v1484, %v1203
      %v1517 = vmul.f32 %v1485, %v1205
      %v1518 = vmul.f32 %v1486, %v1207
      %v1519 = vmul.f32 %v1487, %v1209
      %v1520 = vmul.f32 %v1488, %v1211
      %v1521 = vmul.f32 %v1489, %v1213
      %v1522 = vmul.f32 %v1490, %v1215
      %v1523 = vmul.f32 %v1491, %v1217
      %v1524 = vmul.f32 %v1492, %v1219
      %v1525 = vmul.f32 %v1493, %v1221
      %v1526 = vmul.f32 %v1494, %v1223
      %v1527 = vmul.f32 %v1495, %v1225
      %v1528 = vmul.f32 %v1496, %v1227
      %v1529 = vmul.f32 %v1497, %v1229
      %v1530 = vmul.f32 %v1498, %v1231
      %v1531 = vmul.f32 %v1499, %v1233
      %v1532 = vmul.f32 %v1500, %v1235
      %v1533 = vmul.f32 %v1501, %v1237
      %v1534 = vmul.f32 %v1502, %v1239
      %v1535 = vmul.f32 %v1503, %v1241
      %v1536 = vmul.f32 %v1504, %v1243
      %v1537 = vmul.f32 %v1505, %v1245
      %v1538 = vmul.f32 %v1506, %v1247
      %v1539 = vmul.f32 %v1507, %v1249
      %v1540 = vmul.f32 %v1508, %v1251
      %v1541 = vmul.f32 %v1509, %v1253
      %v1542 = vmul.f32 %v1094, %v1094
      %v1543 = vmul.f32 %v1095, %v1095
      %v1544 = vmul.f32 %v1096, %v1096
      %v1545 = vmul.f32 %v1097, %v1097
      %v1546 = vmul.f32 %v1098, %v1098
      %v1547 = vmul.f32 %v1099, %v1099
      %v1548 = vmul.f32 %v1100, %v1100
      %v1549 = vmul.f32 %v1101, %v1101
      %v1550 = vmul.f32 %v1102, %v1102
      %v1551 = vmul.f32 %v1103, %v1103
      %v1552 = vmul.f32 %v1104, %v1104
      %v1553 = vmul.f32 %v1105, %v1105
      %v1554 = vmul.f32 %v1106, %v1106
      %v1555 = vmul.f32 %v1107, %v1107
      %v1556 = vmul.f32 %v1108, %v1108
      %v1557 = vmul.f32 %v1109, %v1109
      %v1558 = vmul.f32 %v1110, %v1110
      %v1559 = vmul.f32 %v1111, %v1111
      %v1560 = vmul.f32 %v1112, %v1112
      %v1561 = vmul.f32 %v1113, %v1113
      %v1562 = vmul.f32 %v1114, %v1114
      %v1563 = vmul.f32 %v1115, %v1115
      %v1564 = vmul.f32 %v1116, %v1116
      %v1565 = vmul.f32 %v1117, %v1117
      %v1566 = vmul.f32 %v1118, %v1118
      %v1567 = vmul.f32 %v1119, %v1119
      %v1568 = vmul.f32 %v1120, %v1120
      %v1569 = vmul.f32 %v1121, %v1121
      %v1570 = vmul.f32 %v1122, %v1122
      %v1571 = vmul.f32 %v1123, %v1123
      %v1572 = vmul.f32 %v1124, %v1124
      %v1573 = vmul.f32 %v1125, %v1125
      %v1574 = vsub.f32 0.0, %v1542
      %v1575 = vsub.f32 0.0, %v1543
      %v1576 = vsub.f32 0.0, %v1544
      %v1577 = vsub.f32 0.0, %v1545
      %v1578 = vsub.f32 0.0, %v1546
      %v1579 = vsub.f32 0.0, %v1547
      %v1580 = vsub.f32 0.0, %v1548
      %v1581 = vsub.f32 0.0, %v1549
      %v1582 = vsub.f32 0.0, %v1550
      %v1583 = vsub.f32 0.0, %v1551
      %v1584 = vsub.f32 0.0, %v1552
      %v1585 = vsub.f32 0.0, %v1553
      %v1586 = vsub.f32 0.0, %v1554
      %v1587 = vsub.f32 0.0, %v1555
      %v1588 = vsub.f32 0.0, %v1556
      %v1589 = vsub.f32 0.0, %v1557
      %v1590 = vsub.f32 0.0, %v1558
      %v1591 = vsub.f32 0.0, %v1559
      %v1592 = vsub.f32 0.0, %v1560
      %v1593 = vsub.f32 0.0, %v1561
      %v1594 = vsub.f32 0.0, %v1562
      %v1595 = vsub.f32 0.0, %v1563
      %v1596 = vsub.f32 0.0, %v1564
      %v1597 = vsub.f32 0.0, %v1565
      %v1598 = vsub.f32 0.0, %v1566
      %v1599 = vsub.f32 0.0, %v1567
      %v1600 = vsub.f32 0.0, %v1568
      %v1601 = vsub.f32 0.0, %v1569
      %v1602 = vsub.f32 0.0, %v1570
      %v1603 = vsub.f32 0.0, %v1571
      %v1604 = vsub.f32 0.0, %v1572
      %v1605 = vsub.f32 0.0, %v1573
      %v1606 = vmul.f32 %v1574, 1.442695
      %v1607 = vpow.pop %v1606
      %v1608 = vmul.f32 %v1575, 1.442695
      %v1609 = vpow.pop %v1608
      %v1610 = vmul.f32 %v1576, 1.442695
      %v1611 = vpow.pop %v1610
      %v1612 = vmul.f32 %v1577, 1.442695
      %v1613 = vpow.pop %v1612
      %v1614 = vmul.f32 %v1578, 1.442695
      %v1615 = vpow.pop %v1614
      %v1616 = vmul.f32 %v1579, 1.442695
      %v1617 = vpow.pop %v1616
      %v1618 = vmul.f32 %v1580, 1.442695
      %v1619 = vpow.pop %v1618
      %v1620 = vmul.f32 %v1581, 1.442695
      %v1621 = vpow.pop %v1620
      %v1622 = vmul.f32 %v1582, 1.442695
      %v1623 = vpow.pop %v1622
      %v1624 = vmul.f32 %v1583, 1.442695
      %v1625 = vpow.pop %v1624
      %v1626 = vmul.f32 %v1584, 1.442695
      %v1627 = vpow.pop %v1626
      %v1628 = vmul.f32 %v1585, 1.442695
      %v1629 = vpow.pop %v1628
      %v1630 = vmul.f32 %v1586, 1.442695
      %v1631 = vpow.pop %v1630
      %v1632 = vmul.f32 %v1587, 1.442695
      %v1633 = vpow.pop %v1632
      %v1634 = vmul.f32 %v1588, 1.442695
      %v1635 = vpow.pop %v1634
      %v1636 = vmul.f32 %v1589, 1.442695
      %v1637 = vpow.pop %v1636
      %v1638 = vmul.f32 %v1590, 1.442695
      %v1639 = vpow.pop %v1638
      %v1640 = vmul.f32 %v1591, 1.442695
      %v1641 = vpow.pop %v1640
      %v1642 = vmul.f32 %v1592, 1.442695
      %v1643 = vpow.pop %v1642
      %v1644 = vmul.f32 %v1593, 1.442695
      %v1645 = vpow.pop %v1644
      %v1646 = vmul.f32 %v1594, 1.442695
      %v1647 = vpow.pop %v1646
      %v1648 = vmul.f32 %v1595, 1.442695
      %v1649 = vpow.pop %v1648
      %v1650 = vmul.f32 %v1596, 1.442695
      %v1651 = vpow.pop %v1650
      %v1652 = vmul.f32 %v1597, 1.442695
      %v1653 = vpow.pop %v1652
      %v1654 = vmul.f32 %v1598, 1.442695
      %v1655 = vpow.pop %v1654
      %v1656 = vmul.f32 %v1599, 1.442695
      %v1657 = vpow.pop %v1656
      %v1658 = vmul.f32 %v1600, 1.442695
      %v1659 = vpow.pop %v1658
      %v1660 = vmul.f32 %v1601, 1.442695
      %v1661 = vpow.pop %v1660
      %v1662 = vmul.f32 %v1602, 1.442695
      %v1663 = vpow.pop %v1662
      %v1664 = vmul.f32 %v1603, 1.442695
      %v1665 = vpow.pop %v1664
      %v1666 = vmul.f32 %v1604, 1.442695
      %v1667 = vpow.pop %v1666
      %v1668 = vmul.f32 %v1605, 1.442695
      %v1669 = vpow.pop %v1668
      %v1670 = vmul.f32 %v1510, %v1607
      %v1671 = vmul.f32 %v1511, %v1609
      %v1672 = vmul.f32 %v1512, %v1611
      %v1673 = vmul.f32 %v1513, %v1613
      %v1674 = vmul.f32 %v1514, %v1615
      %v1675 = vmul.f32 %v1515, %v1617
      %v1676 = vmul.f32 %v1516, %v1619
      %v1677 = vmul.f32 %v1517, %v1621
      %v1678 = vmul.f32 %v1518, %v1623
      %v1679 = vmul.f32 %v1519, %v1625
      %v1680 = vmul.f32 %v1520, %v1627
      %v1681 = vmul.f32 %v1521, %v1629
      %v1682 = vmul.f32 %v1522, %v1631
      %v1683 = vmul.f32 %v1523, %v1633
      %v1684 = vmul.f32 %v1524, %v1635
      %v1685 = vmul.f32 %v1525, %v1637
      %v1686 = vmul.f32 %v1526, %v1639
      %v1687 = vmul.f32 %v1527, %v1641
      %v1688 = vmul.f32 %v1528, %v1643
      %v1689 = vmul.f32 %v1529, %v1645
      %v1690 = vmul.f32 %v1530, %v1647
      %v1691 = vmul.f32 %v1531, %v1649
      %v1692 = vmul.f32 %v1532, %v1651
      %v1693 = vmul.f32 %v1533, %v1653
      %v1694 = vmul.f32 %v1534, %v1655
      %v1695 = vmul.f32 %v1535, %v1657
      %v1696 = vmul.f32 %v1536, %v1659
      %v1697 = vmul.f32 %v1537, %v1661
      %v1698 = vmul.f32 %v1538, %v1663
      %v1699 = vmul.f32 %v1539, %v1665
      %v1700 = vmul.f32 %v1540, %v1667
      %v1701 = vmul.f32 %v1541, %v1669
      %v1702 = vsub.f32 1.0, %v1670
      %v1703 = vsub.f32 1.0, %v1671
      %v1704 = vsub.f32 1.0, %v1672
      %v1705 = vsub.f32 1.0, %v1673
      %v1706 = vsub.f32 1.0, %v1674
      %v1707 = vsub.f32 1.0, %v1675
      %v1708 = vsub.f32 1.0, %v1676
      %v1709 = vsub.f32 1.0, %v1677
      %v1710 = vsub.f32 1.0, %v1678
      %v1711 = vsub.f32 1.0, %v1679
      %v1712 = vsub.f32 1.0, %v1680
      %v1713 = vsub.f32 1.0, %v1681
      %v1714 = vsub.f32 1.0, %v1682
      %v1715 = vsub.f32 1.0, %v1683
      %v1716 = vsub.f32 1.0, %v1684
      %v1717 = vsub.f32 1.0, %v1685
      %v1718 = vsub.f32 1.0, %v1686
      %v1719 = vsub.f32 1.0, %v1687
      %v1720 = vsub.f32 1.0, %v1688
      %v1721 = vsub.f32 1.0, %v1689
      %v1722 = vsub.f32 1.0, %v1690
      %v1723 = vsub.f32 1.0, %v1691
      %v1724 = vsub.f32 1.0, %v1692
      %v1725 = vsub.f32 1.0, %v1693
      %v1726 = vsub.f32 1.0, %v1694
      %v1727 = vsub.f32 1.0, %v1695
      %v1728 = vsub.f32 1.0, %v1696
      %v1729 = vsub.f32 1.0, %v1697
      %v1730 = vsub.f32 1.0, %v1698
      %v1731 = vsub.f32 1.0, %v1699
      %v1732 = vsub.f32 1.0, %v1700
      %v1733 = vsub.f32 1.0, %v1701
      %vm1734 = vcmp.lt.f32.partialorder %v1062, 0.0
      %vm1735 = vcmp.lt.f32.partialorder %v1063, 0.0
      %vm1736 = vcmp.lt.f32.partialorder %v1064, 0.0
      %vm1737 = vcmp.lt.f32.partialorder %v1065, 0.0
      %vm1738 = vcmp.lt.f32.partialorder %v1066, 0.0
      %vm1739 = vcmp.lt.f32.partialorder %v1067, 0.0
      %vm1740 = vcmp.lt.f32.partialorder %v1068, 0.0
      %vm1741 = vcmp.lt.f32.partialorder %v1069, 0.0
      %vm1742 = vcmp.lt.f32.partialorder %v1070, 0.0
      %vm1743 = vcmp.lt.f32.partialorder %v1071, 0.0
      %vm1744 = vcmp.lt.f32.partialorder %v1072, 0.0
      %vm1745 = vcmp.lt.f32.partialorder %v1073, 0.0
      %vm1746 = vcmp.lt.f32.partialorder %v1074, 0.0
      %vm1747 = vcmp.lt.f32.partialorder %v1075, 0.0
      %vm1748 = vcmp.lt.f32.partialorder %v1076, 0.0
      %vm1749 = vcmp.lt.f32.partialorder %v1077, 0.0
      %vm1750 = vcmp.lt.f32.partialorder %v1078, 0.0
      %vm1751 = vcmp.lt.f32.partialorder %v1079, 0.0
      %vm1752 = vcmp.lt.f32.partialorder %v1080, 0.0
      %vm1753 = vcmp.lt.f32.partialorder %v1081, 0.0
      %vm1754 = vcmp.lt.f32.partialorder %v1082, 0.0
      %vm1755 = vcmp.lt.f32.partialorder %v1083, 0.0
      %vm1756 = vcmp.lt.f32.partialorder %v1084, 0.0
      %vm1757 = vcmp.lt.f32.partialorder %v1085, 0.0
      %vm1758 = vcmp.lt.f32.partialorder %v1086, 0.0
      %vm1759 = vcmp.lt.f32.partialorder %v1087, 0.0
      %vm1760 = vcmp.lt.f32.partialorder %v1088, 0.0
      %vm1761 = vcmp.lt.f32.partialorder %v1089, 0.0
      %vm1762 = vcmp.lt.f32.partialorder %v1090, 0.0
      %vm1763 = vcmp.lt.f32.partialorder %v1091, 0.0
      %vm1764 = vcmp.lt.f32.partialorder %v1092, 0.0
      %vm1765 = vcmp.lt.f32.partialorder %v1093, 0.0
      %v1766 = vsub.f32 0.0, %v1702
      %v1767 = vsub.f32 0.0, %v1703
      %v1768 = vsub.f32 0.0, %v1704
      %v1769 = vsub.f32 0.0, %v1705
      %v1770 = vsub.f32 0.0, %v1706
      %v1771 = vsub.f32 0.0, %v1707
      %v1772 = vsub.f32 0.0, %v1708
      %v1773 = vsub.f32 0.0, %v1709
      %v1774 = vsub.f32 0.0, %v1710
      %v1775 = vsub.f32 0.0, %v1711
      %v1776 = vsub.f32 0.0, %v1712
      %v1777 = vsub.f32 0.0, %v1713
      %v1778 = vsub.f32 0.0, %v1714
      %v1779 = vsub.f32 0.0, %v1715
      %v1780 = vsub.f32 0.0, %v1716
      %v1781 = vsub.f32 0.0, %v1717
      %v1782 = vsub.f32 0.0, %v1718
      %v1783 = vsub.f32 0.0, %v1719
      %v1784 = vsub.f32 0.0, %v1720
      %v1785 = vsub.f32 0.0, %v1721
      %v1786 = vsub.f32 0.0, %v1722
      %v1787 = vsub.f32 0.0, %v1723
      %v1788 = vsub.f32 0.0, %v1724
      %v1789 = vsub.f32 0.0, %v1725
      %v1790 = vsub.f32 0.0, %v1726
      %v1791 = vsub.f32 0.0, %v1727
      %v1792 = vsub.f32 0.0, %v1728
      %v1793 = vsub.f32 0.0, %v1729
      %v1794 = vsub.f32 0.0, %v1730
      %v1795 = vsub.f32 0.0, %v1731
      %v1796 = vsub.f32 0.0, %v1732
      %v1797 = vsub.f32 0.0, %v1733
      %v1798 = vsel %vm1734, %v1766, %v1702
      %v1799 = vsel %vm1735, %v1767, %v1703
      %v1800 = vsel %vm1736, %v1768, %v1704
      %v1801 = vsel %vm1737, %v1769, %v1705
      %v1802 = vsel %vm1738, %v1770, %v1706
      %v1803 = vsel %vm1739, %v1771, %v1707
      %v1804 = vsel %vm1740, %v1772, %v1708
      %v1805 = vsel %vm1741, %v1773, %v1709
      %v1806 = vsel %vm1742, %v1774, %v1710
      %v1807 = vsel %vm1743, %v1775, %v1711
      %v1808 = vsel %vm1744, %v1776, %v1712
      %v1809 = vsel %vm1745, %v1777, %v1713
      %v1810 = vsel %vm1746, %v1778, %v1714
      %v1811 = vsel %vm1747, %v1779, %v1715
      %v1812 = vsel %vm1748, %v1780, %v1716
      %v1813 = vsel %vm1749, %v1781, %v1717
      %v1814 = vsel %vm1750, %v1782, %v1718
      %v1815 = vsel %vm1751, %v1783, %v1719
      %v1816 = vsel %vm1752, %v1784, %v1720
      %v1817 = vsel %vm1753, %v1785, %v1721
      %v1818 = vsel %vm1754, %v1786, %v1722
      %v1819 = vsel %vm1755, %v1787, %v1723
      %v1820 = vsel %vm1756, %v1788, %v1724
      %v1821 = vsel %vm1757, %v1789, %v1725
      %v1822 = vsel %vm1758, %v1790, %v1726
      %v1823 = vsel %vm1759, %v1791, %v1727
      %v1824 = vsel %vm1760, %v1792, %v1728
      %v1825 = vsel %vm1761, %v1793, %v1729
      %v1826 = vsel %vm1762, %v1794, %v1730
      %v1827 = vsel %vm1763, %v1795, %v1731
      %v1828 = vsel %vm1764, %v1796, %v1732
      %v1829 = vsel %vm1765, %v1797, %v1733
      %v1830 = vadd.f32 %v1798, 1.0
      %v1831 = vadd.f32 %v1799, 1.0
      %v1832 = vadd.f32 %v1800, 1.0
      %v1833 = vadd.f32 %v1801, 1.0
      %v1834 = vadd.f32 %v1802, 1.0
      %v1835 = vadd.f32 %v1803, 1.0
      %v1836 = vadd.f32 %v1804, 1.0
      %v1837 = vadd.f32 %v1805, 1.0
      %v1838 = vadd.f32 %v1806, 1.0
      %v1839 = vadd.f32 %v1807, 1.0
      %v1840 = vadd.f32 %v1808, 1.0
      %v1841 = vadd.f32 %v1809, 1.0
      %v1842 = vadd.f32 %v1810, 1.0
      %v1843 = vadd.f32 %v1811, 1.0
      %v1844 = vadd.f32 %v1812, 1.0
      %v1845 = vadd.f32 %v1813, 1.0
      %v1846 = vadd.f32 %v1814, 1.0
      %v1847 = vadd.f32 %v1815, 1.0
      %v1848 = vadd.f32 %v1816, 1.0
      %v1849 = vadd.f32 %v1817, 1.0
      %v1850 = vadd.f32 %v1818, 1.0
      %v1851 = vadd.f32 %v1819, 1.0
      %v1852 = vadd.f32 %v1820, 1.0
      %v1853 = vadd.f32 %v1821, 1.0
      %v1854 = vadd.f32 %v1822, 1.0
      %v1855 = vadd.f32 %v1823, 1.0
      %v1856 = vadd.f32 %v1824, 1.0
      %v1857 = vadd.f32 %v1825, 1.0
      %v1858 = vadd.f32 %v1826, 1.0
      %v1859 = vadd.f32 %v1827, 1.0
      %v1860 = vadd.f32 %v1828, 1.0
      %v1861 = vadd.f32 %v1829, 1.0
      %v1862 = vmul.f32 %v1030, %v1830
      %v1863 = vmul.f32 %v1031, %v1831
      %v1864 = vmul.f32 %v1032, %v1832
      %v1865 = vmul.f32 %v1033, %v1833
      %v1866 = vmul.f32 %v1034, %v1834
      %v1867 = vmul.f32 %v1035, %v1835
      %v1868 = vmul.f32 %v1036, %v1836
      %v1869 = vmul.f32 %v1037, %v1837
      %v1870 = vmul.f32 %v1038, %v1838
      %v1871 = vmul.f32 %v1039, %v1839
      %v1872 = vmul.f32 %v1040, %v1840
      %v1873 = vmul.f32 %v1041, %v1841
      %v1874 = vmul.f32 %v1042, %v1842
      %v1875 = vmul.f32 %v1043, %v1843
      %v1876 = vmul.f32 %v1044, %v1844
      %v1877 = vmul.f32 %v1045, %v1845
      %v1878 = vmul.f32 %v1046, %v1846
      %v1879 = vmul.f32 %v1047, %v1847
      %v1880 = vmul.f32 %v1048, %v1848
      %v1881 = vmul.f32 %v1049, %v1849
      %v1882 = vmul.f32 %v1050, %v1850
      %v1883 = vmul.f32 %v1051, %v1851
      %v1884 = vmul.f32 %v1052, %v1852
      %v1885 = vmul.f32 %v1053, %v1853
      %v1886 = vmul.f32 %v1054, %v1854
      %v1887 = vmul.f32 %v1055, %v1855
      %v1888 = vmul.f32 %v1056, %v1856
      %v1889 = vmul.f32 %v1057, %v1857
      %v1890 = vmul.f32 %v1058, %v1858
      %v1891 = vmul.f32 %v1059, %v1859
      %v1892 = vmul.f32 %v1060, %v1860
      %v1893 = vmul.f32 %v1061, %v1861
      %v1894 = vpack.c.bf16 %v1863, %v1862
      %v1895 = vpack.c.bf16 %v1865, %v1864
      %v1896 = vpack.c.bf16 %v1867, %v1866
      %v1897 = vpack.c.bf16 %v1869, %v1868
      %v1898 = vpack.c.bf16 %v1871, %v1870
      %v1899 = vpack.c.bf16 %v1873, %v1872
      %v1900 = vpack.c.bf16 %v1875, %v1874
      %v1901 = vpack.c.bf16 %v1877, %v1876
      %v1902 = vpack.c.bf16 %v1879, %v1878
      %v1903 = vpack.c.bf16 %v1881, %v1880
      %v1904 = vpack.c.bf16 %v1883, %v1882
      %v1905 = vpack.c.bf16 %v1885, %v1884
      %v1906 = vpack.c.bf16 %v1887, %v1886
      %v1907 = vpack.c.bf16 %v1889, %v1888
      %v1908 = vpack.c.bf16 %v1891, %v1890
      %v1909 = vpack.c.bf16 %v1893, %v1892
      %v1910 = vld [vmem:[%s5] sm:$0xf]
      %v1911 = vld [vmem:[%s5 + $0x4] sm:$0xf]
      %v1912 = vld [vmem:[%s5 + $0x8] sm:$0xf]
      %v1913 = vld [vmem:[%s5 + $0xc] sm:$0xf]
      %v1914 = vld [vmem:[%s5 + $0x10] sm:$0xf]
      %v1915 = vld [vmem:[%s5 + $0x14] sm:$0xf]
      %v1916 = vld [vmem:[%s5 + $0x18] sm:$0xf]
      %v1917 = vld [vmem:[%s5 + $0x1c] sm:$0xf]
      %v1918 = vld [vmem:[%s5 + $0x20] sm:$0xf]
      %v1919 = vld [vmem:[%s5 + $0x24] sm:$0xf]
      %v1920 = vld [vmem:[%s5 + $0x28] sm:$0xf]
      %v1921 = vld [vmem:[%s5 + $0x2c] sm:$0xf]
      %v1922 = vld [vmem:[%s5 + $0x30] sm:$0xf]
      %v1923 = vld [vmem:[%s5 + $0x34] sm:$0xf]
      %v1924 = vld [vmem:[%s5 + $0x38] sm:$0xf]
      %v1925 = vld [vmem:[%s5 + $0x3c] sm:$0xf]
      %v1926 = vld [vmem:[%s6] sm:$0x1]
      %v1928 = vlaneseq
      %v1929 = vshrl.u32 %v1928, 7
      %v1930 = vsub.s32 0, %v1929
      %v1931 = vrot.slane %v1926, %v1930
      %v1949 = vunpack.c.l.b16 %v1910
      %v1950 = vunpack.c.l.b16 %v1911
      %v1951 = vunpack.c.l.b16 %v1912
      %v1952 = vunpack.c.l.b16 %v1913
      %v1953 = vunpack.c.l.b16 %v1914
      %v1954 = vunpack.c.l.b16 %v1915
      %v1955 = vunpack.c.l.b16 %v1916
      %v1956 = vunpack.c.l.b16 %v1917
      %v1957 = vunpack.c.l.b16 %v1918
      %v1958 = vunpack.c.l.b16 %v1919
      %v1959 = vunpack.c.l.b16 %v1920
      %v1960 = vunpack.c.l.b16 %v1921
      %v1961 = vunpack.c.l.b16 %v1922
      %v1962 = vunpack.c.l.b16 %v1923
      %v1963 = vunpack.c.l.b16 %v1924
      %v1964 = vunpack.c.l.b16 %v1925
      %v1965 = vpack.c.b16 %v1950, %v1949
      %v1966 = vpack.c.b16 %v1952, %v1951
      %v1967 = vpack.c.b16 %v1954, %v1953
      %v1968 = vpack.c.b16 %v1956, %v1955
      %v1969 = vpack.c.b16 %v1958, %v1957
      %v1970 = vpack.c.b16 %v1960, %v1959
      %v1971 = vpack.c.b16 %v1962, %v1961
      %v1972 = vpack.c.b16 %v1964, %v1963
      %1981 = vmatprep.subr.bf16.mxu0 0
      %1982 = vmatpush1.bf16.msra.mxu0 %v1972
      %1983 = vmatprep.subr.bf16.mxu0 0
      %1984 = vmatpush1.bf16.msra.mxu0 %v1971
      %1985 = vmatprep.subr.bf16.mxu0 0
      %1986 = vmatpush1.bf16.msra.mxu0 %v1970
      %1987 = vmatprep.subr.bf16.mxu0 0
      %1988 = vmatpush1.bf16.msra.mxu0 %v1969
      %1989 = vmatprep.subr.bf16.mxu0 0
      %1990 = vmatpush1.bf16.msra.mxu0 %v1968
      %1991 = vmatprep.subr.bf16.mxu0 0
      %1992 = vmatpush1.bf16.msra.mxu0 %v1967
      %1993 = vmatprep.subr.bf16.mxu0 0
      %1994 = vmatpush1.bf16.msra.mxu0 %v1966
      %1995 = vmatprep.subr.bf16.mxu0 0
      %1996 = vmatpush1.bf16.msra.mxu0 %v1965
      %1997 = vmatprep.subr.bf16.mxu0 0
      %1998 = vmatpush2.bf16.msra.mxu0 0
      %1999 = vmatprep.subr.bf16.mxu0 0
      %2000 = vmatpush2.bf16.msra.mxu0 0
      %2001 = vmatprep.subr.bf16.mxu0 0
      %2002 = vmatpush2.bf16.msra.mxu0 0
      %2003 = vmatprep.subr.bf16.mxu0 0
      %2004 = vmatpush2.bf16.msra.mxu0 0
      %2005 = vmatprep.subr.bf16.mxu0 0
      %2006 = vmatpush2.bf16.msra.mxu0 0
      %2007 = vmatprep.subr.bf16.mxu0 0
      %2008 = vmatpush2.bf16.msra.mxu0 0
      %2009 = vmatprep.subr.bf16.mxu0 0
      %2010 = vmatpush2.bf16.msra.mxu0 0
      %2011 = vmatprep.subr.bf16.mxu0 0
      %2012 = vmatpush2.bf16.msra.mxu0 0
      %2013 = vmatprep.mubr.bf16.mxu0 0
      %2014 = vmatmul.mubr.bf16.gmra.mxu0 %v1894
      %v2015 = vpop.f32.mrf.mxu0
      %v2016 = vadd.f32 %v1931, %v2015
      %v2017 = vpop.f32.mrf.mxu0
      %v2018 = vpop.f32.mrf.mxu0
      %v2019 = vadd.f32 %v1931, %v2018
      %v2020 = vpop.f32.mrf.mxu0
      %2021 = vmatprep.mubr.bf16.mxu0 0
      %2022 = vmatmul.mubr.bf16.gmra.mxu0 %v1895
      %v2023 = vpop.f32.mrf.mxu0
      %v2024 = vadd.f32 %v1931, %v2023
      %v2025 = vpop.f32.mrf.mxu0
      %v2026 = vpop.f32.mrf.mxu0
      %v2027 = vadd.f32 %v1931, %v2026
      %v2028 = vpop.f32.mrf.mxu0
      %2029 = vmatprep.mubr.bf16.mxu0 0
      %2030 = vmatmul.mubr.bf16.gmra.mxu0 %v1896
      %v2031 = vpop.f32.mrf.mxu0
      %v2032 = vadd.f32 %v1931, %v2031
      %v2033 = vpop.f32.mrf.mxu0
      %v2034 = vpop.f32.mrf.mxu0
      %v2035 = vadd.f32 %v1931, %v2034
      %v2036 = vpop.f32.mrf.mxu0
      %2037 = vmatprep.mubr.bf16.mxu0 0
      %2038 = vmatmul.mubr.bf16.gmra.mxu0 %v1897
      %v2039 = vpop.f32.mrf.mxu0
      %v2040 = vadd.f32 %v1931, %v2039
      %v2041 = vpop.f32.mrf.mxu0
      %v2042 = vpop.f32.mrf.mxu0
      %v2043 = vadd.f32 %v1931, %v2042
      %v2044 = vpop.f32.mrf.mxu0
      %2045 = vmatprep.mubr.bf16.mxu0 0
      %2046 = vmatmul.mubr.bf16.gmra.mxu0 %v1898
      %v2047 = vpop.f32.mrf.mxu0
      %v2048 = vadd.f32 %v1931, %v2047
      %v2049 = vpop.f32.mrf.mxu0
      %v2050 = vpop.f32.mrf.mxu0
      %v2051 = vadd.f32 %v1931, %v2050
      %v2052 = vpop.f32.mrf.mxu0
      %2053 = vmatprep.mubr.bf16.mxu0 0
      %2054 = vmatmul.mubr.bf16.gmra.mxu0 %v1899
      %v2055 = vpop.f32.mrf.mxu0
      %v2056 = vadd.f32 %v1931, %v2055
      %v2057 = vpop.f32.mrf.mxu0
      %v2058 = vpop.f32.mrf.mxu0
      %v2059 = vadd.f32 %v1931, %v2058
      %v2060 = vpop.f32.mrf.mxu0
      %2061 = vmatprep.mubr.bf16.mxu0 0
      %2062 = vmatmul.mubr.bf16.gmra.mxu0 %v1900
      %v2063 = vpop.f32.mrf.mxu0
      %v2064 = vadd.f32 %v1931, %v2063
      %v2065 = vpop.f32.mrf.mxu0
      %v2066 = vpop.f32.mrf.mxu0
      %v2067 = vadd.f32 %v1931, %v2066
      %v2068 = vpop.f32.mrf.mxu0
      %2069 = vmatprep.mubr.bf16.mxu0 0
      %2070 = vmatmul.mubr.bf16.gmra.mxu0 %v1901
      %v2071 = vpop.f32.mrf.mxu0
      %v2072 = vadd.f32 %v1931, %v2071
      %v2073 = vpop.f32.mrf.mxu0
      %v2074 = vpop.f32.mrf.mxu0
      %v2075 = vadd.f32 %v1931, %v2074
      %v2076 = vpop.f32.mrf.mxu0
      %2077 = vmatprep.mubr.bf16.mxu0 0
      %2078 = vmatmul.mubr.bf16.gmra.mxu0 %v1902
      %v2079 = vpop.f32.mrf.mxu0
      %v2080 = vadd.f32 %v1931, %v2079
      %v2081 = vpop.f32.mrf.mxu0
      %v2082 = vpop.f32.mrf.mxu0
      %v2083 = vadd.f32 %v1931, %v2082
      %v2084 = vpop.f32.mrf.mxu0
      %2085 = vmatprep.mubr.bf16.mxu0 0
      %2086 = vmatmul.mubr.bf16.gmra.mxu0 %v1903
      %v2087 = vpop.f32.mrf.mxu0
      %v2088 = vadd.f32 %v1931, %v2087
      %v2089 = vpop.f32.mrf.mxu0
      %v2090 = vpop.f32.mrf.mxu0
      %v2091 = vadd.f32 %v1931, %v2090
      %v2092 = vpop.f32.mrf.mxu0
      %2093 = vmatprep.mubr.bf16.mxu0 0
      %2094 = vmatmul.mubr.bf16.gmra.mxu0 %v1904
      %v2095 = vpop.f32.mrf.mxu0
      %v2096 = vadd.f32 %v1931, %v2095
      %v2097 = vpop.f32.mrf.mxu0
      %v2098 = vpop.f32.mrf.mxu0
      %v2099 = vadd.f32 %v1931, %v2098
      %v2100 = vpop.f32.mrf.mxu0
      %2101 = vmatprep.mubr.bf16.mxu0 0
      %2102 = vmatmul.mubr.bf16.gmra.mxu0 %v1905
      %v2103 = vpop.f32.mrf.mxu0
      %v2104 = vadd.f32 %v1931, %v2103
      %v2105 = vpop.f32.mrf.mxu0
      %v2106 = vpop.f32.mrf.mxu0
      %v2107 = vadd.f32 %v1931, %v2106
      %v2108 = vpop.f32.mrf.mxu0
      %2109 = vmatprep.mubr.bf16.mxu0 0
      %2110 = vmatmul.mubr.bf16.gmra.mxu0 %v1906
      %v2111 = vpop.f32.mrf.mxu0
      %v2112 = vadd.f32 %v1931, %v2111
      %v2113 = vpop.f32.mrf.mxu0
      %v2114 = vpop.f32.mrf.mxu0
      %v2115 = vadd.f32 %v1931, %v2114
      %v2116 = vpop.f32.mrf.mxu0
      %2117 = vmatprep.mubr.bf16.mxu0 0
      %2118 = vmatmul.mubr.bf16.gmra.mxu0 %v1907
      %v2119 = vpop.f32.mrf.mxu0
      %v2120 = vadd.f32 %v1931, %v2119
      %v2121 = vpop.f32.mrf.mxu0
      %v2122 = vpop.f32.mrf.mxu0
      %v2123 = vadd.f32 %v1931, %v2122
      %v2124 = vpop.f32.mrf.mxu0
      %2125 = vmatprep.mubr.bf16.mxu0 0
      %2126 = vmatmul.mubr.bf16.gmra.mxu0 %v1908
      %v2127 = vpop.f32.mrf.mxu0
      %v2128 = vadd.f32 %v1931, %v2127
      %v2129 = vpop.f32.mrf.mxu0
      %v2130 = vpop.f32.mrf.mxu0
      %v2131 = vadd.f32 %v1931, %v2130
      %v2132 = vpop.f32.mrf.mxu0
      %2133 = vmatprep.mubr.bf16.mxu0 0
      %2134 = vmatmul.mubr.bf16.gmra.mxu0 %v1909
      %v2135 = vpop.f32.mrf.mxu0
      %v2136 = vadd.f32 %v1931, %v2135
      %v2137 = vpop.f32.mrf.mxu0
      %v2138 = vpop.f32.mrf.mxu0
      %v2139 = vadd.f32 %v1931, %v2138
      %v2140 = vpop.f32.mrf.mxu0
      %2141 = vdwg.mxu0
      %v2142 = vadd.f32 %v283, %v2016
      %v2143 = vadd.f32 %v284, %v2019
      %v2144 = vadd.f32 %v285, %v2024
      %v2145 = vadd.f32 %v286, %v2027
      %v2146 = vadd.f32 %v287, %v2032
      %v2147 = vadd.f32 %v288, %v2035
      %v2148 = vadd.f32 %v289, %v2040
      %v2149 = vadd.f32 %v290, %v2043
      %v2150 = vadd.f32 %v291, %v2048
      %v2151 = vadd.f32 %v292, %v2051
      %v2152 = vadd.f32 %v293, %v2056
      %v2153 = vadd.f32 %v294, %v2059
      %v2154 = vadd.f32 %v295, %v2064
      %v2155 = vadd.f32 %v296, %v2067
      %v2156 = vadd.f32 %v297, %v2072
      %v2157 = vadd.f32 %v298, %v2075
      %v2158 = vadd.f32 %v299, %v2080
      %v2159 = vadd.f32 %v300, %v2083
      %v2160 = vadd.f32 %v301, %v2088
      %v2161 = vadd.f32 %v302, %v2091
      %v2162 = vadd.f32 %v303, %v2096
      %v2163 = vadd.f32 %v304, %v2099
      %v2164 = vadd.f32 %v305, %v2104
      %v2165 = vadd.f32 %v306, %v2107
      %v2166 = vadd.f32 %v307, %v2112
      %v2167 = vadd.f32 %v308, %v2115
      %v2168 = vadd.f32 %v309, %v2120
      %v2169 = vadd.f32 %v310, %v2123
      %v2170 = vadd.f32 %v311, %v2128
      %v2171 = vadd.f32 %v312, %v2131
      %v2172 = vadd.f32 %v313, %v2136
      %v2173 = vadd.f32 %v314, %v2139
      %2174 = vst [vmem:[%s280] sm:$0xff] %v2142
      %2175 = vst [vmem:[%s280 + $0x8] sm:$0xff] %v2143
      %2176 = vst [vmem:[%s280 + $0x10] sm:$0xff] %v2144
      %2177 = vst [vmem:[%s280 + $0x18] sm:$0xff] %v2145
      %2178 = vst [vmem:[%s280 + $0x20] sm:$0xff] %v2146
      %2179 = vst [vmem:[%s280 + $0x28] sm:$0xff] %v2147
      %2180 = vst [vmem:[%s280 + $0x30] sm:$0xff] %v2148
      %2181 = vst [vmem:[%s280 + $0x38] sm:$0xff] %v2149
      %2182 = vst [vmem:[%s280 + $0x40] sm:$0xff] %v2150
      %2183 = vst [vmem:[%s280 + $0x48] sm:$0xff] %v2151
      %2184 = vst [vmem:[%s280 + $0x50] sm:$0xff] %v2152
      %2185 = vst [vmem:[%s280 + $0x58] sm:$0xff] %v2153
      %2186 = vst [vmem:[%s280 + $0x60] sm:$0xff] %v2154
      %2187 = vst [vmem:[%s280 + $0x68] sm:$0xff] %v2155
      %2188 = vst [vmem:[%s280 + $0x70] sm:$0xff] %v2156
      %2189 = vst [vmem:[%s280 + $0x78] sm:$0xff] %v2157
      %2190 = vst [vmem:[%s280 + $0x80] sm:$0xff] %v2158
      %2191 = vst [vmem:[%s280 + $0x88] sm:$0xff] %v2159
      %2192 = vst [vmem:[%s280 + $0x90] sm:$0xff] %v2160
      %2193 = vst [vmem:[%s280 + $0x98] sm:$0xff] %v2161
      %2194 = vst [vmem:[%s280 + $0xa0] sm:$0xff] %v2162
      %2195 = vst [vmem:[%s280 + $0xa8] sm:$0xff] %v2163
      %2196 = vst [vmem:[%s280 + $0xb0] sm:$0xff] %v2164
      %2197 = vst [vmem:[%s280 + $0xb8] sm:$0xff] %v2165
      %2198 = vst [vmem:[%s280 + $0xc0] sm:$0xff] %v2166
      %2199 = vst [vmem:[%s280 + $0xc8] sm:$0xff] %v2167
      %2200 = vst [vmem:[%s280 + $0xd0] sm:$0xff] %v2168
      %2201 = vst [vmem:[%s280 + $0xd8] sm:$0xff] %v2169
      %2202 = vst [vmem:[%s280 + $0xe0] sm:$0xff] %v2170
      %2203 = vst [vmem:[%s280 + $0xe8] sm:$0xff] %v2171
      %2204 = vst [vmem:[%s280 + $0xf0] sm:$0xff] %v2172
      %2205 = vst [vmem:[%s280 + $0xf8] sm:$0xff] %v2173
      %s2206 = smul.u32 32, %s18
      %p2207 = scmp.lt.s32.totalorder %s2206, 63
      %s2208 = scalar_select %p2207, %s2206, 63
      %s2209 = smul.addr %s2208, 8
      %s2210 = scalar_lea.vmem %s7, %s2209
      // Predicated region
      $region49: #{basic_uformer_layer.5} parent=47 // pred_check
        %p2211 = pneg %p188
      $region50: #{basic_uformer_layer.5} parent=47 // pred_check_branch
        %2213 = sbr.rel (%p2211) target = $region52
      $region51: #{basic_uformer_layer.5} parent=47 // pred_region
        %s2214 = smul.u32 32, %s18
      $region52: #{basic_uformer_layer.5} parent=47 // pred_fallthru
        _
    $region48: #{basic_uformer_layer.5} parent=5 // pred_fallthru
      _
    %p2215 = scmp.le.s32.totalorder 2, %s13
    // Predicated region
    $region53: #{basic_uformer_layer.5} parent=5 // pred_check
      %p2216 = pneg %p2215
    $region54: #{basic_uformer_layer.5} parent=5 // pred_check_branch
      %2218 = sbr.rel (%p2216) target = $region56
    $region55: #{basic_uformer_layer.5} parent=5 // pred_region
      %s2219 = ssub.s32 %s13, 2
      // Predicated region
      $region57: #{basic_uformer_layer.5} parent=55 // pred_check
        %p2220 = pneg %p194
      $region58: #{basic_uformer_layer.5} parent=55 // pred_check_branch
        %2222 = sbr.rel (%p2220) target = $region60
      $region59: #{basic_uformer_layer.5} parent=55 // pred_region
        %s2223 = smul.u32 32, %s19
        %p2224 = scmp.lt.s32.totalorder %s2223, 63
        %s2225 = scalar_select %p2224, %s2223, 63
        %s2226 = smul.addr %s2225, 8
        %s2227 = scalar_lea.vmem %s7, %s2226
      $region60: #{basic_uformer_layer.5} parent=55 // pred_fallthru
        _
    $region56: #{basic_uformer_layer.5} parent=5 // pred_fallthru
      _
  $region6: #{basic_uformer_layer.5} parent=0 // loop_footer
    %s17 = sadd.s32 1, %s13
  $region7: #{basic_uformer_layer.5} parent=0 // loop_footer_branch
    %12 = sbr.rel target = $region3
  $region8: #{basic_uformer_layer.5} parent=0 // loop_exit
    _

// kernel: basic_uformer_layer.4
$region0: #{basic_uformer_layer.4}
  #allocation0 [shape = 'u32[]', space=smem, size = 0x4, offset = 0x4, fixed_abs, tag = 'smem constant byte address 0x4 - core index']
  #allocation1 [shape = 'u32[144,128]{1,0:T(1,128)}', space=vmem, size = 0x12000, scoped, tag = 'internal scratch']
  %s0 = inlined_call_operand.vmem [shape: f32[512,128], index: 0, kind: input, shape index: {}]
  %s1 = inlined_call_operand.vmem [shape: f32[1,128], index: 1, kind: input, shape index: {}]
  %s2 = inlined_call_operand.vmem [shape: f32[1,128], index: 2, kind: input, shape index: {}]
  %s3 = inlined_call_operand.vmem [shape: bf16[128,48], index: 3, kind: input, shape index: {}]
  %s4 = inlined_call_operand.vmem [shape: f32[1,48], index: 4, kind: input, shape index: {}]
  %s5 = inlined_call_operand.vmem [shape: f32[2,64,64], index: 5, kind: input, shape index: {}]
  %s6 = inlined_call_operand.vmem [shape: bf16[16,128], index: 6, kind: input, shape index: {}]
  %s7 = inlined_call_operand.vmem [shape: f32[1,128], index: 7, kind: input, shape index: {}]
  %s8 = inlined_call_operand.vmem [shape: f32[512,128], index: 8, kind: output, shape index: {}]
  %s9 = sld [smem:[#allocation0]]
  $region65: #{basic_uformer_layer.4} parent=0
    _
  %s11 = ssub.s32 1, %s9
  %s12 = scalar_select 0, %s11, %s9
  loop: start=0, step=1, limit=4
  $region2: #{basic_uformer_layer.4} parent=0 // loop_pre_header
    _
  $region3: #{basic_uformer_layer.4} parent=0 // loop_header
    %s14 = sphi 0, %s18
    %p15 = scmp.ge.s32.totalorder %s14, 4
    %s24 = sphi 0, %s26
    %s27 = sphi 0, %s24
    %s28 = sphi 0, %s27
    %s44 = sphi 0, %s28
    %s48 = sphi 0, %s48
    %s50 = sphi 0, %s48
    %s51 = sphi 0, %s50
    %s65 = sphi 0, %s51
    %s69 = sphi 0, %s69
    %s71 = sphi 0, %s69
    %s72 = sphi 0, %s71
    %s86 = sphi 0, %s72
    %s90 = sphi 0, %s90
    %s92 = sphi 0, %s90
    %s93 = sphi 0, %s92
    %s107 = sphi 0, %s93
    %s111 = sphi 0, %s111
    %s113 = sphi 0, %s111
    %s114 = sphi 0, %s113
    %s128 = sphi 0, %s114
    %s132 = sphi 0, %s132
    %s134 = sphi 0, %s132
    %s135 = sphi 0, %s134
    %s149 = sphi 0, %s135
    %s153 = sphi 0, %s153
    %s155 = sphi 0, %s153
    %s156 = sphi 0, %s155
    %s170 = sphi 0, %s156
    %s174 = sphi 0, %s174
    %s176 = sphi 0, %s174
    %s177 = sphi 0, %s176
    %s191 = sphi 0, %s177
    %s197 = sphi 0, %s199
    %s200 = sphi 0, %s197
    %s201 = sphi 0, %s200
    %s217 = sphi 0, %s201
  $region4: #{basic_uformer_layer.4} parent=0 // loop_header_branch
    %17 = sbr.rel (%p15) target = $region8
  $region5: #{basic_uformer_layer.4} parent=0 // loop_body
    %s19 = ssub.s32 %s14, 1
    %s20 = ssub.s32 %s14, 2
    %s21 = sadd.s32 %s14, 1
    %s22 = ssub.s32 %s14, %s21
    %p23 = scmp.eq.s32.totalorder %s22, 0
    %s25 = sadd.s32 %s24, 1
    %s26 = scalar_select %p23, %s24, %s25
    %p29 = pneg %p23
    %p30 = scmp.eq.s32.totalorder %s14, 1
    %p31 = por %p29, %p30
    %p32 = scmp.ne.s32.totalorder %s24, %s27
    %p33 = scmp.eq.s32.totalorder %s14, 0
    %p34 = por %p32, %p33
    %p35 = scmp.ne.s32.totalorder %s24, %s27
    %p36 = scmp.eq.s32.totalorder %s19, 1
    %p37 = por %p35, %p36
    %p38 = scmp.ne.s32.totalorder %s27, %s28
    %p39 = scmp.eq.s32.totalorder %s19, 0
    %p40 = por %p38, %p39
    %p41 = scmp.ne.s32.totalorder %s27, %s28
    %p42 = scmp.eq.s32.totalorder %s20, 1
    %p43 = por %p41, %p42
    %p45 = scmp.ne.s32.totalorder %s28, %s44
    %p46 = scmp.eq.s32.totalorder %s20, 0
    %p47 = por %p45, %p46
    %s49 = sadd.s32 %s48, 1
    %p52 = scmp.eq.s32.totalorder %s14, 1
    %p53 = scmp.ne.s32.totalorder %s48, %s50
    %p54 = scmp.eq.s32.totalorder %s14, 0
    %p55 = por %p53, %p54
    %p56 = scmp.ne.s32.totalorder %s48, %s50
    %p57 = scmp.eq.s32.totalorder %s19, 1
    %p58 = por %p56, %p57
    %p59 = scmp.ne.s32.totalorder %s50, %s51
    %p60 = scmp.eq.s32.totalorder %s19, 0
    %p61 = por %p59, %p60
    %p62 = scmp.ne.s32.totalorder %s50, %s51
    %p63 = scmp.eq.s32.totalorder %s20, 1
    %p64 = por %p62, %p63
    %p66 = scmp.ne.s32.totalorder %s51, %s65
    %p67 = scmp.eq.s32.totalorder %s20, 0
    %p68 = por %p66, %p67
    %s70 = sadd.s32 %s69, 1
    %p73 = scmp.eq.s32.totalorder %s14, 1
    %p74 = scmp.ne.s32.totalorder %s69, %s71
    %p75 = scmp.eq.s32.totalorder %s14, 0
    %p76 = por %p74, %p75
    %p77 = scmp.ne.s32.totalorder %s69, %s71
    %p78 = scmp.eq.s32.totalorder %s19, 1
    %p79 = por %p77, %p78
    %p80 = scmp.ne.s32.totalorder %s71, %s72
    %p81 = scmp.eq.s32.totalorder %s19, 0
    %p82 = por %p80, %p81
    %p83 = scmp.ne.s32.totalorder %s71, %s72
    %p84 = scmp.eq.s32.totalorder %s20, 1
    %p85 = por %p83, %p84
    %p87 = scmp.ne.s32.totalorder %s72, %s86
    %p88 = scmp.eq.s32.totalorder %s20, 0
    %p89 = por %p87, %p88
    %s91 = sadd.s32 %s90, 1
    %p94 = scmp.eq.s32.totalorder %s14, 1
    %p95 = scmp.ne.s32.totalorder %s90, %s92
    %p96 = scmp.eq.s32.totalorder %s14, 0
    %p97 = por %p95, %p96
    %p98 = scmp.ne.s32.totalorder %s90, %s92
    %p99 = scmp.eq.s32.totalorder %s19, 1
    %p100 = por %p98, %p99
    %p101 = scmp.ne.s32.totalorder %s92, %s93
    %p102 = scmp.eq.s32.totalorder %s19, 0
    %p103 = por %p101, %p102
    %p104 = scmp.ne.s32.totalorder %s92, %s93
    %p105 = scmp.eq.s32.totalorder %s20, 1
    %p106 = por %p104, %p105
    %p108 = scmp.ne.s32.totalorder %s93, %s107
    %p109 = scmp.eq.s32.totalorder %s20, 0
    %p110 = por %p108, %p109
    %s112 = sadd.s32 %s111, 1
    %p115 = scmp.eq.s32.totalorder %s14, 1
    %p116 = scmp.ne.s32.totalorder %s111, %s113
    %p117 = scmp.eq.s32.totalorder %s14, 0
    %p118 = por %p116, %p117
    %p119 = scmp.ne.s32.totalorder %s111, %s113
    %p120 = scmp.eq.s32.totalorder %s19, 1
    %p121 = por %p119, %p120
    %p122 = scmp.ne.s32.totalorder %s113, %s114
    %p123 = scmp.eq.s32.totalorder %s19, 0
    %p124 = por %p122, %p123
    %p125 = scmp.ne.s32.totalorder %s113, %s114
    %p126 = scmp.eq.s32.totalorder %s20, 1
    %p127 = por %p125, %p126
    %p129 = scmp.ne.s32.totalorder %s114, %s128
    %p130 = scmp.eq.s32.totalorder %s20, 0
    %p131 = por %p129, %p130
    %s133 = sadd.s32 %s132, 1
    %p136 = scmp.eq.s32.totalorder %s14, 1
    %p137 = scmp.ne.s32.totalorder %s132, %s134
    %p138 = scmp.eq.s32.totalorder %s14, 0
    %p139 = por %p137, %p138
    %p140 = scmp.ne.s32.totalorder %s132, %s134
    %p141 = scmp.eq.s32.totalorder %s19, 1
    %p142 = por %p140, %p141
    %p143 = scmp.ne.s32.totalorder %s134, %s135
    %p144 = scmp.eq.s32.totalorder %s19, 0
    %p145 = por %p143, %p144
    %p146 = scmp.ne.s32.totalorder %s134, %s135
    %p147 = scmp.eq.s32.totalorder %s20, 1
    %p148 = por %p146, %p147
    %p150 = scmp.ne.s32.totalorder %s135, %s149
    %p151 = scmp.eq.s32.totalorder %s20, 0
    %p152 = por %p150, %p151
    %s154 = sadd.s32 %s153, 1
    %p157 = scmp.eq.s32.totalorder %s14, 1
    %p158 = scmp.ne.s32.totalorder %s153, %s155
    %p159 = scmp.eq.s32.totalorder %s14, 0
    %p160 = por %p158, %p159
    %p161 = scmp.ne.s32.totalorder %s153, %s155
    %p162 = scmp.eq.s32.totalorder %s19, 1
    %p163 = por %p161, %p162
    %p164 = scmp.ne.s32.totalorder %s155, %s156
    %p165 = scmp.eq.s32.totalorder %s19, 0
    %p166 = por %p164, %p165
    %p167 = scmp.ne.s32.totalorder %s155, %s156
    %p168 = scmp.eq.s32.totalorder %s20, 1
    %p169 = por %p167, %p168
    %p171 = scmp.ne.s32.totalorder %s156, %s170
    %p172 = scmp.eq.s32.totalorder %s20, 0
    %p173 = por %p171, %p172
    %s175 = sadd.s32 %s174, 1
    %p178 = scmp.eq.s32.totalorder %s14, 1
    %p179 = scmp.ne.s32.totalorder %s174, %s176
    %p180 = scmp.eq.s32.totalorder %s14, 0
    %p181 = por %p179, %p180
    %p182 = scmp.ne.s32.totalorder %s174, %s176
    %p183 = scmp.eq.s32.totalorder %s19, 1
    %p184 = por %p182, %p183
    %p185 = scmp.ne.s32.totalorder %s176, %s177
    %p186 = scmp.eq.s32.totalorder %s19, 0
    %p187 = por %p185, %p186
    %p188 = scmp.ne.s32.totalorder %s176, %s177
    %p189 = scmp.eq.s32.totalorder %s20, 1
    %p190 = por %p188, %p189
    %p192 = scmp.ne.s32.totalorder %s177, %s191
    %p193 = scmp.eq.s32.totalorder %s20, 0
    %p194 = por %p192, %p193
    %s195 = ssub.s32 %s14, %s21
    %p196 = scmp.eq.s32.totalorder %s195, 0
    %s198 = sadd.s32 %s197, 1
    %s199 = scalar_select %p196, %s197, %s198
    %p202 = pneg %p196
    %p203 = scmp.eq.s32.totalorder %s14, 1
    %p204 = por %p202, %p203
    %p205 = scmp.ne.s32.totalorder %s197, %s200
    %p206 = scmp.eq.s32.totalorder %s14, 0
    %p207 = por %p205, %p206
    %p208 = scmp.ne.s32.totalorder %s197, %s200
    %p209 = scmp.eq.s32.totalorder %s19, 1
    %p210 = por %p208, %p209
    %p211 = scmp.ne.s32.totalorder %s200, %s201
    %p212 = scmp.eq.s32.totalorder %s19, 0
    %p213 = por %p211, %p212
    %p214 = scmp.ne.s32.totalorder %s200, %s201
    %p215 = scmp.eq.s32.totalorder %s20, 1
    %p216 = por %p214, %p215
    %p218 = scmp.ne.s32.totalorder %s201, %s217
    %p219 = scmp.eq.s32.totalorder %s20, 0
    %p220 = por %p218, %p219
    %p221 = scmp.le.s32.totalorder 1, %s14
    %p222 = scmp.lt.s32.totalorder %s14, 3
    %p223 = pnand %p221, %p222
    %p224 = pneg %p223
    // Predicated region
    $region9: #{basic_uformer_layer.4} parent=5 // pred_check
      _
    $region10: #{basic_uformer_layer.4} parent=5 // pred_check_branch
      %226 = sbr.rel (%p223) target = $region12
    $region11: #{basic_uformer_layer.4} parent=5 // pred_region
      %s227 = ssub.s32 %s14, 1
      // Predicated region
      $region13: #{basic_uformer_layer.4} parent=11 // pred_check
        %p228 = pneg %p61
      $region14: #{basic_uformer_layer.4} parent=11 // pred_check_branch
        %230 = sbr.rel (%p228) target = $region16
      $region15: #{basic_uformer_layer.4} parent=11 // pred_region
        _
      $region16: #{basic_uformer_layer.4} parent=11 // pred_fallthru
        _
      // Predicated region
      $region17: #{basic_uformer_layer.4} parent=11 // pred_check
        %p231 = pneg %p82
      $region18: #{basic_uformer_layer.4} parent=11 // pred_check_branch
        %233 = sbr.rel (%p231) target = $region20
      $region19: #{basic_uformer_layer.4} parent=11 // pred_region
        _
      $region20: #{basic_uformer_layer.4} parent=11 // pred_fallthru
        _
      // Predicated region
      $region21: #{basic_uformer_layer.4} parent=11 // pred_check
        %p234 = pneg %p103
      $region22: #{basic_uformer_layer.4} parent=11 // pred_check_branch
        %236 = sbr.rel (%p234) target = $region24
      $region23: #{basic_uformer_layer.4} parent=11 // pred_region
        _
      $region24: #{basic_uformer_layer.4} parent=11 // pred_fallthru
        _
      // Predicated region
      $region25: #{basic_uformer_layer.4} parent=11 // pred_check
        %p237 = pneg %p124
      $region26: #{basic_uformer_layer.4} parent=11 // pred_check_branch
        %239 = sbr.rel (%p237) target = $region28
      $region27: #{basic_uformer_layer.4} parent=11 // pred_region
        _
      $region28: #{basic_uformer_layer.4} parent=11 // pred_fallthru
        _
      // Predicated region
      $region29: #{basic_uformer_layer.4} parent=11 // pred_check
        %p240 = pneg %p145
      $region30: #{basic_uformer_layer.4} parent=11 // pred_check_branch
        %242 = sbr.rel (%p240) target = $region32
      $region31: #{basic_uformer_layer.4} parent=11 // pred_region
        _
      $region32: #{basic_uformer_layer.4} parent=11 // pred_fallthru
        _
      // Predicated region
      $region33: #{basic_uformer_layer.4} parent=11 // pred_check
        %p243 = pneg %p166
      $region34: #{basic_uformer_layer.4} parent=11 // pred_check_branch
        %245 = sbr.rel (%p243) target = $region36
      $region35: #{basic_uformer_layer.4} parent=11 // pred_region
        _
      $region36: #{basic_uformer_layer.4} parent=11 // pred_fallthru
        _
      // Predicated region
      $region37: #{basic_uformer_layer.4} parent=11 // pred_check
        %p246 = pneg %p187
      $region38: #{basic_uformer_layer.4} parent=11 // pred_check_branch
        %248 = sbr.rel (%p246) target = $region40
      $region39: #{basic_uformer_layer.4} parent=11 // pred_region
        _
      $region40: #{basic_uformer_layer.4} parent=11 // pred_fallthru
        _
    $region12: #{basic_uformer_layer.4} parent=5 // pred_fallthru
      _
    %p249 = scmp.lt.s32.totalorder %s14, 2
    // Predicated region
    $region41: #{basic_uformer_layer.4} parent=5 // pred_check
      %p250 = pneg %p249
    $region42: #{basic_uformer_layer.4} parent=5 // pred_check_branch
      %252 = sbr.rel (%p250) target = $region44
    $region43: #{basic_uformer_layer.4} parent=5 // pred_region
      // Predicated region
      $region45: #{basic_uformer_layer.4} parent=43 // pred_check
        %p253 = pneg %p34
      $region46: #{basic_uformer_layer.4} parent=43 // pred_check_branch
        %255 = sbr.rel (%p253) target = $region48
      $region47: #{basic_uformer_layer.4} parent=43 // pred_region
        %s256 = smul.u32 32, %s14
        %p257 = scmp.lt.s32.totalorder %s256, 63
        %s258 = scalar_select %p257, %s256, 63
        %s259 = smul.addr %s258, 8
        %s260 = scalar_lea.vmem %s0, %s259
        %s261 = smul.u32 32, %s14
      $region48: #{basic_uformer_layer.4} parent=43 // pred_fallthru
        _
    $region44: #{basic_uformer_layer.4} parent=5 // pred_fallthru
      _
    %p262 = scmp.le.s32.totalorder 1, %s14
    %p263 = scmp.lt.s32.totalorder %s14, 3
    %p264 = pnand %p262, %p263
    %p265 = pneg %p264
    // Predicated region
    $region49: #{basic_uformer_layer.4} parent=5 // pred_check
      _
    $region50: #{basic_uformer_layer.4} parent=5 // pred_check_branch
      %267 = sbr.rel (%p264) target = $region52
    $region51: #{basic_uformer_layer.4} parent=5 // pred_region
      %s268 = ssub.s32 %s14, 1
      %s269 = smul.u32 32, %s19
      %p270 = scmp.lt.s32.totalorder %s269, 63
      %s271 = scalar_select %p270, %s269, 63
      %s272 = smul.addr %s271, 8
      %s273 = scalar_lea.vmem %s0, %s272
      %p274 = pneg %p40
      %p275 = pneg %p37
      %p276 = pneg %p61
      %p277 = pneg %p58
      %p278 = pneg %p82
      %p279 = pneg %p79
      %p280 = pneg %p103
      %p281 = pneg %p100
      %p282 = pneg %p124
      %p283 = pneg %p121
      %p284 = pneg %p145
      %p285 = pneg %p142
      %p286 = pneg %p166
      %p287 = pneg %p163
      %p288 = pneg %p187
      %p289 = pneg %p184
      %p290 = pneg %p213
      %p291 = pneg %p210
      %s292 = smul.u32 32, %s19
      %p293 = scmp.lt.s32.totalorder %s292, 63
      %s294 = scalar_select %p293, %s292, 63
      %s295 = smul.addr %s294, 8
      %s296 = scalar_lea.vmem %s8, %s295
      %s297 = smul.u32 32, %s19
      %p298 = scmp.lt.s32.totalorder %s297, 63
      %s299 = scalar_select %p298, %s297, 63
      %s300 = smul.addr %s299, 8
      %s301 = scalar_lea.vmem %s0, %s300
      %s302 = smul.u32 32, %s19
      %s303 = smul.u32 32, %s19
      %p304 = scmp.lt.s32.totalorder %s303, 63
      %s305 = scalar_select %p304, %s303, 63
      %s306 = smul.addr %s305, 8
      %s307 = scalar_lea.vmem %s8, %s306
      %s308 = smul.u32 32, %s19
      %v310 = vld [vmem:[%s301] sm:$0xff]
      %v311 = vld [vmem:[%s301 + $0x8] sm:$0xff]
      %v312 = vld [vmem:[%s301 + $0x10] sm:$0xff]
      %v313 = vld [vmem:[%s301 + $0x18] sm:$0xff]
      %v314 = vld [vmem:[%s301 + $0x20] sm:$0xff]
      %v315 = vld [vmem:[%s301 + $0x28] sm:$0xff]
      %v316 = vld [vmem:[%s301 + $0x30] sm:$0xff]
      %v317 = vld [vmem:[%s301 + $0x38] sm:$0xff]
      %v318 = vld [vmem:[%s301 + $0x40] sm:$0xff]
      %v319 = vld [vmem:[%s301 + $0x48] sm:$0xff]
      %v320 = vld [vmem:[%s301 + $0x50] sm:$0xff]
      %v321 = vld [vmem:[%s301 + $0x58] sm:$0xff]
      %v322 = vld [vmem:[%s301 + $0x60] sm:$0xff]
      %v323 = vld [vmem:[%s301 + $0x68] sm:$0xff]
      %v324 = vld [vmem:[%s301 + $0x70] sm:$0xff]
      %v325 = vld [vmem:[%s301 + $0x78] sm:$0xff]
      %v326 = vld [vmem:[%s301 + $0x80] sm:$0xff]
      %v327 = vld [vmem:[%s301 + $0x88] sm:$0xff]
      %v328 = vld [vmem:[%s301 + $0x90] sm:$0xff]
      %v329 = vld [vmem:[%s301 + $0x98] sm:$0xff]
      %v330 = vld [vmem:[%s301 + $0xa0] sm:$0xff]
      %v331 = vld [vmem:[%s301 + $0xa8] sm:$0xff]
      %v332 = vld [vmem:[%s301 + $0xb0] sm:$0xff]
      %v333 = vld [vmem:[%s301 + $0xb8] sm:$0xff]
      %v334 = vld [vmem:[%s301 + $0xc0] sm:$0xff]
      %v335 = vld [vmem:[%s301 + $0xc8] sm:$0xff]
      %v336 = vld [vmem:[%s301 + $0xd0] sm:$0xff]
      %v337 = vld [vmem:[%s301 + $0xd8] sm:$0xff]
      %v338 = vld [vmem:[%s301 + $0xe0] sm:$0xff]
      %v339 = vld [vmem:[%s301 + $0xe8] sm:$0xff]
      %v340 = vld [vmem:[%s301 + $0xf0] sm:$0xff]
      %v341 = vld [vmem:[%s301 + $0xf8] sm:$0xff]
      %v342 = vld [vmem:[%s1] sm:$0x1]
      %v343 = vld [vmem:[%s2] sm:$0x1]
      %344 = vadd.xlane.f32.xlu0 %v310
      %v345 = vpop.xlane.xlu0 %344
      %346 = vadd.xlane.f32.xlu0 %v311
      %v347 = vpop.xlane.xlu0 %346
      %348 = vadd.xlane.f32.xlu0 %v312
      %v349 = vpop.xlane.xlu0 %348
      %350 = vadd.xlane.f32.xlu0 %v313
      %v351 = vpop.xlane.xlu0 %350
      %352 = vadd.xlane.f32.xlu0 %v314
      %v353 = vpop.xlane.xlu0 %352
      %354 = vadd.xlane.f32.xlu0 %v315
      %v355 = vpop.xlane.xlu0 %354
      %356 = vadd.xlane.f32.xlu0 %v316
      %v357 = vpop.xlane.xlu0 %356
      %358 = vadd.xlane.f32.xlu0 %v317
      %v359 = vpop.xlane.xlu0 %358
      %360 = vadd.xlane.f32.xlu0 %v318
      %v361 = vpop.xlane.xlu0 %360
      %362 = vadd.xlane.f32.xlu0 %v319
      %v363 = vpop.xlane.xlu0 %362
      %364 = vadd.xlane.f32.xlu0 %v320
      %v365 = vpop.xlane.xlu0 %364
      %366 = vadd.xlane.f32.xlu0 %v321
      %v367 = vpop.xlane.xlu0 %366
      %368 = vadd.xlane.f32.xlu0 %v322
      %v369 = vpop.xlane.xlu0 %368
      %370 = vadd.xlane.f32.xlu0 %v323
      %v371 = vpop.xlane.xlu0 %370
      %372 = vadd.xlane.f32.xlu0 %v324
      %v373 = vpop.xlane.xlu0 %372
      %374 = vadd.xlane.f32.xlu0 %v325
      %v375 = vpop.xlane.xlu0 %374
      %376 = vadd.xlane.f32.xlu0 %v326
      %v377 = vpop.xlane.xlu0 %376
      %378 = vadd.xlane.f32.xlu0 %v327
      %v379 = vpop.xlane.xlu0 %378
      %380 = vadd.xlane.f32.xlu0 %v328
      %v381 = vpop.xlane.xlu0 %380
      %382 = vadd.xlane.f32.xlu0 %v329
      %v383 = vpop.xlane.xlu0 %382
      %384 = vadd.xlane.f32.xlu0 %v330
      %v385 = vpop.xlane.xlu0 %384
      %386 = vadd.xlane.f32.xlu0 %v331
      %v387 = vpop.xlane.xlu0 %386
      %388 = vadd.xlane.f32.xlu0 %v332
      %v389 = vpop.xlane.xlu0 %388
      %390 = vadd.xlane.f32.xlu0 %v333
      %v391 = vpop.xlane.xlu0 %390
      %392 = vadd.xlane.f32.xlu0 %v334
      %v393 = vpop.xlane.xlu0 %392
      %394 = vadd.xlane.f32.xlu0 %v335
      %v395 = vpop.xlane.xlu0 %394
      %396 = vadd.xlane.f32.xlu0 %v336
      %v397 = vpop.xlane.xlu0 %396
      %398 = vadd.xlane.f32.xlu0 %v337
      %v399 = vpop.xlane.xlu0 %398
      %400 = vadd.xlane.f32.xlu0 %v338
      %v401 = vpop.xlane.xlu0 %400
      %402 = vadd.xlane.f32.xlu0 %v339
      %v403 = vpop.xlane.xlu0 %402
      %404 = vadd.xlane.f32.xlu0 %v340
      %v405 = vpop.xlane.xlu0 %404
      %406 = vadd.xlane.f32.xlu0 %v341
      %v407 = vpop.xlane.xlu0 %406
      %v408 = vmul.f32 %v345, 0.0625
      %v409 = vmul.f32 %v347, 0.0625
      %v410 = vmul.f32 %v349, 0.0625
      %v411 = vmul.f32 %v351, 0.0625
      %v412 = vmul.f32 %v353, 0.0625
      %v413 = vmul.f32 %v355, 0.0625
      %v414 = vmul.f32 %v357, 0.0625
      %v415 = vmul.f32 %v359, 0.0625
      %v416 = vmul.f32 %v361, 0.0625
      %v417 = vmul.f32 %v363, 0.0625
      %v418 = vmul.f32 %v365, 0.0625
      %v419 = vmul.f32 %v367, 0.0625
      %v420 = vmul.f32 %v369, 0.0625
      %v421 = vmul.f32 %v371, 0.0625
      %v422 = vmul.f32 %v373, 0.0625
      %v423 = vmul.f32 %v375, 0.0625
      %v424 = vmul.f32 %v377, 0.0625
      %v425 = vmul.f32 %v379, 0.0625
      %v426 = vmul.f32 %v381, 0.0625
      %v427 = vmul.f32 %v383, 0.0625
      %v428 = vmul.f32 %v385, 0.0625
      %v429 = vmul.f32 %v387, 0.0625
      %v430 = vmul.f32 %v389, 0.0625
      %v431 = vmul.f32 %v391, 0.0625
      %v432 = vmul.f32 %v393, 0.0625
      %v433 = vmul.f32 %v395, 0.0625
      %v434 = vmul.f32 %v397, 0.0625
      %v435 = vmul.f32 %v399, 0.0625
      %v436 = vmul.f32 %v401, 0.0625
      %v437 = vmul.f32 %v403, 0.0625
      %v438 = vmul.f32 %v405, 0.0625
      %v439 = vmul.f32 %v407, 0.0625
      %v440 = vsub.f32 %v310, %v408
      %v441 = vsub.f32 %v311, %v409
      %v442 = vsub.f32 %v312, %v410
      %v443 = vsub.f32 %v313, %v411
      %v444 = vsub.f32 %v314, %v412
      %v445 = vsub.f32 %v315, %v413
      %v446 = vsub.f32 %v316, %v414
      %v447 = vsub.f32 %v317, %v415
      %v448 = vsub.f32 %v318, %v416
      %v449 = vsub.f32 %v319, %v417
      %v450 = vsub.f32 %v320, %v418
      %v451 = vsub.f32 %v321, %v419
      %v452 = vsub.f32 %v322, %v420
      %v453 = vsub.f32 %v323, %v421
      %v454 = vsub.f32 %v324, %v422
      %v455 = vsub.f32 %v325, %v423
      %v456 = vsub.f32 %v326, %v424
      %v457 = vsub.f32 %v327, %v425
      %v458 = vsub.f32 %v328, %v426
      %v459 = vsub.f32 %v329, %v427
      %v460 = vsub.f32 %v330, %v428
      %v461 = vsub.f32 %v331, %v429
      %v462 = vsub.f32 %v332, %v430
      %v463 = vsub.f32 %v333, %v431
      %v464 = vsub.f32 %v334, %v432
      %v465 = vsub.f32 %v335, %v433
      %v466 = vsub.f32 %v336, %v434
      %v467 = vsub.f32 %v337, %v435
      %v468 = vsub.f32 %v338, %v436
      %v469 = vsub.f32 %v339, %v437
      %v470 = vsub.f32 %v340, %v438
      %v471 = vsub.f32 %v341, %v439
      %v472 = vlaneseq
      %v473 = vand.u32 %v472, 127
      %vm474 = vcmp.lt.s32.totalorder %v473, 16
      %v475 = vsel %vm474, 1, 0
      %vm476 = vcmp.eq.s32.totalorder %v475, 1
      %v477 = vsel %vm476, %v440, 0.0
      %v478 = vsel %vm476, %v441, 0.0
      %v479 = vsel %vm476, %v442, 0.0
      %v480 = vsel %vm476, %v443, 0.0
      %v481 = vsel %vm476, %v444, 0.0
      %v482 = vsel %vm476, %v445, 0.0
      %v483 = vsel %vm476, %v446, 0.0
      %v484 = vsel %vm476, %v447, 0.0
      %v485 = vsel %vm476, %v448, 0.0
      %v486 = vsel %vm476, %v449, 0.0
      %v487 = vsel %vm476, %v450, 0.0
      %v488 = vsel %vm476, %v451, 0.0
      %v489 = vsel %vm476, %v452, 0.0
      %v490 = vsel %vm476, %v453, 0.0
      %v491 = vsel %vm476, %v454, 0.0
      %v492 = vsel %vm476, %v455, 0.0
      %v493 = vsel %vm476, %v456, 0.0
      %v494 = vsel %vm476, %v457, 0.0
      %v495 = vsel %vm476, %v458, 0.0
      %v496 = vsel %vm476, %v459, 0.0
      %v497 = vsel %vm476, %v460, 0.0
      %v498 = vsel %vm476, %v461, 0.0
      %v499 = vsel %vm476, %v462, 0.0
      %v500 = vsel %vm476, %v463, 0.0
      %v501 = vsel %vm476, %v464, 0.0
      %v502 = vsel %vm476, %v465, 0.0
      %v503 = vsel %vm476, %v466, 0.0
      %v504 = vsel %vm476, %v467, 0.0
      %v505 = vsel %vm476, %v468, 0.0
      %v506 = vsel %vm476, %v469, 0.0
      %v507 = vsel %vm476, %v470, 0.0
      %v508 = vsel %vm476, %v471, 0.0
      %v509 = vmul.f32 %v477, %v477
      %v510 = vmul.f32 %v478, %v478
      %v511 = vmul.f32 %v479, %v479
      %v512 = vmul.f32 %v480, %v480
      %v513 = vmul.f32 %v481, %v481
      %v514 = vmul.f32 %v482, %v482
      %v515 = vmul.f32 %v483, %v483
      %v516 = vmul.f32 %v484, %v484
      %v517 = vmul.f32 %v485, %v485
      %v518 = vmul.f32 %v486, %v486
      %v519 = vmul.f32 %v487, %v487
      %v520 = vmul.f32 %v488, %v488
      %v521 = vmul.f32 %v489, %v489
      %v522 = vmul.f32 %v490, %v490
      %v523 = vmul.f32 %v491, %v491
      %v524 = vmul.f32 %v492, %v492
      %v525 = vmul.f32 %v493, %v493
      %v526 = vmul.f32 %v494, %v494
      %v527 = vmul.f32 %v495, %v495
      %v528 = vmul.f32 %v496, %v496
      %v529 = vmul.f32 %v497, %v497
      %v530 = vmul.f32 %v498, %v498
      %v531 = vmul.f32 %v499, %v499
      %v532 = vmul.f32 %v500, %v500
      %v533 = vmul.f32 %v501, %v501
      %v534 = vmul.f32 %v502, %v502
      %v535 = vmul.f32 %v503, %v503
      %v536 = vmul.f32 %v504, %v504
      %v537 = vmul.f32 %v505, %v505
      %v538 = vmul.f32 %v506, %v506
      %v539 = vmul.f32 %v507, %v507
      %v540 = vmul.f32 %v508, %v508
      %541 = vadd.xlane.f32.xlu0 %v509
      %v542 = vpop.xlane.xlu0 %541
      %543 = vadd.xlane.f32.xlu0 %v510
      %v544 = vpop.xlane.xlu0 %543
      %545 = vadd.xlane.f32.xlu0 %v511
      %v546 = vpop.xlane.xlu0 %545
      %547 = vadd.xlane.f32.xlu0 %v512
      %v548 = vpop.xlane.xlu0 %547
      %549 = vadd.xlane.f32.xlu0 %v513
      %v550 = vpop.xlane.xlu0 %549
      %551 = vadd.xlane.f32.xlu0 %v514
      %v552 = vpop.xlane.xlu0 %551
      %553 = vadd.xlane.f32.xlu0 %v515
      %v554 = vpop.xlane.xlu0 %553
      %555 = vadd.xlane.f32.xlu0 %v516
      %v556 = vpop.xlane.xlu0 %555
      %557 = vadd.xlane.f32.xlu0 %v517
      %v558 = vpop.xlane.xlu0 %557
      %559 = vadd.xlane.f32.xlu0 %v518
      %v560 = vpop.xlane.xlu0 %559
      %561 = vadd.xlane.f32.xlu0 %v519
      %v562 = vpop.xlane.xlu0 %561
      %563 = vadd.xlane.f32.xlu0 %v520
      %v564 = vpop.xlane.xlu0 %563
      %565 = vadd.xlane.f32.xlu0 %v521
      %v566 = vpop.xlane.xlu0 %565
      %567 = vadd.xlane.f32.xlu0 %v522
      %v568 = vpop.xlane.xlu0 %567
      %569 = vadd.xlane.f32.xlu0 %v523
      %v570 = vpop.xlane.xlu0 %569
      %571 = vadd.xlane.f32.xlu0 %v524
      %v572 = vpop.xlane.xlu0 %571
      %573 = vadd.xlane.f32.xlu0 %v525
      %v574 = vpop.xlane.xlu0 %573
      %575 = vadd.xlane.f32.xlu0 %v526
      %v576 = vpop.xlane.xlu0 %575
      %577 = vadd.xlane.f32.xlu0 %v527
      %v578 = vpop.xlane.xlu0 %577
      %579 = vadd.xlane.f32.xlu0 %v528
      %v580 = vpop.xlane.xlu0 %579
      %581 = vadd.xlane.f32.xlu0 %v529
      %v582 = vpop.xlane.xlu0 %581
      %583 = vadd.xlane.f32.xlu0 %v530
      %v584 = vpop.xlane.xlu0 %583
      %585 = vadd.xlane.f32.xlu0 %v531
      %v586 = vpop.xlane.xlu0 %585
      %587 = vadd.xlane.f32.xlu0 %v532
      %v588 = vpop.xlane.xlu0 %587
      %589 = vadd.xlane.f32.xlu0 %v533
      %v590 = vpop.xlane.xlu0 %589
      %591 = vadd.xlane.f32.xlu0 %v534
      %v592 = vpop.xlane.xlu0 %591
      %593 = vadd.xlane.f32.xlu0 %v535
      %v594 = vpop.xlane.xlu0 %593
      %595 = vadd.xlane.f32.xlu0 %v536
      %v596 = vpop.xlane.xlu0 %595
      %597 = vadd.xlane.f32.xlu0 %v537
      %v598 = vpop.xlane.xlu0 %597
      %599 = vadd.xlane.f32.xlu0 %v538
      %v600 = vpop.xlane.xlu0 %599
      %601 = vadd.xlane.f32.xlu0 %v539
      %v602 = vpop.xlane.xlu0 %601
      %603 = vadd.xlane.f32.xlu0 %v540
      %v604 = vpop.xlane.xlu0 %603
      %v605 = vmul.f32 %v542, 0.0625
      %v606 = vmul.f32 %v544, 0.0625
      %v607 = vmul.f32 %v546, 0.0625
      %v608 = vmul.f32 %v548, 0.0625
      %v609 = vmul.f32 %v550, 0.0625
      %v610 = vmul.f32 %v552, 0.0625
      %v611 = vmul.f32 %v554, 0.0625
      %v612 = vmul.f32 %v556, 0.0625
      %v613 = vmul.f32 %v558, 0.0625
      %v614 = vmul.f32 %v560, 0.0625
      %v615 = vmul.f32 %v562, 0.0625
      %v616 = vmul.f32 %v564, 0.0625
      %v617 = vmul.f32 %v566, 0.0625
      %v618 = vmul.f32 %v568, 0.0625
      %v619 = vmul.f32 %v570, 0.0625
      %v620 = vmul.f32 %v572, 0.0625
      %v621 = vmul.f32 %v574, 0.0625
      %v622 = vmul.f32 %v576, 0.0625
      %v623 = vmul.f32 %v578, 0.0625
      %v624 = vmul.f32 %v580, 0.0625
      %v625 = vmul.f32 %v582, 0.0625
      %v626 = vmul.f32 %v584, 0.0625
      %v627 = vmul.f32 %v586, 0.0625
      %v628 = vmul.f32 %v588, 0.0625
      %v629 = vmul.f32 %v590, 0.0625
      %v630 = vmul.f32 %v592, 0.0625
      %v631 = vmul.f32 %v594, 0.0625
      %v632 = vmul.f32 %v596, 0.0625
      %v633 = vmul.f32 %v598, 0.0625
      %v634 = vmul.f32 %v600, 0.0625
      %v635 = vmul.f32 %v602, 0.0625
      %v636 = vmul.f32 %v604, 0.0625
      %v637 = vadd.f32 %v605, 1e-05
      %v638 = vadd.f32 %v606, 1e-05
      %v639 = vadd.f32 %v607, 1e-05
      %v640 = vadd.f32 %v608, 1e-05
      %v641 = vadd.f32 %v609, 1e-05
      %v642 = vadd.f32 %v610, 1e-05
      %v643 = vadd.f32 %v611, 1e-05
      %v644 = vadd.f32 %v612, 1e-05
      %v645 = vadd.f32 %v613, 1e-05
      %v646 = vadd.f32 %v614, 1e-05
      %v647 = vadd.f32 %v615, 1e-05
      %v648 = vadd.f32 %v616, 1e-05
      %v649 = vadd.f32 %v617, 1e-05
      %v650 = vadd.f32 %v618, 1e-05
      %v651 = vadd.f32 %v619, 1e-05
      %v652 = vadd.f32 %v620, 1e-05
      %v653 = vadd.f32 %v621, 1e-05
      %v654 = vadd.f32 %v622, 1e-05
      %v655 = vadd.f32 %v623, 1e-05
      %v656 = vadd.f32 %v624, 1e-05
      %v657 = vadd.f32 %v625, 1e-05
      %v658 = vadd.f32 %v626, 1e-05
      %v659 = vadd.f32 %v627, 1e-05
      %v660 = vadd.f32 %v628, 1e-05
      %v661 = vadd.f32 %v629, 1e-05
      %v662 = vadd.f32 %v630, 1e-05
      %v663 = vadd.f32 %v631, 1e-05
      %v664 = vadd.f32 %v632, 1e-05
      %v665 = vadd.f32 %v633, 1e-05
      %v666 = vadd.f32 %v634, 1e-05
      %v667 = vadd.f32 %v635, 1e-05
      %v668 = vadd.f32 %v636, 1e-05
      %v669 = vrsqrt.pop %v637
      %v670 = vrsqrt.pop %v638
      %v671 = vrsqrt.pop %v639
      %v672 = vrsqrt.pop %v640
      %v673 = vrsqrt.pop %v641
      %v674 = vrsqrt.pop %v642
      %v675 = vrsqrt.pop %v643
      %v676 = vrsqrt.pop %v644
      %v677 = vrsqrt.pop %v645
      %v678 = vrsqrt.pop %v646
      %v679 = vrsqrt.pop %v647
      %v680 = vrsqrt.pop %v648
      %v681 = vrsqrt.pop %v649
      %v682 = vrsqrt.pop %v650
      %v683 = vrsqrt.pop %v651
      %v684 = vrsqrt.pop %v652
      %v685 = vrsqrt.pop %v653
      %v686 = vrsqrt.pop %v654
      %v687 = vrsqrt.pop %v655
      %v688 = vrsqrt.pop %v656
      %v689 = vrsqrt.pop %v657
      %v690 = vrsqrt.pop %v658
      %v691 = vrsqrt.pop %v659
      %v692 = vrsqrt.pop %v660
      %v693 = vrsqrt.pop %v661
      %v694 = vrsqrt.pop %v662
      %v695 = vrsqrt.pop %v663
      %v696 = vrsqrt.pop %v664
      %v697 = vrsqrt.pop %v665
      %v698 = vrsqrt.pop %v666
      %v699 = vrsqrt.pop %v667
      %v700 = vrsqrt.pop %v668
      %v701 = vmul.f32 %v440, %v669
      %v702 = vmul.f32 %v441, %v670
      %v703 = vmul.f32 %v442, %v671
      %v704 = vmul.f32 %v443, %v672
      %v705 = vmul.f32 %v444, %v673
      %v706 = vmul.f32 %v445, %v674
      %v707 = vmul.f32 %v446, %v675
      %v708 = vmul.f32 %v447, %v676
      %v709 = vmul.f32 %v448, %v677
      %v710 = vmul.f32 %v449, %v678
      %v711 = vmul.f32 %v450, %v679
      %v712 = vmul.f32 %v451, %v680
      %v713 = vmul.f32 %v452, %v681
      %v714 = vmul.f32 %v453, %v682
      %v715 = vmul.f32 %v454, %v683
      %v716 = vmul.f32 %v455, %v684
      %v717 = vmul.f32 %v456, %v685
      %v718 = vmul.f32 %v457, %v686
      %v719 = vmul.f32 %v458, %v687
      %v720 = vmul.f32 %v459, %v688
      %v721 = vmul.f32 %v460, %v689
      %v722 = vmul.f32 %v461, %v690
      %v723 = vmul.f32 %v462, %v691
      %v724 = vmul.f32 %v463, %v692
      %v725 = vmul.f32 %v464, %v693
      %v726 = vmul.f32 %v465, %v694
      %v727 = vmul.f32 %v466, %v695
      %v728 = vmul.f32 %v467, %v696
      %v729 = vmul.f32 %v468, %v697
      %v730 = vmul.f32 %v469, %v698
      %v731 = vmul.f32 %v470, %v699
      %v732 = vmul.f32 %v471, %v700
      %v734 = vlaneseq
      %v735 = vshrl.u32 %v734, 7
      %v736 = vsub.s32 0, %v735
      %v737 = vrot.slane %v342, %v736
      %v739 = vmul.f32 %v701, %v737
      %v740 = vmul.f32 %v702, %v737
      %v741 = vmul.f32 %v703, %v737
      %v742 = vmul.f32 %v704, %v737
      %v743 = vmul.f32 %v705, %v737
      %v744 = vmul.f32 %v706, %v737
      %v745 = vmul.f32 %v707, %v737
      %v746 = vmul.f32 %v708, %v737
      %v747 = vmul.f32 %v709, %v737
      %v748 = vmul.f32 %v710, %v737
      %v749 = vmul.f32 %v711, %v737
      %v750 = vmul.f32 %v712, %v737
      %v751 = vmul.f32 %v713, %v737
      %v752 = vmul.f32 %v714, %v737
      %v753 = vmul.f32 %v715, %v737
      %v754 = vmul.f32 %v716, %v737
      %v755 = vmul.f32 %v717, %v737
      %v756 = vmul.f32 %v718, %v737
      %v757 = vmul.f32 %v719, %v737
      %v758 = vmul.f32 %v720, %v737
      %v759 = vmul.f32 %v721, %v737
      %v760 = vmul.f32 %v722, %v737
      %v761 = vmul.f32 %v723, %v737
      %v762 = vmul.f32 %v724, %v737
      %v763 = vmul.f32 %v725, %v737
      %v764 = vmul.f32 %v726, %v737
      %v765 = vmul.f32 %v727, %v737
      %v766 = vmul.f32 %v728, %v737
      %v767 = vmul.f32 %v729, %v737
      %v768 = vmul.f32 %v730, %v737
      %v769 = vmul.f32 %v731, %v737
      %v770 = vmul.f32 %v732, %v737
      %v772 = vlaneseq
      %v773 = vshrl.u32 %v772, 7
      %v774 = vsub.s32 0, %v773
      %v775 = vrot.slane %v343, %v774
      %v777 = vadd.f32 %v739, %v775
      %v778 = vadd.f32 %v740, %v775
      %v779 = vadd.f32 %v741, %v775
      %v780 = vadd.f32 %v742, %v775
      %v781 = vadd.f32 %v743, %v775
      %v782 = vadd.f32 %v744, %v775
      %v783 = vadd.f32 %v745, %v775
      %v784 = vadd.f32 %v746, %v775
      %v785 = vadd.f32 %v747, %v775
      %v786 = vadd.f32 %v748, %v775
      %v787 = vadd.f32 %v749, %v775
      %v788 = vadd.f32 %v750, %v775
      %v789 = vadd.f32 %v751, %v775
      %v790 = vadd.f32 %v752, %v775
      %v791 = vadd.f32 %v753, %v775
      %v792 = vadd.f32 %v754, %v775
      %v793 = vadd.f32 %v755, %v775
      %v794 = vadd.f32 %v756, %v775
      %v795 = vadd.f32 %v757, %v775
      %v796 = vadd.f32 %v758, %v775
      %v797 = vadd.f32 %v759, %v775
      %v798 = vadd.f32 %v760, %v775
      %v799 = vadd.f32 %v761, %v775
      %v800 = vadd.f32 %v762, %v775
      %v801 = vadd.f32 %v763, %v775
      %v802 = vadd.f32 %v764, %v775
      %v803 = vadd.f32 %v765, %v775
      %v804 = vadd.f32 %v766, %v775
      %v805 = vadd.f32 %v767, %v775
      %v806 = vadd.f32 %v768, %v775
      %v807 = vadd.f32 %v769, %v775
      %v808 = vadd.f32 %v770, %v775
      %v809 = vpack.c.bf16 %v778, %v777
      %v810 = vpack.c.bf16 %v780, %v779
      %v811 = vpack.c.bf16 %v782, %v781
      %v812 = vpack.c.bf16 %v784, %v783
      %v813 = vpack.c.bf16 %v786, %v785
      %v814 = vpack.c.bf16 %v788, %v787
      %v815 = vpack.c.bf16 %v790, %v789
      %v816 = vpack.c.bf16 %v792, %v791
      %v817 = vpack.c.bf16 %v794, %v793
      %v818 = vpack.c.bf16 %v796, %v795
      %v819 = vpack.c.bf16 %v798, %v797
      %v820 = vpack.c.bf16 %v800, %v799
      %v821 = vpack.c.bf16 %v802, %v801
      %v822 = vpack.c.bf16 %v804, %v803
      %v823 = vpack.c.bf16 %v806, %v805
      %v824 = vpack.c.bf16 %v808, %v807
      %v825 = vld [vmem:[%s3] sm:$0xf]
      %v826 = vld [vmem:[%s3 + $0x4] sm:$0xf]
      %v827 = vld [vmem:[%s3 + $0x8] sm:$0xf]
      %v828 = vld [vmem:[%s3 + $0xc] sm:$0xf]
      %v829 = vld [vmem:[%s3 + $0x10] sm:$0xf]
      %v830 = vld [vmem:[%s3 + $0x14] sm:$0xf]
      %v831 = vld [vmem:[%s3 + $0x18] sm:$0xf]
      %v832 = vld [vmem:[%s3 + $0x1c] sm:$0xf]
      %v833 = vld [vmem:[%s3 + $0x20] sm:$0xf]
      %v834 = vld [vmem:[%s3 + $0x24] sm:$0xf]
      %v835 = vld [vmem:[%s3 + $0x28] sm:$0xf]
      %v836 = vld [vmem:[%s3 + $0x2c] sm:$0xf]
      %v837 = vld [vmem:[%s3 + $0x30] sm:$0xf]
      %v838 = vld [vmem:[%s3 + $0x34] sm:$0xf]
      %v839 = vld [vmem:[%s3 + $0x38] sm:$0xf]
      %v840 = vld [vmem:[%s3 + $0x3c] sm:$0xf]
      %v841 = vld [vmem:[%s4] sm:$0x1]
      %v843 = vlaneseq
      %v844 = vshrl.u32 %v843, 7
      %v845 = vsub.s32 0, %v844
      %v846 = vrot.slane %v841, %v845
      %v864 = vunpack.c.l.b16 %v825
      %v865 = vunpack.c.l.b16 %v826
      %v866 = vunpack.c.l.b16 %v827
      %v867 = vunpack.c.l.b16 %v828
      %v868 = vunpack.c.l.b16 %v829
      %v869 = vunpack.c.l.b16 %v830
      %v870 = vunpack.c.l.b16 %v831
      %v871 = vunpack.c.l.b16 %v832
      %v872 = vunpack.c.l.b16 %v833
      %v873 = vunpack.c.l.b16 %v834
      %v874 = vunpack.c.l.b16 %v835
      %v875 = vunpack.c.l.b16 %v836
      %v876 = vunpack.c.l.b16 %v837
      %v877 = vunpack.c.l.b16 %v838
      %v878 = vunpack.c.l.b16 %v839
      %v879 = vunpack.c.l.b16 %v840
      %v880 = vpack.c.b16 %v865, %v864
      %v881 = vpack.c.b16 %v867, %v866
      %v882 = vpack.c.b16 %v869, %v868
      %v883 = vpack.c.b16 %v871, %v870
      %v884 = vpack.c.b16 %v873, %v872
      %v885 = vpack.c.b16 %v875, %v874
      %v886 = vpack.c.b16 %v877, %v876
      %v887 = vpack.c.b16 %v879, %v878
      %896 = vmatprep.subr.bf16.mxu0 0
      %897 = vmatpush1.bf16.msra.mxu0 %v887
      %898 = vmatprep.subr.bf16.mxu0 0
      %899 = vmatpush1.bf16.msra.mxu0 %v886
      %900 = vmatprep.subr.bf16.mxu0 0
      %901 = vmatpush1.bf16.msra.mxu0 %v885
      %902 = vmatprep.subr.bf16.mxu0 0
      %903 = vmatpush1.bf16.msra.mxu0 %v884
      %904 = vmatprep.subr.bf16.mxu0 0
      %905 = vmatpush1.bf16.msra.mxu0 %v883
      %906 = vmatprep.subr.bf16.mxu0 0
      %907 = vmatpush1.bf16.msra.mxu0 %v882
      %908 = vmatprep.subr.bf16.mxu0 0
      %909 = vmatpush1.bf16.msra.mxu0 %v881
      %910 = vmatprep.subr.bf16.mxu0 0
      %911 = vmatpush1.bf16.msra.mxu0 %v880
      %912 = vmatprep.subr.bf16.mxu0 0
      %913 = vmatpush2.bf16.msra.mxu0 0
      %914 = vmatprep.subr.bf16.mxu0 0
      %915 = vmatpush2.bf16.msra.mxu0 0
      %916 = vmatprep.subr.bf16.mxu0 0
      %917 = vmatpush2.bf16.msra.mxu0 0
      %918 = vmatprep.subr.bf16.mxu0 0
      %919 = vmatpush2.bf16.msra.mxu0 0
      %920 = vmatprep.subr.bf16.mxu0 0
      %921 = vmatpush2.bf16.msra.mxu0 0
      %922 = vmatprep.subr.bf16.mxu0 0
      %923 = vmatpush2.bf16.msra.mxu0 0
      %924 = vmatprep.subr.bf16.mxu0 0
      %925 = vmatpush2.bf16.msra.mxu0 0
      %926 = vmatprep.subr.bf16.mxu0 0
      %927 = vmatpush2.bf16.msra.mxu0 0
      %928 = vmatprep.mubr.bf16.mxu0 0
      %929 = vmatmul.mubr.bf16.gmra.mxu0 %v809
      %v930 = vpop.f32.mrf.mxu0
      %v931 = vadd.f32 %v846, %v930
      %v932 = vpop.f32.mrf.mxu0
      %v933 = vpop.f32.mrf.mxu0
      %v934 = vadd.f32 %v846, %v933
      %v935 = vpop.f32.mrf.mxu0
      %936 = vmatprep.mubr.bf16.mxu0 0
      %937 = vmatmul.mubr.bf16.gmra.mxu0 %v810
      %v938 = vpop.f32.mrf.mxu0
      %v939 = vadd.f32 %v846, %v938
      %v940 = vpop.f32.mrf.mxu0
      %v941 = vpop.f32.mrf.mxu0
      %v942 = vadd.f32 %v846, %v941
      %v943 = vpop.f32.mrf.mxu0
      %944 = vmatprep.mubr.bf16.mxu0 0
      %945 = vmatmul.mubr.bf16.gmra.mxu0 %v811
      %v946 = vpop.f32.mrf.mxu0
      %v947 = vadd.f32 %v846, %v946
      %v948 = vpop.f32.mrf.mxu0
      %v949 = vpop.f32.mrf.mxu0
      %v950 = vadd.f32 %v846, %v949
      %v951 = vpop.f32.mrf.mxu0
      %952 = vmatprep.mubr.bf16.mxu0 0
      %953 = vmatmul.mubr.bf16.gmra.mxu0 %v812
      %v954 = vpop.f32.mrf.mxu0
      %v955 = vadd.f32 %v846, %v954
      %v956 = vpop.f32.mrf.mxu0
      %v957 = vpop.f32.mrf.mxu0
      %v958 = vadd.f32 %v846, %v957
      %v959 = vpop.f32.mrf.mxu0
      %960 = vmatprep.mubr.bf16.mxu0 0
      %961 = vmatmul.mubr.bf16.gmra.mxu0 %v813
      %v962 = vpop.f32.mrf.mxu0
      %v963 = vadd.f32 %v846, %v962
      %v964 = vpop.f32.mrf.mxu0
      %v965 = vpop.f32.mrf.mxu0
      %v966 = vadd.f32 %v846, %v965
      %v967 = vpop.f32.mrf.mxu0
      %968 = vmatprep.mubr.bf16.mxu0 0
      %969 = vmatmul.mubr.bf16.gmra.mxu0 %v814
      %v970 = vpop.f32.mrf.mxu0
      %v971 = vadd.f32 %v846, %v970
      %v972 = vpop.f32.mrf.mxu0
      %v973 = vpop.f32.mrf.mxu0
      %v974 = vadd.f32 %v846, %v973
      %v975 = vpop.f32.mrf.mxu0
      %976 = vmatprep.mubr.bf16.mxu0 0
      %977 = vmatmul.mubr.bf16.gmra.mxu0 %v815
      %v978 = vpop.f32.mrf.mxu0
      %v979 = vadd.f32 %v846, %v978
      %v980 = vpop.f32.mrf.mxu0
      %v981 = vpop.f32.mrf.mxu0
      %v982 = vadd.f32 %v846, %v981
      %v983 = vpop.f32.mrf.mxu0
      %984 = vmatprep.mubr.bf16.mxu0 0
      %985 = vmatmul.mubr.bf16.gmra.mxu0 %v816
      %v986 = vpop.f32.mrf.mxu0
      %v987 = vadd.f32 %v846, %v986
      %v988 = vpop.f32.mrf.mxu0
      %v989 = vpop.f32.mrf.mxu0
      %v990 = vadd.f32 %v846, %v989
      %v991 = vpop.f32.mrf.mxu0
      %992 = vmatprep.mubr.bf16.mxu0 0
      %993 = vmatmul.mubr.bf16.gmra.mxu0 %v817
      %v994 = vpop.f32.mrf.mxu0
      %v995 = vadd.f32 %v846, %v994
      %v996 = vpop.f32.mrf.mxu0
      %v997 = vpop.f32.mrf.mxu0
      %v998 = vadd.f32 %v846, %v997
      %v999 = vpop.f32.mrf.mxu0
      %1000 = vmatprep.mubr.bf16.mxu0 0
      %1001 = vmatmul.mubr.bf16.gmra.mxu0 %v818
      %v1002 = vpop.f32.mrf.mxu0
      %v1003 = vadd.f32 %v846, %v1002
      %v1004 = vpop.f32.mrf.mxu0
      %v1005 = vpop.f32.mrf.mxu0
      %v1006 = vadd.f32 %v846, %v1005
      %v1007 = vpop.f32.mrf.mxu0
      %1008 = vmatprep.mubr.bf16.mxu0 0
      %1009 = vmatmul.mubr.bf16.gmra.mxu0 %v819
      %v1010 = vpop.f32.mrf.mxu0
      %v1011 = vadd.f32 %v846, %v1010
      %v1012 = vpop.f32.mrf.mxu0
      %v1013 = vpop.f32.mrf.mxu0
      %v1014 = vadd.f32 %v846, %v1013
      %v1015 = vpop.f32.mrf.mxu0
      %1016 = vmatprep.mubr.bf16.mxu0 0
      %1017 = vmatmul.mubr.bf16.gmra.mxu0 %v820
      %v1018 = vpop.f32.mrf.mxu0
      %v1019 = vadd.f32 %v846, %v1018
      %v1020 = vpop.f32.mrf.mxu0
      %v1021 = vpop.f32.mrf.mxu0
      %v1022 = vadd.f32 %v846, %v1021
      %v1023 = vpop.f32.mrf.mxu0
      %1024 = vmatprep.mubr.bf16.mxu0 0
      %1025 = vmatmul.mubr.bf16.gmra.mxu0 %v821
      %v1026 = vpop.f32.mrf.mxu0
      %v1027 = vadd.f32 %v846, %v1026
      %v1028 = vpop.f32.mrf.mxu0
      %v1029 = vpop.f32.mrf.mxu0
      %v1030 = vadd.f32 %v846, %v1029
      %v1031 = vpop.f32.mrf.mxu0
      %1032 = vmatprep.mubr.bf16.mxu0 0
      %1033 = vmatmul.mubr.bf16.gmra.mxu0 %v822
      %v1034 = vpop.f32.mrf.mxu0
      %v1035 = vadd.f32 %v846, %v1034
      %v1036 = vpop.f32.mrf.mxu0
      %v1037 = vpop.f32.mrf.mxu0
      %v1038 = vadd.f32 %v846, %v1037
      %v1039 = vpop.f32.mrf.mxu0
      %1040 = vmatprep.mubr.bf16.mxu0 0
      %1041 = vmatmul.mubr.bf16.gmra.mxu0 %v823
      %v1042 = vpop.f32.mrf.mxu0
      %v1043 = vadd.f32 %v846, %v1042
      %v1044 = vpop.f32.mrf.mxu0
      %v1045 = vpop.f32.mrf.mxu0
      %v1046 = vadd.f32 %v846, %v1045
      %v1047 = vpop.f32.mrf.mxu0
      %1048 = vmatprep.mubr.bf16.mxu0 0
      %1049 = vmatmul.mubr.bf16.gmra.mxu0 %v824
      %v1050 = vpop.f32.mrf.mxu0
      %v1051 = vadd.f32 %v846, %v1050
      %v1052 = vpop.f32.mrf.mxu0
      %v1053 = vpop.f32.mrf.mxu0
      %v1054 = vadd.f32 %v846, %v1053
      %v1055 = vpop.f32.mrf.mxu0
      %1056 = vdwg.mxu0
      %v1057 = vpack.c.bf16 %v934, %v931
      %v1058 = vpack.c.bf16 %v942, %v939
      %v1059 = vpack.c.bf16 %v950, %v947
      %v1060 = vpack.c.bf16 %v958, %v955
      %v1061 = vpack.c.bf16 %v966, %v963
      %v1062 = vpack.c.bf16 %v974, %v971
      %v1063 = vpack.c.bf16 %v982, %v979
      %v1064 = vpack.c.bf16 %v990, %v987
      %v1065 = vpack.c.bf16 %v998, %v995
      %v1066 = vpack.c.bf16 %v1006, %v1003
      %v1067 = vpack.c.bf16 %v1014, %v1011
      %v1068 = vpack.c.bf16 %v1022, %v1019
      %v1069 = vpack.c.bf16 %v1030, %v1027
      %v1070 = vpack.c.bf16 %v1038, %v1035
      %v1071 = vpack.c.bf16 %v1046, %v1043
      %v1072 = vpack.c.bf16 %v1054, %v1051
      %v1073 = vld [vmem:[%s5] sm:$0xff]
      %v1074 = vld [vmem:[%s5 + $0x8] sm:$0xff]
      %v1075 = vld [vmem:[%s5 + $0x10] sm:$0xff]
      %v1076 = vld [vmem:[%s5 + $0x18] sm:$0xff]
      %v1077 = vld [vmem:[%s5 + $0x20] sm:$0xff]
      %v1078 = vld [vmem:[%s5 + $0x28] sm:$0xff]
      %v1079 = vld [vmem:[%s5 + $0x30] sm:$0xff]
      %v1080 = vld [vmem:[%s5 + $0x38] sm:$0xff]
      %1085 = vrot.lane.b32.xlu0 %v1057, 112
      %v1086 = vpop.permute.xlu0 %1085
      %1087 = vrot.lane.b32.xlu0 %v1058, 112
      %v1088 = vpop.permute.xlu0 %1087
      %1089 = vrot.lane.b32.xlu0 %v1059, 112
      %v1090 = vpop.permute.xlu0 %1089
      %1091 = vrot.lane.b32.xlu0 %v1060, 112
      %v1092 = vpop.permute.xlu0 %1091
      %vm1093 = vcmask 64512
      %v1095 = vsel %vm1093, %v1057, 0
      %v1098 = vsel %vm1093, %v1058, 0
      %v1101 = vsel %vm1093, %v1059, 0
      %v1104 = vsel %vm1093, %v1060, 0
      %v1107 = vsel %vm1093, %v1086, 0
      %v1110 = vsel %vm1093, %v1088, 0
      %v1113 = vsel %vm1093, %v1090, 0
      %v1116 = vsel %vm1093, %v1092, 0
      %1118 = vmatprep.subr.bf16.mxu0 0
      %1119 = vmatpush1.bf16.xpose.msra.mxu0 0
      %1120 = vmatprep.subr.bf16.mxu0 0
      %1121 = vmatpush1.bf16.xpose.msra.mxu0 0
      %1122 = vmatprep.subr.bf16.mxu0 0
      %1123 = vmatpush1.bf16.xpose.msra.mxu0 0
      %1124 = vmatprep.subr.bf16.mxu0 0
      %1125 = vmatpush1.bf16.xpose.msra.mxu0 0
      %1126 = vmatprep.subr.bf16.mxu0 0
      %1127 = vmatpush1.bf16.xpose.msra.mxu0 %v1116
      %1128 = vmatprep.subr.bf16.mxu0 0
      %1129 = vmatpush1.bf16.xpose.msra.mxu0 %v1113
      %1130 = vmatprep.subr.bf16.mxu0 0
      %1131 = vmatpush1.bf16.xpose.msra.mxu0 %v1110
      %1132 = vmatprep.subr.bf16.mxu0 0
      %1133 = vmatpush1.bf16.xpose.msra.mxu0 %v1107
      %1134 = vmatprep.subr.bf16.mxu0 0
      %1135 = vmatpush2.bf16.xpose.msra.mxu0 0
      %1136 = vmatprep.subr.bf16.mxu0 0
      %1137 = vmatpush2.bf16.xpose.msra.mxu0 0
      %1138 = vmatprep.subr.bf16.mxu0 0
      %1139 = vmatpush2.bf16.xpose.msra.mxu0 0
      %1140 = vmatprep.subr.bf16.mxu0 0
      %1141 = vmatpush2.bf16.xpose.msra.mxu0 0
      %1142 = vmatprep.subr.bf16.mxu0 0
      %1143 = vmatpush2.bf16.xpose.msra.mxu0 0
      %1144 = vmatprep.subr.bf16.mxu0 0
      %1145 = vmatpush2.bf16.xpose.msra.mxu0 0
      %1146 = vmatprep.subr.bf16.mxu0 0
      %1147 = vmatpush2.bf16.xpose.msra.mxu0 0
      %1148 = vmatprep.subr.bf16.mxu0 0
      %1149 = vmatpush2.bf16.xpose.msra.mxu0 0
      %1150 = vmatprep.mubr.bf16.mxu0 0
      %1151 = vmatmul.mubr.bf16.gmra.mxu0 %v1095
      %v1152 = vpop.f32.mrf.mxu0
      %v1153 = vadd.f32 %v1073, %v1152
      %v1154 = vpop.f32.mrf.mxu0
      %v1155 = vpop.f32.mrf.mxu0
      %v1156 = vadd.f32 %v1074, %v1155
      %v1157 = vpop.f32.mrf.mxu0
      %1158 = vmatprep.mubr.bf16.mxu0 0
      %1159 = vmatmul.mubr.bf16.gmra.mxu0 %v1098
      %v1160 = vpop.f32.mrf.mxu0
      %v1161 = vadd.f32 %v1075, %v1160
      %v1162 = vpop.f32.mrf.mxu0
      %v1163 = vpop.f32.mrf.mxu0
      %v1164 = vadd.f32 %v1076, %v1163
      %v1165 = vpop.f32.mrf.mxu0
      %1166 = vmatprep.mubr.bf16.mxu0 0
      %1167 = vmatmul.mubr.bf16.gmra.mxu0 %v1101
      %v1168 = vpop.f32.mrf.mxu0
      %v1169 = vadd.f32 %v1077, %v1168
      %v1170 = vpop.f32.mrf.mxu0
      %v1171 = vpop.f32.mrf.mxu0
      %v1172 = vadd.f32 %v1078, %v1171
      %v1173 = vpop.f32.mrf.mxu0
      %1174 = vmatprep.mubr.bf16.mxu0 0
      %1175 = vmatmul.mubr.bf16.gmra.mxu0 %v1104
      %v1176 = vpop.f32.mrf.mxu0
      %v1177 = vadd.f32 %v1079, %v1176
      %v1178 = vpop.f32.mrf.mxu0
      %v1179 = vpop.f32.mrf.mxu0
      %v1180 = vadd.f32 %v1080, %v1179
      %v1181 = vpop.f32.mrf.mxu0
      %1182 = vdwg.mxu0
      %1187 = vrot.lane.b32.xlu0 %v1061, 112
      %v1188 = vpop.permute.xlu0 %1187
      %1189 = vrot.lane.b32.xlu0 %v1062, 112
      %v1190 = vpop.permute.xlu0 %1189
      %1191 = vrot.lane.b32.xlu0 %v1063, 112
      %v1192 = vpop.permute.xlu0 %1191
      %1193 = vrot.lane.b32.xlu0 %v1064, 112
      %v1194 = vpop.permute.xlu0 %1193
      %v1196 = vsel %vm1093, %v1061, 0
      %v1199 = vsel %vm1093, %v1062, 0
      %v1202 = vsel %vm1093, %v1063, 0
      %v1205 = vsel %vm1093, %v1064, 0
      %v1208 = vsel %vm1093, %v1188, 0
      %v1211 = vsel %vm1093, %v1190, 0
      %v1214 = vsel %vm1093, %v1192, 0
      %v1217 = vsel %vm1093, %v1194, 0
      %1219 = vmatprep.subr.bf16.mxu0 0
      %1220 = vmatpush1.bf16.xpose.msra.mxu0 0
      %1221 = vmatprep.subr.bf16.mxu0 0
      %1222 = vmatpush1.bf16.xpose.msra.mxu0 0
      %1223 = vmatprep.subr.bf16.mxu0 0
      %1224 = vmatpush1.bf16.xpose.msra.mxu0 0
      %1225 = vmatprep.subr.bf16.mxu0 0
      %1226 = vmatpush1.bf16.xpose.msra.mxu0 0
      %1227 = vmatprep.subr.bf16.mxu0 0
      %1228 = vmatpush1.bf16.xpose.msra.mxu0 %v1217
      %1229 = vmatprep.subr.bf16.mxu0 0
      %1230 = vmatpush1.bf16.xpose.msra.mxu0 %v1214
      %1231 = vmatprep.subr.bf16.mxu0 0
      %1232 = vmatpush1.bf16.xpose.msra.mxu0 %v1211
      %1233 = vmatprep.subr.bf16.mxu0 0
      %1234 = vmatpush1.bf16.xpose.msra.mxu0 %v1208
      %1235 = vmatprep.subr.bf16.mxu0 0
      %1236 = vmatpush2.bf16.xpose.msra.mxu0 0
      %1237 = vmatprep.subr.bf16.mxu0 0
      %1238 = vmatpush2.bf16.xpose.msra.mxu0 0
      %1239 = vmatprep.subr.bf16.mxu0 0
      %1240 = vmatpush2.bf16.xpose.msra.mxu0 0
      %1241 = vmatprep.subr.bf16.mxu0 0
      %1242 = vmatpush2.bf16.xpose.msra.mxu0 0
      %1243 = vmatprep.subr.bf16.mxu0 0
      %1244 = vmatpush2.bf16.xpose.msra.mxu0 0
      %1245 = vmatprep.subr.bf16.mxu0 0
      %1246 = vmatpush2.bf16.xpose.msra.mxu0 0
      %1247 = vmatprep.subr.bf16.mxu0 0
      %1248 = vmatpush2.bf16.xpose.msra.mxu0 0
      %1249 = vmatprep.subr.bf16.mxu0 0
      %1250 = vmatpush2.bf16.xpose.msra.mxu0 0
      %1251 = vmatprep.mubr.bf16.mxu0 0
      %1252 = vmatmul.mubr.bf16.gmra.mxu0 %v1196
      %v1253 = vpop.f32.mrf.mxu0
      %v1254 = vadd.f32 %v1073, %v1253
      %v1255 = vpop.f32.mrf.mxu0
      %v1256 = vpop.f32.mrf.mxu0
      %v1257 = vadd.f32 %v1074, %v1256
      %v1258 = vpop.f32.mrf.mxu0
      %1259 = vmatprep.mubr.bf16.mxu0 0
      %1260 = vmatmul.mubr.bf16.gmra.mxu0 %v1199
      %v1261 = vpop.f32.mrf.mxu0
      %v1262 = vadd.f32 %v1075, %v1261
      %v1263 = vpop.f32.mrf.mxu0
      %v1264 = vpop.f32.mrf.mxu0
      %v1265 = vadd.f32 %v1076, %v1264
      %v1266 = vpop.f32.mrf.mxu0
      %1267 = vmatprep.mubr.bf16.mxu0 0
      %1268 = vmatmul.mubr.bf16.gmra.mxu0 %v1202
      %v1269 = vpop.f32.mrf.mxu0
      %v1270 = vadd.f32 %v1077, %v1269
      %v1271 = vpop.f32.mrf.mxu0
      %v1272 = vpop.f32.mrf.mxu0
      %v1273 = vadd.f32 %v1078, %v1272
      %v1274 = vpop.f32.mrf.mxu0
      %1275 = vmatprep.mubr.bf16.mxu0 0
      %1276 = vmatmul.mubr.bf16.gmra.mxu0 %v1205
      %v1277 = vpop.f32.mrf.mxu0
      %v1278 = vadd.f32 %v1079, %v1277
      %v1279 = vpop.f32.mrf.mxu0
      %v1280 = vpop.f32.mrf.mxu0
      %v1281 = vadd.f32 %v1080, %v1280
      %v1282 = vpop.f32.mrf.mxu0
      %1283 = vdwg.mxu0
      %1288 = vrot.lane.b32.xlu0 %v1065, 112
      %v1289 = vpop.permute.xlu0 %1288
      %1290 = vrot.lane.b32.xlu0 %v1066, 112
      %v1291 = vpop.permute.xlu0 %1290
      %1292 = vrot.lane.b32.xlu0 %v1067, 112
      %v1293 = vpop.permute.xlu0 %1292
      %1294 = vrot.lane.b32.xlu0 %v1068, 112
      %v1295 = vpop.permute.xlu0 %1294
      %v1297 = vsel %vm1093, %v1065, 0
      %v1300 = vsel %vm1093, %v1066, 0
      %v1303 = vsel %vm1093, %v1067, 0
      %v1306 = vsel %vm1093, %v1068, 0
      %v1309 = vsel %vm1093, %v1289, 0
      %v1312 = vsel %vm1093, %v1291, 0
      %v1315 = vsel %vm1093, %v1293, 0
      %v1318 = vsel %vm1093, %v1295, 0
      %1320 = vmatprep.subr.bf16.mxu0 0
      %1321 = vmatpush1.bf16.xpose.msra.mxu0 0
      %1322 = vmatprep.subr.bf16.mxu0 0
      %1323 = vmatpush1.bf16.xpose.msra.mxu0 0
      %1324 = vmatprep.subr.bf16.mxu0 0
      %1325 = vmatpush1.bf16.xpose.msra.mxu0 0
      %1326 = vmatprep.subr.bf16.mxu0 0
      %1327 = vmatpush1.bf16.xpose.msra.mxu0 0
      %1328 = vmatprep.subr.bf16.mxu0 0
      %1329 = vmatpush1.bf16.xpose.msra.mxu0 %v1318
      %1330 = vmatprep.subr.bf16.mxu0 0
      %1331 = vmatpush1.bf16.xpose.msra.mxu0 %v1315
      %1332 = vmatprep.subr.bf16.mxu0 0
      %1333 = vmatpush1.bf16.xpose.msra.mxu0 %v1312
      %1334 = vmatprep.subr.bf16.mxu0 0
      %1335 = vmatpush1.bf16.xpose.msra.mxu0 %v1309
      %1336 = vmatprep.subr.bf16.mxu0 0
      %1337 = vmatpush2.bf16.xpose.msra.mxu0 0
      %1338 = vmatprep.subr.bf16.mxu0 0
      %1339 = vmatpush2.bf16.xpose.msra.mxu0 0
      %1340 = vmatprep.subr.bf16.mxu0 0
      %1341 = vmatpush2.bf16.xpose.msra.mxu0 0
      %1342 = vmatprep.subr.bf16.mxu0 0
      %1343 = vmatpush2.bf16.xpose.msra.mxu0 0
      %1344 = vmatprep.subr.bf16.mxu0 0
      %1345 = vmatpush2.bf16.xpose.msra.mxu0 0
      %1346 = vmatprep.subr.bf16.mxu0 0
      %1347 = vmatpush2.bf16.xpose.msra.mxu0 0
      %1348 = vmatprep.subr.bf16.mxu0 0
      %1349 = vmatpush2.bf16.xpose.msra.mxu0 0
      %1350 = vmatprep.subr.bf16.mxu0 0
      %1351 = vmatpush2.bf16.xpose.msra.mxu0 0
      %1352 = vmatprep.mubr.bf16.mxu0 0
      %1353 = vmatmul.mubr.bf16.gmra.mxu0 %v1297
      %v1354 = vpop.f32.mrf.mxu0
      %v1355 = vadd.f32 %v1073, %v1354
      %v1356 = vpop.f32.mrf.mxu0
      %v1357 = vpop.f32.mrf.mxu0
      %v1358 = vadd.f32 %v1074, %v1357
      %v1359 = vpop.f32.mrf.mxu0
      %1360 = vmatprep.mubr.bf16.mxu0 0
      %1361 = vmatmul.mubr.bf16.gmra.mxu0 %v1300
      %v1362 = vpop.f32.mrf.mxu0
      %v1363 = vadd.f32 %v1075, %v1362
      %v1364 = vpop.f32.mrf.mxu0
      %v1365 = vpop.f32.mrf.mxu0
      %v1366 = vadd.f32 %v1076, %v1365
      %v1367 = vpop.f32.mrf.mxu0
      %1368 = vmatprep.mubr.bf16.mxu0 0
      %1369 = vmatmul.mubr.bf16.gmra.mxu0 %v1303
      %v1370 = vpop.f32.mrf.mxu0
      %v1371 = vadd.f32 %v1077, %v1370
      %v1372 = vpop.f32.mrf.mxu0
      %v1373 = vpop.f32.mrf.mxu0
      %v1374 = vadd.f32 %v1078, %v1373
      %v1375 = vpop.f32.mrf.mxu0
      %1376 = vmatprep.mubr.bf16.mxu0 0
      %1377 = vmatmul.mubr.bf16.gmra.mxu0 %v1306
      %v1378 = vpop.f32.mrf.mxu0
      %v1379 = vadd.f32 %v1079, %v1378
      %v1380 = vpop.f32.mrf.mxu0
      %v1381 = vpop.f32.mrf.mxu0
      %v1382 = vadd.f32 %v1080, %v1381
      %v1383 = vpop.f32.mrf.mxu0
      %1384 = vdwg.mxu0
      %1389 = vrot.lane.b32.xlu0 %v1069, 112
      %v1390 = vpop.permute.xlu0 %1389
      %1391 = vrot.lane.b32.xlu0 %v1070, 112
      %v1392 = vpop.permute.xlu0 %1391
      %1393 = vrot.lane.b32.xlu0 %v1071, 112
      %v1394 = vpop.permute.xlu0 %1393
      %1395 = vrot.lane.b32.xlu0 %v1072, 112
      %v1396 = vpop.permute.xlu0 %1395
      %v1398 = vsel %vm1093, %v1069, 0
      %v1401 = vsel %vm1093, %v1070, 0
      %v1404 = vsel %vm1093, %v1071, 0
      %v1407 = vsel %vm1093, %v1072, 0
      %v1410 = vsel %vm1093, %v1390, 0
      %v1413 = vsel %vm1093, %v1392, 0
      %v1416 = vsel %vm1093, %v1394, 0
      %v1419 = vsel %vm1093, %v1396, 0
      %1421 = vmatprep.subr.bf16.mxu0 0
      %1422 = vmatpush1.bf16.xpose.msra.mxu0 0
      %1423 = vmatprep.subr.bf16.mxu0 0
      %1424 = vmatpush1.bf16.xpose.msra.mxu0 0
      %1425 = vmatprep.subr.bf16.mxu0 0
      %1426 = vmatpush1.bf16.xpose.msra.mxu0 0
      %1427 = vmatprep.subr.bf16.mxu0 0
      %1428 = vmatpush1.bf16.xpose.msra.mxu0 0
      %1429 = vmatprep.subr.bf16.mxu0 0
      %1430 = vmatpush1.bf16.xpose.msra.mxu0 %v1419
      %1431 = vmatprep.subr.bf16.mxu0 0
      %1432 = vmatpush1.bf16.xpose.msra.mxu0 %v1416
      %1433 = vmatprep.subr.bf16.mxu0 0
      %1434 = vmatpush1.bf16.xpose.msra.mxu0 %v1413
      %1435 = vmatprep.subr.bf16.mxu0 0
      %1436 = vmatpush1.bf16.xpose.msra.mxu0 %v1410
      %1437 = vmatprep.subr.bf16.mxu0 0
      %1438 = vmatpush2.bf16.xpose.msra.mxu0 0
      %1439 = vmatprep.subr.bf16.mxu0 0
      %1440 = vmatpush2.bf16.xpose.msra.mxu0 0
      %1441 = vmatprep.subr.bf16.mxu0 0
      %1442 = vmatpush2.bf16.xpose.msra.mxu0 0
      %1443 = vmatprep.subr.bf16.mxu0 0
      %1444 = vmatpush2.bf16.xpose.msra.mxu0 0
      %1445 = vmatprep.subr.bf16.mxu0 0
      %1446 = vmatpush2.bf16.xpose.msra.mxu0 0
      %1447 = vmatprep.subr.bf16.mxu0 0
      %1448 = vmatpush2.bf16.xpose.msra.mxu0 0
      %1449 = vmatprep.subr.bf16.mxu0 0
      %1450 = vmatpush2.bf16.xpose.msra.mxu0 0
      %1451 = vmatprep.subr.bf16.mxu0 0
      %1452 = vmatpush2.bf16.xpose.msra.mxu0 0
      %1453 = vmatprep.mubr.bf16.mxu0 0
      %1454 = vmatmul.mubr.bf16.gmra.mxu0 %v1398
      %v1455 = vpop.f32.mrf.mxu0
      %v1456 = vadd.f32 %v1073, %v1455
      %v1457 = vpop.f32.mrf.mxu0
      %v1458 = vpop.f32.mrf.mxu0
      %v1459 = vadd.f32 %v1074, %v1458
      %v1460 = vpop.f32.mrf.mxu0
      %1461 = vmatprep.mubr.bf16.mxu0 0
      %1462 = vmatmul.mubr.bf16.gmra.mxu0 %v1401
      %v1463 = vpop.f32.mrf.mxu0
      %v1464 = vadd.f32 %v1075, %v1463
      %v1465 = vpop.f32.mrf.mxu0
      %v1466 = vpop.f32.mrf.mxu0
      %v1467 = vadd.f32 %v1076, %v1466
      %v1468 = vpop.f32.mrf.mxu0
      %1469 = vmatprep.mubr.bf16.mxu0 0
      %1470 = vmatmul.mubr.bf16.gmra.mxu0 %v1404
      %v1471 = vpop.f32.mrf.mxu0
      %v1472 = vadd.f32 %v1077, %v1471
      %v1473 = vpop.f32.mrf.mxu0
      %v1474 = vpop.f32.mrf.mxu0
      %v1475 = vadd.f32 %v1078, %v1474
      %v1476 = vpop.f32.mrf.mxu0
      %1477 = vmatprep.mubr.bf16.mxu0 0
      %1478 = vmatmul.mubr.bf16.gmra.mxu0 %v1407
      %v1479 = vpop.f32.mrf.mxu0
      %v1480 = vadd.f32 %v1079, %v1479
      %v1481 = vpop.f32.mrf.mxu0
      %v1482 = vpop.f32.mrf.mxu0
      %v1483 = vadd.f32 %v1080, %v1482
      %v1484 = vpop.f32.mrf.mxu0
      %1485 = vdwg.mxu0
      %vm1486 = vcmask 523264
      %v1487 = vsel %vm1486, %v1153, -inf
      %1488 = vmax.xlane.f32.xlu0 %v1487
      %v1489 = vpop.xlane.xlu0 %1488
      %v1490 = vsel %vm1486, %v1156, -inf
      %1491 = vmax.xlane.f32.xlu0 %v1490
      %v1492 = vpop.xlane.xlu0 %1491
      %v1493 = vsel %vm1486, %v1161, -inf
      %1494 = vmax.xlane.f32.xlu0 %v1493
      %v1495 = vpop.xlane.xlu0 %1494
      %v1496 = vsel %vm1486, %v1164, -inf
      %1497 = vmax.xlane.f32.xlu0 %v1496
      %v1498 = vpop.xlane.xlu0 %1497
      %v1499 = vsel %vm1486, %v1169, -inf
      %1500 = vmax.xlane.f32.xlu0 %v1499
      %v1501 = vpop.xlane.xlu0 %1500
      %v1502 = vsel %vm1486, %v1172, -inf
      %1503 = vmax.xlane.f32.xlu0 %v1502
      %v1504 = vpop.xlane.xlu0 %1503
      %v1505 = vsel %vm1486, %v1177, -inf
      %1506 = vmax.xlane.f32.xlu0 %v1505
      %v1507 = vpop.xlane.xlu0 %1506
      %v1508 = vsel %vm1486, %v1180, -inf
      %1509 = vmax.xlane.f32.xlu0 %v1508
      %v1510 = vpop.xlane.xlu0 %1509
      %v1511 = vsel %vm1486, %v1254, -inf
      %1512 = vmax.xlane.f32.xlu0 %v1511
      %v1513 = vpop.xlane.xlu0 %1512
      %v1514 = vsel %vm1486, %v1257, -inf
      %1515 = vmax.xlane.f32.xlu0 %v1514
      %v1516 = vpop.xlane.xlu0 %1515
      %v1517 = vsel %vm1486, %v1262, -inf
      %1518 = vmax.xlane.f32.xlu0 %v1517
      %v1519 = vpop.xlane.xlu0 %1518
      %v1520 = vsel %vm1486, %v1265, -inf
      %1521 = vmax.xlane.f32.xlu0 %v1520
      %v1522 = vpop.xlane.xlu0 %1521
      %v1523 = vsel %vm1486, %v1270, -inf
      %1524 = vmax.xlane.f32.xlu0 %v1523
      %v1525 = vpop.xlane.xlu0 %1524
      %v1526 = vsel %vm1486, %v1273, -inf
      %1527 = vmax.xlane.f32.xlu0 %v1526
      %v1528 = vpop.xlane.xlu0 %1527
      %v1529 = vsel %vm1486, %v1278, -inf
      %1530 = vmax.xlane.f32.xlu0 %v1529
      %v1531 = vpop.xlane.xlu0 %1530
      %v1532 = vsel %vm1486, %v1281, -inf
      %1533 = vmax.xlane.f32.xlu0 %v1532
      %v1534 = vpop.xlane.xlu0 %1533
      %v1535 = vsel %vm1486, %v1355, -inf
      %1536 = vmax.xlane.f32.xlu0 %v1535
      %v1537 = vpop.xlane.xlu0 %1536
      %v1538 = vsel %vm1486, %v1358, -inf
      %1539 = vmax.xlane.f32.xlu0 %v1538
      %v1540 = vpop.xlane.xlu0 %1539
      %v1541 = vsel %vm1486, %v1363, -inf
      %1542 = vmax.xlane.f32.xlu0 %v1541
      %v1543 = vpop.xlane.xlu0 %1542
      %v1544 = vsel %vm1486, %v1366, -inf
      %1545 = vmax.xlane.f32.xlu0 %v1544
      %v1546 = vpop.xlane.xlu0 %1545
      %v1547 = vsel %vm1486, %v1371, -inf
      %1548 = vmax.xlane.f32.xlu0 %v1547
      %v1549 = vpop.xlane.xlu0 %1548
      %v1550 = vsel %vm1486, %v1374, -inf
      %1551 = vmax.xlane.f32.xlu0 %v1550
      %v1552 = vpop.xlane.xlu0 %1551
      %v1553 = vsel %vm1486, %v1379, -inf
      %1554 = vmax.xlane.f32.xlu0 %v1553
      %v1555 = vpop.xlane.xlu0 %1554
      %v1556 = vsel %vm1486, %v1382, -inf
      %1557 = vmax.xlane.f32.xlu0 %v1556
      %v1558 = vpop.xlane.xlu0 %1557
      %v1559 = vsel %vm1486, %v1456, -inf
      %1560 = vmax.xlane.f32.xlu0 %v1559
      %v1561 = vpop.xlane.xlu0 %1560
      %v1562 = vsel %vm1486, %v1459, -inf
      %1563 = vmax.xlane.f32.xlu0 %v1562
      %v1564 = vpop.xlane.xlu0 %1563
      %v1565 = vsel %vm1486, %v1464, -inf
      %1566 = vmax.xlane.f32.xlu0 %v1565
      %v1567 = vpop.xlane.xlu0 %1566
      %v1568 = vsel %vm1486, %v1467, -inf
      %1569 = vmax.xlane.f32.xlu0 %v1568
      %v1570 = vpop.xlane.xlu0 %1569
      %v1571 = vsel %vm1486, %v1472, -inf
      %1572 = vmax.xlane.f32.xlu0 %v1571
      %v1573 = vpop.xlane.xlu0 %1572
      %v1574 = vsel %vm1486, %v1475, -inf
      %1575 = vmax.xlane.f32.xlu0 %v1574
      %v1576 = vpop.xlane.xlu0 %1575
      %v1577 = vsel %vm1486, %v1480, -inf
      %1578 = vmax.xlane.f32.xlu0 %v1577
      %v1579 = vpop.xlane.xlu0 %1578
      %v1580 = vsel %vm1486, %v1483, -inf
      %1581 = vmax.xlane.f32.xlu0 %v1580
      %v1582 = vpop.xlane.xlu0 %1581
      %v1583 = vsub.f32 %v1153, %v1489
      %v1584 = vsub.f32 %v1156, %v1492
      %v1585 = vsub.f32 %v1161, %v1495
      %v1586 = vsub.f32 %v1164, %v1498
      %v1587 = vsub.f32 %v1169, %v1501
      %v1588 = vsub.f32 %v1172, %v1504
      %v1589 = vsub.f32 %v1177, %v1507
      %v1590 = vsub.f32 %v1180, %v1510
      %v1591 = vsub.f32 %v1254, %v1513
      %v1592 = vsub.f32 %v1257, %v1516
      %v1593 = vsub.f32 %v1262, %v1519
      %v1594 = vsub.f32 %v1265, %v1522
      %v1595 = vsub.f32 %v1270, %v1525
      %v1596 = vsub.f32 %v1273, %v1528
      %v1597 = vsub.f32 %v1278, %v1531
      %v1598 = vsub.f32 %v1281, %v1534
      %v1599 = vsub.f32 %v1355, %v1537
      %v1600 = vsub.f32 %v1358, %v1540
      %v1601 = vsub.f32 %v1363, %v1543
      %v1602 = vsub.f32 %v1366, %v1546
      %v1603 = vsub.f32 %v1371, %v1549
      %v1604 = vsub.f32 %v1374, %v1552
      %v1605 = vsub.f32 %v1379, %v1555
      %v1606 = vsub.f32 %v1382, %v1558
      %v1607 = vsub.f32 %v1456, %v1561
      %v1608 = vsub.f32 %v1459, %v1564
      %v1609 = vsub.f32 %v1464, %v1567
      %v1610 = vsub.f32 %v1467, %v1570
      %v1611 = vsub.f32 %v1472, %v1573
      %v1612 = vsub.f32 %v1475, %v1576
      %v1613 = vsub.f32 %v1480, %v1579
      %v1614 = vsub.f32 %v1483, %v1582
      %v1615 = vmul.f32 %v1583, 1.442695
      %v1616 = vpow.pop %v1615
      %v1617 = vmul.f32 %v1584, 1.442695
      %v1618 = vpow.pop %v1617
      %v1619 = vmul.f32 %v1585, 1.442695
      %v1620 = vpow.pop %v1619
      %v1621 = vmul.f32 %v1586, 1.442695
      %v1622 = vpow.pop %v1621
      %v1623 = vmul.f32 %v1587, 1.442695
      %v1624 = vpow.pop %v1623
      %v1625 = vmul.f32 %v1588, 1.442695
      %v1626 = vpow.pop %v1625
      %v1627 = vmul.f32 %v1589, 1.442695
      %v1628 = vpow.pop %v1627
      %v1629 = vmul.f32 %v1590, 1.442695
      %v1630 = vpow.pop %v1629
      %v1631 = vmul.f32 %v1591, 1.442695
      %v1632 = vpow.pop %v1631
      %v1633 = vmul.f32 %v1592, 1.442695
      %v1634 = vpow.pop %v1633
      %v1635 = vmul.f32 %v1593, 1.442695
      %v1636 = vpow.pop %v1635
      %v1637 = vmul.f32 %v1594, 1.442695
      %v1638 = vpow.pop %v1637
      %v1639 = vmul.f32 %v1595, 1.442695
      %v1640 = vpow.pop %v1639
      %v1641 = vmul.f32 %v1596, 1.442695
      %v1642 = vpow.pop %v1641
      %v1643 = vmul.f32 %v1597, 1.442695
      %v1644 = vpow.pop %v1643
      %v1645 = vmul.f32 %v1598, 1.442695
      %v1646 = vpow.pop %v1645
      %v1647 = vmul.f32 %v1599, 1.442695
      %v1648 = vpow.pop %v1647
      %v1649 = vmul.f32 %v1600, 1.442695
      %v1650 = vpow.pop %v1649
      %v1651 = vmul.f32 %v1601, 1.442695
      %v1652 = vpow.pop %v1651
      %v1653 = vmul.f32 %v1602, 1.442695
      %v1654 = vpow.pop %v1653
      %v1655 = vmul.f32 %v1603, 1.442695
      %v1656 = vpow.pop %v1655
      %v1657 = vmul.f32 %v1604, 1.442695
      %v1658 = vpow.pop %v1657
      %v1659 = vmul.f32 %v1605, 1.442695
      %v1660 = vpow.pop %v1659
      %v1661 = vmul.f32 %v1606, 1.442695
      %v1662 = vpow.pop %v1661
      %v1663 = vmul.f32 %v1607, 1.442695
      %v1664 = vpow.pop %v1663
      %v1665 = vmul.f32 %v1608, 1.442695
      %v1666 = vpow.pop %v1665
      %v1667 = vmul.f32 %v1609, 1.442695
      %v1668 = vpow.pop %v1667
      %v1669 = vmul.f32 %v1610, 1.442695
      %v1670 = vpow.pop %v1669
      %v1671 = vmul.f32 %v1611, 1.442695
      %v1672 = vpow.pop %v1671
      %v1673 = vmul.f32 %v1612, 1.442695
      %v1674 = vpow.pop %v1673
      %v1675 = vmul.f32 %v1613, 1.442695
      %v1676 = vpow.pop %v1675
      %v1677 = vmul.f32 %v1614, 1.442695
      %v1678 = vpow.pop %v1677
      %v1679 = vsel %vm1486, %v1616, 0.0
      %1680 = vadd.xlane.f32.xlu0 %v1679
      %v1681 = vpop.xlane.xlu0 %1680
      %v1682 = vsel %vm1486, %v1618, 0.0
      %1683 = vadd.xlane.f32.xlu0 %v1682
      %v1684 = vpop.xlane.xlu0 %1683
      %v1685 = vsel %vm1486, %v1620, 0.0
      %1686 = vadd.xlane.f32.xlu0 %v1685
      %v1687 = vpop.xlane.xlu0 %1686
      %v1688 = vsel %vm1486, %v1622, 0.0
      %1689 = vadd.xlane.f32.xlu0 %v1688
      %v1690 = vpop.xlane.xlu0 %1689
      %v1691 = vsel %vm1486, %v1624, 0.0
      %1692 = vadd.xlane.f32.xlu0 %v1691
      %v1693 = vpop.xlane.xlu0 %1692
      %v1694 = vsel %vm1486, %v1626, 0.0
      %1695 = vadd.xlane.f32.xlu0 %v1694
      %v1696 = vpop.xlane.xlu0 %1695
      %v1697 = vsel %vm1486, %v1628, 0.0
      %1698 = vadd.xlane.f32.xlu0 %v1697
      %v1699 = vpop.xlane.xlu0 %1698
      %v1700 = vsel %vm1486, %v1630, 0.0
      %1701 = vadd.xlane.f32.xlu0 %v1700
      %v1702 = vpop.xlane.xlu0 %1701
      %v1703 = vsel %vm1486, %v1632, 0.0
      %1704 = vadd.xlane.f32.xlu0 %v1703
      %v1705 = vpop.xlane.xlu0 %1704
      %v1706 = vsel %vm1486, %v1634, 0.0
      %1707 = vadd.xlane.f32.xlu0 %v1706
      %v1708 = vpop.xlane.xlu0 %1707
      %v1709 = vsel %vm1486, %v1636, 0.0
      %1710 = vadd.xlane.f32.xlu0 %v1709
      %v1711 = vpop.xlane.xlu0 %1710
      %v1712 = vsel %vm1486, %v1638, 0.0
      %1713 = vadd.xlane.f32.xlu0 %v1712
      %v1714 = vpop.xlane.xlu0 %1713
      %v1715 = vsel %vm1486, %v1640, 0.0
      %1716 = vadd.xlane.f32.xlu0 %v1715
      %v1717 = vpop.xlane.xlu0 %1716
      %v1718 = vsel %vm1486, %v1642, 0.0
      %1719 = vadd.xlane.f32.xlu0 %v1718
      %v1720 = vpop.xlane.xlu0 %1719
      %v1721 = vsel %vm1486, %v1644, 0.0
      %1722 = vadd.xlane.f32.xlu0 %v1721
      %v1723 = vpop.xlane.xlu0 %1722
      %v1724 = vsel %vm1486, %v1646, 0.0
      %1725 = vadd.xlane.f32.xlu0 %v1724
      %v1726 = vpop.xlane.xlu0 %1725
      %v1727 = vsel %vm1486, %v1648, 0.0
      %1728 = vadd.xlane.f32.xlu0 %v1727
      %v1729 = vpop.xlane.xlu0 %1728
      %v1730 = vsel %vm1486, %v1650, 0.0
      %1731 = vadd.xlane.f32.xlu0 %v1730
      %v1732 = vpop.xlane.xlu0 %1731
      %v1733 = vsel %vm1486, %v1652, 0.0
      %1734 = vadd.xlane.f32.xlu0 %v1733
      %v1735 = vpop.xlane.xlu0 %1734
      %v1736 = vsel %vm1486, %v1654, 0.0
      %1737 = vadd.xlane.f32.xlu0 %v1736
      %v1738 = vpop.xlane.xlu0 %1737
      %v1739 = vsel %vm1486, %v1656, 0.0
      %1740 = vadd.xlane.f32.xlu0 %v1739
      %v1741 = vpop.xlane.xlu0 %1740
      %v1742 = vsel %vm1486, %v1658, 0.0
      %1743 = vadd.xlane.f32.xlu0 %v1742
      %v1744 = vpop.xlane.xlu0 %1743
      %v1745 = vsel %vm1486, %v1660, 0.0
      %1746 = vadd.xlane.f32.xlu0 %v1745
      %v1747 = vpop.xlane.xlu0 %1746
      %v1748 = vsel %vm1486, %v1662, 0.0
      %1749 = vadd.xlane.f32.xlu0 %v1748
      %v1750 = vpop.xlane.xlu0 %1749
      %v1751 = vsel %vm1486, %v1664, 0.0
      %1752 = vadd.xlane.f32.xlu0 %v1751
      %v1753 = vpop.xlane.xlu0 %1752
      %v1754 = vsel %vm1486, %v1666, 0.0
      %1755 = vadd.xlane.f32.xlu0 %v1754
      %v1756 = vpop.xlane.xlu0 %1755
      %v1757 = vsel %vm1486, %v1668, 0.0
      %1758 = vadd.xlane.f32.xlu0 %v1757
      %v1759 = vpop.xlane.xlu0 %1758
      %v1760 = vsel %vm1486, %v1670, 0.0
      %1761 = vadd.xlane.f32.xlu0 %v1760
      %v1762 = vpop.xlane.xlu0 %1761
      %v1763 = vsel %vm1486, %v1672, 0.0
      %1764 = vadd.xlane.f32.xlu0 %v1763
      %v1765 = vpop.xlane.xlu0 %1764
      %v1766 = vsel %vm1486, %v1674, 0.0
      %1767 = vadd.xlane.f32.xlu0 %v1766
      %v1768 = vpop.xlane.xlu0 %1767
      %v1769 = vsel %vm1486, %v1676, 0.0
      %1770 = vadd.xlane.f32.xlu0 %v1769
      %v1771 = vpop.xlane.xlu0 %1770
      %v1772 = vsel %vm1486, %v1678, 0.0
      %1773 = vadd.xlane.f32.xlu0 %v1772
      %v1774 = vpop.xlane.xlu0 %1773
      %v1775 = vrcp.pop %v1681
      %v1776 = vrcp.pop %v1684
      %v1777 = vrcp.pop %v1687
      %v1778 = vrcp.pop %v1690
      %v1779 = vrcp.pop %v1693
      %v1780 = vrcp.pop %v1696
      %v1781 = vrcp.pop %v1699
      %v1782 = vrcp.pop %v1702
      %v1783 = vrcp.pop %v1705
      %v1784 = vrcp.pop %v1708
      %v1785 = vrcp.pop %v1711
      %v1786 = vrcp.pop %v1714
      %v1787 = vrcp.pop %v1717
      %v1788 = vrcp.pop %v1720
      %v1789 = vrcp.pop %v1723
      %v1790 = vrcp.pop %v1726
      %v1791 = vrcp.pop %v1729
      %v1792 = vrcp.pop %v1732
      %v1793 = vrcp.pop %v1735
      %v1794 = vrcp.pop %v1738
      %v1795 = vrcp.pop %v1741
      %v1796 = vrcp.pop %v1744
      %v1797 = vrcp.pop %v1747
      %v1798 = vrcp.pop %v1750
      %v1799 = vrcp.pop %v1753
      %v1800 = vrcp.pop %v1756
      %v1801 = vrcp.pop %v1759
      %v1802 = vrcp.pop %v1762
      %v1803 = vrcp.pop %v1765
      %v1804 = vrcp.pop %v1768
      %v1805 = vrcp.pop %v1771
      %v1806 = vrcp.pop %v1774
      %v1807 = vmul.f32 %v1616, %v1775
      %v1808 = vmul.f32 %v1618, %v1776
      %v1809 = vmul.f32 %v1620, %v1777
      %v1810 = vmul.f32 %v1622, %v1778
      %v1811 = vmul.f32 %v1624, %v1779
      %v1812 = vmul.f32 %v1626, %v1780
      %v1813 = vmul.f32 %v1628, %v1781
      %v1814 = vmul.f32 %v1630, %v1782
      %v1815 = vmul.f32 %v1632, %v1783
      %v1816 = vmul.f32 %v1634, %v1784
      %v1817 = vmul.f32 %v1636, %v1785
      %v1818 = vmul.f32 %v1638, %v1786
      %v1819 = vmul.f32 %v1640, %v1787
      %v1820 = vmul.f32 %v1642, %v1788
      %v1821 = vmul.f32 %v1644, %v1789
      %v1822 = vmul.f32 %v1646, %v1790
      %v1823 = vmul.f32 %v1648, %v1791
      %v1824 = vmul.f32 %v1650, %v1792
      %v1825 = vmul.f32 %v1652, %v1793
      %v1826 = vmul.f32 %v1654, %v1794
      %v1827 = vmul.f32 %v1656, %v1795
      %v1828 = vmul.f32 %v1658, %v1796
      %v1829 = vmul.f32 %v1660, %v1797
      %v1830 = vmul.f32 %v1662, %v1798
      %v1831 = vmul.f32 %v1664, %v1799
      %v1832 = vmul.f32 %v1666, %v1800
      %v1833 = vmul.f32 %v1668, %v1801
      %v1834 = vmul.f32 %v1670, %v1802
      %v1835 = vmul.f32 %v1672, %v1803
      %v1836 = vmul.f32 %v1674, %v1804
      %v1837 = vmul.f32 %v1676, %v1805
      %v1838 = vmul.f32 %v1678, %v1806
      %v1839 = vpack.c.bf16 %v1808, %v1807
      %v1840 = vpack.c.bf16 %v1810, %v1809
      %v1841 = vpack.c.bf16 %v1812, %v1811
      %v1842 = vpack.c.bf16 %v1814, %v1813
      %v1843 = vpack.c.bf16 %v1816, %v1815
      %v1844 = vpack.c.bf16 %v1818, %v1817
      %v1845 = vpack.c.bf16 %v1820, %v1819
      %v1846 = vpack.c.bf16 %v1822, %v1821
      %v1847 = vpack.c.bf16 %v1824, %v1823
      %v1848 = vpack.c.bf16 %v1826, %v1825
      %v1849 = vpack.c.bf16 %v1828, %v1827
      %v1850 = vpack.c.bf16 %v1830, %v1829
      %v1851 = vpack.c.bf16 %v1832, %v1831
      %v1852 = vpack.c.bf16 %v1834, %v1833
      %v1853 = vpack.c.bf16 %v1836, %v1835
      %v1854 = vpack.c.bf16 %v1838, %v1837
      %1855 = vrot.lane.b32.xlu0 %v1057, 96
      %v1856 = vpop.permute.xlu0 %1855
      %1857 = vrot.lane.b32.xlu0 %v1058, 96
      %v1858 = vpop.permute.xlu0 %1857
      %1859 = vrot.lane.b32.xlu0 %v1059, 96
      %v1860 = vpop.permute.xlu0 %1859
      %1861 = vrot.lane.b32.xlu0 %v1060, 96
      %v1862 = vpop.permute.xlu0 %1861
      %v1868 = vsel %vm1486, %v1839, 0
      %v1871 = vsel %vm1486, %v1840, 0
      %v1874 = vsel %vm1486, %v1841, 0
      %v1877 = vsel %vm1486, %v1842, 0
      %1879 = vmatprep.subr.bf16.mxu0 0
      %1880 = vmatpush1.bf16.msra.mxu0 0
      %1881 = vmatprep.subr.bf16.mxu0 0
      %1882 = vmatpush1.bf16.msra.mxu0 0
      %1883 = vmatprep.subr.bf16.mxu0 0
      %1884 = vmatpush1.bf16.msra.mxu0 0
      %1885 = vmatprep.subr.bf16.mxu0 0
      %1886 = vmatpush1.bf16.msra.mxu0 0
      %1887 = vmatprep.subr.bf16.mxu0 0
      %1888 = vmatpush1.bf16.msra.mxu0 %v1862
      %1889 = vmatprep.subr.bf16.mxu0 0
      %1890 = vmatpush1.bf16.msra.mxu0 %v1860
      %1891 = vmatprep.subr.bf16.mxu0 0
      %1892 = vmatpush1.bf16.msra.mxu0 %v1858
      %1893 = vmatprep.subr.bf16.mxu0 0
      %1894 = vmatpush1.bf16.msra.mxu0 %v1856
      %1895 = vmatprep.subr.bf16.mxu0 0
      %1896 = vmatpush2.bf16.msra.mxu0 0
      %1897 = vmatprep.subr.bf16.mxu0 0
      %1898 = vmatpush2.bf16.msra.mxu0 0
      %1899 = vmatprep.subr.bf16.mxu0 0
      %1900 = vmatpush2.bf16.msra.mxu0 0
      %1901 = vmatprep.subr.bf16.mxu0 0
      %1902 = vmatpush2.bf16.msra.mxu0 0
      %1903 = vmatprep.subr.bf16.mxu0 0
      %1904 = vmatpush2.bf16.msra.mxu0 0
      %1905 = vmatprep.subr.bf16.mxu0 0
      %1906 = vmatpush2.bf16.msra.mxu0 0
      %1907 = vmatprep.subr.bf16.mxu0 0
      %1908 = vmatpush2.bf16.msra.mxu0 0
      %1909 = vmatprep.subr.bf16.mxu0 0
      %1910 = vmatpush2.bf16.msra.mxu0 0
      %1911 = vmatprep.mubr.bf16.mxu0 0
      %1912 = vmatmul.mubr.bf16.gmra.mxu0 %v1868
      %v1913 = vpop.f32.mrf.mxu0
      %v1914 = vadd.f32 0.0, %v1913
      %v1915 = vpop.f32.mrf.mxu0
      %v1916 = vpop.f32.mrf.mxu0
      %v1917 = vadd.f32 0.0, %v1916
      %v1918 = vpop.f32.mrf.mxu0
      %1919 = vmatprep.mubr.bf16.mxu0 0
      %1920 = vmatmul.mubr.bf16.gmra.mxu0 %v1871
      %v1921 = vpop.f32.mrf.mxu0
      %v1922 = vadd.f32 0.0, %v1921
      %v1923 = vpop.f32.mrf.mxu0
      %v1924 = vpop.f32.mrf.mxu0
      %v1925 = vadd.f32 0.0, %v1924
      %v1926 = vpop.f32.mrf.mxu0
      %1927 = vmatprep.mubr.bf16.mxu0 0
      %1928 = vmatmul.mubr.bf16.gmra.mxu0 %v1874
      %v1929 = vpop.f32.mrf.mxu0
      %v1930 = vadd.f32 0.0, %v1929
      %v1931 = vpop.f32.mrf.mxu0
      %v1932 = vpop.f32.mrf.mxu0
      %v1933 = vadd.f32 0.0, %v1932
      %v1934 = vpop.f32.mrf.mxu0
      %1935 = vmatprep.mubr.bf16.mxu0 0
      %1936 = vmatmul.mubr.bf16.gmra.mxu0 %v1877
      %v1937 = vpop.f32.mrf.mxu0
      %v1938 = vadd.f32 0.0, %v1937
      %v1939 = vpop.f32.mrf.mxu0
      %v1940 = vpop.f32.mrf.mxu0
      %v1941 = vadd.f32 0.0, %v1940
      %v1942 = vpop.f32.mrf.mxu0
      %1943 = vdwg.mxu0
      %1944 = vrot.lane.b32.xlu0 %v1061, 96
      %v1945 = vpop.permute.xlu0 %1944
      %1946 = vrot.lane.b32.xlu0 %v1062, 96
      %v1947 = vpop.permute.xlu0 %1946
      %1948 = vrot.lane.b32.xlu0 %v1063, 96
      %v1949 = vpop.permute.xlu0 %1948
      %1950 = vrot.lane.b32.xlu0 %v1064, 96
      %v1951 = vpop.permute.xlu0 %1950
      %v1957 = vsel %vm1486, %v1843, 0
      %v1960 = vsel %vm1486, %v1844, 0
      %v1963 = vsel %vm1486, %v1845, 0
      %v1966 = vsel %vm1486, %v1846, 0
      %1968 = vmatprep.subr.bf16.mxu0 0
      %1969 = vmatpush1.bf16.msra.mxu0 0
      %1970 = vmatprep.subr.bf16.mxu0 0
      %1971 = vmatpush1.bf16.msra.mxu0 0
      %1972 = vmatprep.subr.bf16.mxu0 0
      %1973 = vmatpush1.bf16.msra.mxu0 0
      %1974 = vmatprep.subr.bf16.mxu0 0
      %1975 = vmatpush1.bf16.msra.mxu0 0
      %1976 = vmatprep.subr.bf16.mxu0 0
      %1977 = vmatpush1.bf16.msra.mxu0 %v1951
      %1978 = vmatprep.subr.bf16.mxu0 0
      %1979 = vmatpush1.bf16.msra.mxu0 %v1949
      %1980 = vmatprep.subr.bf16.mxu0 0
      %1981 = vmatpush1.bf16.msra.mxu0 %v1947
      %1982 = vmatprep.subr.bf16.mxu0 0
      %1983 = vmatpush1.bf16.msra.mxu0 %v1945
      %1984 = vmatprep.subr.bf16.mxu0 0
      %1985 = vmatpush2.bf16.msra.mxu0 0
      %1986 = vmatprep.subr.bf16.mxu0 0
      %1987 = vmatpush2.bf16.msra.mxu0 0
      %1988 = vmatprep.subr.bf16.mxu0 0
      %1989 = vmatpush2.bf16.msra.mxu0 0
      %1990 = vmatprep.subr.bf16.mxu0 0
      %1991 = vmatpush2.bf16.msra.mxu0 0
      %1992 = vmatprep.subr.bf16.mxu0 0
      %1993 = vmatpush2.bf16.msra.mxu0 0
      %1994 = vmatprep.subr.bf16.mxu0 0
      %1995 = vmatpush2.bf16.msra.mxu0 0
      %1996 = vmatprep.subr.bf16.mxu0 0
      %1997 = vmatpush2.bf16.msra.mxu0 0
      %1998 = vmatprep.subr.bf16.mxu0 0
      %1999 = vmatpush2.bf16.msra.mxu0 0
      %2000 = vmatprep.mubr.bf16.mxu0 0
      %2001 = vmatmul.mubr.bf16.gmra.mxu0 %v1957
      %v2002 = vpop.f32.mrf.mxu0
      %v2003 = vadd.f32 0.0, %v2002
      %v2004 = vpop.f32.mrf.mxu0
      %v2005 = vpop.f32.mrf.mxu0
      %v2006 = vadd.f32 0.0, %v2005
      %v2007 = vpop.f32.mrf.mxu0
      %2008 = vmatprep.mubr.bf16.mxu0 0
      %2009 = vmatmul.mubr.bf16.gmra.mxu0 %v1960
      %v2010 = vpop.f32.mrf.mxu0
      %v2011 = vadd.f32 0.0, %v2010
      %v2012 = vpop.f32.mrf.mxu0
      %v2013 = vpop.f32.mrf.mxu0
      %v2014 = vadd.f32 0.0, %v2013
      %v2015 = vpop.f32.mrf.mxu0
      %2016 = vmatprep.mubr.bf16.mxu0 0
      %2017 = vmatmul.mubr.bf16.gmra.mxu0 %v1963
      %v2018 = vpop.f32.mrf.mxu0
      %v2019 = vadd.f32 0.0, %v2018
      %v2020 = vpop.f32.mrf.mxu0
      %v2021 = vpop.f32.mrf.mxu0
      %v2022 = vadd.f32 0.0, %v2021
      %v2023 = vpop.f32.mrf.mxu0
      %2024 = vmatprep.mubr.bf16.mxu0 0
      %2025 = vmatmul.mubr.bf16.gmra.mxu0 %v1966
      %v2026 = vpop.f32.mrf.mxu0
      %v2027 = vadd.f32 0.0, %v2026
      %v2028 = vpop.f32.mrf.mxu0
      %v2029 = vpop.f32.mrf.mxu0
      %v2030 = vadd.f32 0.0, %v2029
      %v2031 = vpop.f32.mrf.mxu0
      %2032 = vdwg.mxu0
      %2033 = vrot.lane.b32.xlu0 %v1065, 96
      %v2034 = vpop.permute.xlu0 %2033
      %2035 = vrot.lane.b32.xlu0 %v1066, 96
      %v2036 = vpop.permute.xlu0 %2035
      %2037 = vrot.lane.b32.xlu0 %v1067, 96
      %v2038 = vpop.permute.xlu0 %2037
      %2039 = vrot.lane.b32.xlu0 %v1068, 96
      %v2040 = vpop.permute.xlu0 %2039
      %v2046 = vsel %vm1486, %v1847, 0
      %v2049 = vsel %vm1486, %v1848, 0
      %v2052 = vsel %vm1486, %v1849, 0
      %v2055 = vsel %vm1486, %v1850, 0
      %2057 = vmatprep.subr.bf16.mxu0 0
      %2058 = vmatpush1.bf16.msra.mxu0 0
      %2059 = vmatprep.subr.bf16.mxu0 0
      %2060 = vmatpush1.bf16.msra.mxu0 0
      %2061 = vmatprep.subr.bf16.mxu0 0
      %2062 = vmatpush1.bf16.msra.mxu0 0
      %2063 = vmatprep.subr.bf16.mxu0 0
      %2064 = vmatpush1.bf16.msra.mxu0 0
      %2065 = vmatprep.subr.bf16.mxu0 0
      %2066 = vmatpush1.bf16.msra.mxu0 %v2040
      %2067 = vmatprep.subr.bf16.mxu0 0
      %2068 = vmatpush1.bf16.msra.mxu0 %v2038
      %2069 = vmatprep.subr.bf16.mxu0 0
      %2070 = vmatpush1.bf16.msra.mxu0 %v2036
      %2071 = vmatprep.subr.bf16.mxu0 0
      %2072 = vmatpush1.bf16.msra.mxu0 %v2034
      %2073 = vmatprep.subr.bf16.mxu0 0
      %2074 = vmatpush2.bf16.msra.mxu0 0
      %2075 = vmatprep.subr.bf16.mxu0 0
      %2076 = vmatpush2.bf16.msra.mxu0 0
      %2077 = vmatprep.subr.bf16.mxu0 0
      %2078 = vmatpush2.bf16.msra.mxu0 0
      %2079 = vmatprep.subr.bf16.mxu0 0
      %2080 = vmatpush2.bf16.msra.mxu0 0
      %2081 = vmatprep.subr.bf16.mxu0 0
      %2082 = vmatpush2.bf16.msra.mxu0 0
      %2083 = vmatprep.subr.bf16.mxu0 0
      %2084 = vmatpush2.bf16.msra.mxu0 0
      %2085 = vmatprep.subr.bf16.mxu0 0
      %2086 = vmatpush2.bf16.msra.mxu0 0
      %2087 = vmatprep.subr.bf16.mxu0 0
      %2088 = vmatpush2.bf16.msra.mxu0 0
      %2089 = vmatprep.mubr.bf16.mxu0 0
      %2090 = vmatmul.mubr.bf16.gmra.mxu0 %v2046
      %v2091 = vpop.f32.mrf.mxu0
      %v2092 = vadd.f32 0.0, %v2091
      %v2093 = vpop.f32.mrf.mxu0
      %v2094 = vpop.f32.mrf.mxu0
      %v2095 = vadd.f32 0.0, %v2094
      %v2096 = vpop.f32.mrf.mxu0
      %2097 = vmatprep.mubr.bf16.mxu0 0
      %2098 = vmatmul.mubr.bf16.gmra.mxu0 %v2049
      %v2099 = vpop.f32.mrf.mxu0
      %v2100 = vadd.f32 0.0, %v2099
      %v2101 = vpop.f32.mrf.mxu0
      %v2102 = vpop.f32.mrf.mxu0
      %v2103 = vadd.f32 0.0, %v2102
      %v2104 = vpop.f32.mrf.mxu0
      %2105 = vmatprep.mubr.bf16.mxu0 0
      %2106 = vmatmul.mubr.bf16.gmra.mxu0 %v2052
      %v2107 = vpop.f32.mrf.mxu0
      %v2108 = vadd.f32 0.0, %v2107
      %v2109 = vpop.f32.mrf.mxu0
      %v2110 = vpop.f32.mrf.mxu0
      %v2111 = vadd.f32 0.0, %v2110
      %v2112 = vpop.f32.mrf.mxu0
      %2113 = vmatprep.mubr.bf16.mxu0 0
      %2114 = vmatmul.mubr.bf16.gmra.mxu0 %v2055
      %v2115 = vpop.f32.mrf.mxu0
      %v2116 = vadd.f32 0.0, %v2115
      %v2117 = vpop.f32.mrf.mxu0
      %v2118 = vpop.f32.mrf.mxu0
      %v2119 = vadd.f32 0.0, %v2118
      %v2120 = vpop.f32.mrf.mxu0
      %2121 = vdwg.mxu0
      %2122 = vrot.lane.b32.xlu0 %v1069, 96
      %v2123 = vpop.permute.xlu0 %2122
      %2124 = vrot.lane.b32.xlu0 %v1070, 96
      %v2125 = vpop.permute.xlu0 %2124
      %2126 = vrot.lane.b32.xlu0 %v1071, 96
      %v2127 = vpop.permute.xlu0 %2126
      %2128 = vrot.lane.b32.xlu0 %v1072, 96
      %v2129 = vpop.permute.xlu0 %2128
      %v2135 = vsel %vm1486, %v1851, 0
      %v2138 = vsel %vm1486, %v1852, 0
      %v2141 = vsel %vm1486, %v1853, 0
      %v2144 = vsel %vm1486, %v1854, 0
      %2146 = vmatprep.subr.bf16.mxu0 0
      %2147 = vmatpush1.bf16.msra.mxu0 0
      %2148 = vmatprep.subr.bf16.mxu0 0
      %2149 = vmatpush1.bf16.msra.mxu0 0
      %2150 = vmatprep.subr.bf16.mxu0 0
      %2151 = vmatpush1.bf16.msra.mxu0 0
      %2152 = vmatprep.subr.bf16.mxu0 0
      %2153 = vmatpush1.bf16.msra.mxu0 0
      %2154 = vmatprep.subr.bf16.mxu0 0
      %2155 = vmatpush1.bf16.msra.mxu0 %v2129
      %2156 = vmatprep.subr.bf16.mxu0 0
      %2157 = vmatpush1.bf16.msra.mxu0 %v2127
      %2158 = vmatprep.subr.bf16.mxu0 0
      %2159 = vmatpush1.bf16.msra.mxu0 %v2125
      %2160 = vmatprep.subr.bf16.mxu0 0
      %2161 = vmatpush1.bf16.msra.mxu0 %v2123
      %2162 = vmatprep.subr.bf16.mxu0 0
      %2163 = vmatpush2.bf16.msra.mxu0 0
      %2164 = vmatprep.subr.bf16.mxu0 0
      %2165 = vmatpush2.bf16.msra.mxu0 0
      %2166 = vmatprep.subr.bf16.mxu0 0
      %2167 = vmatpush2.bf16.msra.mxu0 0
      %2168 = vmatprep.subr.bf16.mxu0 0
      %2169 = vmatpush2.bf16.msra.mxu0 0
      %2170 = vmatprep.subr.bf16.mxu0 0
      %2171 = vmatpush2.bf16.msra.mxu0 0
      %2172 = vmatprep.subr.bf16.mxu0 0
      %2173 = vmatpush2.bf16.msra.mxu0 0
      %2174 = vmatprep.subr.bf16.mxu0 0
      %2175 = vmatpush2.bf16.msra.mxu0 0
      %2176 = vmatprep.subr.bf16.mxu0 0
      %2177 = vmatpush2.bf16.msra.mxu0 0
      %2178 = vmatprep.mubr.bf16.mxu0 0
      %2179 = vmatmul.mubr.bf16.gmra.mxu0 %v2135
      %v2180 = vpop.f32.mrf.mxu0
      %v2181 = vadd.f32 0.0, %v2180
      %v2182 = vpop.f32.mrf.mxu0
      %v2183 = vpop.f32.mrf.mxu0
      %v2184 = vadd.f32 0.0, %v2183
      %v2185 = vpop.f32.mrf.mxu0
      %2186 = vmatprep.mubr.bf16.mxu0 0
      %2187 = vmatmul.mubr.bf16.gmra.mxu0 %v2138
      %v2188 = vpop.f32.mrf.mxu0
      %v2189 = vadd.f32 0.0, %v2188
      %v2190 = vpop.f32.mrf.mxu0
      %v2191 = vpop.f32.mrf.mxu0
      %v2192 = vadd.f32 0.0, %v2191
      %v2193 = vpop.f32.mrf.mxu0
      %2194 = vmatprep.mubr.bf16.mxu0 0
      %2195 = vmatmul.mubr.bf16.gmra.mxu0 %v2141
      %v2196 = vpop.f32.mrf.mxu0
      %v2197 = vadd.f32 0.0, %v2196
      %v2198 = vpop.f32.mrf.mxu0
      %v2199 = vpop.f32.mrf.mxu0
      %v2200 = vadd.f32 0.0, %v2199
      %v2201 = vpop.f32.mrf.mxu0
      %2202 = vmatprep.mubr.bf16.mxu0 0
      %2203 = vmatmul.mubr.bf16.gmra.mxu0 %v2144
      %v2204 = vpop.f32.mrf.mxu0
      %v2205 = vadd.f32 0.0, %v2204
      %v2206 = vpop.f32.mrf.mxu0
      %v2207 = vpop.f32.mrf.mxu0
      %v2208 = vadd.f32 0.0, %v2207
      %v2209 = vpop.f32.mrf.mxu0
      %2210 = vdwg.mxu0
      %s2211 = scalar_lea.vmem %s5, 64
      %v2212 = vld [vmem:[%s2211] sm:$0xff]
      %v2213 = vld [vmem:[%s2211 + $0x8] sm:$0xff]
      %v2214 = vld [vmem:[%s2211 + $0x10] sm:$0xff]
      %v2215 = vld [vmem:[%s2211 + $0x18] sm:$0xff]
      %v2216 = vld [vmem:[%s2211 + $0x20] sm:$0xff]
      %v2217 = vld [vmem:[%s2211 + $0x28] sm:$0xff]
      %v2218 = vld [vmem:[%s2211 + $0x30] sm:$0xff]
      %v2219 = vld [vmem:[%s2211 + $0x38] sm:$0xff]
      %2220 = vrot.lane.b32.xlu0 %v1057, 120
      %v2221 = vpop.permute.xlu0 %2220
      %2222 = vrot.lane.b32.xlu0 %v1058, 120
      %v2223 = vpop.permute.xlu0 %2222
      %2224 = vrot.lane.b32.xlu0 %v1059, 120
      %v2225 = vpop.permute.xlu0 %2224
      %2226 = vrot.lane.b32.xlu0 %v1060, 120
      %v2227 = vpop.permute.xlu0 %2226
      %2228 = vrot.lane.b32.xlu0 %v1057, 104
      %v2229 = vpop.permute.xlu0 %2228
      %2230 = vrot.lane.b32.xlu0 %v1058, 104
      %v2231 = vpop.permute.xlu0 %2230
      %2232 = vrot.lane.b32.xlu0 %v1059, 104
      %v2233 = vpop.permute.xlu0 %2232
      %2234 = vrot.lane.b32.xlu0 %v1060, 104
      %v2235 = vpop.permute.xlu0 %2234
      %v2237 = vsel %vm1093, %v2221, 0
      %v2240 = vsel %vm1093, %v2223, 0
      %v2243 = vsel %vm1093, %v2225, 0
      %v2246 = vsel %vm1093, %v2227, 0
      %v2249 = vsel %vm1093, %v2229, 0
      %v2252 = vsel %vm1093, %v2231, 0
      %v2255 = vsel %vm1093, %v2233, 0
      %v2258 = vsel %vm1093, %v2235, 0
      %2260 = vmatprep.subr.bf16.mxu0 0
      %2261 = vmatpush1.bf16.xpose.msra.mxu0 0
      %2262 = vmatprep.subr.bf16.mxu0 0
      %2263 = vmatpush1.bf16.xpose.msra.mxu0 0
      %2264 = vmatprep.subr.bf16.mxu0 0
      %2265 = vmatpush1.bf16.xpose.msra.mxu0 0
      %2266 = vmatprep.subr.bf16.mxu0 0
      %2267 = vmatpush1.bf16.xpose.msra.mxu0 0
      %2268 = vmatprep.subr.bf16.mxu0 0
      %2269 = vmatpush1.bf16.xpose.msra.mxu0 %v2258
      %2270 = vmatprep.subr.bf16.mxu0 0
      %2271 = vmatpush1.bf16.xpose.msra.mxu0 %v2255
      %2272 = vmatprep.subr.bf16.mxu0 0
      %2273 = vmatpush1.bf16.xpose.msra.mxu0 %v2252
      %2274 = vmatprep.subr.bf16.mxu0 0
      %2275 = vmatpush1.bf16.xpose.msra.mxu0 %v2249
      %2276 = vmatprep.subr.bf16.mxu0 0
      %2277 = vmatpush2.bf16.xpose.msra.mxu0 0
      %2278 = vmatprep.subr.bf16.mxu0 0
      %2279 = vmatpush2.bf16.xpose.msra.mxu0 0
      %2280 = vmatprep.subr.bf16.mxu0 0
      %2281 = vmatpush2.bf16.xpose.msra.mxu0 0
      %2282 = vmatprep.subr.bf16.mxu0 0
      %2283 = vmatpush2.bf16.xpose.msra.mxu0 0
      %2284 = vmatprep.subr.bf16.mxu0 0
      %2285 = vmatpush2.bf16.xpose.msra.mxu0 0
      %2286 = vmatprep.subr.bf16.mxu0 0
      %2287 = vmatpush2.bf16.xpose.msra.mxu0 0
      %2288 = vmatprep.subr.bf16.mxu0 0
      %2289 = vmatpush2.bf16.xpose.msra.mxu0 0
      %2290 = vmatprep.subr.bf16.mxu0 0
      %2291 = vmatpush2.bf16.xpose.msra.mxu0 0
      %2292 = vmatprep.mubr.bf16.mxu0 0
      %2293 = vmatmul.mubr.bf16.gmra.mxu0 %v2237
      %v2294 = vpop.f32.mrf.mxu0
      %v2295 = vadd.f32 %v2212, %v2294
      %v2296 = vpop.f32.mrf.mxu0
      %v2297 = vpop.f32.mrf.mxu0
      %v2298 = vadd.f32 %v2213, %v2297
      %v2299 = vpop.f32.mrf.mxu0
      %2300 = vmatprep.mubr.bf16.mxu0 0
      %2301 = vmatmul.mubr.bf16.gmra.mxu0 %v2240
      %v2302 = vpop.f32.mrf.mxu0
      %v2303 = vadd.f32 %v2214, %v2302
      %v2304 = vpop.f32.mrf.mxu0
      %v2305 = vpop.f32.mrf.mxu0
      %v2306 = vadd.f32 %v2215, %v2305
      %v2307 = vpop.f32.mrf.mxu0
      %2308 = vmatprep.mubr.bf16.mxu0 0
      %2309 = vmatmul.mubr.bf16.gmra.mxu0 %v2243
      %v2310 = vpop.f32.mrf.mxu0
      %v2311 = vadd.f32 %v2216, %v2310
      %v2312 = vpop.f32.mrf.mxu0
      %v2313 = vpop.f32.mrf.mxu0
      %v2314 = vadd.f32 %v2217, %v2313
      %v2315 = vpop.f32.mrf.mxu0
      %2316 = vmatprep.mubr.bf16.mxu0 0
      %2317 = vmatmul.mubr.bf16.gmra.mxu0 %v2246
      %v2318 = vpop.f32.mrf.mxu0
      %v2319 = vadd.f32 %v2218, %v2318
      %v2320 = vpop.f32.mrf.mxu0
      %v2321 = vpop.f32.mrf.mxu0
      %v2322 = vadd.f32 %v2219, %v2321
      %v2323 = vpop.f32.mrf.mxu0
      %2324 = vdwg.mxu0
      %2325 = vrot.lane.b32.xlu0 %v1061, 120
      %v2326 = vpop.permute.xlu0 %2325
      %2327 = vrot.lane.b32.xlu0 %v1062, 120
      %v2328 = vpop.permute.xlu0 %2327
      %2329 = vrot.lane.b32.xlu0 %v1063, 120
      %v2330 = vpop.permute.xlu0 %2329
      %2331 = vrot.lane.b32.xlu0 %v1064, 120
      %v2332 = vpop.permute.xlu0 %2331
      %2333 = vrot.lane.b32.xlu0 %v1061, 104
      %v2334 = vpop.permute.xlu0 %2333
      %2335 = vrot.lane.b32.xlu0 %v1062, 104
      %v2336 = vpop.permute.xlu0 %2335
      %2337 = vrot.lane.b32.xlu0 %v1063, 104
      %v2338 = vpop.permute.xlu0 %2337
      %2339 = vrot.lane.b32.xlu0 %v1064, 104
      %v2340 = vpop.permute.xlu0 %2339
      %v2342 = vsel %vm1093, %v2326, 0
      %v2345 = vsel %vm1093, %v2328, 0
      %v2348 = vsel %vm1093, %v2330, 0
      %v2351 = vsel %vm1093, %v2332, 0
      %v2354 = vsel %vm1093, %v2334, 0
      %v2357 = vsel %vm1093, %v2336, 0
      %v2360 = vsel %vm1093, %v2338, 0
      %v2363 = vsel %vm1093, %v2340, 0
      %2365 = vmatprep.subr.bf16.mxu0 0
      %2366 = vmatpush1.bf16.xpose.msra.mxu0 0
      %2367 = vmatprep.subr.bf16.mxu0 0
      %2368 = vmatpush1.bf16.xpose.msra.mxu0 0
      %2369 = vmatprep.subr.bf16.mxu0 0
      %2370 = vmatpush1.bf16.xpose.msra.mxu0 0
      %2371 = vmatprep.subr.bf16.mxu0 0
      %2372 = vmatpush1.bf16.xpose.msra.mxu0 0
      %2373 = vmatprep.subr.bf16.mxu0 0
      %2374 = vmatpush1.bf16.xpose.msra.mxu0 %v2363
      %2375 = vmatprep.subr.bf16.mxu0 0
      %2376 = vmatpush1.bf16.xpose.msra.mxu0 %v2360
      %2377 = vmatprep.subr.bf16.mxu0 0
      %2378 = vmatpush1.bf16.xpose.msra.mxu0 %v2357
      %2379 = vmatprep.subr.bf16.mxu0 0
      %2380 = vmatpush1.bf16.xpose.msra.mxu0 %v2354
      %2381 = vmatprep.subr.bf16.mxu0 0
      %2382 = vmatpush2.bf16.xpose.msra.mxu0 0
      %2383 = vmatprep.subr.bf16.mxu0 0
      %2384 = vmatpush2.bf16.xpose.msra.mxu0 0
      %2385 = vmatprep.subr.bf16.mxu0 0
      %2386 = vmatpush2.bf16.xpose.msra.mxu0 0
      %2387 = vmatprep.subr.bf16.mxu0 0
      %2388 = vmatpush2.bf16.xpose.msra.mxu0 0
      %2389 = vmatprep.subr.bf16.mxu0 0
      %2390 = vmatpush2.bf16.xpose.msra.mxu0 0
      %2391 = vmatprep.subr.bf16.mxu0 0
      %2392 = vmatpush2.bf16.xpose.msra.mxu0 0
      %2393 = vmatprep.subr.bf16.mxu0 0
      %2394 = vmatpush2.bf16.xpose.msra.mxu0 0
      %2395 = vmatprep.subr.bf16.mxu0 0
      %2396 = vmatpush2.bf16.xpose.msra.mxu0 0
      %2397 = vmatprep.mubr.bf16.mxu0 0
      %2398 = vmatmul.mubr.bf16.gmra.mxu0 %v2342
      %v2399 = vpop.f32.mrf.mxu0
      %v2400 = vadd.f32 %v2212, %v2399
      %v2401 = vpop.f32.mrf.mxu0
      %v2402 = vpop.f32.mrf.mxu0
      %v2403 = vadd.f32 %v2213, %v2402
      %v2404 = vpop.f32.mrf.mxu0
      %2405 = vmatprep.mubr.bf16.mxu0 0
      %2406 = vmatmul.mubr.bf16.gmra.mxu0 %v2345
      %v2407 = vpop.f32.mrf.mxu0
      %v2408 = vadd.f32 %v2214, %v2407
      %v2409 = vpop.f32.mrf.mxu0
      %v2410 = vpop.f32.mrf.mxu0
      %v2411 = vadd.f32 %v2215, %v2410
      %v2412 = vpop.f32.mrf.mxu0
      %2413 = vmatprep.mubr.bf16.mxu0 0
      %2414 = vmatmul.mubr.bf16.gmra.mxu0 %v2348
      %v2415 = vpop.f32.mrf.mxu0
      %v2416 = vadd.f32 %v2216, %v2415
      %v2417 = vpop.f32.mrf.mxu0
      %v2418 = vpop.f32.mrf.mxu0
      %v2419 = vadd.f32 %v2217, %v2418
      %v2420 = vpop.f32.mrf.mxu0
      %2421 = vmatprep.mubr.bf16.mxu0 0
      %2422 = vmatmul.mubr.bf16.gmra.mxu0 %v2351
      %v2423 = vpop.f32.mrf.mxu0
      %v2424 = vadd.f32 %v2218, %v2423
      %v2425 = vpop.f32.mrf.mxu0
      %v2426 = vpop.f32.mrf.mxu0
      %v2427 = vadd.f32 %v2219, %v2426
      %v2428 = vpop.f32.mrf.mxu0
      %2429 = vdwg.mxu0
      %2430 = vrot.lane.b32.xlu0 %v1065, 120
      %v2431 = vpop.permute.xlu0 %2430
      %2432 = vrot.lane.b32.xlu0 %v1066, 120
      %v2433 = vpop.permute.xlu0 %2432
      %2434 = vrot.lane.b32.xlu0 %v1067, 120
      %v2435 = vpop.permute.xlu0 %2434
      %2436 = vrot.lane.b32.xlu0 %v1068, 120
      %v2437 = vpop.permute.xlu0 %2436
      %2438 = vrot.lane.b32.xlu0 %v1065, 104
      %v2439 = vpop.permute.xlu0 %2438
      %2440 = vrot.lane.b32.xlu0 %v1066, 104
      %v2441 = vpop.permute.xlu0 %2440
      %2442 = vrot.lane.b32.xlu0 %v1067, 104
      %v2443 = vpop.permute.xlu0 %2442
      %2444 = vrot.lane.b32.xlu0 %v1068, 104
      %v2445 = vpop.permute.xlu0 %2444
      %v2447 = vsel %vm1093, %v2431, 0
      %v2450 = vsel %vm1093, %v2433, 0
      %v2453 = vsel %vm1093, %v2435, 0
      %v2456 = vsel %vm1093, %v2437, 0
      %v2459 = vsel %vm1093, %v2439, 0
      %v2462 = vsel %vm1093, %v2441, 0
      %v2465 = vsel %vm1093, %v2443, 0
      %v2468 = vsel %vm1093, %v2445, 0
      %2470 = vmatprep.subr.bf16.mxu0 0
      %2471 = vmatpush1.bf16.xpose.msra.mxu0 0
      %2472 = vmatprep.subr.bf16.mxu0 0
      %2473 = vmatpush1.bf16.xpose.msra.mxu0 0
      %2474 = vmatprep.subr.bf16.mxu0 0
      %2475 = vmatpush1.bf16.xpose.msra.mxu0 0
      %2476 = vmatprep.subr.bf16.mxu0 0
      %2477 = vmatpush1.bf16.xpose.msra.mxu0 0
      %2478 = vmatprep.subr.bf16.mxu0 0
      %2479 = vmatpush1.bf16.xpose.msra.mxu0 %v2468
      %2480 = vmatprep.subr.bf16.mxu0 0
      %2481 = vmatpush1.bf16.xpose.msra.mxu0 %v2465
      %2482 = vmatprep.subr.bf16.mxu0 0
      %2483 = vmatpush1.bf16.xpose.msra.mxu0 %v2462
      %2484 = vmatprep.subr.bf16.mxu0 0
      %2485 = vmatpush1.bf16.xpose.msra.mxu0 %v2459
      %2486 = vmatprep.subr.bf16.mxu0 0
      %2487 = vmatpush2.bf16.xpose.msra.mxu0 0
      %2488 = vmatprep.subr.bf16.mxu0 0
      %2489 = vmatpush2.bf16.xpose.msra.mxu0 0
      %2490 = vmatprep.subr.bf16.mxu0 0
      %2491 = vmatpush2.bf16.xpose.msra.mxu0 0
      %2492 = vmatprep.subr.bf16.mxu0 0
      %2493 = vmatpush2.bf16.xpose.msra.mxu0 0
      %2494 = vmatprep.subr.bf16.mxu0 0
      %2495 = vmatpush2.bf16.xpose.msra.mxu0 0
      %2496 = vmatprep.subr.bf16.mxu0 0
      %2497 = vmatpush2.bf16.xpose.msra.mxu0 0
      %2498 = vmatprep.subr.bf16.mxu0 0
      %2499 = vmatpush2.bf16.xpose.msra.mxu0 0
      %2500 = vmatprep.subr.bf16.mxu0 0
      %2501 = vmatpush2.bf16.xpose.msra.mxu0 0
      %2502 = vmatprep.mubr.bf16.mxu0 0
      %2503 = vmatmul.mubr.bf16.gmra.mxu0 %v2447
      %v2504 = vpop.f32.mrf.mxu0
      %v2505 = vadd.f32 %v2212, %v2504
      %v2506 = vpop.f32.mrf.mxu0
      %v2507 = vpop.f32.mrf.mxu0
      %v2508 = vadd.f32 %v2213, %v2507
      %v2509 = vpop.f32.mrf.mxu0
      %2510 = vmatprep.mubr.bf16.mxu0 0
      %2511 = vmatmul.mubr.bf16.gmra.mxu0 %v2450
      %v2512 = vpop.f32.mrf.mxu0
      %v2513 = vadd.f32 %v2214, %v2512
      %v2514 = vpop.f32.mrf.mxu0
      %v2515 = vpop.f32.mrf.mxu0
      %v2516 = vadd.f32 %v2215, %v2515
      %v2517 = vpop.f32.mrf.mxu0
      %2518 = vmatprep.mubr.bf16.mxu0 0
      %2519 = vmatmul.mubr.bf16.gmra.mxu0 %v2453
      %v2520 = vpop.f32.mrf.mxu0
      %v2521 = vadd.f32 %v2216, %v2520
      %v2522 = vpop.f32.mrf.mxu0
      %v2523 = vpop.f32.mrf.mxu0
      %v2524 = vadd.f32 %v2217, %v2523
      %v2525 = vpop.f32.mrf.mxu0
      %2526 = vmatprep.mubr.bf16.mxu0 0
      %2527 = vmatmul.mubr.bf16.gmra.mxu0 %v2456
      %v2528 = vpop.f32.mrf.mxu0
      %v2529 = vadd.f32 %v2218, %v2528
      %v2530 = vpop.f32.mrf.mxu0
      %v2531 = vpop.f32.mrf.mxu0
      %v2532 = vadd.f32 %v2219, %v2531
      %v2533 = vpop.f32.mrf.mxu0
      %2534 = vdwg.mxu0
      %2535 = vrot.lane.b32.xlu0 %v1069, 120
      %v2536 = vpop.permute.xlu0 %2535
      %2537 = vrot.lane.b32.xlu0 %v1070, 120
      %v2538 = vpop.permute.xlu0 %2537
      %2539 = vrot.lane.b32.xlu0 %v1071, 120
      %v2540 = vpop.permute.xlu0 %2539
      %2541 = vrot.lane.b32.xlu0 %v1072, 120
      %v2542 = vpop.permute.xlu0 %2541
      %2543 = vrot.lane.b32.xlu0 %v1069, 104
      %v2544 = vpop.permute.xlu0 %2543
      %2545 = vrot.lane.b32.xlu0 %v1070, 104
      %v2546 = vpop.permute.xlu0 %2545
      %2547 = vrot.lane.b32.xlu0 %v1071, 104
      %v2548 = vpop.permute.xlu0 %2547
      %2549 = vrot.lane.b32.xlu0 %v1072, 104
      %v2550 = vpop.permute.xlu0 %2549
      %v2552 = vsel %vm1093, %v2536, 0
      %v2555 = vsel %vm1093, %v2538, 0
      %v2558 = vsel %vm1093, %v2540, 0
      %v2561 = vsel %vm1093, %v2542, 0
      %v2564 = vsel %vm1093, %v2544, 0
      %v2567 = vsel %vm1093, %v2546, 0
      %v2570 = vsel %vm1093, %v2548, 0
      %v2573 = vsel %vm1093, %v2550, 0
      %2575 = vmatprep.subr.bf16.mxu0 0
      %2576 = vmatpush1.bf16.xpose.msra.mxu0 0
      %2577 = vmatprep.subr.bf16.mxu0 0
      %2578 = vmatpush1.bf16.xpose.msra.mxu0 0
      %2579 = vmatprep.subr.bf16.mxu0 0
      %2580 = vmatpush1.bf16.xpose.msra.mxu0 0
      %2581 = vmatprep.subr.bf16.mxu0 0
      %2582 = vmatpush1.bf16.xpose.msra.mxu0 0
      %2583 = vmatprep.subr.bf16.mxu0 0
      %2584 = vmatpush1.bf16.xpose.msra.mxu0 %v2573
      %2585 = vmatprep.subr.bf16.mxu0 0
      %2586 = vmatpush1.bf16.xpose.msra.mxu0 %v2570
      %2587 = vmatprep.subr.bf16.mxu0 0
      %2588 = vmatpush1.bf16.xpose.msra.mxu0 %v2567
      %2589 = vmatprep.subr.bf16.mxu0 0
      %2590 = vmatpush1.bf16.xpose.msra.mxu0 %v2564
      %2591 = vmatprep.subr.bf16.mxu0 0
      %2592 = vmatpush2.bf16.xpose.msra.mxu0 0
      %2593 = vmatprep.subr.bf16.mxu0 0
      %2594 = vmatpush2.bf16.xpose.msra.mxu0 0
      %2595 = vmatprep.subr.bf16.mxu0 0
      %2596 = vmatpush2.bf16.xpose.msra.mxu0 0
      %2597 = vmatprep.subr.bf16.mxu0 0
      %2598 = vmatpush2.bf16.xpose.msra.mxu0 0
      %2599 = vmatprep.subr.bf16.mxu0 0
      %2600 = vmatpush2.bf16.xpose.msra.mxu0 0
      %2601 = vmatprep.subr.bf16.mxu0 0
      %2602 = vmatpush2.bf16.xpose.msra.mxu0 0
      %2603 = vmatprep.subr.bf16.mxu0 0
      %2604 = vmatpush2.bf16.xpose.msra.mxu0 0
      %2605 = vmatprep.subr.bf16.mxu0 0
      %2606 = vmatpush2.bf16.xpose.msra.mxu0 0
      %2607 = vmatprep.mubr.bf16.mxu0 0
      %2608 = vmatmul.mubr.bf16.gmra.mxu0 %v2552
      %v2609 = vpop.f32.mrf.mxu0
      %v2610 = vadd.f32 %v2212, %v2609
      %v2611 = vpop.f32.mrf.mxu0
      %v2612 = vpop.f32.mrf.mxu0
      %v2613 = vadd.f32 %v2213, %v2612
      %v2614 = vpop.f32.mrf.mxu0
      %2615 = vmatprep.mubr.bf16.mxu0 0
      %2616 = vmatmul.mubr.bf16.gmra.mxu0 %v2555
      %v2617 = vpop.f32.mrf.mxu0
      %v2618 = vadd.f32 %v2214, %v2617
      %v2619 = vpop.f32.mrf.mxu0
      %v2620 = vpop.f32.mrf.mxu0
      %v2621 = vadd.f32 %v2215, %v2620
      %v2622 = vpop.f32.mrf.mxu0
      %2623 = vmatprep.mubr.bf16.mxu0 0
      %2624 = vmatmul.mubr.bf16.gmra.mxu0 %v2558
      %v2625 = vpop.f32.mrf.mxu0
      %v2626 = vadd.f32 %v2216, %v2625
      %v2627 = vpop.f32.mrf.mxu0
      %v2628 = vpop.f32.mrf.mxu0
      %v2629 = vadd.f32 %v2217, %v2628
      %v2630 = vpop.f32.mrf.mxu0
      %2631 = vmatprep.mubr.bf16.mxu0 0
      %2632 = vmatmul.mubr.bf16.gmra.mxu0 %v2561
      %v2633 = vpop.f32.mrf.mxu0
      %v2634 = vadd.f32 %v2218, %v2633
      %v2635 = vpop.f32.mrf.mxu0
      %v2636 = vpop.f32.mrf.mxu0
      %v2637 = vadd.f32 %v2219, %v2636
      %v2638 = vpop.f32.mrf.mxu0
      %2639 = vdwg.mxu0
      %v2640 = vsel %vm1486, %v2295, -inf
      %2641 = vmax.xlane.f32.xlu0 %v2640
      %v2642 = vpop.xlane.xlu0 %2641
      %v2643 = vsel %vm1486, %v2298, -inf
      %2644 = vmax.xlane.f32.xlu0 %v2643
      %v2645 = vpop.xlane.xlu0 %2644
      %v2646 = vsel %vm1486, %v2303, -inf
      %2647 = vmax.xlane.f32.xlu0 %v2646
      %v2648 = vpop.xlane.xlu0 %2647
      %v2649 = vsel %vm1486, %v2306, -inf
      %2650 = vmax.xlane.f32.xlu0 %v2649
      %v2651 = vpop.xlane.xlu0 %2650
      %v2652 = vsel %vm1486, %v2311, -inf
      %2653 = vmax.xlane.f32.xlu0 %v2652
      %v2654 = vpop.xlane.xlu0 %2653
      %v2655 = vsel %vm1486, %v2314, -inf
      %2656 = vmax.xlane.f32.xlu0 %v2655
      %v2657 = vpop.xlane.xlu0 %2656
      %v2658 = vsel %vm1486, %v2319, -inf
      %2659 = vmax.xlane.f32.xlu0 %v2658
      %v2660 = vpop.xlane.xlu0 %2659
      %v2661 = vsel %vm1486, %v2322, -inf
      %2662 = vmax.xlane.f32.xlu0 %v2661
      %v2663 = vpop.xlane.xlu0 %2662
      %v2664 = vsel %vm1486, %v2400, -inf
      %2665 = vmax.xlane.f32.xlu0 %v2664
      %v2666 = vpop.xlane.xlu0 %2665
      %v2667 = vsel %vm1486, %v2403, -inf
      %2668 = vmax.xlane.f32.xlu0 %v2667
      %v2669 = vpop.xlane.xlu0 %2668
      %v2670 = vsel %vm1486, %v2408, -inf
      %2671 = vmax.xlane.f32.xlu0 %v2670
      %v2672 = vpop.xlane.xlu0 %2671
      %v2673 = vsel %vm1486, %v2411, -inf
      %2674 = vmax.xlane.f32.xlu0 %v2673
      %v2675 = vpop.xlane.xlu0 %2674
      %v2676 = vsel %vm1486, %v2416, -inf
      %2677 = vmax.xlane.f32.xlu0 %v2676
      %v2678 = vpop.xlane.xlu0 %2677
      %v2679 = vsel %vm1486, %v2419, -inf
      %2680 = vmax.xlane.f32.xlu0 %v2679
      %v2681 = vpop.xlane.xlu0 %2680
      %v2682 = vsel %vm1486, %v2424, -inf
      %2683 = vmax.xlane.f32.xlu0 %v2682
      %v2684 = vpop.xlane.xlu0 %2683
      %v2685 = vsel %vm1486, %v2427, -inf
      %2686 = vmax.xlane.f32.xlu0 %v2685
      %v2687 = vpop.xlane.xlu0 %2686
      %v2688 = vsel %vm1486, %v2505, -inf
      %2689 = vmax.xlane.f32.xlu0 %v2688
      %v2690 = vpop.xlane.xlu0 %2689
      %v2691 = vsel %vm1486, %v2508, -inf
      %2692 = vmax.xlane.f32.xlu0 %v2691
      %v2693 = vpop.xlane.xlu0 %2692
      %v2694 = vsel %vm1486, %v2513, -inf
      %2695 = vmax.xlane.f32.xlu0 %v2694
      %v2696 = vpop.xlane.xlu0 %2695
      %v2697 = vsel %vm1486, %v2516, -inf
      %2698 = vmax.xlane.f32.xlu0 %v2697
      %v2699 = vpop.xlane.xlu0 %2698
      %v2700 = vsel %vm1486, %v2521, -inf
      %2701 = vmax.xlane.f32.xlu0 %v2700
      %v2702 = vpop.xlane.xlu0 %2701
      %v2703 = vsel %vm1486, %v2524, -inf
      %2704 = vmax.xlane.f32.xlu0 %v2703
      %v2705 = vpop.xlane.xlu0 %2704
      %v2706 = vsel %vm1486, %v2529, -inf
      %2707 = vmax.xlane.f32.xlu0 %v2706
      %v2708 = vpop.xlane.xlu0 %2707
      %v2709 = vsel %vm1486, %v2532, -inf
      %2710 = vmax.xlane.f32.xlu0 %v2709
      %v2711 = vpop.xlane.xlu0 %2710
      %v2712 = vsel %vm1486, %v2610, -inf
      %2713 = vmax.xlane.f32.xlu0 %v2712
      %v2714 = vpop.xlane.xlu0 %2713
      %v2715 = vsel %vm1486, %v2613, -inf
      %2716 = vmax.xlane.f32.xlu0 %v2715
      %v2717 = vpop.xlane.xlu0 %2716
      %v2718 = vsel %vm1486, %v2618, -inf
      %2719 = vmax.xlane.f32.xlu0 %v2718
      %v2720 = vpop.xlane.xlu0 %2719
      %v2721 = vsel %vm1486, %v2621, -inf
      %2722 = vmax.xlane.f32.xlu0 %v2721
      %v2723 = vpop.xlane.xlu0 %2722
      %v2724 = vsel %vm1486, %v2626, -inf
      %2725 = vmax.xlane.f32.xlu0 %v2724
      %v2726 = vpop.xlane.xlu0 %2725
      %v2727 = vsel %vm1486, %v2629, -inf
      %2728 = vmax.xlane.f32.xlu0 %v2727
      %v2729 = vpop.xlane.xlu0 %2728
      %v2730 = vsel %vm1486, %v2634, -inf
      %2731 = vmax.xlane.f32.xlu0 %v2730
      %v2732 = vpop.xlane.xlu0 %2731
      %v2733 = vsel %vm1486, %v2637, -inf
      %2734 = vmax.xlane.f32.xlu0 %v2733
      %v2735 = vpop.xlane.xlu0 %2734
      %v2736 = vsub.f32 %v2295, %v2642
      %v2737 = vsub.f32 %v2298, %v2645
      %v2738 = vsub.f32 %v2303, %v2648
      %v2739 = vsub.f32 %v2306, %v2651
      %v2740 = vsub.f32 %v2311, %v2654
      %v2741 = vsub.f32 %v2314, %v2657
      %v2742 = vsub.f32 %v2319, %v2660
      %v2743 = vsub.f32 %v2322, %v2663
      %v2744 = vsub.f32 %v2400, %v2666
      %v2745 = vsub.f32 %v2403, %v2669
      %v2746 = vsub.f32 %v2408, %v2672
      %v2747 = vsub.f32 %v2411, %v2675
      %v2748 = vsub.f32 %v2416, %v2678
      %v2749 = vsub.f32 %v2419, %v2681
      %v2750 = vsub.f32 %v2424, %v2684
      %v2751 = vsub.f32 %v2427, %v2687
      %v2752 = vsub.f32 %v2505, %v2690
      %v2753 = vsub.f32 %v2508, %v2693
      %v2754 = vsub.f32 %v2513, %v2696
      %v2755 = vsub.f32 %v2516, %v2699
      %v2756 = vsub.f32 %v2521, %v2702
      %v2757 = vsub.f32 %v2524, %v2705
      %v2758 = vsub.f32 %v2529, %v2708
      %v2759 = vsub.f32 %v2532, %v2711
      %v2760 = vsub.f32 %v2610, %v2714
      %v2761 = vsub.f32 %v2613, %v2717
      %v2762 = vsub.f32 %v2618, %v2720
      %v2763 = vsub.f32 %v2621, %v2723
      %v2764 = vsub.f32 %v2626, %v2726
      %v2765 = vsub.f32 %v2629, %v2729
      %v2766 = vsub.f32 %v2634, %v2732
      %v2767 = vsub.f32 %v2637, %v2735
      %v2768 = vmul.f32 %v2736, 1.442695
      %v2769 = vpow.pop %v2768
      %v2770 = vmul.f32 %v2737, 1.442695
      %v2771 = vpow.pop %v2770
      %v2772 = vmul.f32 %v2738, 1.442695
      %v2773 = vpow.pop %v2772
      %v2774 = vmul.f32 %v2739, 1.442695
      %v2775 = vpow.pop %v2774
      %v2776 = vmul.f32 %v2740, 1.442695
      %v2777 = vpow.pop %v2776
      %v2778 = vmul.f32 %v2741, 1.442695
      %v2779 = vpow.pop %v2778
      %v2780 = vmul.f32 %v2742, 1.442695
      %v2781 = vpow.pop %v2780
      %v2782 = vmul.f32 %v2743, 1.442695
      %v2783 = vpow.pop %v2782
      %v2784 = vmul.f32 %v2744, 1.442695
      %v2785 = vpow.pop %v2784
      %v2786 = vmul.f32 %v2745, 1.442695
      %v2787 = vpow.pop %v2786
      %v2788 = vmul.f32 %v2746, 1.442695
      %v2789 = vpow.pop %v2788
      %v2790 = vmul.f32 %v2747, 1.442695
      %v2791 = vpow.pop %v2790
      %v2792 = vmul.f32 %v2748, 1.442695
      %v2793 = vpow.pop %v2792
      %v2794 = vmul.f32 %v2749, 1.442695
      %v2795 = vpow.pop %v2794
      %v2796 = vmul.f32 %v2750, 1.442695
      %v2797 = vpow.pop %v2796
      %v2798 = vmul.f32 %v2751, 1.442695
      %v2799 = vpow.pop %v2798
      %v2800 = vmul.f32 %v2752, 1.442695
      %v2801 = vpow.pop %v2800
      %v2802 = vmul.f32 %v2753, 1.442695
      %v2803 = vpow.pop %v2802
      %v2804 = vmul.f32 %v2754, 1.442695
      %v2805 = vpow.pop %v2804
      %v2806 = vmul.f32 %v2755, 1.442695
      %v2807 = vpow.pop %v2806
      %v2808 = vmul.f32 %v2756, 1.442695
      %v2809 = vpow.pop %v2808
      %v2810 = vmul.f32 %v2757, 1.442695
      %v2811 = vpow.pop %v2810
      %v2812 = vmul.f32 %v2758, 1.442695
      %v2813 = vpow.pop %v2812
      %v2814 = vmul.f32 %v2759, 1.442695
      %v2815 = vpow.pop %v2814
      %v2816 = vmul.f32 %v2760, 1.442695
      %v2817 = vpow.pop %v2816
      %v2818 = vmul.f32 %v2761, 1.442695
      %v2819 = vpow.pop %v2818
      %v2820 = vmul.f32 %v2762, 1.442695
      %v2821 = vpow.pop %v2820
      %v2822 = vmul.f32 %v2763, 1.442695
      %v2823 = vpow.pop %v2822
      %v2824 = vmul.f32 %v2764, 1.442695
      %v2825 = vpow.pop %v2824
      %v2826 = vmul.f32 %v2765, 1.442695
      %v2827 = vpow.pop %v2826
      %v2828 = vmul.f32 %v2766, 1.442695
      %v2829 = vpow.pop %v2828
      %v2830 = vmul.f32 %v2767, 1.442695
      %v2831 = vpow.pop %v2830
      %v2832 = vsel %vm1486, %v2769, 0.0
      %2833 = vadd.xlane.f32.xlu0 %v2832
      %v2834 = vpop.xlane.xlu0 %2833
      %v2835 = vsel %vm1486, %v2771, 0.0
      %2836 = vadd.xlane.f32.xlu0 %v2835
      %v2837 = vpop.xlane.xlu0 %2836
      %v2838 = vsel %vm1486, %v2773, 0.0
      %2839 = vadd.xlane.f32.xlu0 %v2838
      %v2840 = vpop.xlane.xlu0 %2839
      %v2841 = vsel %vm1486, %v2775, 0.0
      %2842 = vadd.xlane.f32.xlu0 %v2841
      %v2843 = vpop.xlane.xlu0 %2842
      %v2844 = vsel %vm1486, %v2777, 0.0
      %2845 = vadd.xlane.f32.xlu0 %v2844
      %v2846 = vpop.xlane.xlu0 %2845
      %v2847 = vsel %vm1486, %v2779, 0.0
      %2848 = vadd.xlane.f32.xlu0 %v2847
      %v2849 = vpop.xlane.xlu0 %2848
      %v2850 = vsel %vm1486, %v2781, 0.0
      %2851 = vadd.xlane.f32.xlu0 %v2850
      %v2852 = vpop.xlane.xlu0 %2851
      %v2853 = vsel %vm1486, %v2783, 0.0
      %2854 = vadd.xlane.f32.xlu0 %v2853
      %v2855 = vpop.xlane.xlu0 %2854
      %v2856 = vsel %vm1486, %v2785, 0.0
      %2857 = vadd.xlane.f32.xlu0 %v2856
      %v2858 = vpop.xlane.xlu0 %2857
      %v2859 = vsel %vm1486, %v2787, 0.0
      %2860 = vadd.xlane.f32.xlu0 %v2859
      %v2861 = vpop.xlane.xlu0 %2860
      %v2862 = vsel %vm1486, %v2789, 0.0
      %2863 = vadd.xlane.f32.xlu0 %v2862
      %v2864 = vpop.xlane.xlu0 %2863
      %v2865 = vsel %vm1486, %v2791, 0.0
      %2866 = vadd.xlane.f32.xlu0 %v2865
      %v2867 = vpop.xlane.xlu0 %2866
      %v2868 = vsel %vm1486, %v2793, 0.0
      %2869 = vadd.xlane.f32.xlu0 %v2868
      %v2870 = vpop.xlane.xlu0 %2869
      %v2871 = vsel %vm1486, %v2795, 0.0
      %2872 = vadd.xlane.f32.xlu0 %v2871
      %v2873 = vpop.xlane.xlu0 %2872
      %v2874 = vsel %vm1486, %v2797, 0.0
      %2875 = vadd.xlane.f32.xlu0 %v2874
      %v2876 = vpop.xlane.xlu0 %2875
      %v2877 = vsel %vm1486, %v2799, 0.0
      %2878 = vadd.xlane.f32.xlu0 %v2877
      %v2879 = vpop.xlane.xlu0 %2878
      %v2880 = vsel %vm1486, %v2801, 0.0
      %2881 = vadd.xlane.f32.xlu0 %v2880
      %v2882 = vpop.xlane.xlu0 %2881
      %v2883 = vsel %vm1486, %v2803, 0.0
      %2884 = vadd.xlane.f32.xlu0 %v2883
      %v2885 = vpop.xlane.xlu0 %2884
      %v2886 = vsel %vm1486, %v2805, 0.0
      %2887 = vadd.xlane.f32.xlu0 %v2886
      %v2888 = vpop.xlane.xlu0 %2887
      %v2889 = vsel %vm1486, %v2807, 0.0
      %2890 = vadd.xlane.f32.xlu0 %v2889
      %v2891 = vpop.xlane.xlu0 %2890
      %v2892 = vsel %vm1486, %v2809, 0.0
      %2893 = vadd.xlane.f32.xlu0 %v2892
      %v2894 = vpop.xlane.xlu0 %2893
      %v2895 = vsel %vm1486, %v2811, 0.0
      %2896 = vadd.xlane.f32.xlu0 %v2895
      %v2897 = vpop.xlane.xlu0 %2896
      %v2898 = vsel %vm1486, %v2813, 0.0
      %2899 = vadd.xlane.f32.xlu0 %v2898
      %v2900 = vpop.xlane.xlu0 %2899
      %v2901 = vsel %vm1486, %v2815, 0.0
      %2902 = vadd.xlane.f32.xlu0 %v2901
      %v2903 = vpop.xlane.xlu0 %2902
      %v2904 = vsel %vm1486, %v2817, 0.0
      %2905 = vadd.xlane.f32.xlu0 %v2904
      %v2906 = vpop.xlane.xlu0 %2905
      %v2907 = vsel %vm1486, %v2819, 0.0
      %2908 = vadd.xlane.f32.xlu0 %v2907
      %v2909 = vpop.xlane.xlu0 %2908
      %v2910 = vsel %vm1486, %v2821, 0.0
      %2911 = vadd.xlane.f32.xlu0 %v2910
      %v2912 = vpop.xlane.xlu0 %2911
      %v2913 = vsel %vm1486, %v2823, 0.0
      %2914 = vadd.xlane.f32.xlu0 %v2913
      %v2915 = vpop.xlane.xlu0 %2914
      %v2916 = vsel %vm1486, %v2825, 0.0
      %2917 = vadd.xlane.f32.xlu0 %v2916
      %v2918 = vpop.xlane.xlu0 %2917
      %v2919 = vsel %vm1486, %v2827, 0.0
      %2920 = vadd.xlane.f32.xlu0 %v2919
      %v2921 = vpop.xlane.xlu0 %2920
      %v2922 = vsel %vm1486, %v2829, 0.0
      %2923 = vadd.xlane.f32.xlu0 %v2922
      %v2924 = vpop.xlane.xlu0 %2923
      %v2925 = vsel %vm1486, %v2831, 0.0
      %2926 = vadd.xlane.f32.xlu0 %v2925
      %v2927 = vpop.xlane.xlu0 %2926
      %v2928 = vrcp.pop %v2834
      %v2929 = vrcp.pop %v2837
      %v2930 = vrcp.pop %v2840
      %v2931 = vrcp.pop %v2843
      %v2932 = vrcp.pop %v2846
      %v2933 = vrcp.pop %v2849
      %v2934 = vrcp.pop %v2852
      %v2935 = vrcp.pop %v2855
      %v2936 = vrcp.pop %v2858
      %v2937 = vrcp.pop %v2861
      %v2938 = vrcp.pop %v2864
      %v2939 = vrcp.pop %v2867
      %v2940 = vrcp.pop %v2870
      %v2941 = vrcp.pop %v2873
      %v2942 = vrcp.pop %v2876
      %v2943 = vrcp.pop %v2879
      %v2944 = vrcp.pop %v2882
      %v2945 = vrcp.pop %v2885
      %v2946 = vrcp.pop %v2888
      %v2947 = vrcp.pop %v2891
      %v2948 = vrcp.pop %v2894
      %v2949 = vrcp.pop %v2897
      %v2950 = vrcp.pop %v2900
      %v2951 = vrcp.pop %v2903
      %v2952 = vrcp.pop %v2906
      %v2953 = vrcp.pop %v2909
      %v2954 = vrcp.pop %v2912
      %v2955 = vrcp.pop %v2915
      %v2956 = vrcp.pop %v2918
      %v2957 = vrcp.pop %v2921
      %v2958 = vrcp.pop %v2924
      %v2959 = vrcp.pop %v2927
      %v2960 = vmul.f32 %v2769, %v2928
      %v2961 = vmul.f32 %v2771, %v2929
      %v2962 = vmul.f32 %v2773, %v2930
      %v2963 = vmul.f32 %v2775, %v2931
      %v2964 = vmul.f32 %v2777, %v2932
      %v2965 = vmul.f32 %v2779, %v2933
      %v2966 = vmul.f32 %v2781, %v2934
      %v2967 = vmul.f32 %v2783, %v2935
      %v2968 = vmul.f32 %v2785, %v2936
      %v2969 = vmul.f32 %v2787, %v2937
      %v2970 = vmul.f32 %v2789, %v2938
      %v2971 = vmul.f32 %v2791, %v2939
      %v2972 = vmul.f32 %v2793, %v2940
      %v2973 = vmul.f32 %v2795, %v2941
      %v2974 = vmul.f32 %v2797, %v2942
      %v2975 = vmul.f32 %v2799, %v2943
      %v2976 = vmul.f32 %v2801, %v2944
      %v2977 = vmul.f32 %v2803, %v2945
      %v2978 = vmul.f32 %v2805, %v2946
      %v2979 = vmul.f32 %v2807, %v2947
      %v2980 = vmul.f32 %v2809, %v2948
      %v2981 = vmul.f32 %v2811, %v2949
      %v2982 = vmul.f32 %v2813, %v2950
      %v2983 = vmul.f32 %v2815, %v2951
      %v2984 = vmul.f32 %v2817, %v2952
      %v2985 = vmul.f32 %v2819, %v2953
      %v2986 = vmul.f32 %v2821, %v2954
      %v2987 = vmul.f32 %v2823, %v2955
      %v2988 = vmul.f32 %v2825, %v2956
      %v2989 = vmul.f32 %v2827, %v2957
      %v2990 = vmul.f32 %v2829, %v2958
      %v2991 = vmul.f32 %v2831, %v2959
      %v2992 = vpack.c.bf16 %v2961, %v2960
      %v2993 = vpack.c.bf16 %v2963, %v2962
      %v2994 = vpack.c.bf16 %v2965, %v2964
      %v2995 = vpack.c.bf16 %v2967, %v2966
      %v2996 = vpack.c.bf16 %v2969, %v2968
      %v2997 = vpack.c.bf16 %v2971, %v2970
      %v2998 = vpack.c.bf16 %v2973, %v2972
      %v2999 = vpack.c.bf16 %v2975, %v2974
      %v3000 = vpack.c.bf16 %v2977, %v2976
      %v3001 = vpack.c.bf16 %v2979, %v2978
      %v3002 = vpack.c.bf16 %v2981, %v2980
      %v3003 = vpack.c.bf16 %v2983, %v2982
      %v3004 = vpack.c.bf16 %v2985, %v2984
      %v3005 = vpack.c.bf16 %v2987, %v2986
      %v3006 = vpack.c.bf16 %v2989, %v2988
      %v3007 = vpack.c.bf16 %v2991, %v2990
      %3008 = vrot.lane.b32.xlu0 %v1057, 88
      %v3009 = vpop.permute.xlu0 %3008
      %3010 = vrot.lane.b32.xlu0 %v1058, 88
      %v3011 = vpop.permute.xlu0 %3010
      %3012 = vrot.lane.b32.xlu0 %v1059, 88
      %v3013 = vpop.permute.xlu0 %3012
      %3014 = vrot.lane.b32.xlu0 %v1060, 88
      %v3015 = vpop.permute.xlu0 %3014
      %v3021 = vsel %vm1486, %v2992, 0
      %v3024 = vsel %vm1486, %v2993, 0
      %v3027 = vsel %vm1486, %v2994, 0
      %v3030 = vsel %vm1486, %v2995, 0
      %3032 = vmatprep.subr.bf16.mxu0 0
      %3033 = vmatpush1.bf16.msra.mxu0 0
      %3034 = vmatprep.subr.bf16.mxu0 0
      %3035 = vmatpush1.bf16.msra.mxu0 0
      %3036 = vmatprep.subr.bf16.mxu0 0
      %3037 = vmatpush1.bf16.msra.mxu0 0
      %3038 = vmatprep.subr.bf16.mxu0 0
      %3039 = vmatpush1.bf16.msra.mxu0 0
      %3040 = vmatprep.subr.bf16.mxu0 0
      %3041 = vmatpush1.bf16.msra.mxu0 %v3015
      %3042 = vmatprep.subr.bf16.mxu0 0
      %3043 = vmatpush1.bf16.msra.mxu0 %v3013
      %3044 = vmatprep.subr.bf16.mxu0 0
      %3045 = vmatpush1.bf16.msra.mxu0 %v3011
      %3046 = vmatprep.subr.bf16.mxu0 0
      %3047 = vmatpush1.bf16.msra.mxu0 %v3009
      %3048 = vmatprep.subr.bf16.mxu0 0
      %3049 = vmatpush2.bf16.msra.mxu0 0
      %3050 = vmatprep.subr.bf16.mxu0 0
      %3051 = vmatpush2.bf16.msra.mxu0 0
      %3052 = vmatprep.subr.bf16.mxu0 0
      %3053 = vmatpush2.bf16.msra.mxu0 0
      %3054 = vmatprep.subr.bf16.mxu0 0
      %3055 = vmatpush2.bf16.msra.mxu0 0
      %3056 = vmatprep.subr.bf16.mxu0 0
      %3057 = vmatpush2.bf16.msra.mxu0 0
      %3058 = vmatprep.subr.bf16.mxu0 0
      %3059 = vmatpush2.bf16.msra.mxu0 0
      %3060 = vmatprep.subr.bf16.mxu0 0
      %3061 = vmatpush2.bf16.msra.mxu0 0
      %3062 = vmatprep.subr.bf16.mxu0 0
      %3063 = vmatpush2.bf16.msra.mxu0 0
      %3064 = vmatprep.mubr.bf16.mxu0 0
      %3065 = vmatmul.mubr.bf16.gmra.mxu0 %v3021
      %v3066 = vpop.f32.mrf.mxu0
      %v3067 = vadd.f32 0.0, %v3066
      %v3068 = vpop.f32.mrf.mxu0
      %v3069 = vpop.f32.mrf.mxu0
      %v3070 = vadd.f32 0.0, %v3069
      %v3071 = vpop.f32.mrf.mxu0
      %3072 = vmatprep.mubr.bf16.mxu0 0
      %3073 = vmatmul.mubr.bf16.gmra.mxu0 %v3024
      %v3074 = vpop.f32.mrf.mxu0
      %v3075 = vadd.f32 0.0, %v3074
      %v3076 = vpop.f32.mrf.mxu0
      %v3077 = vpop.f32.mrf.mxu0
      %v3078 = vadd.f32 0.0, %v3077
      %v3079 = vpop.f32.mrf.mxu0
      %3080 = vmatprep.mubr.bf16.mxu0 0
      %3081 = vmatmul.mubr.bf16.gmra.mxu0 %v3027
      %v3082 = vpop.f32.mrf.mxu0
      %v3083 = vadd.f32 0.0, %v3082
      %v3084 = vpop.f32.mrf.mxu0
      %v3085 = vpop.f32.mrf.mxu0
      %v3086 = vadd.f32 0.0, %v3085
      %v3087 = vpop.f32.mrf.mxu0
      %3088 = vmatprep.mubr.bf16.mxu0 0
      %3089 = vmatmul.mubr.bf16.gmra.mxu0 %v3030
      %v3090 = vpop.f32.mrf.mxu0
      %v3091 = vadd.f32 0.0, %v3090
      %v3092 = vpop.f32.mrf.mxu0
      %v3093 = vpop.f32.mrf.mxu0
      %v3094 = vadd.f32 0.0, %v3093
      %v3095 = vpop.f32.mrf.mxu0
      %3096 = vdwg.mxu0
      %3097 = vrot.lane.b32.xlu0 %v1061, 88
      %v3098 = vpop.permute.xlu0 %3097
      %3099 = vrot.lane.b32.xlu0 %v1062, 88
      %v3100 = vpop.permute.xlu0 %3099
      %3101 = vrot.lane.b32.xlu0 %v1063, 88
      %v3102 = vpop.permute.xlu0 %3101
      %3103 = vrot.lane.b32.xlu0 %v1064, 88
      %v3104 = vpop.permute.xlu0 %3103
      %v3110 = vsel %vm1486, %v2996, 0
      %v3113 = vsel %vm1486, %v2997, 0
      %v3116 = vsel %vm1486, %v2998, 0
      %v3119 = vsel %vm1486, %v2999, 0
      %3121 = vmatprep.subr.bf16.mxu0 0
      %3122 = vmatpush1.bf16.msra.mxu0 0
      %3123 = vmatprep.subr.bf16.mxu0 0
      %3124 = vmatpush1.bf16.msra.mxu0 0
      %3125 = vmatprep.subr.bf16.mxu0 0
      %3126 = vmatpush1.bf16.msra.mxu0 0
      %3127 = vmatprep.subr.bf16.mxu0 0
      %3128 = vmatpush1.bf16.msra.mxu0 0
      %3129 = vmatprep.subr.bf16.mxu0 0
      %3130 = vmatpush1.bf16.msra.mxu0 %v3104
      %3131 = vmatprep.subr.bf16.mxu0 0
      %3132 = vmatpush1.bf16.msra.mxu0 %v3102
      %3133 = vmatprep.subr.bf16.mxu0 0
      %3134 = vmatpush1.bf16.msra.mxu0 %v3100
      %3135 = vmatprep.subr.bf16.mxu0 0
      %3136 = vmatpush1.bf16.msra.mxu0 %v3098
      %3137 = vmatprep.subr.bf16.mxu0 0
      %3138 = vmatpush2.bf16.msra.mxu0 0
      %3139 = vmatprep.subr.bf16.mxu0 0
      %3140 = vmatpush2.bf16.msra.mxu0 0
      %3141 = vmatprep.subr.bf16.mxu0 0
      %3142 = vmatpush2.bf16.msra.mxu0 0
      %3143 = vmatprep.subr.bf16.mxu0 0
      %3144 = vmatpush2.bf16.msra.mxu0 0
      %3145 = vmatprep.subr.bf16.mxu0 0
      %3146 = vmatpush2.bf16.msra.mxu0 0
      %3147 = vmatprep.subr.bf16.mxu0 0
      %3148 = vmatpush2.bf16.msra.mxu0 0
      %3149 = vmatprep.subr.bf16.mxu0 0
      %3150 = vmatpush2.bf16.msra.mxu0 0
      %3151 = vmatprep.subr.bf16.mxu0 0
      %3152 = vmatpush2.bf16.msra.mxu0 0
      %3153 = vmatprep.mubr.bf16.mxu0 0
      %3154 = vmatmul.mubr.bf16.gmra.mxu0 %v3110
      %v3155 = vpop.f32.mrf.mxu0
      %v3156 = vadd.f32 0.0, %v3155
      %v3157 = vpop.f32.mrf.mxu0
      %v3158 = vpop.f32.mrf.mxu0
      %v3159 = vadd.f32 0.0, %v3158
      %v3160 = vpop.f32.mrf.mxu0
      %3161 = vmatprep.mubr.bf16.mxu0 0
      %3162 = vmatmul.mubr.bf16.gmra.mxu0 %v3113
      %v3163 = vpop.f32.mrf.mxu0
      %v3164 = vadd.f32 0.0, %v3163
      %v3165 = vpop.f32.mrf.mxu0
      %v3166 = vpop.f32.mrf.mxu0
      %v3167 = vadd.f32 0.0, %v3166
      %v3168 = vpop.f32.mrf.mxu0
      %3169 = vmatprep.mubr.bf16.mxu0 0
      %3170 = vmatmul.mubr.bf16.gmra.mxu0 %v3116
      %v3171 = vpop.f32.mrf.mxu0
      %v3172 = vadd.f32 0.0, %v3171
      %v3173 = vpop.f32.mrf.mxu0
      %v3174 = vpop.f32.mrf.mxu0
      %v3175 = vadd.f32 0.0, %v3174
      %v3176 = vpop.f32.mrf.mxu0
      %3177 = vmatprep.mubr.bf16.mxu0 0
      %3178 = vmatmul.mubr.bf16.gmra.mxu0 %v3119
      %v3179 = vpop.f32.mrf.mxu0
      %v3180 = vadd.f32 0.0, %v3179
      %v3181 = vpop.f32.mrf.mxu0
      %v3182 = vpop.f32.mrf.mxu0
      %v3183 = vadd.f32 0.0, %v3182
      %v3184 = vpop.f32.mrf.mxu0
      %3185 = vdwg.mxu0
      %3186 = vrot.lane.b32.xlu0 %v1065, 88
      %v3187 = vpop.permute.xlu0 %3186
      %3188 = vrot.lane.b32.xlu0 %v1066, 88
      %v3189 = vpop.permute.xlu0 %3188
      %3190 = vrot.lane.b32.xlu0 %v1067, 88
      %v3191 = vpop.permute.xlu0 %3190
      %3192 = vrot.lane.b32.xlu0 %v1068, 88
      %v3193 = vpop.permute.xlu0 %3192
      %v3199 = vsel %vm1486, %v3000, 0
      %v3202 = vsel %vm1486, %v3001, 0
      %v3205 = vsel %vm1486, %v3002, 0
      %v3208 = vsel %vm1486, %v3003, 0
      %3210 = vmatprep.subr.bf16.mxu0 0
      %3211 = vmatpush1.bf16.msra.mxu0 0
      %3212 = vmatprep.subr.bf16.mxu0 0
      %3213 = vmatpush1.bf16.msra.mxu0 0
      %3214 = vmatprep.subr.bf16.mxu0 0
      %3215 = vmatpush1.bf16.msra.mxu0 0
      %3216 = vmatprep.subr.bf16.mxu0 0
      %3217 = vmatpush1.bf16.msra.mxu0 0
      %3218 = vmatprep.subr.bf16.mxu0 0
      %3219 = vmatpush1.bf16.msra.mxu0 %v3193
      %3220 = vmatprep.subr.bf16.mxu0 0
      %3221 = vmatpush1.bf16.msra.mxu0 %v3191
      %3222 = vmatprep.subr.bf16.mxu0 0
      %3223 = vmatpush1.bf16.msra.mxu0 %v3189
      %3224 = vmatprep.subr.bf16.mxu0 0
      %3225 = vmatpush1.bf16.msra.mxu0 %v3187
      %3226 = vmatprep.subr.bf16.mxu0 0
      %3227 = vmatpush2.bf16.msra.mxu0 0
      %3228 = vmatprep.subr.bf16.mxu0 0
      %3229 = vmatpush2.bf16.msra.mxu0 0
      %3230 = vmatprep.subr.bf16.mxu0 0
      %3231 = vmatpush2.bf16.msra.mxu0 0
      %3232 = vmatprep.subr.bf16.mxu0 0
      %3233 = vmatpush2.bf16.msra.mxu0 0
      %3234 = vmatprep.subr.bf16.mxu0 0
      %3235 = vmatpush2.bf16.msra.mxu0 0
      %3236 = vmatprep.subr.bf16.mxu0 0
      %3237 = vmatpush2.bf16.msra.mxu0 0
      %3238 = vmatprep.subr.bf16.mxu0 0
      %3239 = vmatpush2.bf16.msra.mxu0 0
      %3240 = vmatprep.subr.bf16.mxu0 0
      %3241 = vmatpush2.bf16.msra.mxu0 0
      %3242 = vmatprep.mubr.bf16.mxu0 0
      %3243 = vmatmul.mubr.bf16.gmra.mxu0 %v3199
      %v3244 = vpop.f32.mrf.mxu0
      %v3245 = vadd.f32 0.0, %v3244
      %v3246 = vpop.f32.mrf.mxu0
      %v3247 = vpop.f32.mrf.mxu0
      %v3248 = vadd.f32 0.0, %v3247
      %v3249 = vpop.f32.mrf.mxu0
      %3250 = vmatprep.mubr.bf16.mxu0 0
      %3251 = vmatmul.mubr.bf16.gmra.mxu0 %v3202
      %v3252 = vpop.f32.mrf.mxu0
      %v3253 = vadd.f32 0.0, %v3252
      %v3254 = vpop.f32.mrf.mxu0
      %v3255 = vpop.f32.mrf.mxu0
      %v3256 = vadd.f32 0.0, %v3255
      %v3257 = vpop.f32.mrf.mxu0
      %3258 = vmatprep.mubr.bf16.mxu0 0
      %3259 = vmatmul.mubr.bf16.gmra.mxu0 %v3205
      %v3260 = vpop.f32.mrf.mxu0
      %v3261 = vadd.f32 0.0, %v3260
      %v3262 = vpop.f32.mrf.mxu0
      %v3263 = vpop.f32.mrf.mxu0
      %v3264 = vadd.f32 0.0, %v3263
      %v3265 = vpop.f32.mrf.mxu0
      %3266 = vmatprep.mubr.bf16.mxu0 0
      %3267 = vmatmul.mubr.bf16.gmra.mxu0 %v3208
      %v3268 = vpop.f32.mrf.mxu0
      %v3269 = vadd.f32 0.0, %v3268
      %v3270 = vpop.f32.mrf.mxu0
      %v3271 = vpop.f32.mrf.mxu0
      %v3272 = vadd.f32 0.0, %v3271
      %v3273 = vpop.f32.mrf.mxu0
      %3274 = vdwg.mxu0
      %3275 = vrot.lane.b32.xlu0 %v1069, 88
      %v3276 = vpop.permute.xlu0 %3275
      %3277 = vrot.lane.b32.xlu0 %v1070, 88
      %v3278 = vpop.permute.xlu0 %3277
      %3279 = vrot.lane.b32.xlu0 %v1071, 88
      %v3280 = vpop.permute.xlu0 %3279
      %3281 = vrot.lane.b32.xlu0 %v1072, 88
      %v3282 = vpop.permute.xlu0 %3281
      %v3288 = vsel %vm1486, %v3004, 0
      %v3291 = vsel %vm1486, %v3005, 0
      %v3294 = vsel %vm1486, %v3006, 0
      %v3297 = vsel %vm1486, %v3007, 0
      %3299 = vmatprep.subr.bf16.mxu0 0
      %3300 = vmatpush1.bf16.msra.mxu0 0
      %3301 = vmatprep.subr.bf16.mxu0 0
      %3302 = vmatpush1.bf16.msra.mxu0 0
      %3303 = vmatprep.subr.bf16.mxu0 0
      %3304 = vmatpush1.bf16.msra.mxu0 0
      %3305 = vmatprep.subr.bf16.mxu0 0
      %3306 = vmatpush1.bf16.msra.mxu0 0
      %3307 = vmatprep.subr.bf16.mxu0 0
      %3308 = vmatpush1.bf16.msra.mxu0 %v3282
      %3309 = vmatprep.subr.bf16.mxu0 0
      %3310 = vmatpush1.bf16.msra.mxu0 %v3280
      %3311 = vmatprep.subr.bf16.mxu0 0
      %3312 = vmatpush1.bf16.msra.mxu0 %v3278
      %3313 = vmatprep.subr.bf16.mxu0 0
      %3314 = vmatpush1.bf16.msra.mxu0 %v3276
      %3315 = vmatprep.subr.bf16.mxu0 0
      %3316 = vmatpush2.bf16.msra.mxu0 0
      %3317 = vmatprep.subr.bf16.mxu0 0
      %3318 = vmatpush2.bf16.msra.mxu0 0
      %3319 = vmatprep.subr.bf16.mxu0 0
      %3320 = vmatpush2.bf16.msra.mxu0 0
      %3321 = vmatprep.subr.bf16.mxu0 0
      %3322 = vmatpush2.bf16.msra.mxu0 0
      %3323 = vmatprep.subr.bf16.mxu0 0
      %3324 = vmatpush2.bf16.msra.mxu0 0
      %3325 = vmatprep.subr.bf16.mxu0 0
      %3326 = vmatpush2.bf16.msra.mxu0 0
      %3327 = vmatprep.subr.bf16.mxu0 0
      %3328 = vmatpush2.bf16.msra.mxu0 0
      %3329 = vmatprep.subr.bf16.mxu0 0
      %3330 = vmatpush2.bf16.msra.mxu0 0
      %3331 = vmatprep.mubr.bf16.mxu0 0
      %3332 = vmatmul.mubr.bf16.gmra.mxu0 %v3288
      %v3333 = vpop.f32.mrf.mxu0
      %v3334 = vadd.f32 0.0, %v3333
      %v3335 = vpop.f32.mrf.mxu0
      %v3336 = vpop.f32.mrf.mxu0
      %v3337 = vadd.f32 0.0, %v3336
      %v3338 = vpop.f32.mrf.mxu0
      %3339 = vmatprep.mubr.bf16.mxu0 0
      %3340 = vmatmul.mubr.bf16.gmra.mxu0 %v3291
      %v3341 = vpop.f32.mrf.mxu0
      %v3342 = vadd.f32 0.0, %v3341
      %v3343 = vpop.f32.mrf.mxu0
      %v3344 = vpop.f32.mrf.mxu0
      %v3345 = vadd.f32 0.0, %v3344
      %v3346 = vpop.f32.mrf.mxu0
      %3347 = vmatprep.mubr.bf16.mxu0 0
      %3348 = vmatmul.mubr.bf16.gmra.mxu0 %v3294
      %v3349 = vpop.f32.mrf.mxu0
      %v3350 = vadd.f32 0.0, %v3349
      %v3351 = vpop.f32.mrf.mxu0
      %v3352 = vpop.f32.mrf.mxu0
      %v3353 = vadd.f32 0.0, %v3352
      %v3354 = vpop.f32.mrf.mxu0
      %3355 = vmatprep.mubr.bf16.mxu0 0
      %3356 = vmatmul.mubr.bf16.gmra.mxu0 %v3297
      %v3357 = vpop.f32.mrf.mxu0
      %v3358 = vadd.f32 0.0, %v3357
      %v3359 = vpop.f32.mrf.mxu0
      %v3360 = vpop.f32.mrf.mxu0
      %v3361 = vadd.f32 0.0, %v3360
      %v3362 = vpop.f32.mrf.mxu0
      %3363 = vdwg.mxu0
      %3396 = vrot.lane.b32.xlu0 %v3067, 8
      %v3397 = vpop.permute.xlu0 %3396
      %3398 = vrot.lane.b32.xlu0 %v3070, 8
      %v3399 = vpop.permute.xlu0 %3398
      %3400 = vrot.lane.b32.xlu0 %v3075, 8
      %v3401 = vpop.permute.xlu0 %3400
      %3402 = vrot.lane.b32.xlu0 %v3078, 8
      %v3403 = vpop.permute.xlu0 %3402
      %3404 = vrot.lane.b32.xlu0 %v3083, 8
      %v3405 = vpop.permute.xlu0 %3404
      %3406 = vrot.lane.b32.xlu0 %v3086, 8
      %v3407 = vpop.permute.xlu0 %3406
      %3408 = vrot.lane.b32.xlu0 %v3091, 8
      %v3409 = vpop.permute.xlu0 %3408
      %3410 = vrot.lane.b32.xlu0 %v3094, 8
      %v3411 = vpop.permute.xlu0 %3410
      %3412 = vrot.lane.b32.xlu0 %v3156, 8
      %v3413 = vpop.permute.xlu0 %3412
      %3414 = vrot.lane.b32.xlu0 %v3159, 8
      %v3415 = vpop.permute.xlu0 %3414
      %3416 = vrot.lane.b32.xlu0 %v3164, 8
      %v3417 = vpop.permute.xlu0 %3416
      %3418 = vrot.lane.b32.xlu0 %v3167, 8
      %v3419 = vpop.permute.xlu0 %3418
      %3420 = vrot.lane.b32.xlu0 %v3172, 8
      %v3421 = vpop.permute.xlu0 %3420
      %3422 = vrot.lane.b32.xlu0 %v3175, 8
      %v3423 = vpop.permute.xlu0 %3422
      %3424 = vrot.lane.b32.xlu0 %v3180, 8
      %v3425 = vpop.permute.xlu0 %3424
      %3426 = vrot.lane.b32.xlu0 %v3183, 8
      %v3427 = vpop.permute.xlu0 %3426
      %3428 = vrot.lane.b32.xlu0 %v3245, 8
      %v3429 = vpop.permute.xlu0 %3428
      %3430 = vrot.lane.b32.xlu0 %v3248, 8
      %v3431 = vpop.permute.xlu0 %3430
      %3432 = vrot.lane.b32.xlu0 %v3253, 8
      %v3433 = vpop.permute.xlu0 %3432
      %3434 = vrot.lane.b32.xlu0 %v3256, 8
      %v3435 = vpop.permute.xlu0 %3434
      %3436 = vrot.lane.b32.xlu0 %v3261, 8
      %v3437 = vpop.permute.xlu0 %3436
      %3438 = vrot.lane.b32.xlu0 %v3264, 8
      %v3439 = vpop.permute.xlu0 %3438
      %3440 = vrot.lane.b32.xlu0 %v3269, 8
      %v3441 = vpop.permute.xlu0 %3440
      %3442 = vrot.lane.b32.xlu0 %v3272, 8
      %v3443 = vpop.permute.xlu0 %3442
      %3444 = vrot.lane.b32.xlu0 %v3334, 8
      %v3445 = vpop.permute.xlu0 %3444
      %3446 = vrot.lane.b32.xlu0 %v3337, 8
      %v3447 = vpop.permute.xlu0 %3446
      %3448 = vrot.lane.b32.xlu0 %v3342, 8
      %v3449 = vpop.permute.xlu0 %3448
      %3450 = vrot.lane.b32.xlu0 %v3345, 8
      %v3451 = vpop.permute.xlu0 %3450
      %3452 = vrot.lane.b32.xlu0 %v3350, 8
      %v3453 = vpop.permute.xlu0 %3452
      %3454 = vrot.lane.b32.xlu0 %v3353, 8
      %v3455 = vpop.permute.xlu0 %3454
      %3456 = vrot.lane.b32.xlu0 %v3358, 8
      %v3457 = vpop.permute.xlu0 %3456
      %3458 = vrot.lane.b32.xlu0 %v3361, 8
      %v3459 = vpop.permute.xlu0 %3458
      %v3492 = vsel %vm1093, %v1914, %v3397
      %v3493 = vsel %vm1093, %v1917, %v3399
      %v3494 = vsel %vm1093, %v1922, %v3401
      %v3495 = vsel %vm1093, %v1925, %v3403
      %v3496 = vsel %vm1093, %v1930, %v3405
      %v3497 = vsel %vm1093, %v1933, %v3407
      %v3498 = vsel %vm1093, %v1938, %v3409
      %v3499 = vsel %vm1093, %v1941, %v3411
      %v3500 = vsel %vm1093, %v2003, %v3413
      %v3501 = vsel %vm1093, %v2006, %v3415
      %v3502 = vsel %vm1093, %v2011, %v3417
      %v3503 = vsel %vm1093, %v2014, %v3419
      %v3504 = vsel %vm1093, %v2019, %v3421
      %v3505 = vsel %vm1093, %v2022, %v3423
      %v3506 = vsel %vm1093, %v2027, %v3425
      %v3507 = vsel %vm1093, %v2030, %v3427
      %v3508 = vsel %vm1093, %v2092, %v3429
      %v3509 = vsel %vm1093, %v2095, %v3431
      %v3510 = vsel %vm1093, %v2100, %v3433
      %v3511 = vsel %vm1093, %v2103, %v3435
      %v3512 = vsel %vm1093, %v2108, %v3437
      %v3513 = vsel %vm1093, %v2111, %v3439
      %v3514 = vsel %vm1093, %v2116, %v3441
      %v3515 = vsel %vm1093, %v2119, %v3443
      %v3516 = vsel %vm1093, %v2181, %v3445
      %v3517 = vsel %vm1093, %v2184, %v3447
      %v3518 = vsel %vm1093, %v2189, %v3449
      %v3519 = vsel %vm1093, %v2192, %v3451
      %v3520 = vsel %vm1093, %v2197, %v3453
      %v3521 = vsel %vm1093, %v2200, %v3455
      %v3522 = vsel %vm1093, %v2205, %v3457
      %v3523 = vsel %vm1093, %v2208, %v3459
      %v3524 = vpack.c.bf16 %v3493, %v3492
      %v3525 = vpack.c.bf16 %v3495, %v3494
      %v3526 = vpack.c.bf16 %v3497, %v3496
      %v3527 = vpack.c.bf16 %v3499, %v3498
      %v3528 = vpack.c.bf16 %v3501, %v3500
      %v3529 = vpack.c.bf16 %v3503, %v3502
      %v3530 = vpack.c.bf16 %v3505, %v3504
      %v3531 = vpack.c.bf16 %v3507, %v3506
      %v3532 = vpack.c.bf16 %v3509, %v3508
      %v3533 = vpack.c.bf16 %v3511, %v3510
      %v3534 = vpack.c.bf16 %v3513, %v3512
      %v3535 = vpack.c.bf16 %v3515, %v3514
      %v3536 = vpack.c.bf16 %v3517, %v3516
      %v3537 = vpack.c.bf16 %v3519, %v3518
      %v3538 = vpack.c.bf16 %v3521, %v3520
      %v3539 = vpack.c.bf16 %v3523, %v3522
      %v3540 = vld [vmem:[%s6] sm:$0xf]
      %v3541 = vld [vmem:[%s6 + $0x4] sm:$0xf]
      %v3542 = vld [vmem:[%s7] sm:$0x1]
      %v3544 = vlaneseq
      %v3545 = vshrl.u32 %v3544, 7
      %v3546 = vsub.s32 0, %v3545
      %v3547 = vrot.slane %v3542, %v3546
      %v3551 = vunpack.c.l.b16 %v3540
      %v3552 = vunpack.c.l.b16 %v3541
      %v3553 = vpack.c.b16 %v3552, %v3551
      %vm3555 = vcmask 130048
      %v3557 = vsel %vm3555, %v3524, 0
      %v3560 = vsel %vm3555, %v3525, 0
      %v3563 = vsel %vm3555, %v3526, 0
      %v3566 = vsel %vm3555, %v3527, 0
      %v3569 = vsel %vm3555, %v3528, 0
      %v3572 = vsel %vm3555, %v3529, 0
      %v3575 = vsel %vm3555, %v3530, 0
      %v3578 = vsel %vm3555, %v3531, 0
      %v3581 = vsel %vm3555, %v3532, 0
      %v3584 = vsel %vm3555, %v3533, 0
      %v3587 = vsel %vm3555, %v3534, 0
      %v3590 = vsel %vm3555, %v3535, 0
      %v3593 = vsel %vm3555, %v3536, 0
      %v3596 = vsel %vm3555, %v3537, 0
      %v3599 = vsel %vm3555, %v3538, 0
      %v3602 = vsel %vm3555, %v3539, 0
      %3604 = vmatprep.subr.bf16.mxu0 0
      %3605 = vmatpush1.bf16.msra.mxu0 0
      %3606 = vmatprep.subr.bf16.mxu0 0
      %3607 = vmatpush1.bf16.msra.mxu0 0
      %3608 = vmatprep.subr.bf16.mxu0 0
      %3609 = vmatpush1.bf16.msra.mxu0 0
      %3610 = vmatprep.subr.bf16.mxu0 0
      %3611 = vmatpush1.bf16.msra.mxu0 0
      %3612 = vmatprep.subr.bf16.mxu0 0
      %3613 = vmatpush1.bf16.msra.mxu0 0
      %3614 = vmatprep.subr.bf16.mxu0 0
      %3615 = vmatpush1.bf16.msra.mxu0 0
      %3616 = vmatprep.subr.bf16.mxu0 0
      %3617 = vmatpush1.bf16.msra.mxu0 0
      %3618 = vmatprep.subr.bf16.mxu0 0
      %3619 = vmatpush1.bf16.msra.mxu0 %v3553
      %3620 = vmatprep.subr.bf16.mxu0 0
      %3621 = vmatpush2.bf16.msra.mxu0 0
      %3622 = vmatprep.subr.bf16.mxu0 0
      %3623 = vmatpush2.bf16.msra.mxu0 0
      %3624 = vmatprep.subr.bf16.mxu0 0
      %3625 = vmatpush2.bf16.msra.mxu0 0
      %3626 = vmatprep.subr.bf16.mxu0 0
      %3627 = vmatpush2.bf16.msra.mxu0 0
      %3628 = vmatprep.subr.bf16.mxu0 0
      %3629 = vmatpush2.bf16.msra.mxu0 0
      %3630 = vmatprep.subr.bf16.mxu0 0
      %3631 = vmatpush2.bf16.msra.mxu0 0
      %3632 = vmatprep.subr.bf16.mxu0 0
      %3633 = vmatpush2.bf16.msra.mxu0 0
      %3634 = vmatprep.subr.bf16.mxu0 0
      %3635 = vmatpush2.bf16.msra.mxu0 0
      %3636 = vmatprep.mubr.bf16.mxu0 0
      %3637 = vmatmul.mubr.bf16.gmra.mxu0 %v3557
      %v3638 = vpop.f32.mrf.mxu0
      %v3639 = vadd.f32 %v3547, %v3638
      %v3640 = vpop.f32.mrf.mxu0
      %v3641 = vpop.f32.mrf.mxu0
      %v3642 = vadd.f32 %v3547, %v3641
      %v3643 = vpop.f32.mrf.mxu0
      %3644 = vmatprep.mubr.bf16.mxu0 0
      %3645 = vmatmul.mubr.bf16.gmra.mxu0 %v3560
      %v3646 = vpop.f32.mrf.mxu0
      %v3647 = vadd.f32 %v3547, %v3646
      %v3648 = vpop.f32.mrf.mxu0
      %v3649 = vpop.f32.mrf.mxu0
      %v3650 = vadd.f32 %v3547, %v3649
      %v3651 = vpop.f32.mrf.mxu0
      %3652 = vmatprep.mubr.bf16.mxu0 0
      %3653 = vmatmul.mubr.bf16.gmra.mxu0 %v3563
      %v3654 = vpop.f32.mrf.mxu0
      %v3655 = vadd.f32 %v3547, %v3654
      %v3656 = vpop.f32.mrf.mxu0
      %v3657 = vpop.f32.mrf.mxu0
      %v3658 = vadd.f32 %v3547, %v3657
      %v3659 = vpop.f32.mrf.mxu0
      %3660 = vmatprep.mubr.bf16.mxu0 0
      %3661 = vmatmul.mubr.bf16.gmra.mxu0 %v3566
      %v3662 = vpop.f32.mrf.mxu0
      %v3663 = vadd.f32 %v3547, %v3662
      %v3664 = vpop.f32.mrf.mxu0
      %v3665 = vpop.f32.mrf.mxu0
      %v3666 = vadd.f32 %v3547, %v3665
      %v3667 = vpop.f32.mrf.mxu0
      %3668 = vmatprep.mubr.bf16.mxu0 0
      %3669 = vmatmul.mubr.bf16.gmra.mxu0 %v3569
      %v3670 = vpop.f32.mrf.mxu0
      %v3671 = vadd.f32 %v3547, %v3670
      %v3672 = vpop.f32.mrf.mxu0
      %v3673 = vpop.f32.mrf.mxu0
      %v3674 = vadd.f32 %v3547, %v3673
      %v3675 = vpop.f32.mrf.mxu0
      %3676 = vmatprep.mubr.bf16.mxu0 0
      %3677 = vmatmul.mubr.bf16.gmra.mxu0 %v3572
      %v3678 = vpop.f32.mrf.mxu0
      %v3679 = vadd.f32 %v3547, %v3678
      %v3680 = vpop.f32.mrf.mxu0
      %v3681 = vpop.f32.mrf.mxu0
      %v3682 = vadd.f32 %v3547, %v3681
      %v3683 = vpop.f32.mrf.mxu0
      %3684 = vmatprep.mubr.bf16.mxu0 0
      %3685 = vmatmul.mubr.bf16.gmra.mxu0 %v3575
      %v3686 = vpop.f32.mrf.mxu0
      %v3687 = vadd.f32 %v3547, %v3686
      %v3688 = vpop.f32.mrf.mxu0
      %v3689 = vpop.f32.mrf.mxu0
      %v3690 = vadd.f32 %v3547, %v3689
      %v3691 = vpop.f32.mrf.mxu0
      %3692 = vmatprep.mubr.bf16.mxu0 0
      %3693 = vmatmul.mubr.bf16.gmra.mxu0 %v3578
      %v3694 = vpop.f32.mrf.mxu0
      %v3695 = vadd.f32 %v3547, %v3694
      %v3696 = vpop.f32.mrf.mxu0
      %v3697 = vpop.f32.mrf.mxu0
      %v3698 = vadd.f32 %v3547, %v3697
      %v3699 = vpop.f32.mrf.mxu0
      %3700 = vmatprep.mubr.bf16.mxu0 0
      %3701 = vmatmul.mubr.bf16.gmra.mxu0 %v3581
      %v3702 = vpop.f32.mrf.mxu0
      %v3703 = vadd.f32 %v3547, %v3702
      %v3704 = vpop.f32.mrf.mxu0
      %v3705 = vpop.f32.mrf.mxu0
      %v3706 = vadd.f32 %v3547, %v3705
      %v3707 = vpop.f32.mrf.mxu0
      %3708 = vmatprep.mubr.bf16.mxu0 0
      %3709 = vmatmul.mubr.bf16.gmra.mxu0 %v3584
      %v3710 = vpop.f32.mrf.mxu0
      %v3711 = vadd.f32 %v3547, %v3710
      %v3712 = vpop.f32.mrf.mxu0
      %v3713 = vpop.f32.mrf.mxu0
      %v3714 = vadd.f32 %v3547, %v3713
      %v3715 = vpop.f32.mrf.mxu0
      %3716 = vmatprep.mubr.bf16.mxu0 0
      %3717 = vmatmul.mubr.bf16.gmra.mxu0 %v3587
      %v3718 = vpop.f32.mrf.mxu0
      %v3719 = vadd.f32 %v3547, %v3718
      %v3720 = vpop.f32.mrf.mxu0
      %v3721 = vpop.f32.mrf.mxu0
      %v3722 = vadd.f32 %v3547, %v3721
      %v3723 = vpop.f32.mrf.mxu0
      %3724 = vmatprep.mubr.bf16.mxu0 0
      %3725 = vmatmul.mubr.bf16.gmra.mxu0 %v3590
      %v3726 = vpop.f32.mrf.mxu0
      %v3727 = vadd.f32 %v3547, %v3726
      %v3728 = vpop.f32.mrf.mxu0
      %v3729 = vpop.f32.mrf.mxu0
      %v3730 = vadd.f32 %v3547, %v3729
      %v3731 = vpop.f32.mrf.mxu0
      %3732 = vmatprep.mubr.bf16.mxu0 0
      %3733 = vmatmul.mubr.bf16.gmra.mxu0 %v3593
      %v3734 = vpop.f32.mrf.mxu0
      %v3735 = vadd.f32 %v3547, %v3734
      %v3736 = vpop.f32.mrf.mxu0
      %v3737 = vpop.f32.mrf.mxu0
      %v3738 = vadd.f32 %v3547, %v3737
      %v3739 = vpop.f32.mrf.mxu0
      %3740 = vmatprep.mubr.bf16.mxu0 0
      %3741 = vmatmul.mubr.bf16.gmra.mxu0 %v3596
      %v3742 = vpop.f32.mrf.mxu0
      %v3743 = vadd.f32 %v3547, %v3742
      %v3744 = vpop.f32.mrf.mxu0
      %v3745 = vpop.f32.mrf.mxu0
      %v3746 = vadd.f32 %v3547, %v3745
      %v3747 = vpop.f32.mrf.mxu0
      %3748 = vmatprep.mubr.bf16.mxu0 0
      %3749 = vmatmul.mubr.bf16.gmra.mxu0 %v3599
      %v3750 = vpop.f32.mrf.mxu0
      %v3751 = vadd.f32 %v3547, %v3750
      %v3752 = vpop.f32.mrf.mxu0
      %v3753 = vpop.f32.mrf.mxu0
      %v3754 = vadd.f32 %v3547, %v3753
      %v3755 = vpop.f32.mrf.mxu0
      %3756 = vmatprep.mubr.bf16.mxu0 0
      %3757 = vmatmul.mubr.bf16.gmra.mxu0 %v3602
      %v3758 = vpop.f32.mrf.mxu0
      %v3759 = vadd.f32 %v3547, %v3758
      %v3760 = vpop.f32.mrf.mxu0
      %v3761 = vpop.f32.mrf.mxu0
      %v3762 = vadd.f32 %v3547, %v3761
      %v3763 = vpop.f32.mrf.mxu0
      %3764 = vdwg.mxu0
      %v3765 = vadd.f32 %v310, %v3639
      %v3766 = vadd.f32 %v311, %v3642
      %v3767 = vadd.f32 %v312, %v3647
      %v3768 = vadd.f32 %v313, %v3650
      %v3769 = vadd.f32 %v314, %v3655
      %v3770 = vadd.f32 %v315, %v3658
      %v3771 = vadd.f32 %v316, %v3663
      %v3772 = vadd.f32 %v317, %v3666
      %v3773 = vadd.f32 %v318, %v3671
      %v3774 = vadd.f32 %v319, %v3674
      %v3775 = vadd.f32 %v320, %v3679
      %v3776 = vadd.f32 %v321, %v3682
      %v3777 = vadd.f32 %v322, %v3687
      %v3778 = vadd.f32 %v323, %v3690
      %v3779 = vadd.f32 %v324, %v3695
      %v3780 = vadd.f32 %v325, %v3698
      %v3781 = vadd.f32 %v326, %v3703
      %v3782 = vadd.f32 %v327, %v3706
      %v3783 = vadd.f32 %v328, %v3711
      %v3784 = vadd.f32 %v329, %v3714
      %v3785 = vadd.f32 %v330, %v3719
      %v3786 = vadd.f32 %v331, %v3722
      %v3787 = vadd.f32 %v332, %v3727
      %v3788 = vadd.f32 %v333, %v3730
      %v3789 = vadd.f32 %v334, %v3735
      %v3790 = vadd.f32 %v335, %v3738
      %v3791 = vadd.f32 %v336, %v3743
      %v3792 = vadd.f32 %v337, %v3746
      %v3793 = vadd.f32 %v338, %v3751
      %v3794 = vadd.f32 %v339, %v3754
      %v3795 = vadd.f32 %v340, %v3759
      %v3796 = vadd.f32 %v341, %v3762
      %3797 = vst [vmem:[%s307] sm:$0xff] %v3765
      %3798 = vst [vmem:[%s307 + $0x8] sm:$0xff] %v3766
      %3799 = vst [vmem:[%s307 + $0x10] sm:$0xff] %v3767
      %3800 = vst [vmem:[%s307 + $0x18] sm:$0xff] %v3768
      %3801 = vst [vmem:[%s307 + $0x20] sm:$0xff] %v3769
      %3802 = vst [vmem:[%s307 + $0x28] sm:$0xff] %v3770
      %3803 = vst [vmem:[%s307 + $0x30] sm:$0xff] %v3771
      %3804 = vst [vmem:[%s307 + $0x38] sm:$0xff] %v3772
      %3805 = vst [vmem:[%s307 + $0x40] sm:$0xff] %v3773
      %3806 = vst [vmem:[%s307 + $0x48] sm:$0xff] %v3774
      %3807 = vst [vmem:[%s307 + $0x50] sm:$0xff] %v3775
      %3808 = vst [vmem:[%s307 + $0x58] sm:$0xff] %v3776
      %3809 = vst [vmem:[%s307 + $0x60] sm:$0xff] %v3777
      %3810 = vst [vmem:[%s307 + $0x68] sm:$0xff] %v3778
      %3811 = vst [vmem:[%s307 + $0x70] sm:$0xff] %v3779
      %3812 = vst [vmem:[%s307 + $0x78] sm:$0xff] %v3780
      %3813 = vst [vmem:[%s307 + $0x80] sm:$0xff] %v3781
      %3814 = vst [vmem:[%s307 + $0x88] sm:$0xff] %v3782
      %3815 = vst [vmem:[%s307 + $0x90] sm:$0xff] %v3783
      %3816 = vst [vmem:[%s307 + $0x98] sm:$0xff] %v3784
      %3817 = vst [vmem:[%s307 + $0xa0] sm:$0xff] %v3785
      %3818 = vst [vmem:[%s307 + $0xa8] sm:$0xff] %v3786
      %3819 = vst [vmem:[%s307 + $0xb0] sm:$0xff] %v3787
      %3820 = vst [vmem:[%s307 + $0xb8] sm:$0xff] %v3788
      %3821 = vst [vmem:[%s307 + $0xc0] sm:$0xff] %v3789
      %3822 = vst [vmem:[%s307 + $0xc8] sm:$0xff] %v3790
      %3823 = vst [vmem:[%s307 + $0xd0] sm:$0xff] %v3791
      %3824 = vst [vmem:[%s307 + $0xd8] sm:$0xff] %v3792
      %3825 = vst [vmem:[%s307 + $0xe0] sm:$0xff] %v3793
      %3826 = vst [vmem:[%s307 + $0xe8] sm:$0xff] %v3794
      %3827 = vst [vmem:[%s307 + $0xf0] sm:$0xff] %v3795
      %3828 = vst [vmem:[%s307 + $0xf8] sm:$0xff] %v3796
      %s3829 = smul.u32 32, %s19
      %p3830 = scmp.lt.s32.totalorder %s3829, 63
      %s3831 = scalar_select %p3830, %s3829, 63
      %s3832 = smul.addr %s3831, 8
      %s3833 = scalar_lea.vmem %s8, %s3832
      // Predicated region
      $region53: #{basic_uformer_layer.4} parent=51 // pred_check
        %p3834 = pneg %p210
      $region54: #{basic_uformer_layer.4} parent=51 // pred_check_branch
        %3836 = sbr.rel (%p3834) target = $region56
      $region55: #{basic_uformer_layer.4} parent=51 // pred_region
        %s3837 = smul.u32 32, %s19
      $region56: #{basic_uformer_layer.4} parent=51 // pred_fallthru
        _
    $region52: #{basic_uformer_layer.4} parent=5 // pred_fallthru
      _
    %p3838 = scmp.le.s32.totalorder 2, %s14
    // Predicated region
    $region57: #{basic_uformer_layer.4} parent=5 // pred_check
      %p3839 = pneg %p3838
    $region58: #{basic_uformer_layer.4} parent=5 // pred_check_branch
      %3841 = sbr.rel (%p3839) target = $region60
    $region59: #{basic_uformer_layer.4} parent=5 // pred_region
      %s3842 = ssub.s32 %s14, 2
      // Predicated region
      $region61: #{basic_uformer_layer.4} parent=59 // pred_check
        %p3843 = pneg %p216
      $region62: #{basic_uformer_layer.4} parent=59 // pred_check_branch
        %3845 = sbr.rel (%p3843) target = $region64
      $region63: #{basic_uformer_layer.4} parent=59 // pred_region
        %s3846 = smul.u32 32, %s20
        %p3847 = scmp.lt.s32.totalorder %s3846, 63
        %s3848 = scalar_select %p3847, %s3846, 63
        %s3849 = smul.addr %s3848, 8
        %s3850 = scalar_lea.vmem %s8, %s3849
      $region64: #{basic_uformer_layer.4} parent=59 // pred_fallthru
        _
    $region60: #{basic_uformer_layer.4} parent=5 // pred_fallthru
      _
  $region6: #{basic_uformer_layer.4} parent=0 // loop_footer
    %s18 = sadd.s32 1, %s14
  $region7: #{basic_uformer_layer.4} parent=0 // loop_footer_branch
    %13 = sbr.rel target = $region3
  $region8: #{basic_uformer_layer.4} parent=0 // loop_exit
    _

// kernel: basic_uformer_layer.6
$region0: #{basic_uformer_layer.6}
  #allocation0 [shape = 'u32[]', space=smem, size = 0x4, offset = 0x4, fixed_abs, tag = 'smem constant byte address 0x4 - core index']
  #allocation1 [shape = 'u32[144,128]{1,0:T(1,128)}', space=vmem, size = 0x12000, scoped, tag = 'internal scratch']
  %s0 = inlined_call_operand.vmem [shape: f32[512,128], index: 0, kind: input, shape index: {}]
  %s1 = inlined_call_operand.vmem [shape: f32[1,128], index: 1, kind: input, shape index: {}]
  %s2 = inlined_call_operand.vmem [shape: f32[1,128], index: 2, kind: input, shape index: {}]
  %s3 = inlined_call_operand.vmem [shape: bf16[128,48], index: 3, kind: input, shape index: {}]
  %s4 = inlined_call_operand.vmem [shape: f32[1,48], index: 4, kind: input, shape index: {}]
  %s5 = inlined_call_operand.vmem [shape: f32[2,64,64], index: 5, kind: input, shape index: {}]
  %s6 = inlined_call_operand.vmem [shape: bf16[16,128], index: 6, kind: input, shape index: {}]
  %s7 = inlined_call_operand.vmem [shape: f32[1,128], index: 7, kind: input, shape index: {}]
  %s8 = inlined_call_operand.vmem [shape: f32[4,64,64], index: 8, kind: input, shape index: {}]
  %s9 = inlined_call_operand.vmem [shape: f32[512,128], index: 9, kind: output, shape index: {}]
  %s10 = sld [smem:[#allocation0]]
  $region69: #{basic_uformer_layer.6} parent=0
    _
  %s12 = ssub.s32 1, %s10
  %s13 = scalar_select 0, %s12, %s10
  loop: start=0, step=1, limit=4
  $region2: #{basic_uformer_layer.6} parent=0 // loop_pre_header
    _
  $region3: #{basic_uformer_layer.6} parent=0 // loop_header
    %s15 = sphi 0, %s19
    %p16 = scmp.ge.s32.totalorder %s15, 4
    %s25 = sphi 0, %s27
    %s28 = sphi 0, %s25
    %s29 = sphi 0, %s28
    %s45 = sphi 0, %s29
    %s49 = sphi 0, %s49
    %s51 = sphi 0, %s49
    %s52 = sphi 0, %s51
    %s66 = sphi 0, %s52
    %s70 = sphi 0, %s70
    %s72 = sphi 0, %s70
    %s73 = sphi 0, %s72
    %s87 = sphi 0, %s73
    %s91 = sphi 0, %s91
    %s93 = sphi 0, %s91
    %s94 = sphi 0, %s93
    %s108 = sphi 0, %s94
    %s112 = sphi 0, %s112
    %s114 = sphi 0, %s112
    %s115 = sphi 0, %s114
    %s129 = sphi 0, %s115
    %s133 = sphi 0, %s133
    %s135 = sphi 0, %s133
    %s136 = sphi 0, %s135
    %s150 = sphi 0, %s136
    %s154 = sphi 0, %s154
    %s156 = sphi 0, %s154
    %s157 = sphi 0, %s156
    %s171 = sphi 0, %s157
    %s175 = sphi 0, %s175
    %s177 = sphi 0, %s175
    %s178 = sphi 0, %s177
    %s192 = sphi 0, %s178
    %s196 = sphi 0, %s196
    %s198 = sphi 0, %s196
    %s199 = sphi 0, %s198
    %s213 = sphi 0, %s199
    %s219 = sphi 0, %s221
    %s222 = sphi 0, %s219
    %s223 = sphi 0, %s222
    %s239 = sphi 0, %s223
  $region4: #{basic_uformer_layer.6} parent=0 // loop_header_branch
    %18 = sbr.rel (%p16) target = $region8
  $region5: #{basic_uformer_layer.6} parent=0 // loop_body
    %s20 = ssub.s32 %s15, 1
    %s21 = ssub.s32 %s15, 2
    %s22 = sadd.s32 %s15, 1
    %s23 = ssub.s32 %s15, %s22
    %p24 = scmp.eq.s32.totalorder %s23, 0
    %s26 = sadd.s32 %s25, 1
    %s27 = scalar_select %p24, %s25, %s26
    %p30 = pneg %p24
    %p31 = scmp.eq.s32.totalorder %s15, 1
    %p32 = por %p30, %p31
    %p33 = scmp.ne.s32.totalorder %s25, %s28
    %p34 = scmp.eq.s32.totalorder %s15, 0
    %p35 = por %p33, %p34
    %p36 = scmp.ne.s32.totalorder %s25, %s28
    %p37 = scmp.eq.s32.totalorder %s20, 1
    %p38 = por %p36, %p37
    %p39 = scmp.ne.s32.totalorder %s28, %s29
    %p40 = scmp.eq.s32.totalorder %s20, 0
    %p41 = por %p39, %p40
    %p42 = scmp.ne.s32.totalorder %s28, %s29
    %p43 = scmp.eq.s32.totalorder %s21, 1
    %p44 = por %p42, %p43
    %p46 = scmp.ne.s32.totalorder %s29, %s45
    %p47 = scmp.eq.s32.totalorder %s21, 0
    %p48 = por %p46, %p47
    %s50 = sadd.s32 %s49, 1
    %p53 = scmp.eq.s32.totalorder %s15, 1
    %p54 = scmp.ne.s32.totalorder %s49, %s51
    %p55 = scmp.eq.s32.totalorder %s15, 0
    %p56 = por %p54, %p55
    %p57 = scmp.ne.s32.totalorder %s49, %s51
    %p58 = scmp.eq.s32.totalorder %s20, 1
    %p59 = por %p57, %p58
    %p60 = scmp.ne.s32.totalorder %s51, %s52
    %p61 = scmp.eq.s32.totalorder %s20, 0
    %p62 = por %p60, %p61
    %p63 = scmp.ne.s32.totalorder %s51, %s52
    %p64 = scmp.eq.s32.totalorder %s21, 1
    %p65 = por %p63, %p64
    %p67 = scmp.ne.s32.totalorder %s52, %s66
    %p68 = scmp.eq.s32.totalorder %s21, 0
    %p69 = por %p67, %p68
    %s71 = sadd.s32 %s70, 1
    %p74 = scmp.eq.s32.totalorder %s15, 1
    %p75 = scmp.ne.s32.totalorder %s70, %s72
    %p76 = scmp.eq.s32.totalorder %s15, 0
    %p77 = por %p75, %p76
    %p78 = scmp.ne.s32.totalorder %s70, %s72
    %p79 = scmp.eq.s32.totalorder %s20, 1
    %p80 = por %p78, %p79
    %p81 = scmp.ne.s32.totalorder %s72, %s73
    %p82 = scmp.eq.s32.totalorder %s20, 0
    %p83 = por %p81, %p82
    %p84 = scmp.ne.s32.totalorder %s72, %s73
    %p85 = scmp.eq.s32.totalorder %s21, 1
    %p86 = por %p84, %p85
    %p88 = scmp.ne.s32.totalorder %s73, %s87
    %p89 = scmp.eq.s32.totalorder %s21, 0
    %p90 = por %p88, %p89
    %s92 = sadd.s32 %s91, 1
    %p95 = scmp.eq.s32.totalorder %s15, 1
    %p96 = scmp.ne.s32.totalorder %s91, %s93
    %p97 = scmp.eq.s32.totalorder %s15, 0
    %p98 = por %p96, %p97
    %p99 = scmp.ne.s32.totalorder %s91, %s93
    %p100 = scmp.eq.s32.totalorder %s20, 1
    %p101 = por %p99, %p100
    %p102 = scmp.ne.s32.totalorder %s93, %s94
    %p103 = scmp.eq.s32.totalorder %s20, 0
    %p104 = por %p102, %p103
    %p105 = scmp.ne.s32.totalorder %s93, %s94
    %p106 = scmp.eq.s32.totalorder %s21, 1
    %p107 = por %p105, %p106
    %p109 = scmp.ne.s32.totalorder %s94, %s108
    %p110 = scmp.eq.s32.totalorder %s21, 0
    %p111 = por %p109, %p110
    %s113 = sadd.s32 %s112, 1
    %p116 = scmp.eq.s32.totalorder %s15, 1
    %p117 = scmp.ne.s32.totalorder %s112, %s114
    %p118 = scmp.eq.s32.totalorder %s15, 0
    %p119 = por %p117, %p118
    %p120 = scmp.ne.s32.totalorder %s112, %s114
    %p121 = scmp.eq.s32.totalorder %s20, 1
    %p122 = por %p120, %p121
    %p123 = scmp.ne.s32.totalorder %s114, %s115
    %p124 = scmp.eq.s32.totalorder %s20, 0
    %p125 = por %p123, %p124
    %p126 = scmp.ne.s32.totalorder %s114, %s115
    %p127 = scmp.eq.s32.totalorder %s21, 1
    %p128 = por %p126, %p127
    %p130 = scmp.ne.s32.totalorder %s115, %s129
    %p131 = scmp.eq.s32.totalorder %s21, 0
    %p132 = por %p130, %p131
    %s134 = sadd.s32 %s133, 1
    %p137 = scmp.eq.s32.totalorder %s15, 1
    %p138 = scmp.ne.s32.totalorder %s133, %s135
    %p139 = scmp.eq.s32.totalorder %s15, 0
    %p140 = por %p138, %p139
    %p141 = scmp.ne.s32.totalorder %s133, %s135
    %p142 = scmp.eq.s32.totalorder %s20, 1
    %p143 = por %p141, %p142
    %p144 = scmp.ne.s32.totalorder %s135, %s136
    %p145 = scmp.eq.s32.totalorder %s20, 0
    %p146 = por %p144, %p145
    %p147 = scmp.ne.s32.totalorder %s135, %s136
    %p148 = scmp.eq.s32.totalorder %s21, 1
    %p149 = por %p147, %p148
    %p151 = scmp.ne.s32.totalorder %s136, %s150
    %p152 = scmp.eq.s32.totalorder %s21, 0
    %p153 = por %p151, %p152
    %s155 = sadd.s32 %s154, 1
    %p158 = scmp.eq.s32.totalorder %s15, 1
    %p159 = scmp.ne.s32.totalorder %s154, %s156
    %p160 = scmp.eq.s32.totalorder %s15, 0
    %p161 = por %p159, %p160
    %p162 = scmp.ne.s32.totalorder %s154, %s156
    %p163 = scmp.eq.s32.totalorder %s20, 1
    %p164 = por %p162, %p163
    %p165 = scmp.ne.s32.totalorder %s156, %s157
    %p166 = scmp.eq.s32.totalorder %s20, 0
    %p167 = por %p165, %p166
    %p168 = scmp.ne.s32.totalorder %s156, %s157
    %p169 = scmp.eq.s32.totalorder %s21, 1
    %p170 = por %p168, %p169
    %p172 = scmp.ne.s32.totalorder %s157, %s171
    %p173 = scmp.eq.s32.totalorder %s21, 0
    %p174 = por %p172, %p173
    %s176 = sadd.s32 %s175, 1
    %p179 = scmp.eq.s32.totalorder %s15, 1
    %p180 = scmp.ne.s32.totalorder %s175, %s177
    %p181 = scmp.eq.s32.totalorder %s15, 0
    %p182 = por %p180, %p181
    %p183 = scmp.ne.s32.totalorder %s175, %s177
    %p184 = scmp.eq.s32.totalorder %s20, 1
    %p185 = por %p183, %p184
    %p186 = scmp.ne.s32.totalorder %s177, %s178
    %p187 = scmp.eq.s32.totalorder %s20, 0
    %p188 = por %p186, %p187
    %p189 = scmp.ne.s32.totalorder %s177, %s178
    %p190 = scmp.eq.s32.totalorder %s21, 1
    %p191 = por %p189, %p190
    %p193 = scmp.ne.s32.totalorder %s178, %s192
    %p194 = scmp.eq.s32.totalorder %s21, 0
    %p195 = por %p193, %p194
    %s197 = sadd.s32 %s196, 1
    %p200 = scmp.eq.s32.totalorder %s15, 1
    %p201 = scmp.ne.s32.totalorder %s196, %s198
    %p202 = scmp.eq.s32.totalorder %s15, 0
    %p203 = por %p201, %p202
    %p204 = scmp.ne.s32.totalorder %s196, %s198
    %p205 = scmp.eq.s32.totalorder %s20, 1
    %p206 = por %p204, %p205
    %p207 = scmp.ne.s32.totalorder %s198, %s199
    %p208 = scmp.eq.s32.totalorder %s20, 0
    %p209 = por %p207, %p208
    %p210 = scmp.ne.s32.totalorder %s198, %s199
    %p211 = scmp.eq.s32.totalorder %s21, 1
    %p212 = por %p210, %p211
    %p214 = scmp.ne.s32.totalorder %s199, %s213
    %p215 = scmp.eq.s32.totalorder %s21, 0
    %p216 = por %p214, %p215
    %s217 = ssub.s32 %s15, %s22
    %p218 = scmp.eq.s32.totalorder %s217, 0
    %s220 = sadd.s32 %s219, 1
    %s221 = scalar_select %p218, %s219, %s220
    %p224 = pneg %p218
    %p225 = scmp.eq.s32.totalorder %s15, 1
    %p226 = por %p224, %p225
    %p227 = scmp.ne.s32.totalorder %s219, %s222
    %p228 = scmp.eq.s32.totalorder %s15, 0
    %p229 = por %p227, %p228
    %p230 = scmp.ne.s32.totalorder %s219, %s222
    %p231 = scmp.eq.s32.totalorder %s20, 1
    %p232 = por %p230, %p231
    %p233 = scmp.ne.s32.totalorder %s222, %s223
    %p234 = scmp.eq.s32.totalorder %s20, 0
    %p235 = por %p233, %p234
    %p236 = scmp.ne.s32.totalorder %s222, %s223
    %p237 = scmp.eq.s32.totalorder %s21, 1
    %p238 = por %p236, %p237
    %p240 = scmp.ne.s32.totalorder %s223, %s239
    %p241 = scmp.eq.s32.totalorder %s21, 0
    %p242 = por %p240, %p241
    %p243 = scmp.le.s32.totalorder 1, %s15
    %p244 = scmp.lt.s32.totalorder %s15, 3
    %p245 = pnand %p243, %p244
    %p246 = pneg %p245
    // Predicated region
    $region9: #{basic_uformer_layer.6} parent=5 // pred_check
      _
    $region10: #{basic_uformer_layer.6} parent=5 // pred_check_branch
      %248 = sbr.rel (%p245) target = $region12
    $region11: #{basic_uformer_layer.6} parent=5 // pred_region
      %s249 = ssub.s32 %s15, 1
      // Predicated region
      $region13: #{basic_uformer_layer.6} parent=11 // pred_check
        %p250 = pneg %p62
      $region14: #{basic_uformer_layer.6} parent=11 // pred_check_branch
        %252 = sbr.rel (%p250) target = $region16
      $region15: #{basic_uformer_layer.6} parent=11 // pred_region
        _
      $region16: #{basic_uformer_layer.6} parent=11 // pred_fallthru
        _
      // Predicated region
      $region17: #{basic_uformer_layer.6} parent=11 // pred_check
        %p253 = pneg %p83
      $region18: #{basic_uformer_layer.6} parent=11 // pred_check_branch
        %255 = sbr.rel (%p253) target = $region20
      $region19: #{basic_uformer_layer.6} parent=11 // pred_region
        _
      $region20: #{basic_uformer_layer.6} parent=11 // pred_fallthru
        _
      // Predicated region
      $region21: #{basic_uformer_layer.6} parent=11 // pred_check
        %p256 = pneg %p104
      $region22: #{basic_uformer_layer.6} parent=11 // pred_check_branch
        %258 = sbr.rel (%p256) target = $region24
      $region23: #{basic_uformer_layer.6} parent=11 // pred_region
        _
      $region24: #{basic_uformer_layer.6} parent=11 // pred_fallthru
        _
      // Predicated region
      $region25: #{basic_uformer_layer.6} parent=11 // pred_check
        %p259 = pneg %p125
      $region26: #{basic_uformer_layer.6} parent=11 // pred_check_branch
        %261 = sbr.rel (%p259) target = $region28
      $region27: #{basic_uformer_layer.6} parent=11 // pred_region
        _
      $region28: #{basic_uformer_layer.6} parent=11 // pred_fallthru
        _
      // Predicated region
      $region29: #{basic_uformer_layer.6} parent=11 // pred_check
        %p262 = pneg %p146
      $region30: #{basic_uformer_layer.6} parent=11 // pred_check_branch
        %264 = sbr.rel (%p262) target = $region32
      $region31: #{basic_uformer_layer.6} parent=11 // pred_region
        _
      $region32: #{basic_uformer_layer.6} parent=11 // pred_fallthru
        _
      // Predicated region
      $region33: #{basic_uformer_layer.6} parent=11 // pred_check
        %p265 = pneg %p167
      $region34: #{basic_uformer_layer.6} parent=11 // pred_check_branch
        %267 = sbr.rel (%p265) target = $region36
      $region35: #{basic_uformer_layer.6} parent=11 // pred_region
        _
      $region36: #{basic_uformer_layer.6} parent=11 // pred_fallthru
        _
      // Predicated region
      $region37: #{basic_uformer_layer.6} parent=11 // pred_check
        %p268 = pneg %p188
      $region38: #{basic_uformer_layer.6} parent=11 // pred_check_branch
        %270 = sbr.rel (%p268) target = $region40
      $region39: #{basic_uformer_layer.6} parent=11 // pred_region
        _
      $region40: #{basic_uformer_layer.6} parent=11 // pred_fallthru
        _
      // Predicated region
      $region41: #{basic_uformer_layer.6} parent=11 // pred_check
        %p271 = pneg %p209
      $region42: #{basic_uformer_layer.6} parent=11 // pred_check_branch
        %273 = sbr.rel (%p271) target = $region44
      $region43: #{basic_uformer_layer.6} parent=11 // pred_region
        _
      $region44: #{basic_uformer_layer.6} parent=11 // pred_fallthru
        _
    $region12: #{basic_uformer_layer.6} parent=5 // pred_fallthru
      _
    %p274 = scmp.lt.s32.totalorder %s15, 2
    // Predicated region
    $region45: #{basic_uformer_layer.6} parent=5 // pred_check
      %p275 = pneg %p274
    $region46: #{basic_uformer_layer.6} parent=5 // pred_check_branch
      %277 = sbr.rel (%p275) target = $region48
    $region47: #{basic_uformer_layer.6} parent=5 // pred_region
      // Predicated region
      $region49: #{basic_uformer_layer.6} parent=47 // pred_check
        %p278 = pneg %p35
      $region50: #{basic_uformer_layer.6} parent=47 // pred_check_branch
        %280 = sbr.rel (%p278) target = $region52
      $region51: #{basic_uformer_layer.6} parent=47 // pred_region
        %s281 = smul.u32 32, %s15
        %p282 = scmp.lt.s32.totalorder %s281, 63
        %s283 = scalar_select %p282, %s281, 63
        %s284 = smul.addr %s283, 8
        %s285 = scalar_lea.vmem %s0, %s284
        %s286 = smul.u32 32, %s15
      $region52: #{basic_uformer_layer.6} parent=47 // pred_fallthru
        _
    $region48: #{basic_uformer_layer.6} parent=5 // pred_fallthru
      _
    %p287 = scmp.le.s32.totalorder 1, %s15
    %p288 = scmp.lt.s32.totalorder %s15, 3
    %p289 = pnand %p287, %p288
    %p290 = pneg %p289
    // Predicated region
    $region53: #{basic_uformer_layer.6} parent=5 // pred_check
      _
    $region54: #{basic_uformer_layer.6} parent=5 // pred_check_branch
      %292 = sbr.rel (%p289) target = $region56
    $region55: #{basic_uformer_layer.6} parent=5 // pred_region
      %s293 = ssub.s32 %s15, 1
      %s294 = smul.u32 32, %s20
      %p295 = scmp.lt.s32.totalorder %s294, 63
      %s296 = scalar_select %p295, %s294, 63
      %s297 = smul.addr %s296, 8
      %s298 = scalar_lea.vmem %s0, %s297
      %p299 = pneg %p41
      %p300 = pneg %p38
      %p301 = pneg %p62
      %p302 = pneg %p59
      %p303 = pneg %p83
      %p304 = pneg %p80
      %p305 = pneg %p104
      %p306 = pneg %p101
      %p307 = pneg %p125
      %p308 = pneg %p122
      %p309 = pneg %p146
      %p310 = pneg %p143
      %p311 = pneg %p167
      %p312 = pneg %p164
      %p313 = pneg %p188
      %p314 = pneg %p185
      %p315 = pneg %p209
      %p316 = pneg %p206
      %p317 = pneg %p235
      %p318 = pneg %p232
      %s319 = smul.u32 32, %s20
      %p320 = scmp.lt.s32.totalorder %s319, 63
      %s321 = scalar_select %p320, %s319, 63
      %s322 = smul.addr %s321, 8
      %s323 = scalar_lea.vmem %s9, %s322
      %s324 = smul.u32 32, %s20
      %p325 = scmp.lt.s32.totalorder %s324, 63
      %s326 = scalar_select %p325, %s324, 63
      %s327 = smul.addr %s326, 8
      %s328 = scalar_lea.vmem %s0, %s327
      %s329 = smul.u32 32, %s20
      %s330 = smul.u32 32, %s20
      %p331 = scmp.lt.s32.totalorder %s330, 63
      %s332 = scalar_select %p331, %s330, 63
      %s333 = smul.addr %s332, 8
      %s334 = scalar_lea.vmem %s9, %s333
      %s335 = smul.u32 32, %s20
      %v337 = vld [vmem:[%s328] sm:$0xff]
      %v338 = vld [vmem:[%s328 + $0x8] sm:$0xff]
      %v339 = vld [vmem:[%s328 + $0x10] sm:$0xff]
      %v340 = vld [vmem:[%s328 + $0x18] sm:$0xff]
      %v341 = vld [vmem:[%s328 + $0x20] sm:$0xff]
      %v342 = vld [vmem:[%s328 + $0x28] sm:$0xff]
      %v343 = vld [vmem:[%s328 + $0x30] sm:$0xff]
      %v344 = vld [vmem:[%s328 + $0x38] sm:$0xff]
      %v345 = vld [vmem:[%s328 + $0x40] sm:$0xff]
      %v346 = vld [vmem:[%s328 + $0x48] sm:$0xff]
      %v347 = vld [vmem:[%s328 + $0x50] sm:$0xff]
      %v348 = vld [vmem:[%s328 + $0x58] sm:$0xff]
      %v349 = vld [vmem:[%s328 + $0x60] sm:$0xff]
      %v350 = vld [vmem:[%s328 + $0x68] sm:$0xff]
      %v351 = vld [vmem:[%s328 + $0x70] sm:$0xff]
      %v352 = vld [vmem:[%s328 + $0x78] sm:$0xff]
      %v353 = vld [vmem:[%s328 + $0x80] sm:$0xff]
      %v354 = vld [vmem:[%s328 + $0x88] sm:$0xff]
      %v355 = vld [vmem:[%s328 + $0x90] sm:$0xff]
      %v356 = vld [vmem:[%s328 + $0x98] sm:$0xff]
      %v357 = vld [vmem:[%s328 + $0xa0] sm:$0xff]
      %v358 = vld [vmem:[%s328 + $0xa8] sm:$0xff]
      %v359 = vld [vmem:[%s328 + $0xb0] sm:$0xff]
      %v360 = vld [vmem:[%s328 + $0xb8] sm:$0xff]
      %v361 = vld [vmem:[%s328 + $0xc0] sm:$0xff]
      %v362 = vld [vmem:[%s328 + $0xc8] sm:$0xff]
      %v363 = vld [vmem:[%s328 + $0xd0] sm:$0xff]
      %v364 = vld [vmem:[%s328 + $0xd8] sm:$0xff]
      %v365 = vld [vmem:[%s328 + $0xe0] sm:$0xff]
      %v366 = vld [vmem:[%s328 + $0xe8] sm:$0xff]
      %v367 = vld [vmem:[%s328 + $0xf0] sm:$0xff]
      %v368 = vld [vmem:[%s328 + $0xf8] sm:$0xff]
      %v369 = vld [vmem:[%s1] sm:$0x1]
      %v370 = vld [vmem:[%s2] sm:$0x1]
      %371 = vadd.xlane.f32.xlu0 %v337
      %v372 = vpop.xlane.xlu0 %371
      %373 = vadd.xlane.f32.xlu0 %v338
      %v374 = vpop.xlane.xlu0 %373
      %375 = vadd.xlane.f32.xlu0 %v339
      %v376 = vpop.xlane.xlu0 %375
      %377 = vadd.xlane.f32.xlu0 %v340
      %v378 = vpop.xlane.xlu0 %377
      %379 = vadd.xlane.f32.xlu0 %v341
      %v380 = vpop.xlane.xlu0 %379
      %381 = vadd.xlane.f32.xlu0 %v342
      %v382 = vpop.xlane.xlu0 %381
      %383 = vadd.xlane.f32.xlu0 %v343
      %v384 = vpop.xlane.xlu0 %383
      %385 = vadd.xlane.f32.xlu0 %v344
      %v386 = vpop.xlane.xlu0 %385
      %387 = vadd.xlane.f32.xlu0 %v345
      %v388 = vpop.xlane.xlu0 %387
      %389 = vadd.xlane.f32.xlu0 %v346
      %v390 = vpop.xlane.xlu0 %389
      %391 = vadd.xlane.f32.xlu0 %v347
      %v392 = vpop.xlane.xlu0 %391
      %393 = vadd.xlane.f32.xlu0 %v348
      %v394 = vpop.xlane.xlu0 %393
      %395 = vadd.xlane.f32.xlu0 %v349
      %v396 = vpop.xlane.xlu0 %395
      %397 = vadd.xlane.f32.xlu0 %v350
      %v398 = vpop.xlane.xlu0 %397
      %399 = vadd.xlane.f32.xlu0 %v351
      %v400 = vpop.xlane.xlu0 %399
      %401 = vadd.xlane.f32.xlu0 %v352
      %v402 = vpop.xlane.xlu0 %401
      %403 = vadd.xlane.f32.xlu0 %v353
      %v404 = vpop.xlane.xlu0 %403
      %405 = vadd.xlane.f32.xlu0 %v354
      %v406 = vpop.xlane.xlu0 %405
      %407 = vadd.xlane.f32.xlu0 %v355
      %v408 = vpop.xlane.xlu0 %407
      %409 = vadd.xlane.f32.xlu0 %v356
      %v410 = vpop.xlane.xlu0 %409
      %411 = vadd.xlane.f32.xlu0 %v357
      %v412 = vpop.xlane.xlu0 %411
      %413 = vadd.xlane.f32.xlu0 %v358
      %v414 = vpop.xlane.xlu0 %413
      %415 = vadd.xlane.f32.xlu0 %v359
      %v416 = vpop.xlane.xlu0 %415
      %417 = vadd.xlane.f32.xlu0 %v360
      %v418 = vpop.xlane.xlu0 %417
      %419 = vadd.xlane.f32.xlu0 %v361
      %v420 = vpop.xlane.xlu0 %419
      %421 = vadd.xlane.f32.xlu0 %v362
      %v422 = vpop.xlane.xlu0 %421
      %423 = vadd.xlane.f32.xlu0 %v363
      %v424 = vpop.xlane.xlu0 %423
      %425 = vadd.xlane.f32.xlu0 %v364
      %v426 = vpop.xlane.xlu0 %425
      %427 = vadd.xlane.f32.xlu0 %v365
      %v428 = vpop.xlane.xlu0 %427
      %429 = vadd.xlane.f32.xlu0 %v366
      %v430 = vpop.xlane.xlu0 %429
      %431 = vadd.xlane.f32.xlu0 %v367
      %v432 = vpop.xlane.xlu0 %431
      %433 = vadd.xlane.f32.xlu0 %v368
      %v434 = vpop.xlane.xlu0 %433
      %v435 = vmul.f32 %v372, 0.0625
      %v436 = vmul.f32 %v374, 0.0625
      %v437 = vmul.f32 %v376, 0.0625
      %v438 = vmul.f32 %v378, 0.0625
      %v439 = vmul.f32 %v380, 0.0625
      %v440 = vmul.f32 %v382, 0.0625
      %v441 = vmul.f32 %v384, 0.0625
      %v442 = vmul.f32 %v386, 0.0625
      %v443 = vmul.f32 %v388, 0.0625
      %v444 = vmul.f32 %v390, 0.0625
      %v445 = vmul.f32 %v392, 0.0625
      %v446 = vmul.f32 %v394, 0.0625
      %v447 = vmul.f32 %v396, 0.0625
      %v448 = vmul.f32 %v398, 0.0625
      %v449 = vmul.f32 %v400, 0.0625
      %v450 = vmul.f32 %v402, 0.0625
      %v451 = vmul.f32 %v404, 0.0625
      %v452 = vmul.f32 %v406, 0.0625
      %v453 = vmul.f32 %v408, 0.0625
      %v454 = vmul.f32 %v410, 0.0625
      %v455 = vmul.f32 %v412, 0.0625
      %v456 = vmul.f32 %v414, 0.0625
      %v457 = vmul.f32 %v416, 0.0625
      %v458 = vmul.f32 %v418, 0.0625
      %v459 = vmul.f32 %v420, 0.0625
      %v460 = vmul.f32 %v422, 0.0625
      %v461 = vmul.f32 %v424, 0.0625
      %v462 = vmul.f32 %v426, 0.0625
      %v463 = vmul.f32 %v428, 0.0625
      %v464 = vmul.f32 %v430, 0.0625
      %v465 = vmul.f32 %v432, 0.0625
      %v466 = vmul.f32 %v434, 0.0625
      %v467 = vsub.f32 %v337, %v435
      %v468 = vsub.f32 %v338, %v436
      %v469 = vsub.f32 %v339, %v437
      %v470 = vsub.f32 %v340, %v438
      %v471 = vsub.f32 %v341, %v439
      %v472 = vsub.f32 %v342, %v440
      %v473 = vsub.f32 %v343, %v441
      %v474 = vsub.f32 %v344, %v442
      %v475 = vsub.f32 %v345, %v443
      %v476 = vsub.f32 %v346, %v444
      %v477 = vsub.f32 %v347, %v445
      %v478 = vsub.f32 %v348, %v446
      %v479 = vsub.f32 %v349, %v447
      %v480 = vsub.f32 %v350, %v448
      %v481 = vsub.f32 %v351, %v449
      %v482 = vsub.f32 %v352, %v450
      %v483 = vsub.f32 %v353, %v451
      %v484 = vsub.f32 %v354, %v452
      %v485 = vsub.f32 %v355, %v453
      %v486 = vsub.f32 %v356, %v454
      %v487 = vsub.f32 %v357, %v455
      %v488 = vsub.f32 %v358, %v456
      %v489 = vsub.f32 %v359, %v457
      %v490 = vsub.f32 %v360, %v458
      %v491 = vsub.f32 %v361, %v459
      %v492 = vsub.f32 %v362, %v460
      %v493 = vsub.f32 %v363, %v461
      %v494 = vsub.f32 %v364, %v462
      %v495 = vsub.f32 %v365, %v463
      %v496 = vsub.f32 %v366, %v464
      %v497 = vsub.f32 %v367, %v465
      %v498 = vsub.f32 %v368, %v466
      %v499 = vlaneseq
      %v500 = vand.u32 %v499, 127
      %vm501 = vcmp.lt.s32.totalorder %v500, 16
      %v502 = vsel %vm501, 1, 0
      %vm503 = vcmp.eq.s32.totalorder %v502, 1
      %v504 = vsel %vm503, %v467, 0.0
      %v505 = vsel %vm503, %v468, 0.0
      %v506 = vsel %vm503, %v469, 0.0
      %v507 = vsel %vm503, %v470, 0.0
      %v508 = vsel %vm503, %v471, 0.0
      %v509 = vsel %vm503, %v472, 0.0
      %v510 = vsel %vm503, %v473, 0.0
      %v511 = vsel %vm503, %v474, 0.0
      %v512 = vsel %vm503, %v475, 0.0
      %v513 = vsel %vm503, %v476, 0.0
      %v514 = vsel %vm503, %v477, 0.0
      %v515 = vsel %vm503, %v478, 0.0
      %v516 = vsel %vm503, %v479, 0.0
      %v517 = vsel %vm503, %v480, 0.0
      %v518 = vsel %vm503, %v481, 0.0
      %v519 = vsel %vm503, %v482, 0.0
      %v520 = vsel %vm503, %v483, 0.0
      %v521 = vsel %vm503, %v484, 0.0
      %v522 = vsel %vm503, %v485, 0.0
      %v523 = vsel %vm503, %v486, 0.0
      %v524 = vsel %vm503, %v487, 0.0
      %v525 = vsel %vm503, %v488, 0.0
      %v526 = vsel %vm503, %v489, 0.0
      %v527 = vsel %vm503, %v490, 0.0
      %v528 = vsel %vm503, %v491, 0.0
      %v529 = vsel %vm503, %v492, 0.0
      %v530 = vsel %vm503, %v493, 0.0
      %v531 = vsel %vm503, %v494, 0.0
      %v532 = vsel %vm503, %v495, 0.0
      %v533 = vsel %vm503, %v496, 0.0
      %v534 = vsel %vm503, %v497, 0.0
      %v535 = vsel %vm503, %v498, 0.0
      %v536 = vmul.f32 %v504, %v504
      %v537 = vmul.f32 %v505, %v505
      %v538 = vmul.f32 %v506, %v506
      %v539 = vmul.f32 %v507, %v507
      %v540 = vmul.f32 %v508, %v508
      %v541 = vmul.f32 %v509, %v509
      %v542 = vmul.f32 %v510, %v510
      %v543 = vmul.f32 %v511, %v511
      %v544 = vmul.f32 %v512, %v512
      %v545 = vmul.f32 %v513, %v513
      %v546 = vmul.f32 %v514, %v514
      %v547 = vmul.f32 %v515, %v515
      %v548 = vmul.f32 %v516, %v516
      %v549 = vmul.f32 %v517, %v517
      %v550 = vmul.f32 %v518, %v518
      %v551 = vmul.f32 %v519, %v519
      %v552 = vmul.f32 %v520, %v520
      %v553 = vmul.f32 %v521, %v521
      %v554 = vmul.f32 %v522, %v522
      %v555 = vmul.f32 %v523, %v523
      %v556 = vmul.f32 %v524, %v524
      %v557 = vmul.f32 %v525, %v525
      %v558 = vmul.f32 %v526, %v526
      %v559 = vmul.f32 %v527, %v527
      %v560 = vmul.f32 %v528, %v528
      %v561 = vmul.f32 %v529, %v529
      %v562 = vmul.f32 %v530, %v530
      %v563 = vmul.f32 %v531, %v531
      %v564 = vmul.f32 %v532, %v532
      %v565 = vmul.f32 %v533, %v533
      %v566 = vmul.f32 %v534, %v534
      %v567 = vmul.f32 %v535, %v535
      %568 = vadd.xlane.f32.xlu0 %v536
      %v569 = vpop.xlane.xlu0 %568
      %570 = vadd.xlane.f32.xlu0 %v537
      %v571 = vpop.xlane.xlu0 %570
      %572 = vadd.xlane.f32.xlu0 %v538
      %v573 = vpop.xlane.xlu0 %572
      %574 = vadd.xlane.f32.xlu0 %v539
      %v575 = vpop.xlane.xlu0 %574
      %576 = vadd.xlane.f32.xlu0 %v540
      %v577 = vpop.xlane.xlu0 %576
      %578 = vadd.xlane.f32.xlu0 %v541
      %v579 = vpop.xlane.xlu0 %578
      %580 = vadd.xlane.f32.xlu0 %v542
      %v581 = vpop.xlane.xlu0 %580
      %582 = vadd.xlane.f32.xlu0 %v543
      %v583 = vpop.xlane.xlu0 %582
      %584 = vadd.xlane.f32.xlu0 %v544
      %v585 = vpop.xlane.xlu0 %584
      %586 = vadd.xlane.f32.xlu0 %v545
      %v587 = vpop.xlane.xlu0 %586
      %588 = vadd.xlane.f32.xlu0 %v546
      %v589 = vpop.xlane.xlu0 %588
      %590 = vadd.xlane.f32.xlu0 %v547
      %v591 = vpop.xlane.xlu0 %590
      %592 = vadd.xlane.f32.xlu0 %v548
      %v593 = vpop.xlane.xlu0 %592
      %594 = vadd.xlane.f32.xlu0 %v549
      %v595 = vpop.xlane.xlu0 %594
      %596 = vadd.xlane.f32.xlu0 %v550
      %v597 = vpop.xlane.xlu0 %596
      %598 = vadd.xlane.f32.xlu0 %v551
      %v599 = vpop.xlane.xlu0 %598
      %600 = vadd.xlane.f32.xlu0 %v552
      %v601 = vpop.xlane.xlu0 %600
      %602 = vadd.xlane.f32.xlu0 %v553
      %v603 = vpop.xlane.xlu0 %602
      %604 = vadd.xlane.f32.xlu0 %v554
      %v605 = vpop.xlane.xlu0 %604
      %606 = vadd.xlane.f32.xlu0 %v555
      %v607 = vpop.xlane.xlu0 %606
      %608 = vadd.xlane.f32.xlu0 %v556
      %v609 = vpop.xlane.xlu0 %608
      %610 = vadd.xlane.f32.xlu0 %v557
      %v611 = vpop.xlane.xlu0 %610
      %612 = vadd.xlane.f32.xlu0 %v558
      %v613 = vpop.xlane.xlu0 %612
      %614 = vadd.xlane.f32.xlu0 %v559
      %v615 = vpop.xlane.xlu0 %614
      %616 = vadd.xlane.f32.xlu0 %v560
      %v617 = vpop.xlane.xlu0 %616
      %618 = vadd.xlane.f32.xlu0 %v561
      %v619 = vpop.xlane.xlu0 %618
      %620 = vadd.xlane.f32.xlu0 %v562
      %v621 = vpop.xlane.xlu0 %620
      %622 = vadd.xlane.f32.xlu0 %v563
      %v623 = vpop.xlane.xlu0 %622
      %624 = vadd.xlane.f32.xlu0 %v564
      %v625 = vpop.xlane.xlu0 %624
      %626 = vadd.xlane.f32.xlu0 %v565
      %v627 = vpop.xlane.xlu0 %626
      %628 = vadd.xlane.f32.xlu0 %v566
      %v629 = vpop.xlane.xlu0 %628
      %630 = vadd.xlane.f32.xlu0 %v567
      %v631 = vpop.xlane.xlu0 %630
      %v632 = vmul.f32 %v569, 0.0625
      %v633 = vmul.f32 %v571, 0.0625
      %v634 = vmul.f32 %v573, 0.0625
      %v635 = vmul.f32 %v575, 0.0625
      %v636 = vmul.f32 %v577, 0.0625
      %v637 = vmul.f32 %v579, 0.0625
      %v638 = vmul.f32 %v581, 0.0625
      %v639 = vmul.f32 %v583, 0.0625
      %v640 = vmul.f32 %v585, 0.0625
      %v641 = vmul.f32 %v587, 0.0625
      %v642 = vmul.f32 %v589, 0.0625
      %v643 = vmul.f32 %v591, 0.0625
      %v644 = vmul.f32 %v593, 0.0625
      %v645 = vmul.f32 %v595, 0.0625
      %v646 = vmul.f32 %v597, 0.0625
      %v647 = vmul.f32 %v599, 0.0625
      %v648 = vmul.f32 %v601, 0.0625
      %v649 = vmul.f32 %v603, 0.0625
      %v650 = vmul.f32 %v605, 0.0625
      %v651 = vmul.f32 %v607, 0.0625
      %v652 = vmul.f32 %v609, 0.0625
      %v653 = vmul.f32 %v611, 0.0625
      %v654 = vmul.f32 %v613, 0.0625
      %v655 = vmul.f32 %v615, 0.0625
      %v656 = vmul.f32 %v617, 0.0625
      %v657 = vmul.f32 %v619, 0.0625
      %v658 = vmul.f32 %v621, 0.0625
      %v659 = vmul.f32 %v623, 0.0625
      %v660 = vmul.f32 %v625, 0.0625
      %v661 = vmul.f32 %v627, 0.0625
      %v662 = vmul.f32 %v629, 0.0625
      %v663 = vmul.f32 %v631, 0.0625
      %v664 = vadd.f32 %v632, 1e-05
      %v665 = vadd.f32 %v633, 1e-05
      %v666 = vadd.f32 %v634, 1e-05
      %v667 = vadd.f32 %v635, 1e-05
      %v668 = vadd.f32 %v636, 1e-05
      %v669 = vadd.f32 %v637, 1e-05
      %v670 = vadd.f32 %v638, 1e-05
      %v671 = vadd.f32 %v639, 1e-05
      %v672 = vadd.f32 %v640, 1e-05
      %v673 = vadd.f32 %v641, 1e-05
      %v674 = vadd.f32 %v642, 1e-05
      %v675 = vadd.f32 %v643, 1e-05
      %v676 = vadd.f32 %v644, 1e-05
      %v677 = vadd.f32 %v645, 1e-05
      %v678 = vadd.f32 %v646, 1e-05
      %v679 = vadd.f32 %v647, 1e-05
      %v680 = vadd.f32 %v648, 1e-05
      %v681 = vadd.f32 %v649, 1e-05
      %v682 = vadd.f32 %v650, 1e-05
      %v683 = vadd.f32 %v651, 1e-05
      %v684 = vadd.f32 %v652, 1e-05
      %v685 = vadd.f32 %v653, 1e-05
      %v686 = vadd.f32 %v654, 1e-05
      %v687 = vadd.f32 %v655, 1e-05
      %v688 = vadd.f32 %v656, 1e-05
      %v689 = vadd.f32 %v657, 1e-05
      %v690 = vadd.f32 %v658, 1e-05
      %v691 = vadd.f32 %v659, 1e-05
      %v692 = vadd.f32 %v660, 1e-05
      %v693 = vadd.f32 %v661, 1e-05
      %v694 = vadd.f32 %v662, 1e-05
      %v695 = vadd.f32 %v663, 1e-05
      %v696 = vrsqrt.pop %v664
      %v697 = vrsqrt.pop %v665
      %v698 = vrsqrt.pop %v666
      %v699 = vrsqrt.pop %v667
      %v700 = vrsqrt.pop %v668
      %v701 = vrsqrt.pop %v669
      %v702 = vrsqrt.pop %v670
      %v703 = vrsqrt.pop %v671
      %v704 = vrsqrt.pop %v672
      %v705 = vrsqrt.pop %v673
      %v706 = vrsqrt.pop %v674
      %v707 = vrsqrt.pop %v675
      %v708 = vrsqrt.pop %v676
      %v709 = vrsqrt.pop %v677
      %v710 = vrsqrt.pop %v678
      %v711 = vrsqrt.pop %v679
      %v712 = vrsqrt.pop %v680
      %v713 = vrsqrt.pop %v681
      %v714 = vrsqrt.pop %v682
      %v715 = vrsqrt.pop %v683
      %v716 = vrsqrt.pop %v684
      %v717 = vrsqrt.pop %v685
      %v718 = vrsqrt.pop %v686
      %v719 = vrsqrt.pop %v687
      %v720 = vrsqrt.pop %v688
      %v721 = vrsqrt.pop %v689
      %v722 = vrsqrt.pop %v690
      %v723 = vrsqrt.pop %v691
      %v724 = vrsqrt.pop %v692
      %v725 = vrsqrt.pop %v693
      %v726 = vrsqrt.pop %v694
      %v727 = vrsqrt.pop %v695
      %v728 = vmul.f32 %v467, %v696
      %v729 = vmul.f32 %v468, %v697
      %v730 = vmul.f32 %v469, %v698
      %v731 = vmul.f32 %v470, %v699
      %v732 = vmul.f32 %v471, %v700
      %v733 = vmul.f32 %v472, %v701
      %v734 = vmul.f32 %v473, %v702
      %v735 = vmul.f32 %v474, %v703
      %v736 = vmul.f32 %v475, %v704
      %v737 = vmul.f32 %v476, %v705
      %v738 = vmul.f32 %v477, %v706
      %v739 = vmul.f32 %v478, %v707
      %v740 = vmul.f32 %v479, %v708
      %v741 = vmul.f32 %v480, %v709
      %v742 = vmul.f32 %v481, %v710
      %v743 = vmul.f32 %v482, %v711
      %v744 = vmul.f32 %v483, %v712
      %v745 = vmul.f32 %v484, %v713
      %v746 = vmul.f32 %v485, %v714
      %v747 = vmul.f32 %v486, %v715
      %v748 = vmul.f32 %v487, %v716
      %v749 = vmul.f32 %v488, %v717
      %v750 = vmul.f32 %v489, %v718
      %v751 = vmul.f32 %v490, %v719
      %v752 = vmul.f32 %v491, %v720
      %v753 = vmul.f32 %v492, %v721
      %v754 = vmul.f32 %v493, %v722
      %v755 = vmul.f32 %v494, %v723
      %v756 = vmul.f32 %v495, %v724
      %v757 = vmul.f32 %v496, %v725
      %v758 = vmul.f32 %v497, %v726
      %v759 = vmul.f32 %v498, %v727
      %v761 = vlaneseq
      %v762 = vshrl.u32 %v761, 7
      %v763 = vsub.s32 0, %v762
      %v764 = vrot.slane %v369, %v763
      %v766 = vmul.f32 %v728, %v764
      %v767 = vmul.f32 %v729, %v764
      %v768 = vmul.f32 %v730, %v764
      %v769 = vmul.f32 %v731, %v764
      %v770 = vmul.f32 %v732, %v764
      %v771 = vmul.f32 %v733, %v764
      %v772 = vmul.f32 %v734, %v764
      %v773 = vmul.f32 %v735, %v764
      %v774 = vmul.f32 %v736, %v764
      %v775 = vmul.f32 %v737, %v764
      %v776 = vmul.f32 %v738, %v764
      %v777 = vmul.f32 %v739, %v764
      %v778 = vmul.f32 %v740, %v764
      %v779 = vmul.f32 %v741, %v764
      %v780 = vmul.f32 %v742, %v764
      %v781 = vmul.f32 %v743, %v764
      %v782 = vmul.f32 %v744, %v764
      %v783 = vmul.f32 %v745, %v764
      %v784 = vmul.f32 %v746, %v764
      %v785 = vmul.f32 %v747, %v764
      %v786 = vmul.f32 %v748, %v764
      %v787 = vmul.f32 %v749, %v764
      %v788 = vmul.f32 %v750, %v764
      %v789 = vmul.f32 %v751, %v764
      %v790 = vmul.f32 %v752, %v764
      %v791 = vmul.f32 %v753, %v764
      %v792 = vmul.f32 %v754, %v764
      %v793 = vmul.f32 %v755, %v764
      %v794 = vmul.f32 %v756, %v764
      %v795 = vmul.f32 %v757, %v764
      %v796 = vmul.f32 %v758, %v764
      %v797 = vmul.f32 %v759, %v764
      %v799 = vlaneseq
      %v800 = vshrl.u32 %v799, 7
      %v801 = vsub.s32 0, %v800
      %v802 = vrot.slane %v370, %v801
      %v804 = vadd.f32 %v766, %v802
      %v805 = vadd.f32 %v767, %v802
      %v806 = vadd.f32 %v768, %v802
      %v807 = vadd.f32 %v769, %v802
      %v808 = vadd.f32 %v770, %v802
      %v809 = vadd.f32 %v771, %v802
      %v810 = vadd.f32 %v772, %v802
      %v811 = vadd.f32 %v773, %v802
      %v812 = vadd.f32 %v774, %v802
      %v813 = vadd.f32 %v775, %v802
      %v814 = vadd.f32 %v776, %v802
      %v815 = vadd.f32 %v777, %v802
      %v816 = vadd.f32 %v778, %v802
      %v817 = vadd.f32 %v779, %v802
      %v818 = vadd.f32 %v780, %v802
      %v819 = vadd.f32 %v781, %v802
      %v820 = vadd.f32 %v782, %v802
      %v821 = vadd.f32 %v783, %v802
      %v822 = vadd.f32 %v784, %v802
      %v823 = vadd.f32 %v785, %v802
      %v824 = vadd.f32 %v786, %v802
      %v825 = vadd.f32 %v787, %v802
      %v826 = vadd.f32 %v788, %v802
      %v827 = vadd.f32 %v789, %v802
      %v828 = vadd.f32 %v790, %v802
      %v829 = vadd.f32 %v791, %v802
      %v830 = vadd.f32 %v792, %v802
      %v831 = vadd.f32 %v793, %v802
      %v832 = vadd.f32 %v794, %v802
      %v833 = vadd.f32 %v795, %v802
      %v834 = vadd.f32 %v796, %v802
      %v835 = vadd.f32 %v797, %v802
      %v836 = vpack.c.bf16 %v805, %v804
      %v837 = vpack.c.bf16 %v807, %v806
      %v838 = vpack.c.bf16 %v809, %v808
      %v839 = vpack.c.bf16 %v811, %v810
      %v840 = vpack.c.bf16 %v813, %v812
      %v841 = vpack.c.bf16 %v815, %v814
      %v842 = vpack.c.bf16 %v817, %v816
      %v843 = vpack.c.bf16 %v819, %v818
      %v844 = vpack.c.bf16 %v821, %v820
      %v845 = vpack.c.bf16 %v823, %v822
      %v846 = vpack.c.bf16 %v825, %v824
      %v847 = vpack.c.bf16 %v827, %v826
      %v848 = vpack.c.bf16 %v829, %v828
      %v849 = vpack.c.bf16 %v831, %v830
      %v850 = vpack.c.bf16 %v833, %v832
      %v851 = vpack.c.bf16 %v835, %v834
      %v852 = vld [vmem:[%s3] sm:$0xf]
      %v853 = vld [vmem:[%s3 + $0x4] sm:$0xf]
      %v854 = vld [vmem:[%s3 + $0x8] sm:$0xf]
      %v855 = vld [vmem:[%s3 + $0xc] sm:$0xf]
      %v856 = vld [vmem:[%s3 + $0x10] sm:$0xf]
      %v857 = vld [vmem:[%s3 + $0x14] sm:$0xf]
      %v858 = vld [vmem:[%s3 + $0x18] sm:$0xf]
      %v859 = vld [vmem:[%s3 + $0x1c] sm:$0xf]
      %v860 = vld [vmem:[%s3 + $0x20] sm:$0xf]
      %v861 = vld [vmem:[%s3 + $0x24] sm:$0xf]
      %v862 = vld [vmem:[%s3 + $0x28] sm:$0xf]
      %v863 = vld [vmem:[%s3 + $0x2c] sm:$0xf]
      %v864 = vld [vmem:[%s3 + $0x30] sm:$0xf]
      %v865 = vld [vmem:[%s3 + $0x34] sm:$0xf]
      %v866 = vld [vmem:[%s3 + $0x38] sm:$0xf]
      %v867 = vld [vmem:[%s3 + $0x3c] sm:$0xf]
      %v868 = vld [vmem:[%s4] sm:$0x1]
      %v870 = vlaneseq
      %v871 = vshrl.u32 %v870, 7
      %v872 = vsub.s32 0, %v871
      %v873 = vrot.slane %v868, %v872
      %v891 = vunpack.c.l.b16 %v852
      %v892 = vunpack.c.l.b16 %v853
      %v893 = vunpack.c.l.b16 %v854
      %v894 = vunpack.c.l.b16 %v855
      %v895 = vunpack.c.l.b16 %v856
      %v896 = vunpack.c.l.b16 %v857
      %v897 = vunpack.c.l.b16 %v858
      %v898 = vunpack.c.l.b16 %v859
      %v899 = vunpack.c.l.b16 %v860
      %v900 = vunpack.c.l.b16 %v861
      %v901 = vunpack.c.l.b16 %v862
      %v902 = vunpack.c.l.b16 %v863
      %v903 = vunpack.c.l.b16 %v864
      %v904 = vunpack.c.l.b16 %v865
      %v905 = vunpack.c.l.b16 %v866
      %v906 = vunpack.c.l.b16 %v867
      %v907 = vpack.c.b16 %v892, %v891
      %v908 = vpack.c.b16 %v894, %v893
      %v909 = vpack.c.b16 %v896, %v895
      %v910 = vpack.c.b16 %v898, %v897
      %v911 = vpack.c.b16 %v900, %v899
      %v912 = vpack.c.b16 %v902, %v901
      %v913 = vpack.c.b16 %v904, %v903
      %v914 = vpack.c.b16 %v906, %v905
      %923 = vmatprep.subr.bf16.mxu0 0
      %924 = vmatpush1.bf16.msra.mxu0 %v914
      %925 = vmatprep.subr.bf16.mxu0 0
      %926 = vmatpush1.bf16.msra.mxu0 %v913
      %927 = vmatprep.subr.bf16.mxu0 0
      %928 = vmatpush1.bf16.msra.mxu0 %v912
      %929 = vmatprep.subr.bf16.mxu0 0
      %930 = vmatpush1.bf16.msra.mxu0 %v911
      %931 = vmatprep.subr.bf16.mxu0 0
      %932 = vmatpush1.bf16.msra.mxu0 %v910
      %933 = vmatprep.subr.bf16.mxu0 0
      %934 = vmatpush1.bf16.msra.mxu0 %v909
      %935 = vmatprep.subr.bf16.mxu0 0
      %936 = vmatpush1.bf16.msra.mxu0 %v908
      %937 = vmatprep.subr.bf16.mxu0 0
      %938 = vmatpush1.bf16.msra.mxu0 %v907
      %939 = vmatprep.subr.bf16.mxu0 0
      %940 = vmatpush2.bf16.msra.mxu0 0
      %941 = vmatprep.subr.bf16.mxu0 0
      %942 = vmatpush2.bf16.msra.mxu0 0
      %943 = vmatprep.subr.bf16.mxu0 0
      %944 = vmatpush2.bf16.msra.mxu0 0
      %945 = vmatprep.subr.bf16.mxu0 0
      %946 = vmatpush2.bf16.msra.mxu0 0
      %947 = vmatprep.subr.bf16.mxu0 0
      %948 = vmatpush2.bf16.msra.mxu0 0
      %949 = vmatprep.subr.bf16.mxu0 0
      %950 = vmatpush2.bf16.msra.mxu0 0
      %951 = vmatprep.subr.bf16.mxu0 0
      %952 = vmatpush2.bf16.msra.mxu0 0
      %953 = vmatprep.subr.bf16.mxu0 0
      %954 = vmatpush2.bf16.msra.mxu0 0
      %955 = vmatprep.mubr.bf16.mxu0 0
      %956 = vmatmul.mubr.bf16.gmra.mxu0 %v836
      %v957 = vpop.f32.mrf.mxu0
      %v958 = vadd.f32 %v873, %v957
      %v959 = vpop.f32.mrf.mxu0
      %v960 = vpop.f32.mrf.mxu0
      %v961 = vadd.f32 %v873, %v960
      %v962 = vpop.f32.mrf.mxu0
      %963 = vmatprep.mubr.bf16.mxu0 0
      %964 = vmatmul.mubr.bf16.gmra.mxu0 %v837
      %v965 = vpop.f32.mrf.mxu0
      %v966 = vadd.f32 %v873, %v965
      %v967 = vpop.f32.mrf.mxu0
      %v968 = vpop.f32.mrf.mxu0
      %v969 = vadd.f32 %v873, %v968
      %v970 = vpop.f32.mrf.mxu0
      %971 = vmatprep.mubr.bf16.mxu0 0
      %972 = vmatmul.mubr.bf16.gmra.mxu0 %v838
      %v973 = vpop.f32.mrf.mxu0
      %v974 = vadd.f32 %v873, %v973
      %v975 = vpop.f32.mrf.mxu0
      %v976 = vpop.f32.mrf.mxu0
      %v977 = vadd.f32 %v873, %v976
      %v978 = vpop.f32.mrf.mxu0
      %979 = vmatprep.mubr.bf16.mxu0 0
      %980 = vmatmul.mubr.bf16.gmra.mxu0 %v839
      %v981 = vpop.f32.mrf.mxu0
      %v982 = vadd.f32 %v873, %v981
      %v983 = vpop.f32.mrf.mxu0
      %v984 = vpop.f32.mrf.mxu0
      %v985 = vadd.f32 %v873, %v984
      %v986 = vpop.f32.mrf.mxu0
      %987 = vmatprep.mubr.bf16.mxu0 0
      %988 = vmatmul.mubr.bf16.gmra.mxu0 %v840
      %v989 = vpop.f32.mrf.mxu0
      %v990 = vadd.f32 %v873, %v989
      %v991 = vpop.f32.mrf.mxu0
      %v992 = vpop.f32.mrf.mxu0
      %v993 = vadd.f32 %v873, %v992
      %v994 = vpop.f32.mrf.mxu0
      %995 = vmatprep.mubr.bf16.mxu0 0
      %996 = vmatmul.mubr.bf16.gmra.mxu0 %v841
      %v997 = vpop.f32.mrf.mxu0
      %v998 = vadd.f32 %v873, %v997
      %v999 = vpop.f32.mrf.mxu0
      %v1000 = vpop.f32.mrf.mxu0
      %v1001 = vadd.f32 %v873, %v1000
      %v1002 = vpop.f32.mrf.mxu0
      %1003 = vmatprep.mubr.bf16.mxu0 0
      %1004 = vmatmul.mubr.bf16.gmra.mxu0 %v842
      %v1005 = vpop.f32.mrf.mxu0
      %v1006 = vadd.f32 %v873, %v1005
      %v1007 = vpop.f32.mrf.mxu0
      %v1008 = vpop.f32.mrf.mxu0
      %v1009 = vadd.f32 %v873, %v1008
      %v1010 = vpop.f32.mrf.mxu0
      %1011 = vmatprep.mubr.bf16.mxu0 0
      %1012 = vmatmul.mubr.bf16.gmra.mxu0 %v843
      %v1013 = vpop.f32.mrf.mxu0
      %v1014 = vadd.f32 %v873, %v1013
      %v1015 = vpop.f32.mrf.mxu0
      %v1016 = vpop.f32.mrf.mxu0
      %v1017 = vadd.f32 %v873, %v1016
      %v1018 = vpop.f32.mrf.mxu0
      %1019 = vmatprep.mubr.bf16.mxu0 0
      %1020 = vmatmul.mubr.bf16.gmra.mxu0 %v844
      %v1021 = vpop.f32.mrf.mxu0
      %v1022 = vadd.f32 %v873, %v1021
      %v1023 = vpop.f32.mrf.mxu0
      %v1024 = vpop.f32.mrf.mxu0
      %v1025 = vadd.f32 %v873, %v1024
      %v1026 = vpop.f32.mrf.mxu0
      %1027 = vmatprep.mubr.bf16.mxu0 0
      %1028 = vmatmul.mubr.bf16.gmra.mxu0 %v845
      %v1029 = vpop.f32.mrf.mxu0
      %v1030 = vadd.f32 %v873, %v1029
      %v1031 = vpop.f32.mrf.mxu0
      %v1032 = vpop.f32.mrf.mxu0
      %v1033 = vadd.f32 %v873, %v1032
      %v1034 = vpop.f32.mrf.mxu0
      %1035 = vmatprep.mubr.bf16.mxu0 0
      %1036 = vmatmul.mubr.bf16.gmra.mxu0 %v846
      %v1037 = vpop.f32.mrf.mxu0
      %v1038 = vadd.f32 %v873, %v1037
      %v1039 = vpop.f32.mrf.mxu0
      %v1040 = vpop.f32.mrf.mxu0
      %v1041 = vadd.f32 %v873, %v1040
      %v1042 = vpop.f32.mrf.mxu0
      %1043 = vmatprep.mubr.bf16.mxu0 0
      %1044 = vmatmul.mubr.bf16.gmra.mxu0 %v847
      %v1045 = vpop.f32.mrf.mxu0
      %v1046 = vadd.f32 %v873, %v1045
      %v1047 = vpop.f32.mrf.mxu0
      %v1048 = vpop.f32.mrf.mxu0
      %v1049 = vadd.f32 %v873, %v1048
      %v1050 = vpop.f32.mrf.mxu0
      %1051 = vmatprep.mubr.bf16.mxu0 0
      %1052 = vmatmul.mubr.bf16.gmra.mxu0 %v848
      %v1053 = vpop.f32.mrf.mxu0
      %v1054 = vadd.f32 %v873, %v1053
      %v1055 = vpop.f32.mrf.mxu0
      %v1056 = vpop.f32.mrf.mxu0
      %v1057 = vadd.f32 %v873, %v1056
      %v1058 = vpop.f32.mrf.mxu0
      %1059 = vmatprep.mubr.bf16.mxu0 0
      %1060 = vmatmul.mubr.bf16.gmra.mxu0 %v849
      %v1061 = vpop.f32.mrf.mxu0
      %v1062 = vadd.f32 %v873, %v1061
      %v1063 = vpop.f32.mrf.mxu0
      %v1064 = vpop.f32.mrf.mxu0
      %v1065 = vadd.f32 %v873, %v1064
      %v1066 = vpop.f32.mrf.mxu0
      %1067 = vmatprep.mubr.bf16.mxu0 0
      %1068 = vmatmul.mubr.bf16.gmra.mxu0 %v850
      %v1069 = vpop.f32.mrf.mxu0
      %v1070 = vadd.f32 %v873, %v1069
      %v1071 = vpop.f32.mrf.mxu0
      %v1072 = vpop.f32.mrf.mxu0
      %v1073 = vadd.f32 %v873, %v1072
      %v1074 = vpop.f32.mrf.mxu0
      %1075 = vmatprep.mubr.bf16.mxu0 0
      %1076 = vmatmul.mubr.bf16.gmra.mxu0 %v851
      %v1077 = vpop.f32.mrf.mxu0
      %v1078 = vadd.f32 %v873, %v1077
      %v1079 = vpop.f32.mrf.mxu0
      %v1080 = vpop.f32.mrf.mxu0
      %v1081 = vadd.f32 %v873, %v1080
      %v1082 = vpop.f32.mrf.mxu0
      %1083 = vdwg.mxu0
      %v1084 = vld [vmem:[%s8] sm:$0xff]
      %v1085 = vld [vmem:[%s8 + $0x8] sm:$0xff]
      %v1086 = vld [vmem:[%s8 + $0x10] sm:$0xff]
      %v1087 = vld [vmem:[%s8 + $0x18] sm:$0xff]
      %v1088 = vld [vmem:[%s8 + $0x20] sm:$0xff]
      %v1089 = vld [vmem:[%s8 + $0x28] sm:$0xff]
      %v1090 = vld [vmem:[%s8 + $0x30] sm:$0xff]
      %v1091 = vld [vmem:[%s8 + $0x38] sm:$0xff]
      %v1092 = vld [vmem:[%s8 + $0x40] sm:$0xff]
      %v1093 = vld [vmem:[%s8 + $0x48] sm:$0xff]
      %v1094 = vld [vmem:[%s8 + $0x50] sm:$0xff]
      %v1095 = vld [vmem:[%s8 + $0x58] sm:$0xff]
      %v1096 = vld [vmem:[%s8 + $0x60] sm:$0xff]
      %v1097 = vld [vmem:[%s8 + $0x68] sm:$0xff]
      %v1098 = vld [vmem:[%s8 + $0x70] sm:$0xff]
      %v1099 = vld [vmem:[%s8 + $0x78] sm:$0xff]
      %v1100 = vld [vmem:[%s8 + $0x80] sm:$0xff]
      %v1101 = vld [vmem:[%s8 + $0x88] sm:$0xff]
      %v1102 = vld [vmem:[%s8 + $0x90] sm:$0xff]
      %v1103 = vld [vmem:[%s8 + $0x98] sm:$0xff]
      %v1104 = vld [vmem:[%s8 + $0xa0] sm:$0xff]
      %v1105 = vld [vmem:[%s8 + $0xa8] sm:$0xff]
      %v1106 = vld [vmem:[%s8 + $0xb0] sm:$0xff]
      %v1107 = vld [vmem:[%s8 + $0xb8] sm:$0xff]
      %v1108 = vld [vmem:[%s8 + $0xc0] sm:$0xff]
      %v1109 = vld [vmem:[%s8 + $0xc8] sm:$0xff]
      %v1110 = vld [vmem:[%s8 + $0xd0] sm:$0xff]
      %v1111 = vld [vmem:[%s8 + $0xd8] sm:$0xff]
      %v1112 = vld [vmem:[%s8 + $0xe0] sm:$0xff]
      %v1113 = vld [vmem:[%s8 + $0xe8] sm:$0xff]
      %v1114 = vld [vmem:[%s8 + $0xf0] sm:$0xff]
      %v1115 = vld [vmem:[%s8 + $0xf8] sm:$0xff]
      %v1116 = vpack.c.bf16 %v961, %v958
      %v1117 = vpack.c.bf16 %v969, %v966
      %v1118 = vpack.c.bf16 %v977, %v974
      %v1119 = vpack.c.bf16 %v985, %v982
      %v1120 = vpack.c.bf16 %v993, %v990
      %v1121 = vpack.c.bf16 %v1001, %v998
      %v1122 = vpack.c.bf16 %v1009, %v1006
      %v1123 = vpack.c.bf16 %v1017, %v1014
      %v1124 = vpack.c.bf16 %v1025, %v1022
      %v1125 = vpack.c.bf16 %v1033, %v1030
      %v1126 = vpack.c.bf16 %v1041, %v1038
      %v1127 = vpack.c.bf16 %v1049, %v1046
      %v1128 = vpack.c.bf16 %v1057, %v1054
      %v1129 = vpack.c.bf16 %v1065, %v1062
      %v1130 = vpack.c.bf16 %v1073, %v1070
      %v1131 = vpack.c.bf16 %v1081, %v1078
      %v1132 = vld [vmem:[%s5] sm:$0xff]
      %v1133 = vld [vmem:[%s5 + $0x8] sm:$0xff]
      %v1134 = vld [vmem:[%s5 + $0x10] sm:$0xff]
      %v1135 = vld [vmem:[%s5 + $0x18] sm:$0xff]
      %v1136 = vld [vmem:[%s5 + $0x20] sm:$0xff]
      %v1137 = vld [vmem:[%s5 + $0x28] sm:$0xff]
      %v1138 = vld [vmem:[%s5 + $0x30] sm:$0xff]
      %v1139 = vld [vmem:[%s5 + $0x38] sm:$0xff]
      %1144 = vrot.lane.b32.xlu0 %v1116, 112
      %v1145 = vpop.permute.xlu0 %1144
      %1146 = vrot.lane.b32.xlu0 %v1117, 112
      %v1147 = vpop.permute.xlu0 %1146
      %1148 = vrot.lane.b32.xlu0 %v1118, 112
      %v1149 = vpop.permute.xlu0 %1148
      %1150 = vrot.lane.b32.xlu0 %v1119, 112
      %v1151 = vpop.permute.xlu0 %1150
      %vm1152 = vcmask 64512
      %v1154 = vsel %vm1152, %v1116, 0
      %v1157 = vsel %vm1152, %v1117, 0
      %v1160 = vsel %vm1152, %v1118, 0
      %v1163 = vsel %vm1152, %v1119, 0
      %v1166 = vsel %vm1152, %v1145, 0
      %v1169 = vsel %vm1152, %v1147, 0
      %v1172 = vsel %vm1152, %v1149, 0
      %v1175 = vsel %vm1152, %v1151, 0
      %1177 = vmatprep.subr.bf16.mxu0 0
      %1178 = vmatpush1.bf16.xpose.msra.mxu0 0
      %1179 = vmatprep.subr.bf16.mxu0 0
      %1180 = vmatpush1.bf16.xpose.msra.mxu0 0
      %1181 = vmatprep.subr.bf16.mxu0 0
      %1182 = vmatpush1.bf16.xpose.msra.mxu0 0
      %1183 = vmatprep.subr.bf16.mxu0 0
      %1184 = vmatpush1.bf16.xpose.msra.mxu0 0
      %1185 = vmatprep.subr.bf16.mxu0 0
      %1186 = vmatpush1.bf16.xpose.msra.mxu0 %v1175
      %1187 = vmatprep.subr.bf16.mxu0 0
      %1188 = vmatpush1.bf16.xpose.msra.mxu0 %v1172
      %1189 = vmatprep.subr.bf16.mxu0 0
      %1190 = vmatpush1.bf16.xpose.msra.mxu0 %v1169
      %1191 = vmatprep.subr.bf16.mxu0 0
      %1192 = vmatpush1.bf16.xpose.msra.mxu0 %v1166
      %1193 = vmatprep.subr.bf16.mxu0 0
      %1194 = vmatpush2.bf16.xpose.msra.mxu0 0
      %1195 = vmatprep.subr.bf16.mxu0 0
      %1196 = vmatpush2.bf16.xpose.msra.mxu0 0
      %1197 = vmatprep.subr.bf16.mxu0 0
      %1198 = vmatpush2.bf16.xpose.msra.mxu0 0
      %1199 = vmatprep.subr.bf16.mxu0 0
      %1200 = vmatpush2.bf16.xpose.msra.mxu0 0
      %1201 = vmatprep.subr.bf16.mxu0 0
      %1202 = vmatpush2.bf16.xpose.msra.mxu0 0
      %1203 = vmatprep.subr.bf16.mxu0 0
      %1204 = vmatpush2.bf16.xpose.msra.mxu0 0
      %1205 = vmatprep.subr.bf16.mxu0 0
      %1206 = vmatpush2.bf16.xpose.msra.mxu0 0
      %1207 = vmatprep.subr.bf16.mxu0 0
      %1208 = vmatpush2.bf16.xpose.msra.mxu0 0
      %1209 = vmatprep.mubr.bf16.mxu0 0
      %1210 = vmatmul.mubr.bf16.gmra.mxu0 %v1154
      %v1211 = vpop.f32.mrf.mxu0
      %v1212 = vadd.f32 %v1132, %v1211
      %v1213 = vpop.f32.mrf.mxu0
      %v1214 = vpop.f32.mrf.mxu0
      %v1215 = vadd.f32 %v1133, %v1214
      %v1216 = vpop.f32.mrf.mxu0
      %1217 = vmatprep.mubr.bf16.mxu0 0
      %1218 = vmatmul.mubr.bf16.gmra.mxu0 %v1157
      %v1219 = vpop.f32.mrf.mxu0
      %v1220 = vadd.f32 %v1134, %v1219
      %v1221 = vpop.f32.mrf.mxu0
      %v1222 = vpop.f32.mrf.mxu0
      %v1223 = vadd.f32 %v1135, %v1222
      %v1224 = vpop.f32.mrf.mxu0
      %1225 = vmatprep.mubr.bf16.mxu0 0
      %1226 = vmatmul.mubr.bf16.gmra.mxu0 %v1160
      %v1227 = vpop.f32.mrf.mxu0
      %v1228 = vadd.f32 %v1136, %v1227
      %v1229 = vpop.f32.mrf.mxu0
      %v1230 = vpop.f32.mrf.mxu0
      %v1231 = vadd.f32 %v1137, %v1230
      %v1232 = vpop.f32.mrf.mxu0
      %1233 = vmatprep.mubr.bf16.mxu0 0
      %1234 = vmatmul.mubr.bf16.gmra.mxu0 %v1163
      %v1235 = vpop.f32.mrf.mxu0
      %v1236 = vadd.f32 %v1138, %v1235
      %v1237 = vpop.f32.mrf.mxu0
      %v1238 = vpop.f32.mrf.mxu0
      %v1239 = vadd.f32 %v1139, %v1238
      %v1240 = vpop.f32.mrf.mxu0
      %1241 = vdwg.mxu0
      %1246 = vrot.lane.b32.xlu0 %v1120, 112
      %v1247 = vpop.permute.xlu0 %1246
      %1248 = vrot.lane.b32.xlu0 %v1121, 112
      %v1249 = vpop.permute.xlu0 %1248
      %1250 = vrot.lane.b32.xlu0 %v1122, 112
      %v1251 = vpop.permute.xlu0 %1250
      %1252 = vrot.lane.b32.xlu0 %v1123, 112
      %v1253 = vpop.permute.xlu0 %1252
      %v1255 = vsel %vm1152, %v1120, 0
      %v1258 = vsel %vm1152, %v1121, 0
      %v1261 = vsel %vm1152, %v1122, 0
      %v1264 = vsel %vm1152, %v1123, 0
      %v1267 = vsel %vm1152, %v1247, 0
      %v1270 = vsel %vm1152, %v1249, 0
      %v1273 = vsel %vm1152, %v1251, 0
      %v1276 = vsel %vm1152, %v1253, 0
      %1278 = vmatprep.subr.bf16.mxu0 0
      %1279 = vmatpush1.bf16.xpose.msra.mxu0 0
      %1280 = vmatprep.subr.bf16.mxu0 0
      %1281 = vmatpush1.bf16.xpose.msra.mxu0 0
      %1282 = vmatprep.subr.bf16.mxu0 0
      %1283 = vmatpush1.bf16.xpose.msra.mxu0 0
      %1284 = vmatprep.subr.bf16.mxu0 0
      %1285 = vmatpush1.bf16.xpose.msra.mxu0 0
      %1286 = vmatprep.subr.bf16.mxu0 0
      %1287 = vmatpush1.bf16.xpose.msra.mxu0 %v1276
      %1288 = vmatprep.subr.bf16.mxu0 0
      %1289 = vmatpush1.bf16.xpose.msra.mxu0 %v1273
      %1290 = vmatprep.subr.bf16.mxu0 0
      %1291 = vmatpush1.bf16.xpose.msra.mxu0 %v1270
      %1292 = vmatprep.subr.bf16.mxu0 0
      %1293 = vmatpush1.bf16.xpose.msra.mxu0 %v1267
      %1294 = vmatprep.subr.bf16.mxu0 0
      %1295 = vmatpush2.bf16.xpose.msra.mxu0 0
      %1296 = vmatprep.subr.bf16.mxu0 0
      %1297 = vmatpush2.bf16.xpose.msra.mxu0 0
      %1298 = vmatprep.subr.bf16.mxu0 0
      %1299 = vmatpush2.bf16.xpose.msra.mxu0 0
      %1300 = vmatprep.subr.bf16.mxu0 0
      %1301 = vmatpush2.bf16.xpose.msra.mxu0 0
      %1302 = vmatprep.subr.bf16.mxu0 0
      %1303 = vmatpush2.bf16.xpose.msra.mxu0 0
      %1304 = vmatprep.subr.bf16.mxu0 0
      %1305 = vmatpush2.bf16.xpose.msra.mxu0 0
      %1306 = vmatprep.subr.bf16.mxu0 0
      %1307 = vmatpush2.bf16.xpose.msra.mxu0 0
      %1308 = vmatprep.subr.bf16.mxu0 0
      %1309 = vmatpush2.bf16.xpose.msra.mxu0 0
      %1310 = vmatprep.mubr.bf16.mxu0 0
      %1311 = vmatmul.mubr.bf16.gmra.mxu0 %v1255
      %v1312 = vpop.f32.mrf.mxu0
      %v1313 = vadd.f32 %v1132, %v1312
      %v1314 = vpop.f32.mrf.mxu0
      %v1315 = vpop.f32.mrf.mxu0
      %v1316 = vadd.f32 %v1133, %v1315
      %v1317 = vpop.f32.mrf.mxu0
      %1318 = vmatprep.mubr.bf16.mxu0 0
      %1319 = vmatmul.mubr.bf16.gmra.mxu0 %v1258
      %v1320 = vpop.f32.mrf.mxu0
      %v1321 = vadd.f32 %v1134, %v1320
      %v1322 = vpop.f32.mrf.mxu0
      %v1323 = vpop.f32.mrf.mxu0
      %v1324 = vadd.f32 %v1135, %v1323
      %v1325 = vpop.f32.mrf.mxu0
      %1326 = vmatprep.mubr.bf16.mxu0 0
      %1327 = vmatmul.mubr.bf16.gmra.mxu0 %v1261
      %v1328 = vpop.f32.mrf.mxu0
      %v1329 = vadd.f32 %v1136, %v1328
      %v1330 = vpop.f32.mrf.mxu0
      %v1331 = vpop.f32.mrf.mxu0
      %v1332 = vadd.f32 %v1137, %v1331
      %v1333 = vpop.f32.mrf.mxu0
      %1334 = vmatprep.mubr.bf16.mxu0 0
      %1335 = vmatmul.mubr.bf16.gmra.mxu0 %v1264
      %v1336 = vpop.f32.mrf.mxu0
      %v1337 = vadd.f32 %v1138, %v1336
      %v1338 = vpop.f32.mrf.mxu0
      %v1339 = vpop.f32.mrf.mxu0
      %v1340 = vadd.f32 %v1139, %v1339
      %v1341 = vpop.f32.mrf.mxu0
      %1342 = vdwg.mxu0
      %1347 = vrot.lane.b32.xlu0 %v1124, 112
      %v1348 = vpop.permute.xlu0 %1347
      %1349 = vrot.lane.b32.xlu0 %v1125, 112
      %v1350 = vpop.permute.xlu0 %1349
      %1351 = vrot.lane.b32.xlu0 %v1126, 112
      %v1352 = vpop.permute.xlu0 %1351
      %1353 = vrot.lane.b32.xlu0 %v1127, 112
      %v1354 = vpop.permute.xlu0 %1353
      %v1356 = vsel %vm1152, %v1124, 0
      %v1359 = vsel %vm1152, %v1125, 0
      %v1362 = vsel %vm1152, %v1126, 0
      %v1365 = vsel %vm1152, %v1127, 0
      %v1368 = vsel %vm1152, %v1348, 0
      %v1371 = vsel %vm1152, %v1350, 0
      %v1374 = vsel %vm1152, %v1352, 0
      %v1377 = vsel %vm1152, %v1354, 0
      %1379 = vmatprep.subr.bf16.mxu0 0
      %1380 = vmatpush1.bf16.xpose.msra.mxu0 0
      %1381 = vmatprep.subr.bf16.mxu0 0
      %1382 = vmatpush1.bf16.xpose.msra.mxu0 0
      %1383 = vmatprep.subr.bf16.mxu0 0
      %1384 = vmatpush1.bf16.xpose.msra.mxu0 0
      %1385 = vmatprep.subr.bf16.mxu0 0
      %1386 = vmatpush1.bf16.xpose.msra.mxu0 0
      %1387 = vmatprep.subr.bf16.mxu0 0
      %1388 = vmatpush1.bf16.xpose.msra.mxu0 %v1377
      %1389 = vmatprep.subr.bf16.mxu0 0
      %1390 = vmatpush1.bf16.xpose.msra.mxu0 %v1374
      %1391 = vmatprep.subr.bf16.mxu0 0
      %1392 = vmatpush1.bf16.xpose.msra.mxu0 %v1371
      %1393 = vmatprep.subr.bf16.mxu0 0
      %1394 = vmatpush1.bf16.xpose.msra.mxu0 %v1368
      %1395 = vmatprep.subr.bf16.mxu0 0
      %1396 = vmatpush2.bf16.xpose.msra.mxu0 0
      %1397 = vmatprep.subr.bf16.mxu0 0
      %1398 = vmatpush2.bf16.xpose.msra.mxu0 0
      %1399 = vmatprep.subr.bf16.mxu0 0
      %1400 = vmatpush2.bf16.xpose.msra.mxu0 0
      %1401 = vmatprep.subr.bf16.mxu0 0
      %1402 = vmatpush2.bf16.xpose.msra.mxu0 0
      %1403 = vmatprep.subr.bf16.mxu0 0
      %1404 = vmatpush2.bf16.xpose.msra.mxu0 0
      %1405 = vmatprep.subr.bf16.mxu0 0
      %1406 = vmatpush2.bf16.xpose.msra.mxu0 0
      %1407 = vmatprep.subr.bf16.mxu0 0
      %1408 = vmatpush2.bf16.xpose.msra.mxu0 0
      %1409 = vmatprep.subr.bf16.mxu0 0
      %1410 = vmatpush2.bf16.xpose.msra.mxu0 0
      %1411 = vmatprep.mubr.bf16.mxu0 0
      %1412 = vmatmul.mubr.bf16.gmra.mxu0 %v1356
      %v1413 = vpop.f32.mrf.mxu0
      %v1414 = vadd.f32 %v1132, %v1413
      %v1415 = vpop.f32.mrf.mxu0
      %v1416 = vpop.f32.mrf.mxu0
      %v1417 = vadd.f32 %v1133, %v1416
      %v1418 = vpop.f32.mrf.mxu0
      %1419 = vmatprep.mubr.bf16.mxu0 0
      %1420 = vmatmul.mubr.bf16.gmra.mxu0 %v1359
      %v1421 = vpop.f32.mrf.mxu0
      %v1422 = vadd.f32 %v1134, %v1421
      %v1423 = vpop.f32.mrf.mxu0
      %v1424 = vpop.f32.mrf.mxu0
      %v1425 = vadd.f32 %v1135, %v1424
      %v1426 = vpop.f32.mrf.mxu0
      %1427 = vmatprep.mubr.bf16.mxu0 0
      %1428 = vmatmul.mubr.bf16.gmra.mxu0 %v1362
      %v1429 = vpop.f32.mrf.mxu0
      %v1430 = vadd.f32 %v1136, %v1429
      %v1431 = vpop.f32.mrf.mxu0
      %v1432 = vpop.f32.mrf.mxu0
      %v1433 = vadd.f32 %v1137, %v1432
      %v1434 = vpop.f32.mrf.mxu0
      %1435 = vmatprep.mubr.bf16.mxu0 0
      %1436 = vmatmul.mubr.bf16.gmra.mxu0 %v1365
      %v1437 = vpop.f32.mrf.mxu0
      %v1438 = vadd.f32 %v1138, %v1437
      %v1439 = vpop.f32.mrf.mxu0
      %v1440 = vpop.f32.mrf.mxu0
      %v1441 = vadd.f32 %v1139, %v1440
      %v1442 = vpop.f32.mrf.mxu0
      %1443 = vdwg.mxu0
      %1448 = vrot.lane.b32.xlu0 %v1128, 112
      %v1449 = vpop.permute.xlu0 %1448
      %1450 = vrot.lane.b32.xlu0 %v1129, 112
      %v1451 = vpop.permute.xlu0 %1450
      %1452 = vrot.lane.b32.xlu0 %v1130, 112
      %v1453 = vpop.permute.xlu0 %1452
      %1454 = vrot.lane.b32.xlu0 %v1131, 112
      %v1455 = vpop.permute.xlu0 %1454
      %v1457 = vsel %vm1152, %v1128, 0
      %v1460 = vsel %vm1152, %v1129, 0
      %v1463 = vsel %vm1152, %v1130, 0
      %v1466 = vsel %vm1152, %v1131, 0
      %v1469 = vsel %vm1152, %v1449, 0
      %v1472 = vsel %vm1152, %v1451, 0
      %v1475 = vsel %vm1152, %v1453, 0
      %v1478 = vsel %vm1152, %v1455, 0
      %1480 = vmatprep.subr.bf16.mxu0 0
      %1481 = vmatpush1.bf16.xpose.msra.mxu0 0
      %1482 = vmatprep.subr.bf16.mxu0 0
      %1483 = vmatpush1.bf16.xpose.msra.mxu0 0
      %1484 = vmatprep.subr.bf16.mxu0 0
      %1485 = vmatpush1.bf16.xpose.msra.mxu0 0
      %1486 = vmatprep.subr.bf16.mxu0 0
      %1487 = vmatpush1.bf16.xpose.msra.mxu0 0
      %1488 = vmatprep.subr.bf16.mxu0 0
      %1489 = vmatpush1.bf16.xpose.msra.mxu0 %v1478
      %1490 = vmatprep.subr.bf16.mxu0 0
      %1491 = vmatpush1.bf16.xpose.msra.mxu0 %v1475
      %1492 = vmatprep.subr.bf16.mxu0 0
      %1493 = vmatpush1.bf16.xpose.msra.mxu0 %v1472
      %1494 = vmatprep.subr.bf16.mxu0 0
      %1495 = vmatpush1.bf16.xpose.msra.mxu0 %v1469
      %1496 = vmatprep.subr.bf16.mxu0 0
      %1497 = vmatpush2.bf16.xpose.msra.mxu0 0
      %1498 = vmatprep.subr.bf16.mxu0 0
      %1499 = vmatpush2.bf16.xpose.msra.mxu0 0
      %1500 = vmatprep.subr.bf16.mxu0 0
      %1501 = vmatpush2.bf16.xpose.msra.mxu0 0
      %1502 = vmatprep.subr.bf16.mxu0 0
      %1503 = vmatpush2.bf16.xpose.msra.mxu0 0
      %1504 = vmatprep.subr.bf16.mxu0 0
      %1505 = vmatpush2.bf16.xpose.msra.mxu0 0
      %1506 = vmatprep.subr.bf16.mxu0 0
      %1507 = vmatpush2.bf16.xpose.msra.mxu0 0
      %1508 = vmatprep.subr.bf16.mxu0 0
      %1509 = vmatpush2.bf16.xpose.msra.mxu0 0
      %1510 = vmatprep.subr.bf16.mxu0 0
      %1511 = vmatpush2.bf16.xpose.msra.mxu0 0
      %1512 = vmatprep.mubr.bf16.mxu0 0
      %1513 = vmatmul.mubr.bf16.gmra.mxu0 %v1457
      %v1514 = vpop.f32.mrf.mxu0
      %v1515 = vadd.f32 %v1132, %v1514
      %v1516 = vpop.f32.mrf.mxu0
      %v1517 = vpop.f32.mrf.mxu0
      %v1518 = vadd.f32 %v1133, %v1517
      %v1519 = vpop.f32.mrf.mxu0
      %1520 = vmatprep.mubr.bf16.mxu0 0
      %1521 = vmatmul.mubr.bf16.gmra.mxu0 %v1460
      %v1522 = vpop.f32.mrf.mxu0
      %v1523 = vadd.f32 %v1134, %v1522
      %v1524 = vpop.f32.mrf.mxu0
      %v1525 = vpop.f32.mrf.mxu0
      %v1526 = vadd.f32 %v1135, %v1525
      %v1527 = vpop.f32.mrf.mxu0
      %1528 = vmatprep.mubr.bf16.mxu0 0
      %1529 = vmatmul.mubr.bf16.gmra.mxu0 %v1463
      %v1530 = vpop.f32.mrf.mxu0
      %v1531 = vadd.f32 %v1136, %v1530
      %v1532 = vpop.f32.mrf.mxu0
      %v1533 = vpop.f32.mrf.mxu0
      %v1534 = vadd.f32 %v1137, %v1533
      %v1535 = vpop.f32.mrf.mxu0
      %1536 = vmatprep.mubr.bf16.mxu0 0
      %1537 = vmatmul.mubr.bf16.gmra.mxu0 %v1466
      %v1538 = vpop.f32.mrf.mxu0
      %v1539 = vadd.f32 %v1138, %v1538
      %v1540 = vpop.f32.mrf.mxu0
      %v1541 = vpop.f32.mrf.mxu0
      %v1542 = vadd.f32 %v1139, %v1541
      %v1543 = vpop.f32.mrf.mxu0
      %1544 = vdwg.mxu0
      %v1545 = vadd.f32 %v1212, %v1084
      %v1546 = vadd.f32 %v1215, %v1085
      %v1547 = vadd.f32 %v1220, %v1086
      %v1548 = vadd.f32 %v1223, %v1087
      %v1549 = vadd.f32 %v1228, %v1088
      %v1550 = vadd.f32 %v1231, %v1089
      %v1551 = vadd.f32 %v1236, %v1090
      %v1552 = vadd.f32 %v1239, %v1091
      %v1553 = vadd.f32 %v1313, %v1092
      %v1554 = vadd.f32 %v1316, %v1093
      %v1555 = vadd.f32 %v1321, %v1094
      %v1556 = vadd.f32 %v1324, %v1095
      %v1557 = vadd.f32 %v1329, %v1096
      %v1558 = vadd.f32 %v1332, %v1097
      %v1559 = vadd.f32 %v1337, %v1098
      %v1560 = vadd.f32 %v1340, %v1099
      %v1561 = vadd.f32 %v1414, %v1100
      %v1562 = vadd.f32 %v1417, %v1101
      %v1563 = vadd.f32 %v1422, %v1102
      %v1564 = vadd.f32 %v1425, %v1103
      %v1565 = vadd.f32 %v1430, %v1104
      %v1566 = vadd.f32 %v1433, %v1105
      %v1567 = vadd.f32 %v1438, %v1106
      %v1568 = vadd.f32 %v1441, %v1107
      %v1569 = vadd.f32 %v1515, %v1108
      %v1570 = vadd.f32 %v1518, %v1109
      %v1571 = vadd.f32 %v1523, %v1110
      %v1572 = vadd.f32 %v1526, %v1111
      %v1573 = vadd.f32 %v1531, %v1112
      %v1574 = vadd.f32 %v1534, %v1113
      %v1575 = vadd.f32 %v1539, %v1114
      %v1576 = vadd.f32 %v1542, %v1115
      %vm1577 = vcmask 523264
      %v1578 = vsel %vm1577, %v1545, -inf
      %1579 = vmax.xlane.f32.xlu0 %v1578
      %v1580 = vpop.xlane.xlu0 %1579
      %v1581 = vsel %vm1577, %v1546, -inf
      %1582 = vmax.xlane.f32.xlu0 %v1581
      %v1583 = vpop.xlane.xlu0 %1582
      %v1584 = vsel %vm1577, %v1547, -inf
      %1585 = vmax.xlane.f32.xlu0 %v1584
      %v1586 = vpop.xlane.xlu0 %1585
      %v1587 = vsel %vm1577, %v1548, -inf
      %1588 = vmax.xlane.f32.xlu0 %v1587
      %v1589 = vpop.xlane.xlu0 %1588
      %v1590 = vsel %vm1577, %v1549, -inf
      %1591 = vmax.xlane.f32.xlu0 %v1590
      %v1592 = vpop.xlane.xlu0 %1591
      %v1593 = vsel %vm1577, %v1550, -inf
      %1594 = vmax.xlane.f32.xlu0 %v1593
      %v1595 = vpop.xlane.xlu0 %1594
      %v1596 = vsel %vm1577, %v1551, -inf
      %1597 = vmax.xlane.f32.xlu0 %v1596
      %v1598 = vpop.xlane.xlu0 %1597
      %v1599 = vsel %vm1577, %v1552, -inf
      %1600 = vmax.xlane.f32.xlu0 %v1599
      %v1601 = vpop.xlane.xlu0 %1600
      %v1602 = vsel %vm1577, %v1553, -inf
      %1603 = vmax.xlane.f32.xlu0 %v1602
      %v1604 = vpop.xlane.xlu0 %1603
      %v1605 = vsel %vm1577, %v1554, -inf
      %1606 = vmax.xlane.f32.xlu0 %v1605
      %v1607 = vpop.xlane.xlu0 %1606
      %v1608 = vsel %vm1577, %v1555, -inf
      %1609 = vmax.xlane.f32.xlu0 %v1608
      %v1610 = vpop.xlane.xlu0 %1609
      %v1611 = vsel %vm1577, %v1556, -inf
      %1612 = vmax.xlane.f32.xlu0 %v1611
      %v1613 = vpop.xlane.xlu0 %1612
      %v1614 = vsel %vm1577, %v1557, -inf
      %1615 = vmax.xlane.f32.xlu0 %v1614
      %v1616 = vpop.xlane.xlu0 %1615
      %v1617 = vsel %vm1577, %v1558, -inf
      %1618 = vmax.xlane.f32.xlu0 %v1617
      %v1619 = vpop.xlane.xlu0 %1618
      %v1620 = vsel %vm1577, %v1559, -inf
      %1621 = vmax.xlane.f32.xlu0 %v1620
      %v1622 = vpop.xlane.xlu0 %1621
      %v1623 = vsel %vm1577, %v1560, -inf
      %1624 = vmax.xlane.f32.xlu0 %v1623
      %v1625 = vpop.xlane.xlu0 %1624
      %v1626 = vsel %vm1577, %v1561, -inf
      %1627 = vmax.xlane.f32.xlu0 %v1626
      %v1628 = vpop.xlane.xlu0 %1627
      %v1629 = vsel %vm1577, %v1562, -inf
      %1630 = vmax.xlane.f32.xlu0 %v1629
      %v1631 = vpop.xlane.xlu0 %1630
      %v1632 = vsel %vm1577, %v1563, -inf
      %1633 = vmax.xlane.f32.xlu0 %v1632
      %v1634 = vpop.xlane.xlu0 %1633
      %v1635 = vsel %vm1577, %v1564, -inf
      %1636 = vmax.xlane.f32.xlu0 %v1635
      %v1637 = vpop.xlane.xlu0 %1636
      %v1638 = vsel %vm1577, %v1565, -inf
      %1639 = vmax.xlane.f32.xlu0 %v1638
      %v1640 = vpop.xlane.xlu0 %1639
      %v1641 = vsel %vm1577, %v1566, -inf
      %1642 = vmax.xlane.f32.xlu0 %v1641
      %v1643 = vpop.xlane.xlu0 %1642
      %v1644 = vsel %vm1577, %v1567, -inf
      %1645 = vmax.xlane.f32.xlu0 %v1644
      %v1646 = vpop.xlane.xlu0 %1645
      %v1647 = vsel %vm1577, %v1568, -inf
      %1648 = vmax.xlane.f32.xlu0 %v1647
      %v1649 = vpop.xlane.xlu0 %1648
      %v1650 = vsel %vm1577, %v1569, -inf
      %1651 = vmax.xlane.f32.xlu0 %v1650
      %v1652 = vpop.xlane.xlu0 %1651
      %v1653 = vsel %vm1577, %v1570, -inf
      %1654 = vmax.xlane.f32.xlu0 %v1653
      %v1655 = vpop.xlane.xlu0 %1654
      %v1656 = vsel %vm1577, %v1571, -inf
      %1657 = vmax.xlane.f32.xlu0 %v1656
      %v1658 = vpop.xlane.xlu0 %1657
      %v1659 = vsel %vm1577, %v1572, -inf
      %1660 = vmax.xlane.f32.xlu0 %v1659
      %v1661 = vpop.xlane.xlu0 %1660
      %v1662 = vsel %vm1577, %v1573, -inf
      %1663 = vmax.xlane.f32.xlu0 %v1662
      %v1664 = vpop.xlane.xlu0 %1663
      %v1665 = vsel %vm1577, %v1574, -inf
      %1666 = vmax.xlane.f32.xlu0 %v1665
      %v1667 = vpop.xlane.xlu0 %1666
      %v1668 = vsel %vm1577, %v1575, -inf
      %1669 = vmax.xlane.f32.xlu0 %v1668
      %v1670 = vpop.xlane.xlu0 %1669
      %v1671 = vsel %vm1577, %v1576, -inf
      %1672 = vmax.xlane.f32.xlu0 %v1671
      %v1673 = vpop.xlane.xlu0 %1672
      %v1674 = vsub.f32 %v1545, %v1580
      %v1675 = vsub.f32 %v1546, %v1583
      %v1676 = vsub.f32 %v1547, %v1586
      %v1677 = vsub.f32 %v1548, %v1589
      %v1678 = vsub.f32 %v1549, %v1592
      %v1679 = vsub.f32 %v1550, %v1595
      %v1680 = vsub.f32 %v1551, %v1598
      %v1681 = vsub.f32 %v1552, %v1601
      %v1682 = vsub.f32 %v1553, %v1604
      %v1683 = vsub.f32 %v1554, %v1607
      %v1684 = vsub.f32 %v1555, %v1610
      %v1685 = vsub.f32 %v1556, %v1613
      %v1686 = vsub.f32 %v1557, %v1616
      %v1687 = vsub.f32 %v1558, %v1619
      %v1688 = vsub.f32 %v1559, %v1622
      %v1689 = vsub.f32 %v1560, %v1625
      %v1690 = vsub.f32 %v1561, %v1628
      %v1691 = vsub.f32 %v1562, %v1631
      %v1692 = vsub.f32 %v1563, %v1634
      %v1693 = vsub.f32 %v1564, %v1637
      %v1694 = vsub.f32 %v1565, %v1640
      %v1695 = vsub.f32 %v1566, %v1643
      %v1696 = vsub.f32 %v1567, %v1646
      %v1697 = vsub.f32 %v1568, %v1649
      %v1698 = vsub.f32 %v1569, %v1652
      %v1699 = vsub.f32 %v1570, %v1655
      %v1700 = vsub.f32 %v1571, %v1658
      %v1701 = vsub.f32 %v1572, %v1661
      %v1702 = vsub.f32 %v1573, %v1664
      %v1703 = vsub.f32 %v1574, %v1667
      %v1704 = vsub.f32 %v1575, %v1670
      %v1705 = vsub.f32 %v1576, %v1673
      %v1706 = vmul.f32 %v1674, 1.442695
      %v1707 = vpow.pop %v1706
      %v1708 = vmul.f32 %v1675, 1.442695
      %v1709 = vpow.pop %v1708
      %v1710 = vmul.f32 %v1676, 1.442695
      %v1711 = vpow.pop %v1710
      %v1712 = vmul.f32 %v1677, 1.442695
      %v1713 = vpow.pop %v1712
      %v1714 = vmul.f32 %v1678, 1.442695
      %v1715 = vpow.pop %v1714
      %v1716 = vmul.f32 %v1679, 1.442695
      %v1717 = vpow.pop %v1716
      %v1718 = vmul.f32 %v1680, 1.442695
      %v1719 = vpow.pop %v1718
      %v1720 = vmul.f32 %v1681, 1.442695
      %v1721 = vpow.pop %v1720
      %v1722 = vmul.f32 %v1682, 1.442695
      %v1723 = vpow.pop %v1722
      %v1724 = vmul.f32 %v1683, 1.442695
      %v1725 = vpow.pop %v1724
      %v1726 = vmul.f32 %v1684, 1.442695
      %v1727 = vpow.pop %v1726
      %v1728 = vmul.f32 %v1685, 1.442695
      %v1729 = vpow.pop %v1728
      %v1730 = vmul.f32 %v1686, 1.442695
      %v1731 = vpow.pop %v1730
      %v1732 = vmul.f32 %v1687, 1.442695
      %v1733 = vpow.pop %v1732
      %v1734 = vmul.f32 %v1688, 1.442695
      %v1735 = vpow.pop %v1734
      %v1736 = vmul.f32 %v1689, 1.442695
      %v1737 = vpow.pop %v1736
      %v1738 = vmul.f32 %v1690, 1.442695
      %v1739 = vpow.pop %v1738
      %v1740 = vmul.f32 %v1691, 1.442695
      %v1741 = vpow.pop %v1740
      %v1742 = vmul.f32 %v1692, 1.442695
      %v1743 = vpow.pop %v1742
      %v1744 = vmul.f32 %v1693, 1.442695
      %v1745 = vpow.pop %v1744
      %v1746 = vmul.f32 %v1694, 1.442695
      %v1747 = vpow.pop %v1746
      %v1748 = vmul.f32 %v1695, 1.442695
      %v1749 = vpow.pop %v1748
      %v1750 = vmul.f32 %v1696, 1.442695
      %v1751 = vpow.pop %v1750
      %v1752 = vmul.f32 %v1697, 1.442695
      %v1753 = vpow.pop %v1752
      %v1754 = vmul.f32 %v1698, 1.442695
      %v1755 = vpow.pop %v1754
      %v1756 = vmul.f32 %v1699, 1.442695
      %v1757 = vpow.pop %v1756
      %v1758 = vmul.f32 %v1700, 1.442695
      %v1759 = vpow.pop %v1758
      %v1760 = vmul.f32 %v1701, 1.442695
      %v1761 = vpow.pop %v1760
      %v1762 = vmul.f32 %v1702, 1.442695
      %v1763 = vpow.pop %v1762
      %v1764 = vmul.f32 %v1703, 1.442695
      %v1765 = vpow.pop %v1764
      %v1766 = vmul.f32 %v1704, 1.442695
      %v1767 = vpow.pop %v1766
      %v1768 = vmul.f32 %v1705, 1.442695
      %v1769 = vpow.pop %v1768
      %v1770 = vsel %vm1577, %v1707, 0.0
      %1771 = vadd.xlane.f32.xlu0 %v1770
      %v1772 = vpop.xlane.xlu0 %1771
      %v1773 = vsel %vm1577, %v1709, 0.0
      %1774 = vadd.xlane.f32.xlu0 %v1773
      %v1775 = vpop.xlane.xlu0 %1774
      %v1776 = vsel %vm1577, %v1711, 0.0
      %1777 = vadd.xlane.f32.xlu0 %v1776
      %v1778 = vpop.xlane.xlu0 %1777
      %v1779 = vsel %vm1577, %v1713, 0.0
      %1780 = vadd.xlane.f32.xlu0 %v1779
      %v1781 = vpop.xlane.xlu0 %1780
      %v1782 = vsel %vm1577, %v1715, 0.0
      %1783 = vadd.xlane.f32.xlu0 %v1782
      %v1784 = vpop.xlane.xlu0 %1783
      %v1785 = vsel %vm1577, %v1717, 0.0
      %1786 = vadd.xlane.f32.xlu0 %v1785
      %v1787 = vpop.xlane.xlu0 %1786
      %v1788 = vsel %vm1577, %v1719, 0.0
      %1789 = vadd.xlane.f32.xlu0 %v1788
      %v1790 = vpop.xlane.xlu0 %1789
      %v1791 = vsel %vm1577, %v1721, 0.0
      %1792 = vadd.xlane.f32.xlu0 %v1791
      %v1793 = vpop.xlane.xlu0 %1792
      %v1794 = vsel %vm1577, %v1723, 0.0
      %1795 = vadd.xlane.f32.xlu0 %v1794
      %v1796 = vpop.xlane.xlu0 %1795
      %v1797 = vsel %vm1577, %v1725, 0.0
      %1798 = vadd.xlane.f32.xlu0 %v1797
      %v1799 = vpop.xlane.xlu0 %1798
      %v1800 = vsel %vm1577, %v1727, 0.0
      %1801 = vadd.xlane.f32.xlu0 %v1800
      %v1802 = vpop.xlane.xlu0 %1801
      %v1803 = vsel %vm1577, %v1729, 0.0
      %1804 = vadd.xlane.f32.xlu0 %v1803
      %v1805 = vpop.xlane.xlu0 %1804
      %v1806 = vsel %vm1577, %v1731, 0.0
      %1807 = vadd.xlane.f32.xlu0 %v1806
      %v1808 = vpop.xlane.xlu0 %1807
      %v1809 = vsel %vm1577, %v1733, 0.0
      %1810 = vadd.xlane.f32.xlu0 %v1809
      %v1811 = vpop.xlane.xlu0 %1810
      %v1812 = vsel %vm1577, %v1735, 0.0
      %1813 = vadd.xlane.f32.xlu0 %v1812
      %v1814 = vpop.xlane.xlu0 %1813
      %v1815 = vsel %vm1577, %v1737, 0.0
      %1816 = vadd.xlane.f32.xlu0 %v1815
      %v1817 = vpop.xlane.xlu0 %1816
      %v1818 = vsel %vm1577, %v1739, 0.0
      %1819 = vadd.xlane.f32.xlu0 %v1818
      %v1820 = vpop.xlane.xlu0 %1819
      %v1821 = vsel %vm1577, %v1741, 0.0
      %1822 = vadd.xlane.f32.xlu0 %v1821
      %v1823 = vpop.xlane.xlu0 %1822
      %v1824 = vsel %vm1577, %v1743, 0.0
      %1825 = vadd.xlane.f32.xlu0 %v1824
      %v1826 = vpop.xlane.xlu0 %1825
      %v1827 = vsel %vm1577, %v1745, 0.0
      %1828 = vadd.xlane.f32.xlu0 %v1827
      %v1829 = vpop.xlane.xlu0 %1828
      %v1830 = vsel %vm1577, %v1747, 0.0
      %1831 = vadd.xlane.f32.xlu0 %v1830
      %v1832 = vpop.xlane.xlu0 %1831
      %v1833 = vsel %vm1577, %v1749, 0.0
      %1834 = vadd.xlane.f32.xlu0 %v1833
      %v1835 = vpop.xlane.xlu0 %1834
      %v1836 = vsel %vm1577, %v1751, 0.0
      %1837 = vadd.xlane.f32.xlu0 %v1836
      %v1838 = vpop.xlane.xlu0 %1837
      %v1839 = vsel %vm1577, %v1753, 0.0
      %1840 = vadd.xlane.f32.xlu0 %v1839
      %v1841 = vpop.xlane.xlu0 %1840
      %v1842 = vsel %vm1577, %v1755, 0.0
      %1843 = vadd.xlane.f32.xlu0 %v1842
      %v1844 = vpop.xlane.xlu0 %1843
      %v1845 = vsel %vm1577, %v1757, 0.0
      %1846 = vadd.xlane.f32.xlu0 %v1845
      %v1847 = vpop.xlane.xlu0 %1846
      %v1848 = vsel %vm1577, %v1759, 0.0
      %1849 = vadd.xlane.f32.xlu0 %v1848
      %v1850 = vpop.xlane.xlu0 %1849
      %v1851 = vsel %vm1577, %v1761, 0.0
      %1852 = vadd.xlane.f32.xlu0 %v1851
      %v1853 = vpop.xlane.xlu0 %1852
      %v1854 = vsel %vm1577, %v1763, 0.0
      %1855 = vadd.xlane.f32.xlu0 %v1854
      %v1856 = vpop.xlane.xlu0 %1855
      %v1857 = vsel %vm1577, %v1765, 0.0
      %1858 = vadd.xlane.f32.xlu0 %v1857
      %v1859 = vpop.xlane.xlu0 %1858
      %v1860 = vsel %vm1577, %v1767, 0.0
      %1861 = vadd.xlane.f32.xlu0 %v1860
      %v1862 = vpop.xlane.xlu0 %1861
      %v1863 = vsel %vm1577, %v1769, 0.0
      %1864 = vadd.xlane.f32.xlu0 %v1863
      %v1865 = vpop.xlane.xlu0 %1864
      %v1866 = vrcp.pop %v1772
      %v1867 = vrcp.pop %v1775
      %v1868 = vrcp.pop %v1778
      %v1869 = vrcp.pop %v1781
      %v1870 = vrcp.pop %v1784
      %v1871 = vrcp.pop %v1787
      %v1872 = vrcp.pop %v1790
      %v1873 = vrcp.pop %v1793
      %v1874 = vrcp.pop %v1796
      %v1875 = vrcp.pop %v1799
      %v1876 = vrcp.pop %v1802
      %v1877 = vrcp.pop %v1805
      %v1878 = vrcp.pop %v1808
      %v1879 = vrcp.pop %v1811
      %v1880 = vrcp.pop %v1814
      %v1881 = vrcp.pop %v1817
      %v1882 = vrcp.pop %v1820
      %v1883 = vrcp.pop %v1823
      %v1884 = vrcp.pop %v1826
      %v1885 = vrcp.pop %v1829
      %v1886 = vrcp.pop %v1832
      %v1887 = vrcp.pop %v1835
      %v1888 = vrcp.pop %v1838
      %v1889 = vrcp.pop %v1841
      %v1890 = vrcp.pop %v1844
      %v1891 = vrcp.pop %v1847
      %v1892 = vrcp.pop %v1850
      %v1893 = vrcp.pop %v1853
      %v1894 = vrcp.pop %v1856
      %v1895 = vrcp.pop %v1859
      %v1896 = vrcp.pop %v1862
      %v1897 = vrcp.pop %v1865
      %v1898 = vmul.f32 %v1707, %v1866
      %v1899 = vmul.f32 %v1709, %v1867
      %v1900 = vmul.f32 %v1711, %v1868
      %v1901 = vmul.f32 %v1713, %v1869
      %v1902 = vmul.f32 %v1715, %v1870
      %v1903 = vmul.f32 %v1717, %v1871
      %v1904 = vmul.f32 %v1719, %v1872
      %v1905 = vmul.f32 %v1721, %v1873
      %v1906 = vmul.f32 %v1723, %v1874
      %v1907 = vmul.f32 %v1725, %v1875
      %v1908 = vmul.f32 %v1727, %v1876
      %v1909 = vmul.f32 %v1729, %v1877
      %v1910 = vmul.f32 %v1731, %v1878
      %v1911 = vmul.f32 %v1733, %v1879
      %v1912 = vmul.f32 %v1735, %v1880
      %v1913 = vmul.f32 %v1737, %v1881
      %v1914 = vmul.f32 %v1739, %v1882
      %v1915 = vmul.f32 %v1741, %v1883
      %v1916 = vmul.f32 %v1743, %v1884
      %v1917 = vmul.f32 %v1745, %v1885
      %v1918 = vmul.f32 %v1747, %v1886
      %v1919 = vmul.f32 %v1749, %v1887
      %v1920 = vmul.f32 %v1751, %v1888
      %v1921 = vmul.f32 %v1753, %v1889
      %v1922 = vmul.f32 %v1755, %v1890
      %v1923 = vmul.f32 %v1757, %v1891
      %v1924 = vmul.f32 %v1759, %v1892
      %v1925 = vmul.f32 %v1761, %v1893
      %v1926 = vmul.f32 %v1763, %v1894
      %v1927 = vmul.f32 %v1765, %v1895
      %v1928 = vmul.f32 %v1767, %v1896
      %v1929 = vmul.f32 %v1769, %v1897
      %v1930 = vpack.c.bf16 %v1899, %v1898
      %v1931 = vpack.c.bf16 %v1901, %v1900
      %v1932 = vpack.c.bf16 %v1903, %v1902
      %v1933 = vpack.c.bf16 %v1905, %v1904
      %v1934 = vpack.c.bf16 %v1907, %v1906
      %v1935 = vpack.c.bf16 %v1909, %v1908
      %v1936 = vpack.c.bf16 %v1911, %v1910
      %v1937 = vpack.c.bf16 %v1913, %v1912
      %v1938 = vpack.c.bf16 %v1915, %v1914
      %v1939 = vpack.c.bf16 %v1917, %v1916
      %v1940 = vpack.c.bf16 %v1919, %v1918
      %v1941 = vpack.c.bf16 %v1921, %v1920
      %v1942 = vpack.c.bf16 %v1923, %v1922
      %v1943 = vpack.c.bf16 %v1925, %v1924
      %v1944 = vpack.c.bf16 %v1927, %v1926
      %v1945 = vpack.c.bf16 %v1929, %v1928
      %1946 = vrot.lane.b32.xlu0 %v1116, 96
      %v1947 = vpop.permute.xlu0 %1946
      %1948 = vrot.lane.b32.xlu0 %v1117, 96
      %v1949 = vpop.permute.xlu0 %1948
      %1950 = vrot.lane.b32.xlu0 %v1118, 96
      %v1951 = vpop.permute.xlu0 %1950
      %1952 = vrot.lane.b32.xlu0 %v1119, 96
      %v1953 = vpop.permute.xlu0 %1952
      %v1959 = vsel %vm1577, %v1930, 0
      %v1962 = vsel %vm1577, %v1931, 0
      %v1965 = vsel %vm1577, %v1932, 0
      %v1968 = vsel %vm1577, %v1933, 0
      %1970 = vmatprep.subr.bf16.mxu0 0
      %1971 = vmatpush1.bf16.msra.mxu0 0
      %1972 = vmatprep.subr.bf16.mxu0 0
      %1973 = vmatpush1.bf16.msra.mxu0 0
      %1974 = vmatprep.subr.bf16.mxu0 0
      %1975 = vmatpush1.bf16.msra.mxu0 0
      %1976 = vmatprep.subr.bf16.mxu0 0
      %1977 = vmatpush1.bf16.msra.mxu0 0
      %1978 = vmatprep.subr.bf16.mxu0 0
      %1979 = vmatpush1.bf16.msra.mxu0 %v1953
      %1980 = vmatprep.subr.bf16.mxu0 0
      %1981 = vmatpush1.bf16.msra.mxu0 %v1951
      %1982 = vmatprep.subr.bf16.mxu0 0
      %1983 = vmatpush1.bf16.msra.mxu0 %v1949
      %1984 = vmatprep.subr.bf16.mxu0 0
      %1985 = vmatpush1.bf16.msra.mxu0 %v1947
      %1986 = vmatprep.subr.bf16.mxu0 0
      %1987 = vmatpush2.bf16.msra.mxu0 0
      %1988 = vmatprep.subr.bf16.mxu0 0
      %1989 = vmatpush2.bf16.msra.mxu0 0
      %1990 = vmatprep.subr.bf16.mxu0 0
      %1991 = vmatpush2.bf16.msra.mxu0 0
      %1992 = vmatprep.subr.bf16.mxu0 0
      %1993 = vmatpush2.bf16.msra.mxu0 0
      %1994 = vmatprep.subr.bf16.mxu0 0
      %1995 = vmatpush2.bf16.msra.mxu0 0
      %1996 = vmatprep.subr.bf16.mxu0 0
      %1997 = vmatpush2.bf16.msra.mxu0 0
      %1998 = vmatprep.subr.bf16.mxu0 0
      %1999 = vmatpush2.bf16.msra.mxu0 0
      %2000 = vmatprep.subr.bf16.mxu0 0
      %2001 = vmatpush2.bf16.msra.mxu0 0
      %2002 = vmatprep.mubr.bf16.mxu0 0
      %2003 = vmatmul.mubr.bf16.gmra.mxu0 %v1959
      %v2004 = vpop.f32.mrf.mxu0
      %v2005 = vadd.f32 0.0, %v2004
      %v2006 = vpop.f32.mrf.mxu0
      %v2007 = vpop.f32.mrf.mxu0
      %v2008 = vadd.f32 0.0, %v2007
      %v2009 = vpop.f32.mrf.mxu0
      %2010 = vmatprep.mubr.bf16.mxu0 0
      %2011 = vmatmul.mubr.bf16.gmra.mxu0 %v1962
      %v2012 = vpop.f32.mrf.mxu0
      %v2013 = vadd.f32 0.0, %v2012
      %v2014 = vpop.f32.mrf.mxu0
      %v2015 = vpop.f32.mrf.mxu0
      %v2016 = vadd.f32 0.0, %v2015
      %v2017 = vpop.f32.mrf.mxu0
      %2018 = vmatprep.mubr.bf16.mxu0 0
      %2019 = vmatmul.mubr.bf16.gmra.mxu0 %v1965
      %v2020 = vpop.f32.mrf.mxu0
      %v2021 = vadd.f32 0.0, %v2020
      %v2022 = vpop.f32.mrf.mxu0
      %v2023 = vpop.f32.mrf.mxu0
      %v2024 = vadd.f32 0.0, %v2023
      %v2025 = vpop.f32.mrf.mxu0
      %2026 = vmatprep.mubr.bf16.mxu0 0
      %2027 = vmatmul.mubr.bf16.gmra.mxu0 %v1968
      %v2028 = vpop.f32.mrf.mxu0
      %v2029 = vadd.f32 0.0, %v2028
      %v2030 = vpop.f32.mrf.mxu0
      %v2031 = vpop.f32.mrf.mxu0
      %v2032 = vadd.f32 0.0, %v2031
      %v2033 = vpop.f32.mrf.mxu0
      %2034 = vdwg.mxu0
      %2035 = vrot.lane.b32.xlu0 %v1120, 96
      %v2036 = vpop.permute.xlu0 %2035
      %2037 = vrot.lane.b32.xlu0 %v1121, 96
      %v2038 = vpop.permute.xlu0 %2037
      %2039 = vrot.lane.b32.xlu0 %v1122, 96
      %v2040 = vpop.permute.xlu0 %2039
      %2041 = vrot.lane.b32.xlu0 %v1123, 96
      %v2042 = vpop.permute.xlu0 %2041
      %v2048 = vsel %vm1577, %v1934, 0
      %v2051 = vsel %vm1577, %v1935, 0
      %v2054 = vsel %vm1577, %v1936, 0
      %v2057 = vsel %vm1577, %v1937, 0
      %2059 = vmatprep.subr.bf16.mxu0 0
      %2060 = vmatpush1.bf16.msra.mxu0 0
      %2061 = vmatprep.subr.bf16.mxu0 0
      %2062 = vmatpush1.bf16.msra.mxu0 0
      %2063 = vmatprep.subr.bf16.mxu0 0
      %2064 = vmatpush1.bf16.msra.mxu0 0
      %2065 = vmatprep.subr.bf16.mxu0 0
      %2066 = vmatpush1.bf16.msra.mxu0 0
      %2067 = vmatprep.subr.bf16.mxu0 0
      %2068 = vmatpush1.bf16.msra.mxu0 %v2042
      %2069 = vmatprep.subr.bf16.mxu0 0
      %2070 = vmatpush1.bf16.msra.mxu0 %v2040
      %2071 = vmatprep.subr.bf16.mxu0 0
      %2072 = vmatpush1.bf16.msra.mxu0 %v2038
      %2073 = vmatprep.subr.bf16.mxu0 0
      %2074 = vmatpush1.bf16.msra.mxu0 %v2036
      %2075 = vmatprep.subr.bf16.mxu0 0
      %2076 = vmatpush2.bf16.msra.mxu0 0
      %2077 = vmatprep.subr.bf16.mxu0 0
      %2078 = vmatpush2.bf16.msra.mxu0 0
      %2079 = vmatprep.subr.bf16.mxu0 0
      %2080 = vmatpush2.bf16.msra.mxu0 0
      %2081 = vmatprep.subr.bf16.mxu0 0
      %2082 = vmatpush2.bf16.msra.mxu0 0
      %2083 = vmatprep.subr.bf16.mxu0 0
      %2084 = vmatpush2.bf16.msra.mxu0 0
      %2085 = vmatprep.subr.bf16.mxu0 0
      %2086 = vmatpush2.bf16.msra.mxu0 0
      %2087 = vmatprep.subr.bf16.mxu0 0
      %2088 = vmatpush2.bf16.msra.mxu0 0
      %2089 = vmatprep.subr.bf16.mxu0 0
      %2090 = vmatpush2.bf16.msra.mxu0 0
      %2091 = vmatprep.mubr.bf16.mxu0 0
      %2092 = vmatmul.mubr.bf16.gmra.mxu0 %v2048
      %v2093 = vpop.f32.mrf.mxu0
      %v2094 = vadd.f32 0.0, %v2093
      %v2095 = vpop.f32.mrf.mxu0
      %v2096 = vpop.f32.mrf.mxu0
      %v2097 = vadd.f32 0.0, %v2096
      %v2098 = vpop.f32.mrf.mxu0
      %2099 = vmatprep.mubr.bf16.mxu0 0
      %2100 = vmatmul.mubr.bf16.gmra.mxu0 %v2051
      %v2101 = vpop.f32.mrf.mxu0
      %v2102 = vadd.f32 0.0, %v2101
      %v2103 = vpop.f32.mrf.mxu0
      %v2104 = vpop.f32.mrf.mxu0
      %v2105 = vadd.f32 0.0, %v2104
      %v2106 = vpop.f32.mrf.mxu0
      %2107 = vmatprep.mubr.bf16.mxu0 0
      %2108 = vmatmul.mubr.bf16.gmra.mxu0 %v2054
      %v2109 = vpop.f32.mrf.mxu0
      %v2110 = vadd.f32 0.0, %v2109
      %v2111 = vpop.f32.mrf.mxu0
      %v2112 = vpop.f32.mrf.mxu0
      %v2113 = vadd.f32 0.0, %v2112
      %v2114 = vpop.f32.mrf.mxu0
      %2115 = vmatprep.mubr.bf16.mxu0 0
      %2116 = vmatmul.mubr.bf16.gmra.mxu0 %v2057
      %v2117 = vpop.f32.mrf.mxu0
      %v2118 = vadd.f32 0.0, %v2117
      %v2119 = vpop.f32.mrf.mxu0
      %v2120 = vpop.f32.mrf.mxu0
      %v2121 = vadd.f32 0.0, %v2120
      %v2122 = vpop.f32.mrf.mxu0
      %2123 = vdwg.mxu0
      %2124 = vrot.lane.b32.xlu0 %v1124, 96
      %v2125 = vpop.permute.xlu0 %2124
      %2126 = vrot.lane.b32.xlu0 %v1125, 96
      %v2127 = vpop.permute.xlu0 %2126
      %2128 = vrot.lane.b32.xlu0 %v1126, 96
      %v2129 = vpop.permute.xlu0 %2128
      %2130 = vrot.lane.b32.xlu0 %v1127, 96
      %v2131 = vpop.permute.xlu0 %2130
      %v2137 = vsel %vm1577, %v1938, 0
      %v2140 = vsel %vm1577, %v1939, 0
      %v2143 = vsel %vm1577, %v1940, 0
      %v2146 = vsel %vm1577, %v1941, 0
      %2148 = vmatprep.subr.bf16.mxu0 0
      %2149 = vmatpush1.bf16.msra.mxu0 0
      %2150 = vmatprep.subr.bf16.mxu0 0
      %2151 = vmatpush1.bf16.msra.mxu0 0
      %2152 = vmatprep.subr.bf16.mxu0 0
      %2153 = vmatpush1.bf16.msra.mxu0 0
      %2154 = vmatprep.subr.bf16.mxu0 0
      %2155 = vmatpush1.bf16.msra.mxu0 0
      %2156 = vmatprep.subr.bf16.mxu0 0
      %2157 = vmatpush1.bf16.msra.mxu0 %v2131
      %2158 = vmatprep.subr.bf16.mxu0 0
      %2159 = vmatpush1.bf16.msra.mxu0 %v2129
      %2160 = vmatprep.subr.bf16.mxu0 0
      %2161 = vmatpush1.bf16.msra.mxu0 %v2127
      %2162 = vmatprep.subr.bf16.mxu0 0
      %2163 = vmatpush1.bf16.msra.mxu0 %v2125
      %2164 = vmatprep.subr.bf16.mxu0 0
      %2165 = vmatpush2.bf16.msra.mxu0 0
      %2166 = vmatprep.subr.bf16.mxu0 0
      %2167 = vmatpush2.bf16.msra.mxu0 0
      %2168 = vmatprep.subr.bf16.mxu0 0
      %2169 = vmatpush2.bf16.msra.mxu0 0
      %2170 = vmatprep.subr.bf16.mxu0 0
      %2171 = vmatpush2.bf16.msra.mxu0 0
      %2172 = vmatprep.subr.bf16.mxu0 0
      %2173 = vmatpush2.bf16.msra.mxu0 0
      %2174 = vmatprep.subr.bf16.mxu0 0
      %2175 = vmatpush2.bf16.msra.mxu0 0
      %2176 = vmatprep.subr.bf16.mxu0 0
      %2177 = vmatpush2.bf16.msra.mxu0 0
      %2178 = vmatprep.subr.bf16.mxu0 0
      %2179 = vmatpush2.bf16.msra.mxu0 0
      %2180 = vmatprep.mubr.bf16.mxu0 0
      %2181 = vmatmul.mubr.bf16.gmra.mxu0 %v2137
      %v2182 = vpop.f32.mrf.mxu0
      %v2183 = vadd.f32 0.0, %v2182
      %v2184 = vpop.f32.mrf.mxu0
      %v2185 = vpop.f32.mrf.mxu0
      %v2186 = vadd.f32 0.0, %v2185
      %v2187 = vpop.f32.mrf.mxu0
      %2188 = vmatprep.mubr.bf16.mxu0 0
      %2189 = vmatmul.mubr.bf16.gmra.mxu0 %v2140
      %v2190 = vpop.f32.mrf.mxu0
      %v2191 = vadd.f32 0.0, %v2190
      %v2192 = vpop.f32.mrf.mxu0
      %v2193 = vpop.f32.mrf.mxu0
      %v2194 = vadd.f32 0.0, %v2193
      %v2195 = vpop.f32.mrf.mxu0
      %2196 = vmatprep.mubr.bf16.mxu0 0
      %2197 = vmatmul.mubr.bf16.gmra.mxu0 %v2143
      %v2198 = vpop.f32.mrf.mxu0
      %v2199 = vadd.f32 0.0, %v2198
      %v2200 = vpop.f32.mrf.mxu0
      %v2201 = vpop.f32.mrf.mxu0
      %v2202 = vadd.f32 0.0, %v2201
      %v2203 = vpop.f32.mrf.mxu0
      %2204 = vmatprep.mubr.bf16.mxu0 0
      %2205 = vmatmul.mubr.bf16.gmra.mxu0 %v2146
      %v2206 = vpop.f32.mrf.mxu0
      %v2207 = vadd.f32 0.0, %v2206
      %v2208 = vpop.f32.mrf.mxu0
      %v2209 = vpop.f32.mrf.mxu0
      %v2210 = vadd.f32 0.0, %v2209
      %v2211 = vpop.f32.mrf.mxu0
      %2212 = vdwg.mxu0
      %2213 = vrot.lane.b32.xlu0 %v1128, 96
      %v2214 = vpop.permute.xlu0 %2213
      %2215 = vrot.lane.b32.xlu0 %v1129, 96
      %v2216 = vpop.permute.xlu0 %2215
      %2217 = vrot.lane.b32.xlu0 %v1130, 96
      %v2218 = vpop.permute.xlu0 %2217
      %2219 = vrot.lane.b32.xlu0 %v1131, 96
      %v2220 = vpop.permute.xlu0 %2219
      %v2226 = vsel %vm1577, %v1942, 0
      %v2229 = vsel %vm1577, %v1943, 0
      %v2232 = vsel %vm1577, %v1944, 0
      %v2235 = vsel %vm1577, %v1945, 0
      %2237 = vmatprep.subr.bf16.mxu0 0
      %2238 = vmatpush1.bf16.msra.mxu0 0
      %2239 = vmatprep.subr.bf16.mxu0 0
      %2240 = vmatpush1.bf16.msra.mxu0 0
      %2241 = vmatprep.subr.bf16.mxu0 0
      %2242 = vmatpush1.bf16.msra.mxu0 0
      %2243 = vmatprep.subr.bf16.mxu0 0
      %2244 = vmatpush1.bf16.msra.mxu0 0
      %2245 = vmatprep.subr.bf16.mxu0 0
      %2246 = vmatpush1.bf16.msra.mxu0 %v2220
      %2247 = vmatprep.subr.bf16.mxu0 0
      %2248 = vmatpush1.bf16.msra.mxu0 %v2218
      %2249 = vmatprep.subr.bf16.mxu0 0
      %2250 = vmatpush1.bf16.msra.mxu0 %v2216
      %2251 = vmatprep.subr.bf16.mxu0 0
      %2252 = vmatpush1.bf16.msra.mxu0 %v2214
      %2253 = vmatprep.subr.bf16.mxu0 0
      %2254 = vmatpush2.bf16.msra.mxu0 0
      %2255 = vmatprep.subr.bf16.mxu0 0
      %2256 = vmatpush2.bf16.msra.mxu0 0
      %2257 = vmatprep.subr.bf16.mxu0 0
      %2258 = vmatpush2.bf16.msra.mxu0 0
      %2259 = vmatprep.subr.bf16.mxu0 0
      %2260 = vmatpush2.bf16.msra.mxu0 0
      %2261 = vmatprep.subr.bf16.mxu0 0
      %2262 = vmatpush2.bf16.msra.mxu0 0
      %2263 = vmatprep.subr.bf16.mxu0 0
      %2264 = vmatpush2.bf16.msra.mxu0 0
      %2265 = vmatprep.subr.bf16.mxu0 0
      %2266 = vmatpush2.bf16.msra.mxu0 0
      %2267 = vmatprep.subr.bf16.mxu0 0
      %2268 = vmatpush2.bf16.msra.mxu0 0
      %2269 = vmatprep.mubr.bf16.mxu0 0
      %2270 = vmatmul.mubr.bf16.gmra.mxu0 %v2226
      %v2271 = vpop.f32.mrf.mxu0
      %v2272 = vadd.f32 0.0, %v2271
      %v2273 = vpop.f32.mrf.mxu0
      %v2274 = vpop.f32.mrf.mxu0
      %v2275 = vadd.f32 0.0, %v2274
      %v2276 = vpop.f32.mrf.mxu0
      %2277 = vmatprep.mubr.bf16.mxu0 0
      %2278 = vmatmul.mubr.bf16.gmra.mxu0 %v2229
      %v2279 = vpop.f32.mrf.mxu0
      %v2280 = vadd.f32 0.0, %v2279
      %v2281 = vpop.f32.mrf.mxu0
      %v2282 = vpop.f32.mrf.mxu0
      %v2283 = vadd.f32 0.0, %v2282
      %v2284 = vpop.f32.mrf.mxu0
      %2285 = vmatprep.mubr.bf16.mxu0 0
      %2286 = vmatmul.mubr.bf16.gmra.mxu0 %v2232
      %v2287 = vpop.f32.mrf.mxu0
      %v2288 = vadd.f32 0.0, %v2287
      %v2289 = vpop.f32.mrf.mxu0
      %v2290 = vpop.f32.mrf.mxu0
      %v2291 = vadd.f32 0.0, %v2290
      %v2292 = vpop.f32.mrf.mxu0
      %2293 = vmatprep.mubr.bf16.mxu0 0
      %2294 = vmatmul.mubr.bf16.gmra.mxu0 %v2235
      %v2295 = vpop.f32.mrf.mxu0
      %v2296 = vadd.f32 0.0, %v2295
      %v2297 = vpop.f32.mrf.mxu0
      %v2298 = vpop.f32.mrf.mxu0
      %v2299 = vadd.f32 0.0, %v2298
      %v2300 = vpop.f32.mrf.mxu0
      %2301 = vdwg.mxu0
      %s2302 = scalar_lea.vmem %s5, 64
      %v2303 = vld [vmem:[%s2302] sm:$0xff]
      %v2304 = vld [vmem:[%s2302 + $0x8] sm:$0xff]
      %v2305 = vld [vmem:[%s2302 + $0x10] sm:$0xff]
      %v2306 = vld [vmem:[%s2302 + $0x18] sm:$0xff]
      %v2307 = vld [vmem:[%s2302 + $0x20] sm:$0xff]
      %v2308 = vld [vmem:[%s2302 + $0x28] sm:$0xff]
      %v2309 = vld [vmem:[%s2302 + $0x30] sm:$0xff]
      %v2310 = vld [vmem:[%s2302 + $0x38] sm:$0xff]
      %2311 = vrot.lane.b32.xlu0 %v1116, 120
      %v2312 = vpop.permute.xlu0 %2311
      %2313 = vrot.lane.b32.xlu0 %v1117, 120
      %v2314 = vpop.permute.xlu0 %2313
      %2315 = vrot.lane.b32.xlu0 %v1118, 120
      %v2316 = vpop.permute.xlu0 %2315
      %2317 = vrot.lane.b32.xlu0 %v1119, 120
      %v2318 = vpop.permute.xlu0 %2317
      %2319 = vrot.lane.b32.xlu0 %v1116, 104
      %v2320 = vpop.permute.xlu0 %2319
      %2321 = vrot.lane.b32.xlu0 %v1117, 104
      %v2322 = vpop.permute.xlu0 %2321
      %2323 = vrot.lane.b32.xlu0 %v1118, 104
      %v2324 = vpop.permute.xlu0 %2323
      %2325 = vrot.lane.b32.xlu0 %v1119, 104
      %v2326 = vpop.permute.xlu0 %2325
      %v2328 = vsel %vm1152, %v2312, 0
      %v2331 = vsel %vm1152, %v2314, 0
      %v2334 = vsel %vm1152, %v2316, 0
      %v2337 = vsel %vm1152, %v2318, 0
      %v2340 = vsel %vm1152, %v2320, 0
      %v2343 = vsel %vm1152, %v2322, 0
      %v2346 = vsel %vm1152, %v2324, 0
      %v2349 = vsel %vm1152, %v2326, 0
      %2351 = vmatprep.subr.bf16.mxu0 0
      %2352 = vmatpush1.bf16.xpose.msra.mxu0 0
      %2353 = vmatprep.subr.bf16.mxu0 0
      %2354 = vmatpush1.bf16.xpose.msra.mxu0 0
      %2355 = vmatprep.subr.bf16.mxu0 0
      %2356 = vmatpush1.bf16.xpose.msra.mxu0 0
      %2357 = vmatprep.subr.bf16.mxu0 0
      %2358 = vmatpush1.bf16.xpose.msra.mxu0 0
      %2359 = vmatprep.subr.bf16.mxu0 0
      %2360 = vmatpush1.bf16.xpose.msra.mxu0 %v2349
      %2361 = vmatprep.subr.bf16.mxu0 0
      %2362 = vmatpush1.bf16.xpose.msra.mxu0 %v2346
      %2363 = vmatprep.subr.bf16.mxu0 0
      %2364 = vmatpush1.bf16.xpose.msra.mxu0 %v2343
      %2365 = vmatprep.subr.bf16.mxu0 0
      %2366 = vmatpush1.bf16.xpose.msra.mxu0 %v2340
      %2367 = vmatprep.subr.bf16.mxu0 0
      %2368 = vmatpush2.bf16.xpose.msra.mxu0 0
      %2369 = vmatprep.subr.bf16.mxu0 0
      %2370 = vmatpush2.bf16.xpose.msra.mxu0 0
      %2371 = vmatprep.subr.bf16.mxu0 0
      %2372 = vmatpush2.bf16.xpose.msra.mxu0 0
      %2373 = vmatprep.subr.bf16.mxu0 0
      %2374 = vmatpush2.bf16.xpose.msra.mxu0 0
      %2375 = vmatprep.subr.bf16.mxu0 0
      %2376 = vmatpush2.bf16.xpose.msra.mxu0 0
      %2377 = vmatprep.subr.bf16.mxu0 0
      %2378 = vmatpush2.bf16.xpose.msra.mxu0 0
      %2379 = vmatprep.subr.bf16.mxu0 0
      %2380 = vmatpush2.bf16.xpose.msra.mxu0 0
      %2381 = vmatprep.subr.bf16.mxu0 0
      %2382 = vmatpush2.bf16.xpose.msra.mxu0 0
      %2383 = vmatprep.mubr.bf16.mxu0 0
      %2384 = vmatmul.mubr.bf16.gmra.mxu0 %v2328
      %v2385 = vpop.f32.mrf.mxu0
      %v2386 = vadd.f32 %v2303, %v2385
      %v2387 = vpop.f32.mrf.mxu0
      %v2388 = vpop.f32.mrf.mxu0
      %v2389 = vadd.f32 %v2304, %v2388
      %v2390 = vpop.f32.mrf.mxu0
      %2391 = vmatprep.mubr.bf16.mxu0 0
      %2392 = vmatmul.mubr.bf16.gmra.mxu0 %v2331
      %v2393 = vpop.f32.mrf.mxu0
      %v2394 = vadd.f32 %v2305, %v2393
      %v2395 = vpop.f32.mrf.mxu0
      %v2396 = vpop.f32.mrf.mxu0
      %v2397 = vadd.f32 %v2306, %v2396
      %v2398 = vpop.f32.mrf.mxu0
      %2399 = vmatprep.mubr.bf16.mxu0 0
      %2400 = vmatmul.mubr.bf16.gmra.mxu0 %v2334
      %v2401 = vpop.f32.mrf.mxu0
      %v2402 = vadd.f32 %v2307, %v2401
      %v2403 = vpop.f32.mrf.mxu0
      %v2404 = vpop.f32.mrf.mxu0
      %v2405 = vadd.f32 %v2308, %v2404
      %v2406 = vpop.f32.mrf.mxu0
      %2407 = vmatprep.mubr.bf16.mxu0 0
      %2408 = vmatmul.mubr.bf16.gmra.mxu0 %v2337
      %v2409 = vpop.f32.mrf.mxu0
      %v2410 = vadd.f32 %v2309, %v2409
      %v2411 = vpop.f32.mrf.mxu0
      %v2412 = vpop.f32.mrf.mxu0
      %v2413 = vadd.f32 %v2310, %v2412
      %v2414 = vpop.f32.mrf.mxu0
      %2415 = vdwg.mxu0
      %2416 = vrot.lane.b32.xlu0 %v1120, 120
      %v2417 = vpop.permute.xlu0 %2416
      %2418 = vrot.lane.b32.xlu0 %v1121, 120
      %v2419 = vpop.permute.xlu0 %2418
      %2420 = vrot.lane.b32.xlu0 %v1122, 120
      %v2421 = vpop.permute.xlu0 %2420
      %2422 = vrot.lane.b32.xlu0 %v1123, 120
      %v2423 = vpop.permute.xlu0 %2422
      %2424 = vrot.lane.b32.xlu0 %v1120, 104
      %v2425 = vpop.permute.xlu0 %2424
      %2426 = vrot.lane.b32.xlu0 %v1121, 104
      %v2427 = vpop.permute.xlu0 %2426
      %2428 = vrot.lane.b32.xlu0 %v1122, 104
      %v2429 = vpop.permute.xlu0 %2428
      %2430 = vrot.lane.b32.xlu0 %v1123, 104
      %v2431 = vpop.permute.xlu0 %2430
      %v2433 = vsel %vm1152, %v2417, 0
      %v2436 = vsel %vm1152, %v2419, 0
      %v2439 = vsel %vm1152, %v2421, 0
      %v2442 = vsel %vm1152, %v2423, 0
      %v2445 = vsel %vm1152, %v2425, 0
      %v2448 = vsel %vm1152, %v2427, 0
      %v2451 = vsel %vm1152, %v2429, 0
      %v2454 = vsel %vm1152, %v2431, 0
      %2456 = vmatprep.subr.bf16.mxu0 0
      %2457 = vmatpush1.bf16.xpose.msra.mxu0 0
      %2458 = vmatprep.subr.bf16.mxu0 0
      %2459 = vmatpush1.bf16.xpose.msra.mxu0 0
      %2460 = vmatprep.subr.bf16.mxu0 0
      %2461 = vmatpush1.bf16.xpose.msra.mxu0 0
      %2462 = vmatprep.subr.bf16.mxu0 0
      %2463 = vmatpush1.bf16.xpose.msra.mxu0 0
      %2464 = vmatprep.subr.bf16.mxu0 0
      %2465 = vmatpush1.bf16.xpose.msra.mxu0 %v2454
      %2466 = vmatprep.subr.bf16.mxu0 0
      %2467 = vmatpush1.bf16.xpose.msra.mxu0 %v2451
      %2468 = vmatprep.subr.bf16.mxu0 0
      %2469 = vmatpush1.bf16.xpose.msra.mxu0 %v2448
      %2470 = vmatprep.subr.bf16.mxu0 0
      %2471 = vmatpush1.bf16.xpose.msra.mxu0 %v2445
      %2472 = vmatprep.subr.bf16.mxu0 0
      %2473 = vmatpush2.bf16.xpose.msra.mxu0 0
      %2474 = vmatprep.subr.bf16.mxu0 0
      %2475 = vmatpush2.bf16.xpose.msra.mxu0 0
      %2476 = vmatprep.subr.bf16.mxu0 0
      %2477 = vmatpush2.bf16.xpose.msra.mxu0 0
      %2478 = vmatprep.subr.bf16.mxu0 0
      %2479 = vmatpush2.bf16.xpose.msra.mxu0 0
      %2480 = vmatprep.subr.bf16.mxu0 0
      %2481 = vmatpush2.bf16.xpose.msra.mxu0 0
      %2482 = vmatprep.subr.bf16.mxu0 0
      %2483 = vmatpush2.bf16.xpose.msra.mxu0 0
      %2484 = vmatprep.subr.bf16.mxu0 0
      %2485 = vmatpush2.bf16.xpose.msra.mxu0 0
      %2486 = vmatprep.subr.bf16.mxu0 0
      %2487 = vmatpush2.bf16.xpose.msra.mxu0 0
      %2488 = vmatprep.mubr.bf16.mxu0 0
      %2489 = vmatmul.mubr.bf16.gmra.mxu0 %v2433
      %v2490 = vpop.f32.mrf.mxu0
      %v2491 = vadd.f32 %v2303, %v2490
      %v2492 = vpop.f32.mrf.mxu0
      %v2493 = vpop.f32.mrf.mxu0
      %v2494 = vadd.f32 %v2304, %v2493
      %v2495 = vpop.f32.mrf.mxu0
      %2496 = vmatprep.mubr.bf16.mxu0 0
      %2497 = vmatmul.mubr.bf16.gmra.mxu0 %v2436
      %v2498 = vpop.f32.mrf.mxu0
      %v2499 = vadd.f32 %v2305, %v2498
      %v2500 = vpop.f32.mrf.mxu0
      %v2501 = vpop.f32.mrf.mxu0
      %v2502 = vadd.f32 %v2306, %v2501
      %v2503 = vpop.f32.mrf.mxu0
      %2504 = vmatprep.mubr.bf16.mxu0 0
      %2505 = vmatmul.mubr.bf16.gmra.mxu0 %v2439
      %v2506 = vpop.f32.mrf.mxu0
      %v2507 = vadd.f32 %v2307, %v2506
      %v2508 = vpop.f32.mrf.mxu0
      %v2509 = vpop.f32.mrf.mxu0
      %v2510 = vadd.f32 %v2308, %v2509
      %v2511 = vpop.f32.mrf.mxu0
      %2512 = vmatprep.mubr.bf16.mxu0 0
      %2513 = vmatmul.mubr.bf16.gmra.mxu0 %v2442
      %v2514 = vpop.f32.mrf.mxu0
      %v2515 = vadd.f32 %v2309, %v2514
      %v2516 = vpop.f32.mrf.mxu0
      %v2517 = vpop.f32.mrf.mxu0
      %v2518 = vadd.f32 %v2310, %v2517
      %v2519 = vpop.f32.mrf.mxu0
      %2520 = vdwg.mxu0
      %2521 = vrot.lane.b32.xlu0 %v1124, 120
      %v2522 = vpop.permute.xlu0 %2521
      %2523 = vrot.lane.b32.xlu0 %v1125, 120
      %v2524 = vpop.permute.xlu0 %2523
      %2525 = vrot.lane.b32.xlu0 %v1126, 120
      %v2526 = vpop.permute.xlu0 %2525
      %2527 = vrot.lane.b32.xlu0 %v1127, 120
      %v2528 = vpop.permute.xlu0 %2527
      %2529 = vrot.lane.b32.xlu0 %v1124, 104
      %v2530 = vpop.permute.xlu0 %2529
      %2531 = vrot.lane.b32.xlu0 %v1125, 104
      %v2532 = vpop.permute.xlu0 %2531
      %2533 = vrot.lane.b32.xlu0 %v1126, 104
      %v2534 = vpop.permute.xlu0 %2533
      %2535 = vrot.lane.b32.xlu0 %v1127, 104
      %v2536 = vpop.permute.xlu0 %2535
      %v2538 = vsel %vm1152, %v2522, 0
      %v2541 = vsel %vm1152, %v2524, 0
      %v2544 = vsel %vm1152, %v2526, 0
      %v2547 = vsel %vm1152, %v2528, 0
      %v2550 = vsel %vm1152, %v2530, 0
      %v2553 = vsel %vm1152, %v2532, 0
      %v2556 = vsel %vm1152, %v2534, 0
      %v2559 = vsel %vm1152, %v2536, 0
      %2561 = vmatprep.subr.bf16.mxu0 0
      %2562 = vmatpush1.bf16.xpose.msra.mxu0 0
      %2563 = vmatprep.subr.bf16.mxu0 0
      %2564 = vmatpush1.bf16.xpose.msra.mxu0 0
      %2565 = vmatprep.subr.bf16.mxu0 0
      %2566 = vmatpush1.bf16.xpose.msra.mxu0 0
      %2567 = vmatprep.subr.bf16.mxu0 0
      %2568 = vmatpush1.bf16.xpose.msra.mxu0 0
      %2569 = vmatprep.subr.bf16.mxu0 0
      %2570 = vmatpush1.bf16.xpose.msra.mxu0 %v2559
      %2571 = vmatprep.subr.bf16.mxu0 0
      %2572 = vmatpush1.bf16.xpose.msra.mxu0 %v2556
      %2573 = vmatprep.subr.bf16.mxu0 0
      %2574 = vmatpush1.bf16.xpose.msra.mxu0 %v2553
      %2575 = vmatprep.subr.bf16.mxu0 0
      %2576 = vmatpush1.bf16.xpose.msra.mxu0 %v2550
      %2577 = vmatprep.subr.bf16.mxu0 0
      %2578 = vmatpush2.bf16.xpose.msra.mxu0 0
      %2579 = vmatprep.subr.bf16.mxu0 0
      %2580 = vmatpush2.bf16.xpose.msra.mxu0 0
      %2581 = vmatprep.subr.bf16.mxu0 0
      %2582 = vmatpush2.bf16.xpose.msra.mxu0 0
      %2583 = vmatprep.subr.bf16.mxu0 0
      %2584 = vmatpush2.bf16.xpose.msra.mxu0 0
      %2585 = vmatprep.subr.bf16.mxu0 0
      %2586 = vmatpush2.bf16.xpose.msra.mxu0 0
      %2587 = vmatprep.subr.bf16.mxu0 0
      %2588 = vmatpush2.bf16.xpose.msra.mxu0 0
      %2589 = vmatprep.subr.bf16.mxu0 0
      %2590 = vmatpush2.bf16.xpose.msra.mxu0 0
      %2591 = vmatprep.subr.bf16.mxu0 0
      %2592 = vmatpush2.bf16.xpose.msra.mxu0 0
      %2593 = vmatprep.mubr.bf16.mxu0 0
      %2594 = vmatmul.mubr.bf16.gmra.mxu0 %v2538
      %v2595 = vpop.f32.mrf.mxu0
      %v2596 = vadd.f32 %v2303, %v2595
      %v2597 = vpop.f32.mrf.mxu0
      %v2598 = vpop.f32.mrf.mxu0
      %v2599 = vadd.f32 %v2304, %v2598
      %v2600 = vpop.f32.mrf.mxu0
      %2601 = vmatprep.mubr.bf16.mxu0 0
      %2602 = vmatmul.mubr.bf16.gmra.mxu0 %v2541
      %v2603 = vpop.f32.mrf.mxu0
      %v2604 = vadd.f32 %v2305, %v2603
      %v2605 = vpop.f32.mrf.mxu0
      %v2606 = vpop.f32.mrf.mxu0
      %v2607 = vadd.f32 %v2306, %v2606
      %v2608 = vpop.f32.mrf.mxu0
      %2609 = vmatprep.mubr.bf16.mxu0 0
      %2610 = vmatmul.mubr.bf16.gmra.mxu0 %v2544
      %v2611 = vpop.f32.mrf.mxu0
      %v2612 = vadd.f32 %v2307, %v2611
      %v2613 = vpop.f32.mrf.mxu0
      %v2614 = vpop.f32.mrf.mxu0
      %v2615 = vadd.f32 %v2308, %v2614
      %v2616 = vpop.f32.mrf.mxu0
      %2617 = vmatprep.mubr.bf16.mxu0 0
      %2618 = vmatmul.mubr.bf16.gmra.mxu0 %v2547
      %v2619 = vpop.f32.mrf.mxu0
      %v2620 = vadd.f32 %v2309, %v2619
      %v2621 = vpop.f32.mrf.mxu0
      %v2622 = vpop.f32.mrf.mxu0
      %v2623 = vadd.f32 %v2310, %v2622
      %v2624 = vpop.f32.mrf.mxu0
      %2625 = vdwg.mxu0
      %2626 = vrot.lane.b32.xlu0 %v1128, 120
      %v2627 = vpop.permute.xlu0 %2626
      %2628 = vrot.lane.b32.xlu0 %v1129, 120
      %v2629 = vpop.permute.xlu0 %2628
      %2630 = vrot.lane.b32.xlu0 %v1130, 120
      %v2631 = vpop.permute.xlu0 %2630
      %2632 = vrot.lane.b32.xlu0 %v1131, 120
      %v2633 = vpop.permute.xlu0 %2632
      %2634 = vrot.lane.b32.xlu0 %v1128, 104
      %v2635 = vpop.permute.xlu0 %2634
      %2636 = vrot.lane.b32.xlu0 %v1129, 104
      %v2637 = vpop.permute.xlu0 %2636
      %2638 = vrot.lane.b32.xlu0 %v1130, 104
      %v2639 = vpop.permute.xlu0 %2638
      %2640 = vrot.lane.b32.xlu0 %v1131, 104
      %v2641 = vpop.permute.xlu0 %2640
      %v2643 = vsel %vm1152, %v2627, 0
      %v2646 = vsel %vm1152, %v2629, 0
      %v2649 = vsel %vm1152, %v2631, 0
      %v2652 = vsel %vm1152, %v2633, 0
      %v2655 = vsel %vm1152, %v2635, 0
      %v2658 = vsel %vm1152, %v2637, 0
      %v2661 = vsel %vm1152, %v2639, 0
      %v2664 = vsel %vm1152, %v2641, 0
      %2666 = vmatprep.subr.bf16.mxu0 0
      %2667 = vmatpush1.bf16.xpose.msra.mxu0 0
      %2668 = vmatprep.subr.bf16.mxu0 0
      %2669 = vmatpush1.bf16.xpose.msra.mxu0 0
      %2670 = vmatprep.subr.bf16.mxu0 0
      %2671 = vmatpush1.bf16.xpose.msra.mxu0 0
      %2672 = vmatprep.subr.bf16.mxu0 0
      %2673 = vmatpush1.bf16.xpose.msra.mxu0 0
      %2674 = vmatprep.subr.bf16.mxu0 0
      %2675 = vmatpush1.bf16.xpose.msra.mxu0 %v2664
      %2676 = vmatprep.subr.bf16.mxu0 0
      %2677 = vmatpush1.bf16.xpose.msra.mxu0 %v2661
      %2678 = vmatprep.subr.bf16.mxu0 0
      %2679 = vmatpush1.bf16.xpose.msra.mxu0 %v2658
      %2680 = vmatprep.subr.bf16.mxu0 0
      %2681 = vmatpush1.bf16.xpose.msra.mxu0 %v2655
      %2682 = vmatprep.subr.bf16.mxu0 0
      %2683 = vmatpush2.bf16.xpose.msra.mxu0 0
      %2684 = vmatprep.subr.bf16.mxu0 0
      %2685 = vmatpush2.bf16.xpose.msra.mxu0 0
      %2686 = vmatprep.subr.bf16.mxu0 0
      %2687 = vmatpush2.bf16.xpose.msra.mxu0 0
      %2688 = vmatprep.subr.bf16.mxu0 0
      %2689 = vmatpush2.bf16.xpose.msra.mxu0 0
      %2690 = vmatprep.subr.bf16.mxu0 0
      %2691 = vmatpush2.bf16.xpose.msra.mxu0 0
      %2692 = vmatprep.subr.bf16.mxu0 0
      %2693 = vmatpush2.bf16.xpose.msra.mxu0 0
      %2694 = vmatprep.subr.bf16.mxu0 0
      %2695 = vmatpush2.bf16.xpose.msra.mxu0 0
      %2696 = vmatprep.subr.bf16.mxu0 0
      %2697 = vmatpush2.bf16.xpose.msra.mxu0 0
      %2698 = vmatprep.mubr.bf16.mxu0 0
      %2699 = vmatmul.mubr.bf16.gmra.mxu0 %v2643
      %v2700 = vpop.f32.mrf.mxu0
      %v2701 = vadd.f32 %v2303, %v2700
      %v2702 = vpop.f32.mrf.mxu0
      %v2703 = vpop.f32.mrf.mxu0
      %v2704 = vadd.f32 %v2304, %v2703
      %v2705 = vpop.f32.mrf.mxu0
      %2706 = vmatprep.mubr.bf16.mxu0 0
      %2707 = vmatmul.mubr.bf16.gmra.mxu0 %v2646
      %v2708 = vpop.f32.mrf.mxu0
      %v2709 = vadd.f32 %v2305, %v2708
      %v2710 = vpop.f32.mrf.mxu0
      %v2711 = vpop.f32.mrf.mxu0
      %v2712 = vadd.f32 %v2306, %v2711
      %v2713 = vpop.f32.mrf.mxu0
      %2714 = vmatprep.mubr.bf16.mxu0 0
      %2715 = vmatmul.mubr.bf16.gmra.mxu0 %v2649
      %v2716 = vpop.f32.mrf.mxu0
      %v2717 = vadd.f32 %v2307, %v2716
      %v2718 = vpop.f32.mrf.mxu0
      %v2719 = vpop.f32.mrf.mxu0
      %v2720 = vadd.f32 %v2308, %v2719
      %v2721 = vpop.f32.mrf.mxu0
      %2722 = vmatprep.mubr.bf16.mxu0 0
      %2723 = vmatmul.mubr.bf16.gmra.mxu0 %v2652
      %v2724 = vpop.f32.mrf.mxu0
      %v2725 = vadd.f32 %v2309, %v2724
      %v2726 = vpop.f32.mrf.mxu0
      %v2727 = vpop.f32.mrf.mxu0
      %v2728 = vadd.f32 %v2310, %v2727
      %v2729 = vpop.f32.mrf.mxu0
      %2730 = vdwg.mxu0
      %v2731 = vadd.f32 %v2386, %v1084
      %v2732 = vadd.f32 %v2389, %v1085
      %v2733 = vadd.f32 %v2394, %v1086
      %v2734 = vadd.f32 %v2397, %v1087
      %v2735 = vadd.f32 %v2402, %v1088
      %v2736 = vadd.f32 %v2405, %v1089
      %v2737 = vadd.f32 %v2410, %v1090
      %v2738 = vadd.f32 %v2413, %v1091
      %v2739 = vadd.f32 %v2491, %v1092
      %v2740 = vadd.f32 %v2494, %v1093
      %v2741 = vadd.f32 %v2499, %v1094
      %v2742 = vadd.f32 %v2502, %v1095
      %v2743 = vadd.f32 %v2507, %v1096
      %v2744 = vadd.f32 %v2510, %v1097
      %v2745 = vadd.f32 %v2515, %v1098
      %v2746 = vadd.f32 %v2518, %v1099
      %v2747 = vadd.f32 %v2596, %v1100
      %v2748 = vadd.f32 %v2599, %v1101
      %v2749 = vadd.f32 %v2604, %v1102
      %v2750 = vadd.f32 %v2607, %v1103
      %v2751 = vadd.f32 %v2612, %v1104
      %v2752 = vadd.f32 %v2615, %v1105
      %v2753 = vadd.f32 %v2620, %v1106
      %v2754 = vadd.f32 %v2623, %v1107
      %v2755 = vadd.f32 %v2701, %v1108
      %v2756 = vadd.f32 %v2704, %v1109
      %v2757 = vadd.f32 %v2709, %v1110
      %v2758 = vadd.f32 %v2712, %v1111
      %v2759 = vadd.f32 %v2717, %v1112
      %v2760 = vadd.f32 %v2720, %v1113
      %v2761 = vadd.f32 %v2725, %v1114
      %v2762 = vadd.f32 %v2728, %v1115
      %v2763 = vsel %vm1577, %v2731, -inf
      %2764 = vmax.xlane.f32.xlu0 %v2763
      %v2765 = vpop.xlane.xlu0 %2764
      %v2766 = vsel %vm1577, %v2732, -inf
      %2767 = vmax.xlane.f32.xlu0 %v2766
      %v2768 = vpop.xlane.xlu0 %2767
      %v2769 = vsel %vm1577, %v2733, -inf
      %2770 = vmax.xlane.f32.xlu0 %v2769
      %v2771 = vpop.xlane.xlu0 %2770
      %v2772 = vsel %vm1577, %v2734, -inf
      %2773 = vmax.xlane.f32.xlu0 %v2772
      %v2774 = vpop.xlane.xlu0 %2773
      %v2775 = vsel %vm1577, %v2735, -inf
      %2776 = vmax.xlane.f32.xlu0 %v2775
      %v2777 = vpop.xlane.xlu0 %2776
      %v2778 = vsel %vm1577, %v2736, -inf
      %2779 = vmax.xlane.f32.xlu0 %v2778
      %v2780 = vpop.xlane.xlu0 %2779
      %v2781 = vsel %vm1577, %v2737, -inf
      %2782 = vmax.xlane.f32.xlu0 %v2781
      %v2783 = vpop.xlane.xlu0 %2782
      %v2784 = vsel %vm1577, %v2738, -inf
      %2785 = vmax.xlane.f32.xlu0 %v2784
      %v2786 = vpop.xlane.xlu0 %2785
      %v2787 = vsel %vm1577, %v2739, -inf
      %2788 = vmax.xlane.f32.xlu0 %v2787
      %v2789 = vpop.xlane.xlu0 %2788
      %v2790 = vsel %vm1577, %v2740, -inf
      %2791 = vmax.xlane.f32.xlu0 %v2790
      %v2792 = vpop.xlane.xlu0 %2791
      %v2793 = vsel %vm1577, %v2741, -inf
      %2794 = vmax.xlane.f32.xlu0 %v2793
      %v2795 = vpop.xlane.xlu0 %2794
      %v2796 = vsel %vm1577, %v2742, -inf
      %2797 = vmax.xlane.f32.xlu0 %v2796
      %v2798 = vpop.xlane.xlu0 %2797
      %v2799 = vsel %vm1577, %v2743, -inf
      %2800 = vmax.xlane.f32.xlu0 %v2799
      %v2801 = vpop.xlane.xlu0 %2800
      %v2802 = vsel %vm1577, %v2744, -inf
      %2803 = vmax.xlane.f32.xlu0 %v2802
      %v2804 = vpop.xlane.xlu0 %2803
      %v2805 = vsel %vm1577, %v2745, -inf
      %2806 = vmax.xlane.f32.xlu0 %v2805
      %v2807 = vpop.xlane.xlu0 %2806
      %v2808 = vsel %vm1577, %v2746, -inf
      %2809 = vmax.xlane.f32.xlu0 %v2808
      %v2810 = vpop.xlane.xlu0 %2809
      %v2811 = vsel %vm1577, %v2747, -inf
      %2812 = vmax.xlane.f32.xlu0 %v2811
      %v2813 = vpop.xlane.xlu0 %2812
      %v2814 = vsel %vm1577, %v2748, -inf
      %2815 = vmax.xlane.f32.xlu0 %v2814
      %v2816 = vpop.xlane.xlu0 %2815
      %v2817 = vsel %vm1577, %v2749, -inf
      %2818 = vmax.xlane.f32.xlu0 %v2817
      %v2819 = vpop.xlane.xlu0 %2818
      %v2820 = vsel %vm1577, %v2750, -inf
      %2821 = vmax.xlane.f32.xlu0 %v2820
      %v2822 = vpop.xlane.xlu0 %2821
      %v2823 = vsel %vm1577, %v2751, -inf
      %2824 = vmax.xlane.f32.xlu0 %v2823
      %v2825 = vpop.xlane.xlu0 %2824
      %v2826 = vsel %vm1577, %v2752, -inf
      %2827 = vmax.xlane.f32.xlu0 %v2826
      %v2828 = vpop.xlane.xlu0 %2827
      %v2829 = vsel %vm1577, %v2753, -inf
      %2830 = vmax.xlane.f32.xlu0 %v2829
      %v2831 = vpop.xlane.xlu0 %2830
      %v2832 = vsel %vm1577, %v2754, -inf
      %2833 = vmax.xlane.f32.xlu0 %v2832
      %v2834 = vpop.xlane.xlu0 %2833
      %v2835 = vsel %vm1577, %v2755, -inf
      %2836 = vmax.xlane.f32.xlu0 %v2835
      %v2837 = vpop.xlane.xlu0 %2836
      %v2838 = vsel %vm1577, %v2756, -inf
      %2839 = vmax.xlane.f32.xlu0 %v2838
      %v2840 = vpop.xlane.xlu0 %2839
      %v2841 = vsel %vm1577, %v2757, -inf
      %2842 = vmax.xlane.f32.xlu0 %v2841
      %v2843 = vpop.xlane.xlu0 %2842
      %v2844 = vsel %vm1577, %v2758, -inf
      %2845 = vmax.xlane.f32.xlu0 %v2844
      %v2846 = vpop.xlane.xlu0 %2845
      %v2847 = vsel %vm1577, %v2759, -inf
      %2848 = vmax.xlane.f32.xlu0 %v2847
      %v2849 = vpop.xlane.xlu0 %2848
      %v2850 = vsel %vm1577, %v2760, -inf
      %2851 = vmax.xlane.f32.xlu0 %v2850
      %v2852 = vpop.xlane.xlu0 %2851
      %v2853 = vsel %vm1577, %v2761, -inf
      %2854 = vmax.xlane.f32.xlu0 %v2853
      %v2855 = vpop.xlane.xlu0 %2854
      %v2856 = vsel %vm1577, %v2762, -inf
      %2857 = vmax.xlane.f32.xlu0 %v2856
      %v2858 = vpop.xlane.xlu0 %2857
      %v2859 = vsub.f32 %v2731, %v2765
      %v2860 = vsub.f32 %v2732, %v2768
      %v2861 = vsub.f32 %v2733, %v2771
      %v2862 = vsub.f32 %v2734, %v2774
      %v2863 = vsub.f32 %v2735, %v2777
      %v2864 = vsub.f32 %v2736, %v2780
      %v2865 = vsub.f32 %v2737, %v2783
      %v2866 = vsub.f32 %v2738, %v2786
      %v2867 = vsub.f32 %v2739, %v2789
      %v2868 = vsub.f32 %v2740, %v2792
      %v2869 = vsub.f32 %v2741, %v2795
      %v2870 = vsub.f32 %v2742, %v2798
      %v2871 = vsub.f32 %v2743, %v2801
      %v2872 = vsub.f32 %v2744, %v2804
      %v2873 = vsub.f32 %v2745, %v2807
      %v2874 = vsub.f32 %v2746, %v2810
      %v2875 = vsub.f32 %v2747, %v2813
      %v2876 = vsub.f32 %v2748, %v2816
      %v2877 = vsub.f32 %v2749, %v2819
      %v2878 = vsub.f32 %v2750, %v2822
      %v2879 = vsub.f32 %v2751, %v2825
      %v2880 = vsub.f32 %v2752, %v2828
      %v2881 = vsub.f32 %v2753, %v2831
      %v2882 = vsub.f32 %v2754, %v2834
      %v2883 = vsub.f32 %v2755, %v2837
      %v2884 = vsub.f32 %v2756, %v2840
      %v2885 = vsub.f32 %v2757, %v2843
      %v2886 = vsub.f32 %v2758, %v2846
      %v2887 = vsub.f32 %v2759, %v2849
      %v2888 = vsub.f32 %v2760, %v2852
      %v2889 = vsub.f32 %v2761, %v2855
      %v2890 = vsub.f32 %v2762, %v2858
      %v2891 = vmul.f32 %v2859, 1.442695
      %v2892 = vpow.pop %v2891
      %v2893 = vmul.f32 %v2860, 1.442695
      %v2894 = vpow.pop %v2893
      %v2895 = vmul.f32 %v2861, 1.442695
      %v2896 = vpow.pop %v2895
      %v2897 = vmul.f32 %v2862, 1.442695
      %v2898 = vpow.pop %v2897
      %v2899 = vmul.f32 %v2863, 1.442695
      %v2900 = vpow.pop %v2899
      %v2901 = vmul.f32 %v2864, 1.442695
      %v2902 = vpow.pop %v2901
      %v2903 = vmul.f32 %v2865, 1.442695
      %v2904 = vpow.pop %v2903
      %v2905 = vmul.f32 %v2866, 1.442695
      %v2906 = vpow.pop %v2905
      %v2907 = vmul.f32 %v2867, 1.442695
      %v2908 = vpow.pop %v2907
      %v2909 = vmul.f32 %v2868, 1.442695
      %v2910 = vpow.pop %v2909
      %v2911 = vmul.f32 %v2869, 1.442695
      %v2912 = vpow.pop %v2911
      %v2913 = vmul.f32 %v2870, 1.442695
      %v2914 = vpow.pop %v2913
      %v2915 = vmul.f32 %v2871, 1.442695
      %v2916 = vpow.pop %v2915
      %v2917 = vmul.f32 %v2872, 1.442695
      %v2918 = vpow.pop %v2917
      %v2919 = vmul.f32 %v2873, 1.442695
      %v2920 = vpow.pop %v2919
      %v2921 = vmul.f32 %v2874, 1.442695
      %v2922 = vpow.pop %v2921
      %v2923 = vmul.f32 %v2875, 1.442695
      %v2924 = vpow.pop %v2923
      %v2925 = vmul.f32 %v2876, 1.442695
      %v2926 = vpow.pop %v2925
      %v2927 = vmul.f32 %v2877, 1.442695
      %v2928 = vpow.pop %v2927
      %v2929 = vmul.f32 %v2878, 1.442695
      %v2930 = vpow.pop %v2929
      %v2931 = vmul.f32 %v2879, 1.442695
      %v2932 = vpow.pop %v2931
      %v2933 = vmul.f32 %v2880, 1.442695
      %v2934 = vpow.pop %v2933
      %v2935 = vmul.f32 %v2881, 1.442695
      %v2936 = vpow.pop %v2935
      %v2937 = vmul.f32 %v2882, 1.442695
      %v2938 = vpow.pop %v2937
      %v2939 = vmul.f32 %v2883, 1.442695
      %v2940 = vpow.pop %v2939
      %v2941 = vmul.f32 %v2884, 1.442695
      %v2942 = vpow.pop %v2941
      %v2943 = vmul.f32 %v2885, 1.442695
      %v2944 = vpow.pop %v2943
      %v2945 = vmul.f32 %v2886, 1.442695
      %v2946 = vpow.pop %v2945
      %v2947 = vmul.f32 %v2887, 1.442695
      %v2948 = vpow.pop %v2947
      %v2949 = vmul.f32 %v2888, 1.442695
      %v2950 = vpow.pop %v2949
      %v2951 = vmul.f32 %v2889, 1.442695
      %v2952 = vpow.pop %v2951
      %v2953 = vmul.f32 %v2890, 1.442695
      %v2954 = vpow.pop %v2953
      %v2955 = vsel %vm1577, %v2892, 0.0
      %2956 = vadd.xlane.f32.xlu0 %v2955
      %v2957 = vpop.xlane.xlu0 %2956
      %v2958 = vsel %vm1577, %v2894, 0.0
      %2959 = vadd.xlane.f32.xlu0 %v2958
      %v2960 = vpop.xlane.xlu0 %2959
      %v2961 = vsel %vm1577, %v2896, 0.0
      %2962 = vadd.xlane.f32.xlu0 %v2961
      %v2963 = vpop.xlane.xlu0 %2962
      %v2964 = vsel %vm1577, %v2898, 0.0
      %2965 = vadd.xlane.f32.xlu0 %v2964
      %v2966 = vpop.xlane.xlu0 %2965
      %v2967 = vsel %vm1577, %v2900, 0.0
      %2968 = vadd.xlane.f32.xlu0 %v2967
      %v2969 = vpop.xlane.xlu0 %2968
      %v2970 = vsel %vm1577, %v2902, 0.0
      %2971 = vadd.xlane.f32.xlu0 %v2970
      %v2972 = vpop.xlane.xlu0 %2971
      %v2973 = vsel %vm1577, %v2904, 0.0
      %2974 = vadd.xlane.f32.xlu0 %v2973
      %v2975 = vpop.xlane.xlu0 %2974
      %v2976 = vsel %vm1577, %v2906, 0.0
      %2977 = vadd.xlane.f32.xlu0 %v2976
      %v2978 = vpop.xlane.xlu0 %2977
      %v2979 = vsel %vm1577, %v2908, 0.0
      %2980 = vadd.xlane.f32.xlu0 %v2979
      %v2981 = vpop.xlane.xlu0 %2980
      %v2982 = vsel %vm1577, %v2910, 0.0
      %2983 = vadd.xlane.f32.xlu0 %v2982
      %v2984 = vpop.xlane.xlu0 %2983
      %v2985 = vsel %vm1577, %v2912, 0.0
      %2986 = vadd.xlane.f32.xlu0 %v2985
      %v2987 = vpop.xlane.xlu0 %2986
      %v2988 = vsel %vm1577, %v2914, 0.0
      %2989 = vadd.xlane.f32.xlu0 %v2988
      %v2990 = vpop.xlane.xlu0 %2989
      %v2991 = vsel %vm1577, %v2916, 0.0
      %2992 = vadd.xlane.f32.xlu0 %v2991
      %v2993 = vpop.xlane.xlu0 %2992
      %v2994 = vsel %vm1577, %v2918, 0.0
      %2995 = vadd.xlane.f32.xlu0 %v2994
      %v2996 = vpop.xlane.xlu0 %2995
      %v2997 = vsel %vm1577, %v2920, 0.0
      %2998 = vadd.xlane.f32.xlu0 %v2997
      %v2999 = vpop.xlane.xlu0 %2998
      %v3000 = vsel %vm1577, %v2922, 0.0
      %3001 = vadd.xlane.f32.xlu0 %v3000
      %v3002 = vpop.xlane.xlu0 %3001
      %v3003 = vsel %vm1577, %v2924, 0.0
      %3004 = vadd.xlane.f32.xlu0 %v3003
      %v3005 = vpop.xlane.xlu0 %3004
      %v3006 = vsel %vm1577, %v2926, 0.0
      %3007 = vadd.xlane.f32.xlu0 %v3006
      %v3008 = vpop.xlane.xlu0 %3007
      %v3009 = vsel %vm1577, %v2928, 0.0
      %3010 = vadd.xlane.f32.xlu0 %v3009
      %v3011 = vpop.xlane.xlu0 %3010
      %v3012 = vsel %vm1577, %v2930, 0.0
      %3013 = vadd.xlane.f32.xlu0 %v3012
      %v3014 = vpop.xlane.xlu0 %3013
      %v3015 = vsel %vm1577, %v2932, 0.0
      %3016 = vadd.xlane.f32.xlu0 %v3015
      %v3017 = vpop.xlane.xlu0 %3016
      %v3018 = vsel %vm1577, %v2934, 0.0
      %3019 = vadd.xlane.f32.xlu0 %v3018
      %v3020 = vpop.xlane.xlu0 %3019
      %v3021 = vsel %vm1577, %v2936, 0.0
      %3022 = vadd.xlane.f32.xlu0 %v3021
      %v3023 = vpop.xlane.xlu0 %3022
      %v3024 = vsel %vm1577, %v2938, 0.0
      %3025 = vadd.xlane.f32.xlu0 %v3024
      %v3026 = vpop.xlane.xlu0 %3025
      %v3027 = vsel %vm1577, %v2940, 0.0
      %3028 = vadd.xlane.f32.xlu0 %v3027
      %v3029 = vpop.xlane.xlu0 %3028
      %v3030 = vsel %vm1577, %v2942, 0.0
      %3031 = vadd.xlane.f32.xlu0 %v3030
      %v3032 = vpop.xlane.xlu0 %3031
      %v3033 = vsel %vm1577, %v2944, 0.0
      %3034 = vadd.xlane.f32.xlu0 %v3033
      %v3035 = vpop.xlane.xlu0 %3034
      %v3036 = vsel %vm1577, %v2946, 0.0
      %3037 = vadd.xlane.f32.xlu0 %v3036
      %v3038 = vpop.xlane.xlu0 %3037
      %v3039 = vsel %vm1577, %v2948, 0.0
      %3040 = vadd.xlane.f32.xlu0 %v3039
      %v3041 = vpop.xlane.xlu0 %3040
      %v3042 = vsel %vm1577, %v2950, 0.0
      %3043 = vadd.xlane.f32.xlu0 %v3042
      %v3044 = vpop.xlane.xlu0 %3043
      %v3045 = vsel %vm1577, %v2952, 0.0
      %3046 = vadd.xlane.f32.xlu0 %v3045
      %v3047 = vpop.xlane.xlu0 %3046
      %v3048 = vsel %vm1577, %v2954, 0.0
      %3049 = vadd.xlane.f32.xlu0 %v3048
      %v3050 = vpop.xlane.xlu0 %3049
      %v3051 = vrcp.pop %v2957
      %v3052 = vrcp.pop %v2960
      %v3053 = vrcp.pop %v2963
      %v3054 = vrcp.pop %v2966
      %v3055 = vrcp.pop %v2969
      %v3056 = vrcp.pop %v2972
      %v3057 = vrcp.pop %v2975
      %v3058 = vrcp.pop %v2978
      %v3059 = vrcp.pop %v2981
      %v3060 = vrcp.pop %v2984
      %v3061 = vrcp.pop %v2987
      %v3062 = vrcp.pop %v2990
      %v3063 = vrcp.pop %v2993
      %v3064 = vrcp.pop %v2996
      %v3065 = vrcp.pop %v2999
      %v3066 = vrcp.pop %v3002
      %v3067 = vrcp.pop %v3005
      %v3068 = vrcp.pop %v3008
      %v3069 = vrcp.pop %v3011
      %v3070 = vrcp.pop %v3014
      %v3071 = vrcp.pop %v3017
      %v3072 = vrcp.pop %v3020
      %v3073 = vrcp.pop %v3023
      %v3074 = vrcp.pop %v3026
      %v3075 = vrcp.pop %v3029
      %v3076 = vrcp.pop %v3032
      %v3077 = vrcp.pop %v3035
      %v3078 = vrcp.pop %v3038
      %v3079 = vrcp.pop %v3041
      %v3080 = vrcp.pop %v3044
      %v3081 = vrcp.pop %v3047
      %v3082 = vrcp.pop %v3050
      %v3083 = vmul.f32 %v2892, %v3051
      %v3084 = vmul.f32 %v2894, %v3052
      %v3085 = vmul.f32 %v2896, %v3053
      %v3086 = vmul.f32 %v2898, %v3054
      %v3087 = vmul.f32 %v2900, %v3055
      %v3088 = vmul.f32 %v2902, %v3056
      %v3089 = vmul.f32 %v2904, %v3057
      %v3090 = vmul.f32 %v2906, %v3058
      %v3091 = vmul.f32 %v2908, %v3059
      %v3092 = vmul.f32 %v2910, %v3060
      %v3093 = vmul.f32 %v2912, %v3061
      %v3094 = vmul.f32 %v2914, %v3062
      %v3095 = vmul.f32 %v2916, %v3063
      %v3096 = vmul.f32 %v2918, %v3064
      %v3097 = vmul.f32 %v2920, %v3065
      %v3098 = vmul.f32 %v2922, %v3066
      %v3099 = vmul.f32 %v2924, %v3067
      %v3100 = vmul.f32 %v2926, %v3068
      %v3101 = vmul.f32 %v2928, %v3069
      %v3102 = vmul.f32 %v2930, %v3070
      %v3103 = vmul.f32 %v2932, %v3071
      %v3104 = vmul.f32 %v2934, %v3072
      %v3105 = vmul.f32 %v2936, %v3073
      %v3106 = vmul.f32 %v2938, %v3074
      %v3107 = vmul.f32 %v2940, %v3075
      %v3108 = vmul.f32 %v2942, %v3076
      %v3109 = vmul.f32 %v2944, %v3077
      %v3110 = vmul.f32 %v2946, %v3078
      %v3111 = vmul.f32 %v2948, %v3079
      %v3112 = vmul.f32 %v2950, %v3080
      %v3113 = vmul.f32 %v2952, %v3081
      %v3114 = vmul.f32 %v2954, %v3082
      %v3115 = vpack.c.bf16 %v3084, %v3083
      %v3116 = vpack.c.bf16 %v3086, %v3085
      %v3117 = vpack.c.bf16 %v3088, %v3087
      %v3118 = vpack.c.bf16 %v3090, %v3089
      %v3119 = vpack.c.bf16 %v3092, %v3091
      %v3120 = vpack.c.bf16 %v3094, %v3093
      %v3121 = vpack.c.bf16 %v3096, %v3095
      %v3122 = vpack.c.bf16 %v3098, %v3097
      %v3123 = vpack.c.bf16 %v3100, %v3099
      %v3124 = vpack.c.bf16 %v3102, %v3101
      %v3125 = vpack.c.bf16 %v3104, %v3103
      %v3126 = vpack.c.bf16 %v3106, %v3105
      %v3127 = vpack.c.bf16 %v3108, %v3107
      %v3128 = vpack.c.bf16 %v3110, %v3109
      %v3129 = vpack.c.bf16 %v3112, %v3111
      %v3130 = vpack.c.bf16 %v3114, %v3113
      %3131 = vrot.lane.b32.xlu0 %v1116, 88
      %v3132 = vpop.permute.xlu0 %3131
      %3133 = vrot.lane.b32.xlu0 %v1117, 88
      %v3134 = vpop.permute.xlu0 %3133
      %3135 = vrot.lane.b32.xlu0 %v1118, 88
      %v3136 = vpop.permute.xlu0 %3135
      %3137 = vrot.lane.b32.xlu0 %v1119, 88
      %v3138 = vpop.permute.xlu0 %3137
      %v3144 = vsel %vm1577, %v3115, 0
      %v3147 = vsel %vm1577, %v3116, 0
      %v3150 = vsel %vm1577, %v3117, 0
      %v3153 = vsel %vm1577, %v3118, 0
      %3155 = vmatprep.subr.bf16.mxu0 0
      %3156 = vmatpush1.bf16.msra.mxu0 0
      %3157 = vmatprep.subr.bf16.mxu0 0
      %3158 = vmatpush1.bf16.msra.mxu0 0
      %3159 = vmatprep.subr.bf16.mxu0 0
      %3160 = vmatpush1.bf16.msra.mxu0 0
      %3161 = vmatprep.subr.bf16.mxu0 0
      %3162 = vmatpush1.bf16.msra.mxu0 0
      %3163 = vmatprep.subr.bf16.mxu0 0
      %3164 = vmatpush1.bf16.msra.mxu0 %v3138
      %3165 = vmatprep.subr.bf16.mxu0 0
      %3166 = vmatpush1.bf16.msra.mxu0 %v3136
      %3167 = vmatprep.subr.bf16.mxu0 0
      %3168 = vmatpush1.bf16.msra.mxu0 %v3134
      %3169 = vmatprep.subr.bf16.mxu0 0
      %3170 = vmatpush1.bf16.msra.mxu0 %v3132
      %3171 = vmatprep.subr.bf16.mxu0 0
      %3172 = vmatpush2.bf16.msra.mxu0 0
      %3173 = vmatprep.subr.bf16.mxu0 0
      %3174 = vmatpush2.bf16.msra.mxu0 0
      %3175 = vmatprep.subr.bf16.mxu0 0
      %3176 = vmatpush2.bf16.msra.mxu0 0
      %3177 = vmatprep.subr.bf16.mxu0 0
      %3178 = vmatpush2.bf16.msra.mxu0 0
      %3179 = vmatprep.subr.bf16.mxu0 0
      %3180 = vmatpush2.bf16.msra.mxu0 0
      %3181 = vmatprep.subr.bf16.mxu0 0
      %3182 = vmatpush2.bf16.msra.mxu0 0
      %3183 = vmatprep.subr.bf16.mxu0 0
      %3184 = vmatpush2.bf16.msra.mxu0 0
      %3185 = vmatprep.subr.bf16.mxu0 0
      %3186 = vmatpush2.bf16.msra.mxu0 0
      %3187 = vmatprep.mubr.bf16.mxu0 0
      %3188 = vmatmul.mubr.bf16.gmra.mxu0 %v3144
      %v3189 = vpop.f32.mrf.mxu0
      %v3190 = vadd.f32 0.0, %v3189
      %v3191 = vpop.f32.mrf.mxu0
      %v3192 = vpop.f32.mrf.mxu0
      %v3193 = vadd.f32 0.0, %v3192
      %v3194 = vpop.f32.mrf.mxu0
      %3195 = vmatprep.mubr.bf16.mxu0 0
      %3196 = vmatmul.mubr.bf16.gmra.mxu0 %v3147
      %v3197 = vpop.f32.mrf.mxu0
      %v3198 = vadd.f32 0.0, %v3197
      %v3199 = vpop.f32.mrf.mxu0
      %v3200 = vpop.f32.mrf.mxu0
      %v3201 = vadd.f32 0.0, %v3200
      %v3202 = vpop.f32.mrf.mxu0
      %3203 = vmatprep.mubr.bf16.mxu0 0
      %3204 = vmatmul.mubr.bf16.gmra.mxu0 %v3150
      %v3205 = vpop.f32.mrf.mxu0
      %v3206 = vadd.f32 0.0, %v3205
      %v3207 = vpop.f32.mrf.mxu0
      %v3208 = vpop.f32.mrf.mxu0
      %v3209 = vadd.f32 0.0, %v3208
      %v3210 = vpop.f32.mrf.mxu0
      %3211 = vmatprep.mubr.bf16.mxu0 0
      %3212 = vmatmul.mubr.bf16.gmra.mxu0 %v3153
      %v3213 = vpop.f32.mrf.mxu0
      %v3214 = vadd.f32 0.0, %v3213
      %v3215 = vpop.f32.mrf.mxu0
      %v3216 = vpop.f32.mrf.mxu0
      %v3217 = vadd.f32 0.0, %v3216
      %v3218 = vpop.f32.mrf.mxu0
      %3219 = vdwg.mxu0
      %3220 = vrot.lane.b32.xlu0 %v1120, 88
      %v3221 = vpop.permute.xlu0 %3220
      %3222 = vrot.lane.b32.xlu0 %v1121, 88
      %v3223 = vpop.permute.xlu0 %3222
      %3224 = vrot.lane.b32.xlu0 %v1122, 88
      %v3225 = vpop.permute.xlu0 %3224
      %3226 = vrot.lane.b32.xlu0 %v1123, 88
      %v3227 = vpop.permute.xlu0 %3226
      %v3233 = vsel %vm1577, %v3119, 0
      %v3236 = vsel %vm1577, %v3120, 0
      %v3239 = vsel %vm1577, %v3121, 0
      %v3242 = vsel %vm1577, %v3122, 0
      %3244 = vmatprep.subr.bf16.mxu0 0
      %3245 = vmatpush1.bf16.msra.mxu0 0
      %3246 = vmatprep.subr.bf16.mxu0 0
      %3247 = vmatpush1.bf16.msra.mxu0 0
      %3248 = vmatprep.subr.bf16.mxu0 0
      %3249 = vmatpush1.bf16.msra.mxu0 0
      %3250 = vmatprep.subr.bf16.mxu0 0
      %3251 = vmatpush1.bf16.msra.mxu0 0
      %3252 = vmatprep.subr.bf16.mxu0 0
      %3253 = vmatpush1.bf16.msra.mxu0 %v3227
      %3254 = vmatprep.subr.bf16.mxu0 0
      %3255 = vmatpush1.bf16.msra.mxu0 %v3225
      %3256 = vmatprep.subr.bf16.mxu0 0
      %3257 = vmatpush1.bf16.msra.mxu0 %v3223
      %3258 = vmatprep.subr.bf16.mxu0 0
      %3259 = vmatpush1.bf16.msra.mxu0 %v3221
      %3260 = vmatprep.subr.bf16.mxu0 0
      %3261 = vmatpush2.bf16.msra.mxu0 0
      %3262 = vmatprep.subr.bf16.mxu0 0
      %3263 = vmatpush2.bf16.msra.mxu0 0
      %3264 = vmatprep.subr.bf16.mxu0 0
      %3265 = vmatpush2.bf16.msra.mxu0 0
      %3266 = vmatprep.subr.bf16.mxu0 0
      %3267 = vmatpush2.bf16.msra.mxu0 0
      %3268 = vmatprep.subr.bf16.mxu0 0
      %3269 = vmatpush2.bf16.msra.mxu0 0
      %3270 = vmatprep.subr.bf16.mxu0 0
      %3271 = vmatpush2.bf16.msra.mxu0 0
      %3272 = vmatprep.subr.bf16.mxu0 0
      %3273 = vmatpush2.bf16.msra.mxu0 0
      %3274 = vmatprep.subr.bf16.mxu0 0
      %3275 = vmatpush2.bf16.msra.mxu0 0
      %3276 = vmatprep.mubr.bf16.mxu0 0
      %3277 = vmatmul.mubr.bf16.gmra.mxu0 %v3233
      %v3278 = vpop.f32.mrf.mxu0
      %v3279 = vadd.f32 0.0, %v3278
      %v3280 = vpop.f32.mrf.mxu0
      %v3281 = vpop.f32.mrf.mxu0
      %v3282 = vadd.f32 0.0, %v3281
      %v3283 = vpop.f32.mrf.mxu0
      %3284 = vmatprep.mubr.bf16.mxu0 0
      %3285 = vmatmul.mubr.bf16.gmra.mxu0 %v3236
      %v3286 = vpop.f32.mrf.mxu0
      %v3287 = vadd.f32 0.0, %v3286
      %v3288 = vpop.f32.mrf.mxu0
      %v3289 = vpop.f32.mrf.mxu0
      %v3290 = vadd.f32 0.0, %v3289
      %v3291 = vpop.f32.mrf.mxu0
      %3292 = vmatprep.mubr.bf16.mxu0 0
      %3293 = vmatmul.mubr.bf16.gmra.mxu0 %v3239
      %v3294 = vpop.f32.mrf.mxu0
      %v3295 = vadd.f32 0.0, %v3294
      %v3296 = vpop.f32.mrf.mxu0
      %v3297 = vpop.f32.mrf.mxu0
      %v3298 = vadd.f32 0.0, %v3297
      %v3299 = vpop.f32.mrf.mxu0
      %3300 = vmatprep.mubr.bf16.mxu0 0
      %3301 = vmatmul.mubr.bf16.gmra.mxu0 %v3242
      %v3302 = vpop.f32.mrf.mxu0
      %v3303 = vadd.f32 0.0, %v3302
      %v3304 = vpop.f32.mrf.mxu0
      %v3305 = vpop.f32.mrf.mxu0
      %v3306 = vadd.f32 0.0, %v3305
      %v3307 = vpop.f32.mrf.mxu0
      %3308 = vdwg.mxu0
      %3309 = vrot.lane.b32.xlu0 %v1124, 88
      %v3310 = vpop.permute.xlu0 %3309
      %3311 = vrot.lane.b32.xlu0 %v1125, 88
      %v3312 = vpop.permute.xlu0 %3311
      %3313 = vrot.lane.b32.xlu0 %v1126, 88
      %v3314 = vpop.permute.xlu0 %3313
      %3315 = vrot.lane.b32.xlu0 %v1127, 88
      %v3316 = vpop.permute.xlu0 %3315
      %v3322 = vsel %vm1577, %v3123, 0
      %v3325 = vsel %vm1577, %v3124, 0
      %v3328 = vsel %vm1577, %v3125, 0
      %v3331 = vsel %vm1577, %v3126, 0
      %3333 = vmatprep.subr.bf16.mxu0 0
      %3334 = vmatpush1.bf16.msra.mxu0 0
      %3335 = vmatprep.subr.bf16.mxu0 0
      %3336 = vmatpush1.bf16.msra.mxu0 0
      %3337 = vmatprep.subr.bf16.mxu0 0
      %3338 = vmatpush1.bf16.msra.mxu0 0
      %3339 = vmatprep.subr.bf16.mxu0 0
      %3340 = vmatpush1.bf16.msra.mxu0 0
      %3341 = vmatprep.subr.bf16.mxu0 0
      %3342 = vmatpush1.bf16.msra.mxu0 %v3316
      %3343 = vmatprep.subr.bf16.mxu0 0
      %3344 = vmatpush1.bf16.msra.mxu0 %v3314
      %3345 = vmatprep.subr.bf16.mxu0 0
      %3346 = vmatpush1.bf16.msra.mxu0 %v3312
      %3347 = vmatprep.subr.bf16.mxu0 0
      %3348 = vmatpush1.bf16.msra.mxu0 %v3310
      %3349 = vmatprep.subr.bf16.mxu0 0
      %3350 = vmatpush2.bf16.msra.mxu0 0
      %3351 = vmatprep.subr.bf16.mxu0 0
      %3352 = vmatpush2.bf16.msra.mxu0 0
      %3353 = vmatprep.subr.bf16.mxu0 0
      %3354 = vmatpush2.bf16.msra.mxu0 0
      %3355 = vmatprep.subr.bf16.mxu0 0
      %3356 = vmatpush2.bf16.msra.mxu0 0
      %3357 = vmatprep.subr.bf16.mxu0 0
      %3358 = vmatpush2.bf16.msra.mxu0 0
      %3359 = vmatprep.subr.bf16.mxu0 0
      %3360 = vmatpush2.bf16.msra.mxu0 0
      %3361 = vmatprep.subr.bf16.mxu0 0
      %3362 = vmatpush2.bf16.msra.mxu0 0
      %3363 = vmatprep.subr.bf16.mxu0 0
      %3364 = vmatpush2.bf16.msra.mxu0 0
      %3365 = vmatprep.mubr.bf16.mxu0 0
      %3366 = vmatmul.mubr.bf16.gmra.mxu0 %v3322
      %v3367 = vpop.f32.mrf.mxu0
      %v3368 = vadd.f32 0.0, %v3367
      %v3369 = vpop.f32.mrf.mxu0
      %v3370 = vpop.f32.mrf.mxu0
      %v3371 = vadd.f32 0.0, %v3370
      %v3372 = vpop.f32.mrf.mxu0
      %3373 = vmatprep.mubr.bf16.mxu0 0
      %3374 = vmatmul.mubr.bf16.gmra.mxu0 %v3325
      %v3375 = vpop.f32.mrf.mxu0
      %v3376 = vadd.f32 0.0, %v3375
      %v3377 = vpop.f32.mrf.mxu0
      %v3378 = vpop.f32.mrf.mxu0
      %v3379 = vadd.f32 0.0, %v3378
      %v3380 = vpop.f32.mrf.mxu0
      %3381 = vmatprep.mubr.bf16.mxu0 0
      %3382 = vmatmul.mubr.bf16.gmra.mxu0 %v3328
      %v3383 = vpop.f32.mrf.mxu0
      %v3384 = vadd.f32 0.0, %v3383
      %v3385 = vpop.f32.mrf.mxu0
      %v3386 = vpop.f32.mrf.mxu0
      %v3387 = vadd.f32 0.0, %v3386
      %v3388 = vpop.f32.mrf.mxu0
      %3389 = vmatprep.mubr.bf16.mxu0 0
      %3390 = vmatmul.mubr.bf16.gmra.mxu0 %v3331
      %v3391 = vpop.f32.mrf.mxu0
      %v3392 = vadd.f32 0.0, %v3391
      %v3393 = vpop.f32.mrf.mxu0
      %v3394 = vpop.f32.mrf.mxu0
      %v3395 = vadd.f32 0.0, %v3394
      %v3396 = vpop.f32.mrf.mxu0
      %3397 = vdwg.mxu0
      %3398 = vrot.lane.b32.xlu0 %v1128, 88
      %v3399 = vpop.permute.xlu0 %3398
      %3400 = vrot.lane.b32.xlu0 %v1129, 88
      %v3401 = vpop.permute.xlu0 %3400
      %3402 = vrot.lane.b32.xlu0 %v1130, 88
      %v3403 = vpop.permute.xlu0 %3402
      %3404 = vrot.lane.b32.xlu0 %v1131, 88
      %v3405 = vpop.permute.xlu0 %3404
      %v3411 = vsel %vm1577, %v3127, 0
      %v3414 = vsel %vm1577, %v3128, 0
      %v3417 = vsel %vm1577, %v3129, 0
      %v3420 = vsel %vm1577, %v3130, 0
      %3422 = vmatprep.subr.bf16.mxu0 0
      %3423 = vmatpush1.bf16.msra.mxu0 0
      %3424 = vmatprep.subr.bf16.mxu0 0
      %3425 = vmatpush1.bf16.msra.mxu0 0
      %3426 = vmatprep.subr.bf16.mxu0 0
      %3427 = vmatpush1.bf16.msra.mxu0 0
      %3428 = vmatprep.subr.bf16.mxu0 0
      %3429 = vmatpush1.bf16.msra.mxu0 0
      %3430 = vmatprep.subr.bf16.mxu0 0
      %3431 = vmatpush1.bf16.msra.mxu0 %v3405
      %3432 = vmatprep.subr.bf16.mxu0 0
      %3433 = vmatpush1.bf16.msra.mxu0 %v3403
      %3434 = vmatprep.subr.bf16.mxu0 0
      %3435 = vmatpush1.bf16.msra.mxu0 %v3401
      %3436 = vmatprep.subr.bf16.mxu0 0
      %3437 = vmatpush1.bf16.msra.mxu0 %v3399
      %3438 = vmatprep.subr.bf16.mxu0 0
      %3439 = vmatpush2.bf16.msra.mxu0 0
      %3440 = vmatprep.subr.bf16.mxu0 0
      %3441 = vmatpush2.bf16.msra.mxu0 0
      %3442 = vmatprep.subr.bf16.mxu0 0
      %3443 = vmatpush2.bf16.msra.mxu0 0
      %3444 = vmatprep.subr.bf16.mxu0 0
      %3445 = vmatpush2.bf16.msra.mxu0 0
      %3446 = vmatprep.subr.bf16.mxu0 0
      %3447 = vmatpush2.bf16.msra.mxu0 0
      %3448 = vmatprep.subr.bf16.mxu0 0
      %3449 = vmatpush2.bf16.msra.mxu0 0
      %3450 = vmatprep.subr.bf16.mxu0 0
      %3451 = vmatpush2.bf16.msra.mxu0 0
      %3452 = vmatprep.subr.bf16.mxu0 0
      %3453 = vmatpush2.bf16.msra.mxu0 0
      %3454 = vmatprep.mubr.bf16.mxu0 0
      %3455 = vmatmul.mubr.bf16.gmra.mxu0 %v3411
      %v3456 = vpop.f32.mrf.mxu0
      %v3457 = vadd.f32 0.0, %v3456
      %v3458 = vpop.f32.mrf.mxu0
      %v3459 = vpop.f32.mrf.mxu0
      %v3460 = vadd.f32 0.0, %v3459
      %v3461 = vpop.f32.mrf.mxu0
      %3462 = vmatprep.mubr.bf16.mxu0 0
      %3463 = vmatmul.mubr.bf16.gmra.mxu0 %v3414
      %v3464 = vpop.f32.mrf.mxu0
      %v3465 = vadd.f32 0.0, %v3464
      %v3466 = vpop.f32.mrf.mxu0
      %v3467 = vpop.f32.mrf.mxu0
      %v3468 = vadd.f32 0.0, %v3467
      %v3469 = vpop.f32.mrf.mxu0
      %3470 = vmatprep.mubr.bf16.mxu0 0
      %3471 = vmatmul.mubr.bf16.gmra.mxu0 %v3417
      %v3472 = vpop.f32.mrf.mxu0
      %v3473 = vadd.f32 0.0, %v3472
      %v3474 = vpop.f32.mrf.mxu0
      %v3475 = vpop.f32.mrf.mxu0
      %v3476 = vadd.f32 0.0, %v3475
      %v3477 = vpop.f32.mrf.mxu0
      %3478 = vmatprep.mubr.bf16.mxu0 0
      %3479 = vmatmul.mubr.bf16.gmra.mxu0 %v3420
      %v3480 = vpop.f32.mrf.mxu0
      %v3481 = vadd.f32 0.0, %v3480
      %v3482 = vpop.f32.mrf.mxu0
      %v3483 = vpop.f32.mrf.mxu0
      %v3484 = vadd.f32 0.0, %v3483
      %v3485 = vpop.f32.mrf.mxu0
      %3486 = vdwg.mxu0
      %3519 = vrot.lane.b32.xlu0 %v3190, 8
      %v3520 = vpop.permute.xlu0 %3519
      %3521 = vrot.lane.b32.xlu0 %v3193, 8
      %v3522 = vpop.permute.xlu0 %3521
      %3523 = vrot.lane.b32.xlu0 %v3198, 8
      %v3524 = vpop.permute.xlu0 %3523
      %3525 = vrot.lane.b32.xlu0 %v3201, 8
      %v3526 = vpop.permute.xlu0 %3525
      %3527 = vrot.lane.b32.xlu0 %v3206, 8
      %v3528 = vpop.permute.xlu0 %3527
      %3529 = vrot.lane.b32.xlu0 %v3209, 8
      %v3530 = vpop.permute.xlu0 %3529
      %3531 = vrot.lane.b32.xlu0 %v3214, 8
      %v3532 = vpop.permute.xlu0 %3531
      %3533 = vrot.lane.b32.xlu0 %v3217, 8
      %v3534 = vpop.permute.xlu0 %3533
      %3535 = vrot.lane.b32.xlu0 %v3279, 8
      %v3536 = vpop.permute.xlu0 %3535
      %3537 = vrot.lane.b32.xlu0 %v3282, 8
      %v3538 = vpop.permute.xlu0 %3537
      %3539 = vrot.lane.b32.xlu0 %v3287, 8
      %v3540 = vpop.permute.xlu0 %3539
      %3541 = vrot.lane.b32.xlu0 %v3290, 8
      %v3542 = vpop.permute.xlu0 %3541
      %3543 = vrot.lane.b32.xlu0 %v3295, 8
      %v3544 = vpop.permute.xlu0 %3543
      %3545 = vrot.lane.b32.xlu0 %v3298, 8
      %v3546 = vpop.permute.xlu0 %3545
      %3547 = vrot.lane.b32.xlu0 %v3303, 8
      %v3548 = vpop.permute.xlu0 %3547
      %3549 = vrot.lane.b32.xlu0 %v3306, 8
      %v3550 = vpop.permute.xlu0 %3549
      %3551 = vrot.lane.b32.xlu0 %v3368, 8
      %v3552 = vpop.permute.xlu0 %3551
      %3553 = vrot.lane.b32.xlu0 %v3371, 8
      %v3554 = vpop.permute.xlu0 %3553
      %3555 = vrot.lane.b32.xlu0 %v3376, 8
      %v3556 = vpop.permute.xlu0 %3555
      %3557 = vrot.lane.b32.xlu0 %v3379, 8
      %v3558 = vpop.permute.xlu0 %3557
      %3559 = vrot.lane.b32.xlu0 %v3384, 8
      %v3560 = vpop.permute.xlu0 %3559
      %3561 = vrot.lane.b32.xlu0 %v3387, 8
      %v3562 = vpop.permute.xlu0 %3561
      %3563 = vrot.lane.b32.xlu0 %v3392, 8
      %v3564 = vpop.permute.xlu0 %3563
      %3565 = vrot.lane.b32.xlu0 %v3395, 8
      %v3566 = vpop.permute.xlu0 %3565
      %3567 = vrot.lane.b32.xlu0 %v3457, 8
      %v3568 = vpop.permute.xlu0 %3567
      %3569 = vrot.lane.b32.xlu0 %v3460, 8
      %v3570 = vpop.permute.xlu0 %3569
      %3571 = vrot.lane.b32.xlu0 %v3465, 8
      %v3572 = vpop.permute.xlu0 %3571
      %3573 = vrot.lane.b32.xlu0 %v3468, 8
      %v3574 = vpop.permute.xlu0 %3573
      %3575 = vrot.lane.b32.xlu0 %v3473, 8
      %v3576 = vpop.permute.xlu0 %3575
      %3577 = vrot.lane.b32.xlu0 %v3476, 8
      %v3578 = vpop.permute.xlu0 %3577
      %3579 = vrot.lane.b32.xlu0 %v3481, 8
      %v3580 = vpop.permute.xlu0 %3579
      %3581 = vrot.lane.b32.xlu0 %v3484, 8
      %v3582 = vpop.permute.xlu0 %3581
      %v3615 = vsel %vm1152, %v2005, %v3520
      %v3616 = vsel %vm1152, %v2008, %v3522
      %v3617 = vsel %vm1152, %v2013, %v3524
      %v3618 = vsel %vm1152, %v2016, %v3526
      %v3619 = vsel %vm1152, %v2021, %v3528
      %v3620 = vsel %vm1152, %v2024, %v3530
      %v3621 = vsel %vm1152, %v2029, %v3532
      %v3622 = vsel %vm1152, %v2032, %v3534
      %v3623 = vsel %vm1152, %v2094, %v3536
      %v3624 = vsel %vm1152, %v2097, %v3538
      %v3625 = vsel %vm1152, %v2102, %v3540
      %v3626 = vsel %vm1152, %v2105, %v3542
      %v3627 = vsel %vm1152, %v2110, %v3544
      %v3628 = vsel %vm1152, %v2113, %v3546
      %v3629 = vsel %vm1152, %v2118, %v3548
      %v3630 = vsel %vm1152, %v2121, %v3550
      %v3631 = vsel %vm1152, %v2183, %v3552
      %v3632 = vsel %vm1152, %v2186, %v3554
      %v3633 = vsel %vm1152, %v2191, %v3556
      %v3634 = vsel %vm1152, %v2194, %v3558
      %v3635 = vsel %vm1152, %v2199, %v3560
      %v3636 = vsel %vm1152, %v2202, %v3562
      %v3637 = vsel %vm1152, %v2207, %v3564
      %v3638 = vsel %vm1152, %v2210, %v3566
      %v3639 = vsel %vm1152, %v2272, %v3568
      %v3640 = vsel %vm1152, %v2275, %v3570
      %v3641 = vsel %vm1152, %v2280, %v3572
      %v3642 = vsel %vm1152, %v2283, %v3574
      %v3643 = vsel %vm1152, %v2288, %v3576
      %v3644 = vsel %vm1152, %v2291, %v3578
      %v3645 = vsel %vm1152, %v2296, %v3580
      %v3646 = vsel %vm1152, %v2299, %v3582
      %v3647 = vpack.c.bf16 %v3616, %v3615
      %v3648 = vpack.c.bf16 %v3618, %v3617
      %v3649 = vpack.c.bf16 %v3620, %v3619
      %v3650 = vpack.c.bf16 %v3622, %v3621
      %v3651 = vpack.c.bf16 %v3624, %v3623
      %v3652 = vpack.c.bf16 %v3626, %v3625
      %v3653 = vpack.c.bf16 %v3628, %v3627
      %v3654 = vpack.c.bf16 %v3630, %v3629
      %v3655 = vpack.c.bf16 %v3632, %v3631
      %v3656 = vpack.c.bf16 %v3634, %v3633
      %v3657 = vpack.c.bf16 %v3636, %v3635
      %v3658 = vpack.c.bf16 %v3638, %v3637
      %v3659 = vpack.c.bf16 %v3640, %v3639
      %v3660 = vpack.c.bf16 %v3642, %v3641
      %v3661 = vpack.c.bf16 %v3644, %v3643
      %v3662 = vpack.c.bf16 %v3646, %v3645
      %v3663 = vld [vmem:[%s6] sm:$0xf]
      %v3664 = vld [vmem:[%s6 + $0x4] sm:$0xf]
      %v3665 = vld [vmem:[%s7] sm:$0x1]
      %v3667 = vlaneseq
      %v3668 = vshrl.u32 %v3667, 7
      %v3669 = vsub.s32 0, %v3668
      %v3670 = vrot.slane %v3665, %v3669
      %v3674 = vunpack.c.l.b16 %v3663
      %v3675 = vunpack.c.l.b16 %v3664
      %v3676 = vpack.c.b16 %v3675, %v3674
      %vm3678 = vcmask 130048
      %v3680 = vsel %vm3678, %v3647, 0
      %v3683 = vsel %vm3678, %v3648, 0
      %v3686 = vsel %vm3678, %v3649, 0
      %v3689 = vsel %vm3678, %v3650, 0
      %v3692 = vsel %vm3678, %v3651, 0
      %v3695 = vsel %vm3678, %v3652, 0
      %v3698 = vsel %vm3678, %v3653, 0
      %v3701 = vsel %vm3678, %v3654, 0
      %v3704 = vsel %vm3678, %v3655, 0
      %v3707 = vsel %vm3678, %v3656, 0
      %v3710 = vsel %vm3678, %v3657, 0
      %v3713 = vsel %vm3678, %v3658, 0
      %v3716 = vsel %vm3678, %v3659, 0
      %v3719 = vsel %vm3678, %v3660, 0
      %v3722 = vsel %vm3678, %v3661, 0
      %v3725 = vsel %vm3678, %v3662, 0
      %3727 = vmatprep.subr.bf16.mxu0 0
      %3728 = vmatpush1.bf16.msra.mxu0 0
      %3729 = vmatprep.subr.bf16.mxu0 0
      %3730 = vmatpush1.bf16.msra.mxu0 0
      %3731 = vmatprep.subr.bf16.mxu0 0
      %3732 = vmatpush1.bf16.msra.mxu0 0
      %3733 = vmatprep.subr.bf16.mxu0 0
      %3734 = vmatpush1.bf16.msra.mxu0 0
      %3735 = vmatprep.subr.bf16.mxu0 0
      %3736 = vmatpush1.bf16.msra.mxu0 0
      %3737 = vmatprep.subr.bf16.mxu0 0
      %3738 = vmatpush1.bf16.msra.mxu0 0
      %3739 = vmatprep.subr.bf16.mxu0 0
      %3740 = vmatpush1.bf16.msra.mxu0 0
      %3741 = vmatprep.subr.bf16.mxu0 0
      %3742 = vmatpush1.bf16.msra.mxu0 %v3676
      %3743 = vmatprep.subr.bf16.mxu0 0
      %3744 = vmatpush2.bf16.msra.mxu0 0
      %3745 = vmatprep.subr.bf16.mxu0 0
      %3746 = vmatpush2.bf16.msra.mxu0 0
      %3747 = vmatprep.subr.bf16.mxu0 0
      %3748 = vmatpush2.bf16.msra.mxu0 0
      %3749 = vmatprep.subr.bf16.mxu0 0
      %3750 = vmatpush2.bf16.msra.mxu0 0
      %3751 = vmatprep.subr.bf16.mxu0 0
      %3752 = vmatpush2.bf16.msra.mxu0 0
      %3753 = vmatprep.subr.bf16.mxu0 0
      %3754 = vmatpush2.bf16.msra.mxu0 0
      %3755 = vmatprep.subr.bf16.mxu0 0
      %3756 = vmatpush2.bf16.msra.mxu0 0
      %3757 = vmatprep.subr.bf16.mxu0 0
      %3758 = vmatpush2.bf16.msra.mxu0 0
      %3759 = vmatprep.mubr.bf16.mxu0 0
      %3760 = vmatmul.mubr.bf16.gmra.mxu0 %v3680
      %v3761 = vpop.f32.mrf.mxu0
      %v3762 = vadd.f32 %v3670, %v3761
      %v3763 = vpop.f32.mrf.mxu0
      %v3764 = vpop.f32.mrf.mxu0
      %v3765 = vadd.f32 %v3670, %v3764
      %v3766 = vpop.f32.mrf.mxu0
      %3767 = vmatprep.mubr.bf16.mxu0 0
      %3768 = vmatmul.mubr.bf16.gmra.mxu0 %v3683
      %v3769 = vpop.f32.mrf.mxu0
      %v3770 = vadd.f32 %v3670, %v3769
      %v3771 = vpop.f32.mrf.mxu0
      %v3772 = vpop.f32.mrf.mxu0
      %v3773 = vadd.f32 %v3670, %v3772
      %v3774 = vpop.f32.mrf.mxu0
      %3775 = vmatprep.mubr.bf16.mxu0 0
      %3776 = vmatmul.mubr.bf16.gmra.mxu0 %v3686
      %v3777 = vpop.f32.mrf.mxu0
      %v3778 = vadd.f32 %v3670, %v3777
      %v3779 = vpop.f32.mrf.mxu0
      %v3780 = vpop.f32.mrf.mxu0
      %v3781 = vadd.f32 %v3670, %v3780
      %v3782 = vpop.f32.mrf.mxu0
      %3783 = vmatprep.mubr.bf16.mxu0 0
      %3784 = vmatmul.mubr.bf16.gmra.mxu0 %v3689
      %v3785 = vpop.f32.mrf.mxu0
      %v3786 = vadd.f32 %v3670, %v3785
      %v3787 = vpop.f32.mrf.mxu0
      %v3788 = vpop.f32.mrf.mxu0
      %v3789 = vadd.f32 %v3670, %v3788
      %v3790 = vpop.f32.mrf.mxu0
      %3791 = vmatprep.mubr.bf16.mxu0 0
      %3792 = vmatmul.mubr.bf16.gmra.mxu0 %v3692
      %v3793 = vpop.f32.mrf.mxu0
      %v3794 = vadd.f32 %v3670, %v3793
      %v3795 = vpop.f32.mrf.mxu0
      %v3796 = vpop.f32.mrf.mxu0
      %v3797 = vadd.f32 %v3670, %v3796
      %v3798 = vpop.f32.mrf.mxu0
      %3799 = vmatprep.mubr.bf16.mxu0 0
      %3800 = vmatmul.mubr.bf16.gmra.mxu0 %v3695
      %v3801 = vpop.f32.mrf.mxu0
      %v3802 = vadd.f32 %v3670, %v3801
      %v3803 = vpop.f32.mrf.mxu0
      %v3804 = vpop.f32.mrf.mxu0
      %v3805 = vadd.f32 %v3670, %v3804
      %v3806 = vpop.f32.mrf.mxu0
      %3807 = vmatprep.mubr.bf16.mxu0 0
      %3808 = vmatmul.mubr.bf16.gmra.mxu0 %v3698
      %v3809 = vpop.f32.mrf.mxu0
      %v3810 = vadd.f32 %v3670, %v3809
      %v3811 = vpop.f32.mrf.mxu0
      %v3812 = vpop.f32.mrf.mxu0
      %v3813 = vadd.f32 %v3670, %v3812
      %v3814 = vpop.f32.mrf.mxu0
      %3815 = vmatprep.mubr.bf16.mxu0 0
      %3816 = vmatmul.mubr.bf16.gmra.mxu0 %v3701
      %v3817 = vpop.f32.mrf.mxu0
      %v3818 = vadd.f32 %v3670, %v3817
      %v3819 = vpop.f32.mrf.mxu0
      %v3820 = vpop.f32.mrf.mxu0
      %v3821 = vadd.f32 %v3670, %v3820
      %v3822 = vpop.f32.mrf.mxu0
      %3823 = vmatprep.mubr.bf16.mxu0 0
      %3824 = vmatmul.mubr.bf16.gmra.mxu0 %v3704
      %v3825 = vpop.f32.mrf.mxu0
      %v3826 = vadd.f32 %v3670, %v3825
      %v3827 = vpop.f32.mrf.mxu0
      %v3828 = vpop.f32.mrf.mxu0
      %v3829 = vadd.f32 %v3670, %v3828
      %v3830 = vpop.f32.mrf.mxu0
      %3831 = vmatprep.mubr.bf16.mxu0 0
      %3832 = vmatmul.mubr.bf16.gmra.mxu0 %v3707
      %v3833 = vpop.f32.mrf.mxu0
      %v3834 = vadd.f32 %v3670, %v3833
      %v3835 = vpop.f32.mrf.mxu0
      %v3836 = vpop.f32.mrf.mxu0
      %v3837 = vadd.f32 %v3670, %v3836
      %v3838 = vpop.f32.mrf.mxu0
      %3839 = vmatprep.mubr.bf16.mxu0 0
      %3840 = vmatmul.mubr.bf16.gmra.mxu0 %v3710
      %v3841 = vpop.f32.mrf.mxu0
      %v3842 = vadd.f32 %v3670, %v3841
      %v3843 = vpop.f32.mrf.mxu0
      %v3844 = vpop.f32.mrf.mxu0
      %v3845 = vadd.f32 %v3670, %v3844
      %v3846 = vpop.f32.mrf.mxu0
      %3847 = vmatprep.mubr.bf16.mxu0 0
      %3848 = vmatmul.mubr.bf16.gmra.mxu0 %v3713
      %v3849 = vpop.f32.mrf.mxu0
      %v3850 = vadd.f32 %v3670, %v3849
      %v3851 = vpop.f32.mrf.mxu0
      %v3852 = vpop.f32.mrf.mxu0
      %v3853 = vadd.f32 %v3670, %v3852
      %v3854 = vpop.f32.mrf.mxu0
      %3855 = vmatprep.mubr.bf16.mxu0 0
      %3856 = vmatmul.mubr.bf16.gmra.mxu0 %v3716
      %v3857 = vpop.f32.mrf.mxu0
      %v3858 = vadd.f32 %v3670, %v3857
      %v3859 = vpop.f32.mrf.mxu0
      %v3860 = vpop.f32.mrf.mxu0
      %v3861 = vadd.f32 %v3670, %v3860
      %v3862 = vpop.f32.mrf.mxu0
      %3863 = vmatprep.mubr.bf16.mxu0 0
      %3864 = vmatmul.mubr.bf16.gmra.mxu0 %v3719
      %v3865 = vpop.f32.mrf.mxu0
      %v3866 = vadd.f32 %v3670, %v3865
      %v3867 = vpop.f32.mrf.mxu0
      %v3868 = vpop.f32.mrf.mxu0
      %v3869 = vadd.f32 %v3670, %v3868
      %v3870 = vpop.f32.mrf.mxu0
      %3871 = vmatprep.mubr.bf16.mxu0 0
      %3872 = vmatmul.mubr.bf16.gmra.mxu0 %v3722
      %v3873 = vpop.f32.mrf.mxu0
      %v3874 = vadd.f32 %v3670, %v3873
      %v3875 = vpop.f32.mrf.mxu0
      %v3876 = vpop.f32.mrf.mxu0
      %v3877 = vadd.f32 %v3670, %v3876
      %v3878 = vpop.f32.mrf.mxu0
      %3879 = vmatprep.mubr.bf16.mxu0 0
      %3880 = vmatmul.mubr.bf16.gmra.mxu0 %v3725
      %v3881 = vpop.f32.mrf.mxu0
      %v3882 = vadd.f32 %v3670, %v3881
      %v3883 = vpop.f32.mrf.mxu0
      %v3884 = vpop.f32.mrf.mxu0
      %v3885 = vadd.f32 %v3670, %v3884
      %v3886 = vpop.f32.mrf.mxu0
      %3887 = vdwg.mxu0
      %v3888 = vadd.f32 %v337, %v3762
      %v3889 = vadd.f32 %v338, %v3765
      %v3890 = vadd.f32 %v339, %v3770
      %v3891 = vadd.f32 %v340, %v3773
      %v3892 = vadd.f32 %v341, %v3778
      %v3893 = vadd.f32 %v342, %v3781
      %v3894 = vadd.f32 %v343, %v3786
      %v3895 = vadd.f32 %v344, %v3789
      %v3896 = vadd.f32 %v345, %v3794
      %v3897 = vadd.f32 %v346, %v3797
      %v3898 = vadd.f32 %v347, %v3802
      %v3899 = vadd.f32 %v348, %v3805
      %v3900 = vadd.f32 %v349, %v3810
      %v3901 = vadd.f32 %v350, %v3813
      %v3902 = vadd.f32 %v351, %v3818
      %v3903 = vadd.f32 %v352, %v3821
      %v3904 = vadd.f32 %v353, %v3826
      %v3905 = vadd.f32 %v354, %v3829
      %v3906 = vadd.f32 %v355, %v3834
      %v3907 = vadd.f32 %v356, %v3837
      %v3908 = vadd.f32 %v357, %v3842
      %v3909 = vadd.f32 %v358, %v3845
      %v3910 = vadd.f32 %v359, %v3850
      %v3911 = vadd.f32 %v360, %v3853
      %v3912 = vadd.f32 %v361, %v3858
      %v3913 = vadd.f32 %v362, %v3861
      %v3914 = vadd.f32 %v363, %v3866
      %v3915 = vadd.f32 %v364, %v3869
      %v3916 = vadd.f32 %v365, %v3874
      %v3917 = vadd.f32 %v366, %v3877
      %v3918 = vadd.f32 %v367, %v3882
      %v3919 = vadd.f32 %v368, %v3885
      %3920 = vst [vmem:[%s334] sm:$0xff] %v3888
      %3921 = vst [vmem:[%s334 + $0x8] sm:$0xff] %v3889
      %3922 = vst [vmem:[%s334 + $0x10] sm:$0xff] %v3890
      %3923 = vst [vmem:[%s334 + $0x18] sm:$0xff] %v3891
      %3924 = vst [vmem:[%s334 + $0x20] sm:$0xff] %v3892
      %3925 = vst [vmem:[%s334 + $0x28] sm:$0xff] %v3893
      %3926 = vst [vmem:[%s334 + $0x30] sm:$0xff] %v3894
      %3927 = vst [vmem:[%s334 + $0x38] sm:$0xff] %v3895
      %3928 = vst [vmem:[%s334 + $0x40] sm:$0xff] %v3896
      %3929 = vst [vmem:[%s334 + $0x48] sm:$0xff] %v3897
      %3930 = vst [vmem:[%s334 + $0x50] sm:$0xff] %v3898
      %3931 = vst [vmem:[%s334 + $0x58] sm:$0xff] %v3899
      %3932 = vst [vmem:[%s334 + $0x60] sm:$0xff] %v3900
      %3933 = vst [vmem:[%s334 + $0x68] sm:$0xff] %v3901
      %3934 = vst [vmem:[%s334 + $0x70] sm:$0xff] %v3902
      %3935 = vst [vmem:[%s334 + $0x78] sm:$0xff] %v3903
      %3936 = vst [vmem:[%s334 + $0x80] sm:$0xff] %v3904
      %3937 = vst [vmem:[%s334 + $0x88] sm:$0xff] %v3905
      %3938 = vst [vmem:[%s334 + $0x90] sm:$0xff] %v3906
      %3939 = vst [vmem:[%s334 + $0x98] sm:$0xff] %v3907
      %3940 = vst [vmem:[%s334 + $0xa0] sm:$0xff] %v3908
      %3941 = vst [vmem:[%s334 + $0xa8] sm:$0xff] %v3909
      %3942 = vst [vmem:[%s334 + $0xb0] sm:$0xff] %v3910
      %3943 = vst [vmem:[%s334 + $0xb8] sm:$0xff] %v3911
      %3944 = vst [vmem:[%s334 + $0xc0] sm:$0xff] %v3912
      %3945 = vst [vmem:[%s334 + $0xc8] sm:$0xff] %v3913
      %3946 = vst [vmem:[%s334 + $0xd0] sm:$0xff] %v3914
      %3947 = vst [vmem:[%s334 + $0xd8] sm:$0xff] %v3915
      %3948 = vst [vmem:[%s334 + $0xe0] sm:$0xff] %v3916
      %3949 = vst [vmem:[%s334 + $0xe8] sm:$0xff] %v3917
      %3950 = vst [vmem:[%s334 + $0xf0] sm:$0xff] %v3918
      %3951 = vst [vmem:[%s334 + $0xf8] sm:$0xff] %v3919
      %s3952 = smul.u32 32, %s20
      %p3953 = scmp.lt.s32.totalorder %s3952, 63
      %s3954 = scalar_select %p3953, %s3952, 63
      %s3955 = smul.addr %s3954, 8
      %s3956 = scalar_lea.vmem %s9, %s3955
      // Predicated region
      $region57: #{basic_uformer_layer.6} parent=55 // pred_check
        %p3957 = pneg %p232
      $region58: #{basic_uformer_layer.6} parent=55 // pred_check_branch
        %3959 = sbr.rel (%p3957) target = $region60
      $region59: #{basic_uformer_layer.6} parent=55 // pred_region
        %s3960 = smul.u32 32, %s20
      $region60: #{basic_uformer_layer.6} parent=55 // pred_fallthru
        _
    $region56: #{basic_uformer_layer.6} parent=5 // pred_fallthru
      _
    %p3961 = scmp.le.s32.totalorder 2, %s15
    // Predicated region
    $region61: #{basic_uformer_layer.6} parent=5 // pred_check
      %p3962 = pneg %p3961
    $region62: #{basic_uformer_layer.6} parent=5 // pred_check_branch
      %3964 = sbr.rel (%p3962) target = $region64
    $region63: #{basic_uformer_layer.6} parent=5 // pred_region
      %s3965 = ssub.s32 %s15, 2
      // Predicated region
      $region65: #{basic_uformer_layer.6} parent=63 // pred_check
        %p3966 = pneg %p238
      $region66: #{basic_uformer_layer.6} parent=63 // pred_check_branch
        %3968 = sbr.rel (%p3966) target = $region68
      $region67: #{basic_uformer_layer.6} parent=63 // pred_region
        %s3969 = smul.u32 32, %s21
        %p3970 = scmp.lt.s32.totalorder %s3969, 63
        %s3971 = scalar_select %p3970, %s3969, 63
        %s3972 = smul.addr %s3971, 8
        %s3973 = scalar_lea.vmem %s9, %s3972
      $region68: #{basic_uformer_layer.6} parent=63 // pred_fallthru
        _
    $region64: #{basic_uformer_layer.6} parent=5 // pred_fallthru
      _
  $region6: #{basic_uformer_layer.6} parent=0 // loop_footer
    %s19 = sadd.s32 1, %s15
  $region7: #{basic_uformer_layer.6} parent=0 // loop_footer_branch
    %14 = sbr.rel target = $region3
  $region8: #{basic_uformer_layer.6} parent=0 // loop_exit
    _

</llo_original>
